<compile_context>
chip_gen: v6e
topology: v6e:2x2x1
jax: 0.10.0
libtpu: 0.0.40
codegen_flags: <defaults>
</compile_context>

<pallas_src>
import jax
import jax.numpy as jnp
from jax import lax
from jax.experimental import pallas as pl
from jax.experimental.pallas import tpu as pltpu

# ---- BERT hyper-parameters (small, consistent with the module) --------------
B = 2            # batch
S = 8            # sequence length
N_TOK = B * S    # tokens processed per kernel call
D_MODEL = 32     # dim
N_HEAD = 8
D_K = 32
D_V = 32
D_FF = 64
N_LAYERS = 3
VOCAB = 30       # n_word
MAX_LEN = 64     # positional table (>= S)
LN_EPS = 1e-5
NEG_INF = -1e9


# ----------------------------- kernel ----------------------------------------
def _layer_norm(x, g, b):
    mu = jnp.mean(x, axis=-1, keepdims=True)
    var = jnp.mean((x - mu) ** 2, axis=-1, keepdims=True)
    return (x - mu) * lax.rsqrt(var + LN_EPS) * g + b


def bert_kernel(emb_ref, eg_ref, eb_ref, mask_ref,
                wqkv_ref, bqkv_ref, wo_ref, bo_ref, g_ref, beta_ref,
                w1_ref, b1_ref, w2_ref, b2_ref,
                o_ref):
    # Embedding LayerNorm.
    x = _layer_norm(emb_ref[...], eg_ref[...], eb_ref[...])    # (N_TOK, D_MODEL)

    # Layer-invariant additive mask: 0 where (same batch row AND key not PAD),
    # -1e9 elsewhere.  Built once in the wrapper.
    mask = mask_ref[...]                                       # (N_TOK, N_TOK)

    scale = D_K ** -0.5
    k0 = N_HEAD * D_K
    v0 = 2 * N_HEAD * D_K

    # All encoder layers, fully unrolled; weights stay resident in VMEM.
    for l in range(N_LAYERS):
        # Fused Q/K/V projection: one (N, D) @ (D, 3*H*D_K) MXU matmul.
        qkv = (jnp.dot(x, wqkv_ref[l], preferred_element_type=jnp.float32)
               + bqkv_ref[l])                                  # (N_TOK, 768)

        ctx_heads = []
        for h in range(N_HEAD):
            qh = qkv[:, h * D_K:(h + 1) * D_K]                 # (N, D_K)
            kh = qkv[:, k0 + h * D_K:k0 + (h + 1) * D_K]       # (N, D_K)
            vh = qkv[:, v0 + h * D_V:v0 + (h + 1) * D_V]       # (N, D_V)
            # scores = qh @ kh.T / sqrt(d_k) + additive mask
            s = lax.dot_general(qh, kh, (((1,), (1,)), ((), ())),
                                preferred_element_type=jnp.float32) * scale + mask
            s = s - jnp.max(s, axis=-1, keepdims=True)
            p = jnp.exp(s)
            p = p * pl.reciprocal(jnp.sum(p, axis=-1, keepdims=True), approx=True)
            ctx_heads.append(jnp.dot(p, vh, preferred_element_type=jnp.float32))

        # Lane-concatenate the heads and do ONE output-projection matmul
        # (K = H*D_V = 256) instead of 8 tiny K=32 accumulating dots.
        ctx = jnp.concatenate(ctx_heads, axis=-1)              # (N_TOK, 256)
        attn = (jnp.dot(ctx, wo_ref[l], preferred_element_type=jnp.float32)
                + bo_ref[l])                                   # (N_TOK, D_MODEL)

        # Add & Norm after attention (reference has no Add&Norm after the FFN).
        x = _layer_norm(attn + x, g_ref[l], beta_ref[l])

        # Position-wise FFN.
        h1 = jnp.maximum(
            jnp.dot(x, w1_ref[l], preferred_element_type=jnp.float32) + b1_ref[l],
            0.0)
        x = jnp.dot(h1, w2_ref[l], preferred_element_type=jnp.float32) + b2_ref[l]

    o_ref[...] = x


# ----------------------------- wrappers ---------------------------------------
def build_stacked_weights(params):
    L = params["layers"]
    wqkv = jnp.stack([jnp.concatenate([lp["wq"], lp["wk"], lp["wv"]], axis=1) for lp in L])
    bqkv = jnp.stack([jnp.concatenate([lp["bq"], lp["bk"], lp["bv"]], axis=1) for lp in L])
    wo = jnp.stack([lp["wo"] for lp in L])
    bo = jnp.stack([lp["bo"] for lp in L])
    g = jnp.stack([lp["ln_g"] for lp in L])
    beta = jnp.stack([lp["ln_b"] for lp in L])
    w1 = jnp.stack([lp["w1"] for lp in L])
    b1 = jnp.stack([lp["b1"] for lp in L])
    w2 = jnp.stack([lp["w2"] for lp in L])
    b2 = jnp.stack([lp["b2"] for lp in L])
    return (wqkv, bqkv, wo, bo, g, beta, w1, b1, w2, b2)


def bert_forward(params, input_ids):
    # Embedding gathers (glue): tok + pos lookup, flattened to (B*S, D).
    tok = jnp.take(params["tok_embed"], input_ids, axis=0)             # (B, S, D)
    pos_ids = jnp.arange(S, dtype=jnp.int32)
    pos = jnp.take(params["pos_embed"], pos_ids, axis=0)[None, :, :]   # (1, S, D)
    emb = (tok + pos).reshape(N_TOK, D_MODEL).astype(jnp.float32)

    # Additive attention mask built ONCE (layer-invariant): query i may attend
    # key j iff both tokens share a batch row and key j is not PAD (id == 0).
    pad = (input_ids == 0).reshape(N_TOK)                              # key is PAD
    bid = jnp.repeat(jnp.arange(B, dtype=jnp.int32), S)                # flat batch id
    allowed = (bid[:, None] == bid[None, :]) & (~pad)[None, :]
    mask_add = jnp.where(allowed, 0.0, NEG_INF).astype(jnp.float32)    # (N_TOK, N_TOK)

    stacked = build_stacked_weights(params)

    num_in = 4 + len(stacked)
    vmem_spec = pl.BlockSpec(memory_space=pltpu.MemorySpace.VMEM)
    out = pl.pallas_call(
        bert_kernel,
        out_shape=jax.ShapeDtypeStruct((N_TOK, D_MODEL), jnp.float32),
        in_specs=[vmem_spec] * num_in,
        out_specs=vmem_spec,
    )(emb, params["emb_ln_g"], params["emb_ln_b"], mask_add, *stacked)
    return out.reshape(B, S, D_MODEL)


# ----------------------------- parameters -------------------------------------
def init_params(key):
    def nrm(k, shape, scale=0.02):
        return (scale * jax.random.normal(k, shape)).astype(jnp.float32)

    keys = jax.random.split(key, 4 + N_LAYERS)
    params = {
        "tok_embed": nrm(keys[0], (VOCAB, D_MODEL)),
        "pos_embed": nrm(keys[1], (MAX_LEN, D_MODEL)),
        "emb_ln_g": jnp.ones((1, D_MODEL), jnp.float32),
        "emb_ln_b": jnp.zeros((1, D_MODEL), jnp.float32),
        "layers": [],
    }
    for li in range(N_LAYERS):
        lk = jax.random.split(keys[4 + li], 8)
        params["layers"].append({
            "wq": nrm(lk[0], (D_MODEL, N_HEAD * D_K)),
            "bq": jnp.zeros((1, N_HEAD * D_K), jnp.float32),
            "wk": nrm(lk[1], (D_MODEL, N_HEAD * D_K)),
            "bk": jnp.zeros((1, N_HEAD * D_K), jnp.float32),
            "wv": nrm(lk[2], (D_MODEL, N_HEAD * D_V)),
            "bv": jnp.zeros((1, N_HEAD * D_V), jnp.float32),
            "wo": nrm(lk[3], (N_HEAD * D_V, D_MODEL)),
            "bo": nrm(lk[4], (1, D_MODEL)),
            "ln_g": jnp.ones((1, D_MODEL), jnp.float32),
            "ln_b": jnp.zeros((1, D_MODEL), jnp.float32),
            "w1": nrm(lk[5], (D_MODEL, D_FF)),
            "b1": nrm(lk[6], (1, D_FF)),
            "w2": nrm(lk[7], (D_FF, D_MODEL)),
            "b2": jnp.zeros((1, D_MODEL), jnp.float32),
        })
    return params


# ----------------------------- main --------------------------------------------
if __name__ == "__main__":
    key = jax.random.PRNGKey(0)
    pkey, dkey = jax.random.split(key)
    params = init_params(pkey)

    input_ids = jax.random.randint(dkey, (B, S), 0, VOCAB, dtype=jnp.int32)
    # Guarantee at least one pad token (id 0) per row to exercise the mask.
    input_ids = input_ids.at[:, -1].set(0)

    out = bert_forward(params, input_ids)
    out = jax.block_until_ready(out)
    assert out.shape == (B, S, D_MODEL)
    assert bool(jnp.all(jnp.isfinite(out)))
    print("KERNEL_OK")
</pallas_src>

<mosaic_0001>
module attributes {stable_mosaic.version = 11 : i64} {
  func.func @bert_kernel(%arg0: memref<16x32xf32, #tpu.memory_space<vmem>>, %arg1: memref<1x32xf32, #tpu.memory_space<vmem>>, %arg2: memref<1x32xf32, #tpu.memory_space<vmem>>, %arg3: memref<16x16xf32, #tpu.memory_space<vmem>>, %arg4: memref<3x32x768xf32, #tpu.memory_space<vmem>>, %arg5: memref<3x1x768xf32, #tpu.memory_space<vmem>>, %arg6: memref<3x256x32xf32, #tpu.memory_space<vmem>>, %arg7: memref<3x1x32xf32, #tpu.memory_space<vmem>>, %arg8: memref<3x1x32xf32, #tpu.memory_space<vmem>>, %arg9: memref<3x1x32xf32, #tpu.memory_space<vmem>>, %arg10: memref<3x32x64xf32, #tpu.memory_space<vmem>>, %arg11: memref<3x1x64xf32, #tpu.memory_space<vmem>>, %arg12: memref<3x64x32xf32, #tpu.memory_space<vmem>>, %arg13: memref<3x1x32xf32, #tpu.memory_space<vmem>>, %arg14: memref<16x32xf32, #tpu.memory_space<vmem>>) attributes {dimension_semantics = [], scalar_prefetch = 0 : i64, scratch_operands = 0 : i64, tpu.core_type = #tpu.core_type<tc>} {
    %c0 = arith.constant 0 : index
    %c0_0 = arith.constant 0 : index
    %0 = vector.load %arg0[%c0, %c0_0] : memref<16x32xf32, #tpu.memory_space<vmem>>, vector<16x32xf32>
    %c0_1 = arith.constant 0 : index
    %c0_2 = arith.constant 0 : index
    %1 = vector.load %arg1[%c0_1, %c0_2] : memref<1x32xf32, #tpu.memory_space<vmem>>, vector<1x32xf32>
    %c0_3 = arith.constant 0 : index
    %c0_4 = arith.constant 0 : index
    %2 = vector.load %arg2[%c0_3, %c0_4] : memref<1x32xf32, #tpu.memory_space<vmem>>, vector<1x32xf32>
    %cst = arith.constant dense<0.000000e+00> : vector<16xf32>
    %3 = vector.multi_reduction <add>, %0, %cst [1] : vector<16x32xf32> to vector<16xf32>
    %4 = vector.shape_cast %3 : vector<16xf32> to vector<16x1xf32>
    %cst_5 = arith.constant 3.200000e+01 : f32
    %5 = vector.broadcast %cst_5 : f32 to vector<16x1xf32>
    %6 = arith.divf %4, %5 : vector<16x1xf32>
    %7 = vector.broadcast %6 : vector<16x1xf32> to vector<16x32xf32>
    %8 = arith.subf %0, %7 : vector<16x32xf32>
    %9 = arith.mulf %8, %8 : vector<16x32xf32>
    %cst_6 = arith.constant dense<0.000000e+00> : vector<16xf32>
    %10 = vector.multi_reduction <add>, %9, %cst_6 [1] : vector<16x32xf32> to vector<16xf32>
    %11 = vector.shape_cast %10 : vector<16xf32> to vector<16x1xf32>
    %cst_7 = arith.constant 3.200000e+01 : f32
    %12 = vector.broadcast %cst_7 : f32 to vector<16x1xf32>
    %13 = arith.divf %11, %12 : vector<16x1xf32>
    %14 = vector.broadcast %6 : vector<16x1xf32> to vector<16x32xf32>
    %15 = arith.subf %0, %14 : vector<16x32xf32>
    %cst_8 = arith.constant 9.99999974E-6 : f32
    %16 = vector.broadcast %cst_8 : f32 to vector<16x1xf32>
    %17 = arith.addf %13, %16 : vector<16x1xf32>
    %18 = math.rsqrt %17 : vector<16x1xf32>
    %19 = vector.broadcast %18 : vector<16x1xf32> to vector<16x32xf32>
    %20 = arith.mulf %15, %19 : vector<16x32xf32>
    %21 = vector.broadcast %1 : vector<1x32xf32> to vector<16x32xf32>
    %22 = arith.mulf %20, %21 : vector<16x32xf32>
    %23 = vector.broadcast %2 : vector<1x32xf32> to vector<16x32xf32>
    %24 = arith.addf %22, %23 : vector<16x32xf32>
    %c0_9 = arith.constant 0 : index
    %c0_10 = arith.constant 0 : index
    %25 = vector.load %arg3[%c0_9, %c0_10] : memref<16x16xf32, #tpu.memory_space<vmem>>, vector<16x16xf32>
    %c0_11 = arith.constant 0 : index
    %c0_12 = arith.constant 0 : index
    %c0_13 = arith.constant 0 : index
    %26 = vector.load %arg4[%c0_11, %c0_12, %c0_13] : memref<3x32x768xf32, #tpu.memory_space<vmem>>, vector<1x32x768xf32>
    %27 = vector.shape_cast %26 : vector<1x32x768xf32> to vector<32x768xf32>
    %cst_14 = arith.constant dense<0.000000e+00> : vector<16x768xf32>
    %28 = tpu.matmul %24, %27, %cst_14 {dimension_numbers = #tpu.dot_dimension_numbers<[1], [0], [0], [1], [0, 0, 1, 1], [], []>} : vector<16x32xf32>, vector<32x768xf32>, vector<16x768xf32> -> vector<16x768xf32>
    %c0_15 = arith.constant 0 : index
    %c0_16 = arith.constant 0 : index
    %c0_17 = arith.constant 0 : index
    %29 = vector.load %arg5[%c0_15, %c0_16, %c0_17] : memref<3x1x768xf32, #tpu.memory_space<vmem>>, vector<1x1x768xf32>
    %30 = vector.shape_cast %29 : vector<1x1x768xf32> to vector<1x768xf32>
    %31 = vector.broadcast %30 : vector<1x768xf32> to vector<16x768xf32>
    %32 = arith.addf %28, %31 : vector<16x768xf32>
    %33 = vector.extract_strided_slice %32 {offsets = [0, 0], sizes = [16, 32], strides = [1, 1]} : vector<16x768xf32> to vector<16x32xf32>
    %34 = vector.extract_strided_slice %32 {offsets = [0, 256], sizes = [16, 32], strides = [1, 1]} : vector<16x768xf32> to vector<16x32xf32>
    %35 = vector.extract_strided_slice %32 {offsets = [0, 512], sizes = [16, 32], strides = [1, 1]} : vector<16x768xf32> to vector<16x32xf32>
    %cst_18 = arith.constant dense<0.000000e+00> : vector<16x16xf32>
    %36 = tpu.matmul %33, %34, %cst_18 {dimension_numbers = #tpu.dot_dimension_numbers<[1], [1], [0], [0], [0, 0, 1, 0], [], []>} : vector<16x32xf32>, vector<16x32xf32>, vector<16x16xf32> -> vector<16x16xf32>
    %cst_19 = arith.constant 0.176776692 : f32
    %37 = vector.broadcast %cst_19 : f32 to vector<16x16xf32>
    %38 = arith.mulf %36, %37 : vector<16x16xf32>
    %39 = arith.addf %38, %25 : vector<16x16xf32>
    %cst_20 = arith.constant dense<0xFF800000> : vector<16xf32>
    %40 = vector.multi_reduction <maximumf>, %39, %cst_20 [1] : vector<16x16xf32> to vector<16xf32>
    %41 = vector.shape_cast %40 : vector<16xf32> to vector<16x1xf32>
    %42 = vector.broadcast %41 : vector<16x1xf32> to vector<16x16xf32>
    %43 = arith.subf %39, %42 : vector<16x16xf32>
    %44 = math.exp %43 : vector<16x16xf32>
    %cst_21 = arith.constant dense<0.000000e+00> : vector<16xf32>
    %45 = vector.multi_reduction <add>, %44, %cst_21 [1] : vector<16x16xf32> to vector<16xf32>
    %46 = vector.shape_cast %45 : vector<16xf32> to vector<16x1xf32>
    %47 = tpu.reciprocal %46 {approx = true} : vector<16x1xf32> -> vector<16x1xf32>
    %48 = vector.broadcast %47 : vector<16x1xf32> to vector<16x16xf32>
    %49 = arith.mulf %44, %48 : vector<16x16xf32>
    %cst_22 = arith.constant dense<0.000000e+00> : vector<16x32xf32>
    %50 = tpu.matmul %49, %35, %cst_22 {dimension_numbers = #tpu.dot_dimension_numbers<[1], [0], [0], [1], [0, 0, 1, 1], [], []>} : vector<16x16xf32>, vector<16x32xf32>, vector<16x32xf32> -> vector<16x32xf32>
    %51 = vector.extract_strided_slice %32 {offsets = [0, 32], sizes = [16, 32], strides = [1, 1]} : vector<16x768xf32> to vector<16x32xf32>
    %52 = vector.extract_strided_slice %32 {offsets = [0, 288], sizes = [16, 32], strides = [1, 1]} : vector<16x768xf32> to vector<16x32xf32>
    %53 = vector.extract_strided_slice %32 {offsets = [0, 544], sizes = [16, 32], strides = [1, 1]} : vector<16x768xf32> to vector<16x32xf32>
    %cst_23 = arith.constant dense<0.000000e+00> : vector<16x16xf32>
    %54 = tpu.matmul %51, %52, %cst_23 {dimension_numbers = #tpu.dot_dimension_numbers<[1], [1], [0], [0], [0, 0, 1, 0], [], []>} : vector<16x32xf32>, vector<16x32xf32>, vector<16x16xf32> -> vector<16x16xf32>
    %cst_24 = arith.constant 0.176776692 : f32
    %55 = vector.broadcast %cst_24 : f32 to vector<16x16xf32>
    %56 = arith.mulf %54, %55 : vector<16x16xf32>
    %57 = arith.addf %56, %25 : vector<16x16xf32>
    %cst_25 = arith.constant dense<0xFF800000> : vector<16xf32>
    %58 = vector.multi_reduction <maximumf>, %57, %cst_25 [1] : vector<16x16xf32> to vector<16xf32>
    %59 = vector.shape_cast %58 : vector<16xf32> to vector<16x1xf32>
    %60 = vector.broadcast %59 : vector<16x1xf32> to vector<16x16xf32>
    %61 = arith.subf %57, %60 : vector<16x16xf32>
    %62 = math.exp %61 : vector<16x16xf32>
    %cst_26 = arith.constant dense<0.000000e+00> : vector<16xf32>
    %63 = vector.multi_reduction <add>, %62, %cst_26 [1] : vector<16x16xf32> to vector<16xf32>
    %64 = vector.shape_cast %63 : vector<16xf32> to vector<16x1xf32>
    %65 = tpu.reciprocal %64 {approx = true} : vector<16x1xf32> -> vector<16x1xf32>
    %66 = vector.broadcast %65 : vector<16x1xf32> to vector<16x16xf32>
    %67 = arith.mulf %62, %66 : vector<16x16xf32>
    %cst_27 = arith.constant dense<0.000000e+00> : vector<16x32xf32>
    %68 = tpu.matmul %67, %53, %cst_27 {dimension_numbers = #tpu.dot_dimension_numbers<[1], [0], [0], [1], [0, 0, 1, 1], [], []>} : vector<16x16xf32>, vector<16x32xf32>, vector<16x32xf32> -> vector<16x32xf32>
    %69 = vector.extract_strided_slice %32 {offsets = [0, 64], sizes = [16, 32], strides = [1, 1]} : vector<16x768xf32> to vector<16x32xf32>
    %70 = vector.extract_strided_slice %32 {offsets = [0, 320], sizes = [16, 32], strides = [1, 1]} : vector<16x768xf32> to vector<16x32xf32>
    %71 = vector.extract_strided_slice %32 {offsets = [0, 576], sizes = [16, 32], strides = [1, 1]} : vector<16x768xf32> to vector<16x32xf32>
    %cst_28 = arith.constant dense<0.000000e+00> : vector<16x16xf32>
    %72 = tpu.matmul %69, %70, %cst_28 {dimension_numbers = #tpu.dot_dimension_numbers<[1], [1], [0], [0], [0, 0, 1, 0], [], []>} : vector<16x32xf32>, vector<16x32xf32>, vector<16x16xf32> -> vector<16x16xf32>
    %cst_29 = arith.constant 0.176776692 : f32
    %73 = vector.broadcast %cst_29 : f32 to vector<16x16xf32>
    %74 = arith.mulf %72, %73 : vector<16x16xf32>
    %75 = arith.addf %74, %25 : vector<16x16xf32>
    %cst_30 = arith.constant dense<0xFF800000> : vector<16xf32>
    %76 = vector.multi_reduction <maximumf>, %75, %cst_30 [1] : vector<16x16xf32> to vector<16xf32>
    %77 = vector.shape_cast %76 : vector<16xf32> to vector<16x1xf32>
    %78 = vector.broadcast %77 : vector<16x1xf32> to vector<16x16xf32>
    %79 = arith.subf %75, %78 : vector<16x16xf32>
    %80 = math.exp %79 : vector<16x16xf32>
    %cst_31 = arith.constant dense<0.000000e+00> : vector<16xf32>
    %81 = vector.multi_reduction <add>, %80, %cst_31 [1] : vector<16x16xf32> to vector<16xf32>
    %82 = vector.shape_cast %81 : vector<16xf32> to vector<16x1xf32>
    %83 = tpu.reciprocal %82 {approx = true} : vector<16x1xf32> -> vector<16x1xf32>
    %84 = vector.broadcast %83 : vector<16x1xf32> to vector<16x16xf32>
    %85 = arith.mulf %80, %84 : vector<16x16xf32>
    %cst_32 = arith.constant dense<0.000000e+00> : vector<16x32xf32>
    %86 = tpu.matmul %85, %71, %cst_32 {dimension_numbers = #tpu.dot_dimension_numbers<[1], [0], [0], [1], [0, 0, 1, 1], [], []>} : vector<16x16xf32>, vector<16x32xf32>, vector<16x32xf32> -> vector<16x32xf32>
    %87 = vector.extract_strided_slice %32 {offsets = [0, 96], sizes = [16, 32], strides = [1, 1]} : vector<16x768xf32> to vector<16x32xf32>
    %88 = vector.extract_strided_slice %32 {offsets = [0, 352], sizes = [16, 32], strides = [1, 1]} : vector<16x768xf32> to vector<16x32xf32>
    %89 = vector.extract_strided_slice %32 {offsets = [0, 608], sizes = [16, 32], strides = [1, 1]} : vector<16x768xf32> to vector<16x32xf32>
    %cst_33 = arith.constant dense<0.000000e+00> : vector<16x16xf32>
    %90 = tpu.matmul %87, %88, %cst_33 {dimension_numbers = #tpu.dot_dimension_numbers<[1], [1], [0], [0], [0, 0, 1, 0], [], []>} : vector<16x32xf32>, vector<16x32xf32>, vector<16x16xf32> -> vector<16x16xf32>
    %cst_34 = arith.constant 0.176776692 : f32
    %91 = vector.broadcast %cst_34 : f32 to vector<16x16xf32>
    %92 = arith.mulf %90, %91 : vector<16x16xf32>
    %93 = arith.addf %92, %25 : vector<16x16xf32>
    %cst_35 = arith.constant dense<0xFF800000> : vector<16xf32>
    %94 = vector.multi_reduction <maximumf>, %93, %cst_35 [1] : vector<16x16xf32> to vector<16xf32>
    %95 = vector.shape_cast %94 : vector<16xf32> to vector<16x1xf32>
    %96 = vector.broadcast %95 : vector<16x1xf32> to vector<16x16xf32>
    %97 = arith.subf %93, %96 : vector<16x16xf32>
    %98 = math.exp %97 : vector<16x16xf32>
    %cst_36 = arith.constant dense<0.000000e+00> : vector<16xf32>
    %99 = vector.multi_reduction <add>, %98, %cst_36 [1] : vector<16x16xf32> to vector<16xf32>
    %100 = vector.shape_cast %99 : vector<16xf32> to vector<16x1xf32>
    %101 = tpu.reciprocal %100 {approx = true} : vector<16x1xf32> -> vector<16x1xf32>
    %102 = vector.broadcast %101 : vector<16x1xf32> to vector<16x16xf32>
    %103 = arith.mulf %98, %102 : vector<16x16xf32>
    %cst_37 = arith.constant dense<0.000000e+00> : vector<16x32xf32>
    %104 = tpu.matmul %103, %89, %cst_37 {dimension_numbers = #tpu.dot_dimension_numbers<[1], [0], [0], [1], [0, 0, 1, 1], [], []>} : vector<16x16xf32>, vector<16x32xf32>, vector<16x32xf32> -> vector<16x32xf32>
    %105 = vector.extract_strided_slice %32 {offsets = [0, 128], sizes = [16, 32], strides = [1, 1]} : vector<16x768xf32> to vector<16x32xf32>
    %106 = vector.extract_strided_slice %32 {offsets = [0, 384], sizes = [16, 32], strides = [1, 1]} : vector<16x768xf32> to vector<16x32xf32>
    %107 = vector.extract_strided_slice %32 {offsets = [0, 640], sizes = [16, 32], strides = [1, 1]} : vector<16x768xf32> to vector<16x32xf32>
    %cst_38 = arith.constant dense<0.000000e+00> : vector<16x16xf32>
    %108 = tpu.matmul %105, %106, %cst_38 {dimension_numbers = #tpu.dot_dimension_numbers<[1], [1], [0], [0], [0, 0, 1, 0], [], []>} : vector<16x32xf32>, vector<16x32xf32>, vector<16x16xf32> -> vector<16x16xf32>
    %cst_39 = arith.constant 0.176776692 : f32
    %109 = vector.broadcast %cst_39 : f32 to vector<16x16xf32>
    %110 = arith.mulf %108, %109 : vector<16x16xf32>
    %111 = arith.addf %110, %25 : vector<16x16xf32>
    %cst_40 = arith.constant dense<0xFF800000> : vector<16xf32>
    %112 = vector.multi_reduction <maximumf>, %111, %cst_40 [1] : vector<16x16xf32> to vector<16xf32>
    %113 = vector.shape_cast %112 : vector<16xf32> to vector<16x1xf32>
    %114 = vector.broadcast %113 : vector<16x1xf32> to vector<16x16xf32>
    %115 = arith.subf %111, %114 : vector<16x16xf32>
    %116 = math.exp %115 : vector<16x16xf32>
    %cst_41 = arith.constant dense<0.000000e+00> : vector<16xf32>
    %117 = vector.multi_reduction <add>, %116, %cst_41 [1] : vector<16x16xf32> to vector<16xf32>
    %118 = vector.shape_cast %117 : vector<16xf32> to vector<16x1xf32>
    %119 = tpu.reciprocal %118 {approx = true} : vector<16x1xf32> -> vector<16x1xf32>
    %120 = vector.broadcast %119 : vector<16x1xf32> to vector<16x16xf32>
    %121 = arith.mulf %116, %120 : vector<16x16xf32>
    %cst_42 = arith.constant dense<0.000000e+00> : vector<16x32xf32>
    %122 = tpu.matmul %121, %107, %cst_42 {dimension_numbers = #tpu.dot_dimension_numbers<[1], [0], [0], [1], [0, 0, 1, 1], [], []>} : vector<16x16xf32>, vector<16x32xf32>, vector<16x32xf32> -> vector<16x32xf32>
    %123 = vector.extract_strided_slice %32 {offsets = [0, 160], sizes = [16, 32], strides = [1, 1]} : vector<16x768xf32> to vector<16x32xf32>
    %124 = vector.extract_strided_slice %32 {offsets = [0, 416], sizes = [16, 32], strides = [1, 1]} : vector<16x768xf32> to vector<16x32xf32>
    %125 = vector.extract_strided_slice %32 {offsets = [0, 672], sizes = [16, 32], strides = [1, 1]} : vector<16x768xf32> to vector<16x32xf32>
    %cst_43 = arith.constant dense<0.000000e+00> : vector<16x16xf32>
    %126 = tpu.matmul %123, %124, %cst_43 {dimension_numbers = #tpu.dot_dimension_numbers<[1], [1], [0], [0], [0, 0, 1, 0], [], []>} : vector<16x32xf32>, vector<16x32xf32>, vector<16x16xf32> -> vector<16x16xf32>
    %cst_44 = arith.constant 0.176776692 : f32
    %127 = vector.broadcast %cst_44 : f32 to vector<16x16xf32>
    %128 = arith.mulf %126, %127 : vector<16x16xf32>
    %129 = arith.addf %128, %25 : vector<16x16xf32>
    %cst_45 = arith.constant dense<0xFF800000> : vector<16xf32>
    %130 = vector.multi_reduction <maximumf>, %129, %cst_45 [1] : vector<16x16xf32> to vector<16xf32>
    %131 = vector.shape_cast %130 : vector<16xf32> to vector<16x1xf32>
    %132 = vector.broadcast %131 : vector<16x1xf32> to vector<16x16xf32>
    %133 = arith.subf %129, %132 : vector<16x16xf32>
    %134 = math.exp %133 : vector<16x16xf32>
    %cst_46 = arith.constant dense<0.000000e+00> : vector<16xf32>
    %135 = vector.multi_reduction <add>, %134, %cst_46 [1] : vector<16x16xf32> to vector<16xf32>
    %136 = vector.shape_cast %135 : vector<16xf32> to vector<16x1xf32>
    %137 = tpu.reciprocal %136 {approx = true} : vector<16x1xf32> -> vector<16x1xf32>
    %138 = vector.broadcast %137 : vector<16x1xf32> to vector<16x16xf32>
    %139 = arith.mulf %134, %138 : vector<16x16xf32>
    %cst_47 = arith.constant dense<0.000000e+00> : vector<16x32xf32>
    %140 = tpu.matmul %139, %125, %cst_47 {dimension_numbers = #tpu.dot_dimension_numbers<[1], [0], [0], [1], [0, 0, 1, 1], [], []>} : vector<16x16xf32>, vector<16x32xf32>, vector<16x32xf32> -> vector<16x32xf32>
    %141 = vector.extract_strided_slice %32 {offsets = [0, 192], sizes = [16, 32], strides = [1, 1]} : vector<16x768xf32> to vector<16x32xf32>
    %142 = vector.extract_strided_slice %32 {offsets = [0, 448], sizes = [16, 32], strides = [1, 1]} : vector<16x768xf32> to vector<16x32xf32>
    %143 = vector.extract_strided_slice %32 {offsets = [0, 704], sizes = [16, 32], strides = [1, 1]} : vector<16x768xf32> to vector<16x32xf32>
    %cst_48 = arith.constant dense<0.000000e+00> : vector<16x16xf32>
    %144 = tpu.matmul %141, %142, %cst_48 {dimension_numbers = #tpu.dot_dimension_numbers<[1], [1], [0], [0], [0, 0, 1, 0], [], []>} : vector<16x32xf32>, vector<16x32xf32>, vector<16x16xf32> -> vector<16x16xf32>
    %cst_49 = arith.constant 0.176776692 : f32
    %145 = vector.broadcast %cst_49 : f32 to vector<16x16xf32>
    %146 = arith.mulf %144, %145 : vector<16x16xf32>
    %147 = arith.addf %146, %25 : vector<16x16xf32>
    %cst_50 = arith.constant dense<0xFF800000> : vector<16xf32>
    %148 = vector.multi_reduction <maximumf>, %147, %cst_50 [1] : vector<16x16xf32> to vector<16xf32>
    %149 = vector.shape_cast %148 : vector<16xf32> to vector<16x1xf32>
    %150 = vector.broadcast %149 : vector<16x1xf32> to vector<16x16xf32>
    %151 = arith.subf %147, %150 : vector<16x16xf32>
    %152 = math.exp %151 : vector<16x16xf32>
    %cst_51 = arith.constant dense<0.000000e+00> : vector<16xf32>
    %153 = vector.multi_reduction <add>, %152, %cst_51 [1] : vector<16x16xf32> to vector<16xf32>
    %154 = vector.shape_cast %153 : vector<16xf32> to vector<16x1xf32>
    %155 = tpu.reciprocal %154 {approx = true} : vector<16x1xf32> -> vector<16x1xf32>
    %156 = vector.broadcast %155 : vector<16x1xf32> to vector<16x16xf32>
    %157 = arith.mulf %152, %156 : vector<16x16xf32>
    %cst_52 = arith.constant dense<0.000000e+00> : vector<16x32xf32>
    %158 = tpu.matmul %157, %143, %cst_52 {dimension_numbers = #tpu.dot_dimension_numbers<[1], [0], [0], [1], [0, 0, 1, 1], [], []>} : vector<16x16xf32>, vector<16x32xf32>, vector<16x32xf32> -> vector<16x32xf32>
    %159 = vector.extract_strided_slice %32 {offsets = [0, 224], sizes = [16, 32], strides = [1, 1]} : vector<16x768xf32> to vector<16x32xf32>
    %160 = vector.extract_strided_slice %32 {offsets = [0, 480], sizes = [16, 32], strides = [1, 1]} : vector<16x768xf32> to vector<16x32xf32>
    %161 = vector.extract_strided_slice %32 {offsets = [0, 736], sizes = [16, 32], strides = [1, 1]} : vector<16x768xf32> to vector<16x32xf32>
    %cst_53 = arith.constant dense<0.000000e+00> : vector<16x16xf32>
    %162 = tpu.matmul %159, %160, %cst_53 {dimension_numbers = #tpu.dot_dimension_numbers<[1], [1], [0], [0], [0, 0, 1, 0], [], []>} : vector<16x32xf32>, vector<16x32xf32>, vector<16x16xf32> -> vector<16x16xf32>
    %cst_54 = arith.constant 0.176776692 : f32
    %163 = vector.broadcast %cst_54 : f32 to vector<16x16xf32>
    %164 = arith.mulf %162, %163 : vector<16x16xf32>
    %165 = arith.addf %164, %25 : vector<16x16xf32>
    %cst_55 = arith.constant dense<0xFF800000> : vector<16xf32>
    %166 = vector.multi_reduction <maximumf>, %165, %cst_55 [1] : vector<16x16xf32> to vector<16xf32>
    %167 = vector.shape_cast %166 : vector<16xf32> to vector<16x1xf32>
    %168 = vector.broadcast %167 : vector<16x1xf32> to vector<16x16xf32>
    %169 = arith.subf %165, %168 : vector<16x16xf32>
    %170 = math.exp %169 : vector<16x16xf32>
    %cst_56 = arith.constant dense<0.000000e+00> : vector<16xf32>
    %171 = vector.multi_reduction <add>, %170, %cst_56 [1] : vector<16x16xf32> to vector<16xf32>
    %172 = vector.shape_cast %171 : vector<16xf32> to vector<16x1xf32>
    %173 = tpu.reciprocal %172 {approx = true} : vector<16x1xf32> -> vector<16x1xf32>
    %174 = vector.broadcast %173 : vector<16x1xf32> to vector<16x16xf32>
    %175 = arith.mulf %170, %174 : vector<16x16xf32>
    %cst_57 = arith.constant dense<0.000000e+00> : vector<16x32xf32>
    %176 = tpu.matmul %175, %161, %cst_57 {dimension_numbers = #tpu.dot_dimension_numbers<[1], [0], [0], [1], [0, 0, 1, 1], [], []>} : vector<16x16xf32>, vector<16x32xf32>, vector<16x32xf32> -> vector<16x32xf32>
    %177 = tpu.concatenate %50, %68, %86, %104, %122, %140, %158, %176 in 1 : vector<16x32xf32>, vector<16x32xf32>, vector<16x32xf32>, vector<16x32xf32>, vector<16x32xf32>, vector<16x32xf32>, vector<16x32xf32>, vector<16x32xf32> -> vector<16x256xf32>
    %c0_58 = arith.constant 0 : index
    %c0_59 = arith.constant 0 : index
    %c0_60 = arith.constant 0 : index
    %178 = vector.load %arg6[%c0_58, %c0_59, %c0_60] : memref<3x256x32xf32, #tpu.memory_space<vmem>>, vector<1x256x32xf32>
    %179 = vector.shape_cast %178 : vector<1x256x32xf32> to vector<256x32xf32>
    %cst_61 = arith.constant dense<0.000000e+00> : vector<16x32xf32>
    %180 = tpu.matmul %177, %179, %cst_61 {dimension_numbers = #tpu.dot_dimension_numbers<[1], [0], [0], [1], [0, 0, 1, 1], [], []>} : vector<16x256xf32>, vector<256x32xf32>, vector<16x32xf32> -> vector<16x32xf32>
    %c0_62 = arith.constant 0 : index
    %c0_63 = arith.constant 0 : index
    %c0_64 = arith.constant 0 : index
    %181 = vector.load %arg7[%c0_62, %c0_63, %c0_64] : memref<3x1x32xf32, #tpu.memory_space<vmem>>, vector<1x1x32xf32>
    %182 = vector.shape_cast %181 : vector<1x1x32xf32> to vector<1x32xf32>
    %183 = vector.broadcast %182 : vector<1x32xf32> to vector<16x32xf32>
    %184 = arith.addf %180, %183 : vector<16x32xf32>
    %185 = arith.addf %184, %24 : vector<16x32xf32>
    %c0_65 = arith.constant 0 : index
    %c0_66 = arith.constant 0 : index
    %c0_67 = arith.constant 0 : index
    %186 = vector.load %arg8[%c0_65, %c0_66, %c0_67] : memref<3x1x32xf32, #tpu.memory_space<vmem>>, vector<1x1x32xf32>
    %187 = vector.shape_cast %186 : vector<1x1x32xf32> to vector<1x32xf32>
    %c0_68 = arith.constant 0 : index
    %c0_69 = arith.constant 0 : index
    %c0_70 = arith.constant 0 : index
    %188 = vector.load %arg9[%c0_68, %c0_69, %c0_70] : memref<3x1x32xf32, #tpu.memory_space<vmem>>, vector<1x1x32xf32>
    %189 = vector.shape_cast %188 : vector<1x1x32xf32> to vector<1x32xf32>
    %cst_71 = arith.constant dense<0.000000e+00> : vector<16xf32>
    %190 = vector.multi_reduction <add>, %185, %cst_71 [1] : vector<16x32xf32> to vector<16xf32>
    %191 = vector.shape_cast %190 : vector<16xf32> to vector<16x1xf32>
    %cst_72 = arith.constant 3.200000e+01 : f32
    %192 = vector.broadcast %cst_72 : f32 to vector<16x1xf32>
    %193 = arith.divf %191, %192 : vector<16x1xf32>
    %194 = vector.broadcast %193 : vector<16x1xf32> to vector<16x32xf32>
    %195 = arith.subf %185, %194 : vector<16x32xf32>
    %196 = arith.mulf %195, %195 : vector<16x32xf32>
    %cst_73 = arith.constant dense<0.000000e+00> : vector<16xf32>
    %197 = vector.multi_reduction <add>, %196, %cst_73 [1] : vector<16x32xf32> to vector<16xf32>
    %198 = vector.shape_cast %197 : vector<16xf32> to vector<16x1xf32>
    %cst_74 = arith.constant 3.200000e+01 : f32
    %199 = vector.broadcast %cst_74 : f32 to vector<16x1xf32>
    %200 = arith.divf %198, %199 : vector<16x1xf32>
    %201 = vector.broadcast %193 : vector<16x1xf32> to vector<16x32xf32>
    %202 = arith.subf %185, %201 : vector<16x32xf32>
    %cst_75 = arith.constant 9.99999974E-6 : f32
    %203 = vector.broadcast %cst_75 : f32 to vector<16x1xf32>
    %204 = arith.addf %200, %203 : vector<16x1xf32>
    %205 = math.rsqrt %204 : vector<16x1xf32>
    %206 = vector.broadcast %205 : vector<16x1xf32> to vector<16x32xf32>
    %207 = arith.mulf %202, %206 : vector<16x32xf32>
    %208 = vector.broadcast %187 : vector<1x32xf32> to vector<16x32xf32>
    %209 = arith.mulf %207, %208 : vector<16x32xf32>
    %210 = vector.broadcast %189 : vector<1x32xf32> to vector<16x32xf32>
    %211 = arith.addf %209, %210 : vector<16x32xf32>
    %c0_76 = arith.constant 0 : index
    %c0_77 = arith.constant 0 : index
    %c0_78 = arith.constant 0 : index
    %212 = vector.load %arg10[%c0_76, %c0_77, %c0_78] : memref<3x32x64xf32, #tpu.memory_space<vmem>>, vector<1x32x64xf32>
    %213 = vector.shape_cast %212 : vector<1x32x64xf32> to vector<32x64xf32>
    %cst_79 = arith.constant dense<0.000000e+00> : vector<16x64xf32>
    %214 = tpu.matmul %211, %213, %cst_79 {dimension_numbers = #tpu.dot_dimension_numbers<[1], [0], [0], [1], [0, 0, 1, 1], [], []>} : vector<16x32xf32>, vector<32x64xf32>, vector<16x64xf32> -> vector<16x64xf32>
    %c0_80 = arith.constant 0 : index
    %c0_81 = arith.constant 0 : index
    %c0_82 = arith.constant 0 : index
    %215 = vector.load %arg11[%c0_80, %c0_81, %c0_82] : memref<3x1x64xf32, #tpu.memory_space<vmem>>, vector<1x1x64xf32>
    %216 = vector.shape_cast %215 : vector<1x1x64xf32> to vector<1x64xf32>
    %217 = vector.broadcast %216 : vector<1x64xf32> to vector<16x64xf32>
    %218 = arith.addf %214, %217 : vector<16x64xf32>
    %cst_83 = arith.constant 0.000000e+00 : f32
    %219 = vector.broadcast %cst_83 : f32 to vector<16x64xf32>
    %220 = arith.maximumf %218, %219 : vector<16x64xf32>
    %c0_84 = arith.constant 0 : index
    %c0_85 = arith.constant 0 : index
    %c0_86 = arith.constant 0 : index
    %221 = vector.load %arg12[%c0_84, %c0_85, %c0_86] : memref<3x64x32xf32, #tpu.memory_space<vmem>>, vector<1x64x32xf32>
    %222 = vector.shape_cast %221 : vector<1x64x32xf32> to vector<64x32xf32>
    %cst_87 = arith.constant dense<0.000000e+00> : vector<16x32xf32>
    %223 = tpu.matmul %220, %222, %cst_87 {dimension_numbers = #tpu.dot_dimension_numbers<[1], [0], [0], [1], [0, 0, 1, 1], [], []>} : vector<16x64xf32>, vector<64x32xf32>, vector<16x32xf32> -> vector<16x32xf32>
    %c0_88 = arith.constant 0 : index
    %c0_89 = arith.constant 0 : index
    %c0_90 = arith.constant 0 : index
    %224 = vector.load %arg13[%c0_88, %c0_89, %c0_90] : memref<3x1x32xf32, #tpu.memory_space<vmem>>, vector<1x1x32xf32>
    %225 = vector.shape_cast %224 : vector<1x1x32xf32> to vector<1x32xf32>
    %226 = vector.broadcast %225 : vector<1x32xf32> to vector<16x32xf32>
    %227 = arith.addf %223, %226 : vector<16x32xf32>
    %c1 = arith.constant 1 : index
    %c0_91 = arith.constant 0 : index
    %c0_92 = arith.constant 0 : index
    %228 = vector.load %arg4[%c1, %c0_91, %c0_92] : memref<3x32x768xf32, #tpu.memory_space<vmem>>, vector<1x32x768xf32>
    %229 = vector.shape_cast %228 : vector<1x32x768xf32> to vector<32x768xf32>
    %cst_93 = arith.constant dense<0.000000e+00> : vector<16x768xf32>
    %230 = tpu.matmul %227, %229, %cst_93 {dimension_numbers = #tpu.dot_dimension_numbers<[1], [0], [0], [1], [0, 0, 1, 1], [], []>} : vector<16x32xf32>, vector<32x768xf32>, vector<16x768xf32> -> vector<16x768xf32>
    %c1_94 = arith.constant 1 : index
    %c0_95 = arith.constant 0 : index
    %c0_96 = arith.constant 0 : index
    %231 = vector.load %arg5[%c1_94, %c0_95, %c0_96] : memref<3x1x768xf32, #tpu.memory_space<vmem>>, vector<1x1x768xf32>
    %232 = vector.shape_cast %231 : vector<1x1x768xf32> to vector<1x768xf32>
    %233 = vector.broadcast %232 : vector<1x768xf32> to vector<16x768xf32>
    %234 = arith.addf %230, %233 : vector<16x768xf32>
    %235 = vector.extract_strided_slice %234 {offsets = [0, 0], sizes = [16, 32], strides = [1, 1]} : vector<16x768xf32> to vector<16x32xf32>
    %236 = vector.extract_strided_slice %234 {offsets = [0, 256], sizes = [16, 32], strides = [1, 1]} : vector<16x768xf32> to vector<16x32xf32>
    %237 = vector.extract_strided_slice %234 {offsets = [0, 512], sizes = [16, 32], strides = [1, 1]} : vector<16x768xf32> to vector<16x32xf32>
    %cst_97 = arith.constant dense<0.000000e+00> : vector<16x16xf32>
    %238 = tpu.matmul %235, %236, %cst_97 {dimension_numbers = #tpu.dot_dimension_numbers<[1], [1], [0], [0], [0, 0, 1, 0], [], []>} : vector<16x32xf32>, vector<16x32xf32>, vector<16x16xf32> -> vector<16x16xf32>
    %cst_98 = arith.constant 0.176776692 : f32
    %239 = vector.broadcast %cst_98 : f32 to vector<16x16xf32>
    %240 = arith.mulf %238, %239 : vector<16x16xf32>
    %241 = arith.addf %240, %25 : vector<16x16xf32>
    %cst_99 = arith.constant dense<0xFF800000> : vector<16xf32>
    %242 = vector.multi_reduction <maximumf>, %241, %cst_99 [1] : vector<16x16xf32> to vector<16xf32>
    %243 = vector.shape_cast %242 : vector<16xf32> to vector<16x1xf32>
    %244 = vector.broadcast %243 : vector<16x1xf32> to vector<16x16xf32>
    %245 = arith.subf %241, %244 : vector<16x16xf32>
    %246 = math.exp %245 : vector<16x16xf32>
    %cst_100 = arith.constant dense<0.000000e+00> : vector<16xf32>
    %247 = vector.multi_reduction <add>, %246, %cst_100 [1] : vector<16x16xf32> to vector<16xf32>
    %248 = vector.shape_cast %247 : vector<16xf32> to vector<16x1xf32>
    %249 = tpu.reciprocal %248 {approx = true} : vector<16x1xf32> -> vector<16x1xf32>
    %250 = vector.broadcast %249 : vector<16x1xf32> to vector<16x16xf32>
    %251 = arith.mulf %246, %250 : vector<16x16xf32>
    %cst_101 = arith.constant dense<0.000000e+00> : vector<16x32xf32>
    %252 = tpu.matmul %251, %237, %cst_101 {dimension_numbers = #tpu.dot_dimension_numbers<[1], [0], [0], [1], [0, 0, 1, 1], [], []>} : vector<16x16xf32>, vector<16x32xf32>, vector<16x32xf32> -> vector<16x32xf32>
    %253 = vector.extract_strided_slice %234 {offsets = [0, 32], sizes = [16, 32], strides = [1, 1]} : vector<16x768xf32> to vector<16x32xf32>
    %254 = vector.extract_strided_slice %234 {offsets = [0, 288], sizes = [16, 32], strides = [1, 1]} : vector<16x768xf32> to vector<16x32xf32>
    %255 = vector.extract_strided_slice %234 {offsets = [0, 544], sizes = [16, 32], strides = [1, 1]} : vector<16x768xf32> to vector<16x32xf32>
    %cst_102 = arith.constant dense<0.000000e+00> : vector<16x16xf32>
    %256 = tpu.matmul %253, %254, %cst_102 {dimension_numbers = #tpu.dot_dimension_numbers<[1], [1], [0], [0], [0, 0, 1, 0], [], []>} : vector<16x32xf32>, vector<16x32xf32>, vector<16x16xf32> -> vector<16x16xf32>
    %cst_103 = arith.constant 0.176776692 : f32
    %257 = vector.broadcast %cst_103 : f32 to vector<16x16xf32>
    %258 = arith.mulf %256, %257 : vector<16x16xf32>
    %259 = arith.addf %258, %25 : vector<16x16xf32>
    %cst_104 = arith.constant dense<0xFF800000> : vector<16xf32>
    %260 = vector.multi_reduction <maximumf>, %259, %cst_104 [1] : vector<16x16xf32> to vector<16xf32>
    %261 = vector.shape_cast %260 : vector<16xf32> to vector<16x1xf32>
    %262 = vector.broadcast %261 : vector<16x1xf32> to vector<16x16xf32>
    %263 = arith.subf %259, %262 : vector<16x16xf32>
    %264 = math.exp %263 : vector<16x16xf32>
    %cst_105 = arith.constant dense<0.000000e+00> : vector<16xf32>
    %265 = vector.multi_reduction <add>, %264, %cst_105 [1] : vector<16x16xf32> to vector<16xf32>
    %266 = vector.shape_cast %265 : vector<16xf32> to vector<16x1xf32>
    %267 = tpu.reciprocal %266 {approx = true} : vector<16x1xf32> -> vector<16x1xf32>
    %268 = vector.broadcast %267 : vector<16x1xf32> to vector<16x16xf32>
    %269 = arith.mulf %264, %268 : vector<16x16xf32>
    %cst_106 = arith.constant dense<0.000000e+00> : vector<16x32xf32>
    %270 = tpu.matmul %269, %255, %cst_106 {dimension_numbers = #tpu.dot_dimension_numbers<[1], [0], [0], [1], [0, 0, 1, 1], [], []>} : vector<16x16xf32>, vector<16x32xf32>, vector<16x32xf32> -> vector<16x32xf32>
    %271 = vector.extract_strided_slice %234 {offsets = [0, 64], sizes = [16, 32], strides = [1, 1]} : vector<16x768xf32> to vector<16x32xf32>
    %272 = vector.extract_strided_slice %234 {offsets = [0, 320], sizes = [16, 32], strides = [1, 1]} : vector<16x768xf32> to vector<16x32xf32>
    %273 = vector.extract_strided_slice %234 {offsets = [0, 576], sizes = [16, 32], strides = [1, 1]} : vector<16x768xf32> to vector<16x32xf32>
    %cst_107 = arith.constant dense<0.000000e+00> : vector<16x16xf32>
    %274 = tpu.matmul %271, %272, %cst_107 {dimension_numbers = #tpu.dot_dimension_numbers<[1], [1], [0], [0], [0, 0, 1, 0], [], []>} : vector<16x32xf32>, vector<16x32xf32>, vector<16x16xf32> -> vector<16x16xf32>
    %cst_108 = arith.constant 0.176776692 : f32
    %275 = vector.broadcast %cst_108 : f32 to vector<16x16xf32>
    %276 = arith.mulf %274, %275 : vector<16x16xf32>
    %277 = arith.addf %276, %25 : vector<16x16xf32>
    %cst_109 = arith.constant dense<0xFF800000> : vector<16xf32>
    %278 = vector.multi_reduction <maximumf>, %277, %cst_109 [1] : vector<16x16xf32> to vector<16xf32>
    %279 = vector.shape_cast %278 : vector<16xf32> to vector<16x1xf32>
    %280 = vector.broadcast %279 : vector<16x1xf32> to vector<16x16xf32>
    %281 = arith.subf %277, %280 : vector<16x16xf32>
    %282 = math.exp %281 : vector<16x16xf32>
    %cst_110 = arith.constant dense<0.000000e+00> : vector<16xf32>
    %283 = vector.multi_reduction <add>, %282, %cst_110 [1] : vector<16x16xf32> to vector<16xf32>
    %284 = vector.shape_cast %283 : vector<16xf32> to vector<16x1xf32>
    %285 = tpu.reciprocal %284 {approx = true} : vector<16x1xf32> -> vector<16x1xf32>
    %286 = vector.broadcast %285 : vector<16x1xf32> to vector<16x16xf32>
    %287 = arith.mulf %282, %286 : vector<16x16xf32>
    %cst_111 = arith.constant dense<0.000000e+00> : vector<16x32xf32>
    %288 = tpu.matmul %287, %273, %cst_111 {dimension_numbers = #tpu.dot_dimension_numbers<[1], [0], [0], [1], [0, 0, 1, 1], [], []>} : vector<16x16xf32>, vector<16x32xf32>, vector<16x32xf32> -> vector<16x32xf32>
    %289 = vector.extract_strided_slice %234 {offsets = [0, 96], sizes = [16, 32], strides = [1, 1]} : vector<16x768xf32> to vector<16x32xf32>
    %290 = vector.extract_strided_slice %234 {offsets = [0, 352], sizes = [16, 32], strides = [1, 1]} : vector<16x768xf32> to vector<16x32xf32>
    %291 = vector.extract_strided_slice %234 {offsets = [0, 608], sizes = [16, 32], strides = [1, 1]} : vector<16x768xf32> to vector<16x32xf32>
    %cst_112 = arith.constant dense<0.000000e+00> : vector<16x16xf32>
    %292 = tpu.matmul %289, %290, %cst_112 {dimension_numbers = #tpu.dot_dimension_numbers<[1], [1], [0], [0], [0, 0, 1, 0], [], []>} : vector<16x32xf32>, vector<16x32xf32>, vector<16x16xf32> -> vector<16x16xf32>
    %cst_113 = arith.constant 0.176776692 : f32
    %293 = vector.broadcast %cst_113 : f32 to vector<16x16xf32>
    %294 = arith.mulf %292, %293 : vector<16x16xf32>
    %295 = arith.addf %294, %25 : vector<16x16xf32>
    %cst_114 = arith.constant dense<0xFF800000> : vector<16xf32>
    %296 = vector.multi_reduction <maximumf>, %295, %cst_114 [1] : vector<16x16xf32> to vector<16xf32>
    %297 = vector.shape_cast %296 : vector<16xf32> to vector<16x1xf32>
    %298 = vector.broadcast %297 : vector<16x1xf32> to vector<16x16xf32>
    %299 = arith.subf %295, %298 : vector<16x16xf32>
    %300 = math.exp %299 : vector<16x16xf32>
    %cst_115 = arith.constant dense<0.000000e+00> : vector<16xf32>
    %301 = vector.multi_reduction <add>, %300, %cst_115 [1] : vector<16x16xf32> to vector<16xf32>
    %302 = vector.shape_cast %301 : vector<16xf32> to vector<16x1xf32>
    %303 = tpu.reciprocal %302 {approx = true} : vector<16x1xf32> -> vector<16x1xf32>
    %304 = vector.broadcast %303 : vector<16x1xf32> to vector<16x16xf32>
    %305 = arith.mulf %300, %304 : vector<16x16xf32>
    %cst_116 = arith.constant dense<0.000000e+00> : vector<16x32xf32>
    %306 = tpu.matmul %305, %291, %cst_116 {dimension_numbers = #tpu.dot_dimension_numbers<[1], [0], [0], [1], [0, 0, 1, 1], [], []>} : vector<16x16xf32>, vector<16x32xf32>, vector<16x32xf32> -> vector<16x32xf32>
    %307 = vector.extract_strided_slice %234 {offsets = [0, 128], sizes = [16, 32], strides = [1, 1]} : vector<16x768xf32> to vector<16x32xf32>
    %308 = vector.extract_strided_slice %234 {offsets = [0, 384], sizes = [16, 32], strides = [1, 1]} : vector<16x768xf32> to vector<16x32xf32>
    %309 = vector.extract_strided_slice %234 {offsets = [0, 640], sizes = [16, 32], strides = [1, 1]} : vector<16x768xf32> to vector<16x32xf32>
    %cst_117 = arith.constant dense<0.000000e+00> : vector<16x16xf32>
    %310 = tpu.matmul %307, %308, %cst_117 {dimension_numbers = #tpu.dot_dimension_numbers<[1], [1], [0], [0], [0, 0, 1, 0], [], []>} : vector<16x32xf32>, vector<16x32xf32>, vector<16x16xf32> -> vector<16x16xf32>
    %cst_118 = arith.constant 0.176776692 : f32
    %311 = vector.broadcast %cst_118 : f32 to vector<16x16xf32>
    %312 = arith.mulf %310, %311 : vector<16x16xf32>
    %313 = arith.addf %312, %25 : vector<16x16xf32>
    %cst_119 = arith.constant dense<0xFF800000> : vector<16xf32>
    %314 = vector.multi_reduction <maximumf>, %313, %cst_119 [1] : vector<16x16xf32> to vector<16xf32>
    %315 = vector.shape_cast %314 : vector<16xf32> to vector<16x1xf32>
    %316 = vector.broadcast %315 : vector<16x1xf32> to vector<16x16xf32>
    %317 = arith.subf %313, %316 : vector<16x16xf32>
    %318 = math.exp %317 : vector<16x16xf32>
    %cst_120 = arith.constant dense<0.000000e+00> : vector<16xf32>
    %319 = vector.multi_reduction <add>, %318, %cst_120 [1] : vector<16x16xf32> to vector<16xf32>
    %320 = vector.shape_cast %319 : vector<16xf32> to vector<16x1xf32>
    %321 = tpu.reciprocal %320 {approx = true} : vector<16x1xf32> -> vector<16x1xf32>
    %322 = vector.broadcast %321 : vector<16x1xf32> to vector<16x16xf32>
    %323 = arith.mulf %318, %322 : vector<16x16xf32>
    %cst_121 = arith.constant dense<0.000000e+00> : vector<16x32xf32>
    %324 = tpu.matmul %323, %309, %cst_121 {dimension_numbers = #tpu.dot_dimension_numbers<[1], [0], [0], [1], [0, 0, 1, 1], [], []>} : vector<16x16xf32>, vector<16x32xf32>, vector<16x32xf32> -> vector<16x32xf32>
    %325 = vector.extract_strided_slice %234 {offsets = [0, 160], sizes = [16, 32], strides = [1, 1]} : vector<16x768xf32> to vector<16x32xf32>
    %326 = vector.extract_strided_slice %234 {offsets = [0, 416], sizes = [16, 32], strides = [1, 1]} : vector<16x768xf32> to vector<16x32xf32>
    %327 = vector.extract_strided_slice %234 {offsets = [0, 672], sizes = [16, 32], strides = [1, 1]} : vector<16x768xf32> to vector<16x32xf32>
    %cst_122 = arith.constant dense<0.000000e+00> : vector<16x16xf32>
    %328 = tpu.matmul %325, %326, %cst_122 {dimension_numbers = #tpu.dot_dimension_numbers<[1], [1], [0], [0], [0, 0, 1, 0], [], []>} : vector<16x32xf32>, vector<16x32xf32>, vector<16x16xf32> -> vector<16x16xf32>
    %cst_123 = arith.constant 0.176776692 : f32
    %329 = vector.broadcast %cst_123 : f32 to vector<16x16xf32>
    %330 = arith.mulf %328, %329 : vector<16x16xf32>
    %331 = arith.addf %330, %25 : vector<16x16xf32>
    %cst_124 = arith.constant dense<0xFF800000> : vector<16xf32>
    %332 = vector.multi_reduction <maximumf>, %331, %cst_124 [1] : vector<16x16xf32> to vector<16xf32>
    %333 = vector.shape_cast %332 : vector<16xf32> to vector<16x1xf32>
    %334 = vector.broadcast %333 : vector<16x1xf32> to vector<16x16xf32>
    %335 = arith.subf %331, %334 : vector<16x16xf32>
    %336 = math.exp %335 : vector<16x16xf32>
    %cst_125 = arith.constant dense<0.000000e+00> : vector<16xf32>
    %337 = vector.multi_reduction <add>, %336, %cst_125 [1] : vector<16x16xf32> to vector<16xf32>
    %338 = vector.shape_cast %337 : vector<16xf32> to vector<16x1xf32>
    %339 = tpu.reciprocal %338 {approx = true} : vector<16x1xf32> -> vector<16x1xf32>
    %340 = vector.broadcast %339 : vector<16x1xf32> to vector<16x16xf32>
    %341 = arith.mulf %336, %340 : vector<16x16xf32>
    %cst_126 = arith.constant dense<0.000000e+00> : vector<16x32xf32>
    %342 = tpu.matmul %341, %327, %cst_126 {dimension_numbers = #tpu.dot_dimension_numbers<[1], [0], [0], [1], [0, 0, 1, 1], [], []>} : vector<16x16xf32>, vector<16x32xf32>, vector<16x32xf32> -> vector<16x32xf32>
    %343 = vector.extract_strided_slice %234 {offsets = [0, 192], sizes = [16, 32], strides = [1, 1]} : vector<16x768xf32> to vector<16x32xf32>
    %344 = vector.extract_strided_slice %234 {offsets = [0, 448], sizes = [16, 32], strides = [1, 1]} : vector<16x768xf32> to vector<16x32xf32>
    %345 = vector.extract_strided_slice %234 {offsets = [0, 704], sizes = [16, 32], strides = [1, 1]} : vector<16x768xf32> to vector<16x32xf32>
    %cst_127 = arith.constant dense<0.000000e+00> : vector<16x16xf32>
    %346 = tpu.matmul %343, %344, %cst_127 {dimension_numbers = #tpu.dot_dimension_numbers<[1], [1], [0], [0], [0, 0, 1, 0], [], []>} : vector<16x32xf32>, vector<16x32xf32>, vector<16x16xf32> -> vector<16x16xf32>
    %cst_128 = arith.constant 0.176776692 : f32
    %347 = vector.broadcast %cst_128 : f32 to vector<16x16xf32>
    %348 = arith.mulf %346, %347 : vector<16x16xf32>
    %349 = arith.addf %348, %25 : vector<16x16xf32>
    %cst_129 = arith.constant dense<0xFF800000> : vector<16xf32>
    %350 = vector.multi_reduction <maximumf>, %349, %cst_129 [1] : vector<16x16xf32> to vector<16xf32>
    %351 = vector.shape_cast %350 : vector<16xf32> to vector<16x1xf32>
    %352 = vector.broadcast %351 : vector<16x1xf32> to vector<16x16xf32>
    %353 = arith.subf %349, %352 : vector<16x16xf32>
    %354 = math.exp %353 : vector<16x16xf32>
    %cst_130 = arith.constant dense<0.000000e+00> : vector<16xf32>
    %355 = vector.multi_reduction <add>, %354, %cst_130 [1] : vector<16x16xf32> to vector<16xf32>
    %356 = vector.shape_cast %355 : vector<16xf32> to vector<16x1xf32>
    %357 = tpu.reciprocal %356 {approx = true} : vector<16x1xf32> -> vector<16x1xf32>
    %358 = vector.broadcast %357 : vector<16x1xf32> to vector<16x16xf32>
    %359 = arith.mulf %354, %358 : vector<16x16xf32>
    %cst_131 = arith.constant dense<0.000000e+00> : vector<16x32xf32>
    %360 = tpu.matmul %359, %345, %cst_131 {dimension_numbers = #tpu.dot_dimension_numbers<[1], [0], [0], [1], [0, 0, 1, 1], [], []>} : vector<16x16xf32>, vector<16x32xf32>, vector<16x32xf32> -> vector<16x32xf32>
    %361 = vector.extract_strided_slice %234 {offsets = [0, 224], sizes = [16, 32], strides = [1, 1]} : vector<16x768xf32> to vector<16x32xf32>
    %362 = vector.extract_strided_slice %234 {offsets = [0, 480], sizes = [16, 32], strides = [1, 1]} : vector<16x768xf32> to vector<16x32xf32>
    %363 = vector.extract_strided_slice %234 {offsets = [0, 736], sizes = [16, 32], strides = [1, 1]} : vector<16x768xf32> to vector<16x32xf32>
    %cst_132 = arith.constant dense<0.000000e+00> : vector<16x16xf32>
    %364 = tpu.matmul %361, %362, %cst_132 {dimension_numbers = #tpu.dot_dimension_numbers<[1], [1], [0], [0], [0, 0, 1, 0], [], []>} : vector<16x32xf32>, vector<16x32xf32>, vector<16x16xf32> -> vector<16x16xf32>
    %cst_133 = arith.constant 0.176776692 : f32
    %365 = vector.broadcast %cst_133 : f32 to vector<16x16xf32>
    %366 = arith.mulf %364, %365 : vector<16x16xf32>
    %367 = arith.addf %366, %25 : vector<16x16xf32>
    %cst_134 = arith.constant dense<0xFF800000> : vector<16xf32>
    %368 = vector.multi_reduction <maximumf>, %367, %cst_134 [1] : vector<16x16xf32> to vector<16xf32>
    %369 = vector.shape_cast %368 : vector<16xf32> to vector<16x1xf32>
    %370 = vector.broadcast %369 : vector<16x1xf32> to vector<16x16xf32>
    %371 = arith.subf %367, %370 : vector<16x16xf32>
    %372 = math.exp %371 : vector<16x16xf32>
    %cst_135 = arith.constant dense<0.000000e+00> : vector<16xf32>
    %373 = vector.multi_reduction <add>, %372, %cst_135 [1] : vector<16x16xf32> to vector<16xf32>
    %374 = vector.shape_cast %373 : vector<16xf32> to vector<16x1xf32>
    %375 = tpu.reciprocal %374 {approx = true} : vector<16x1xf32> -> vector<16x1xf32>
    %376 = vector.broadcast %375 : vector<16x1xf32> to vector<16x16xf32>
    %377 = arith.mulf %372, %376 : vector<16x16xf32>
    %cst_136 = arith.constant dense<0.000000e+00> : vector<16x32xf32>
    %378 = tpu.matmul %377, %363, %cst_136 {dimension_numbers = #tpu.dot_dimension_numbers<[1], [0], [0], [1], [0, 0, 1, 1], [], []>} : vector<16x16xf32>, vector<16x32xf32>, vector<16x32xf32> -> vector<16x32xf32>
    %379 = tpu.concatenate %252, %270, %288, %306, %324, %342, %360, %378 in 1 : vector<16x32xf32>, vector<16x32xf32>, vector<16x32xf32>, vector<16x32xf32>, vector<16x32xf32>, vector<16x32xf32>, vector<16x32xf32>, vector<16x32xf32> -> vector<16x256xf32>
    %c1_137 = arith.constant 1 : index
    %c0_138 = arith.constant 0 : index
    %c0_139 = arith.constant 0 : index
    %380 = vector.load %arg6[%c1_137, %c0_138, %c0_139] : memref<3x256x32xf32, #tpu.memory_space<vmem>>, vector<1x256x32xf32>
    %381 = vector.shape_cast %380 : vector<1x256x32xf32> to vector<256x32xf32>
    %cst_140 = arith.constant dense<0.000000e+00> : vector<16x32xf32>
    %382 = tpu.matmul %379, %381, %cst_140 {dimension_numbers = #tpu.dot_dimension_numbers<[1], [0], [0], [1], [0, 0, 1, 1], [], []>} : vector<16x256xf32>, vector<256x32xf32>, vector<16x32xf32> -> vector<16x32xf32>
    %c1_141 = arith.constant 1 : index
    %c0_142 = arith.constant 0 : index
    %c0_143 = arith.constant 0 : index
    %383 = vector.load %arg7[%c1_141, %c0_142, %c0_143] : memref<3x1x32xf32, #tpu.memory_space<vmem>>, vector<1x1x32xf32>
    %384 = vector.shape_cast %383 : vector<1x1x32xf32> to vector<1x32xf32>
    %385 = vector.broadcast %384 : vector<1x32xf32> to vector<16x32xf32>
    %386 = arith.addf %382, %385 : vector<16x32xf32>
    %387 = arith.addf %386, %227 : vector<16x32xf32>
    %c1_144 = arith.constant 1 : index
    %c0_145 = arith.constant 0 : index
    %c0_146 = arith.constant 0 : index
    %388 = vector.load %arg8[%c1_144, %c0_145, %c0_146] : memref<3x1x32xf32, #tpu.memory_space<vmem>>, vector<1x1x32xf32>
    %389 = vector.shape_cast %388 : vector<1x1x32xf32> to vector<1x32xf32>
    %c1_147 = arith.constant 1 : index
    %c0_148 = arith.constant 0 : index
    %c0_149 = arith.constant 0 : index
    %390 = vector.load %arg9[%c1_147, %c0_148, %c0_149] : memref<3x1x32xf32, #tpu.memory_space<vmem>>, vector<1x1x32xf32>
    %391 = vector.shape_cast %390 : vector<1x1x32xf32> to vector<1x32xf32>
    %cst_150 = arith.constant dense<0.000000e+00> : vector<16xf32>
    %392 = vector.multi_reduction <add>, %387, %cst_150 [1] : vector<16x32xf32> to vector<16xf32>
    %393 = vector.shape_cast %392 : vector<16xf32> to vector<16x1xf32>
    %cst_151 = arith.constant 3.200000e+01 : f32
    %394 = vector.broadcast %cst_151 : f32 to vector<16x1xf32>
    %395 = arith.divf %393, %394 : vector<16x1xf32>
    %396 = vector.broadcast %395 : vector<16x1xf32> to vector<16x32xf32>
    %397 = arith.subf %387, %396 : vector<16x32xf32>
    %398 = arith.mulf %397, %397 : vector<16x32xf32>
    %cst_152 = arith.constant dense<0.000000e+00> : vector<16xf32>
    %399 = vector.multi_reduction <add>, %398, %cst_152 [1] : vector<16x32xf32> to vector<16xf32>
    %400 = vector.shape_cast %399 : vector<16xf32> to vector<16x1xf32>
    %cst_153 = arith.constant 3.200000e+01 : f32
    %401 = vector.broadcast %cst_153 : f32 to vector<16x1xf32>
    %402 = arith.divf %400, %401 : vector<16x1xf32>
    %403 = vector.broadcast %395 : vector<16x1xf32> to vector<16x32xf32>
    %404 = arith.subf %387, %403 : vector<16x32xf32>
    %cst_154 = arith.constant 9.99999974E-6 : f32
    %405 = vector.broadcast %cst_154 : f32 to vector<16x1xf32>
    %406 = arith.addf %402, %405 : vector<16x1xf32>
    %407 = math.rsqrt %406 : vector<16x1xf32>
    %408 = vector.broadcast %407 : vector<16x1xf32> to vector<16x32xf32>
    %409 = arith.mulf %404, %408 : vector<16x32xf32>
    %410 = vector.broadcast %389 : vector<1x32xf32> to vector<16x32xf32>
    %411 = arith.mulf %409, %410 : vector<16x32xf32>
    %412 = vector.broadcast %391 : vector<1x32xf32> to vector<16x32xf32>
    %413 = arith.addf %411, %412 : vector<16x32xf32>
    %c1_155 = arith.constant 1 : index
    %c0_156 = arith.constant 0 : index
    %c0_157 = arith.constant 0 : index
    %414 = vector.load %arg10[%c1_155, %c0_156, %c0_157] : memref<3x32x64xf32, #tpu.memory_space<vmem>>, vector<1x32x64xf32>
    %415 = vector.shape_cast %414 : vector<1x32x64xf32> to vector<32x64xf32>
    %cst_158 = arith.constant dense<0.000000e+00> : vector<16x64xf32>
    %416 = tpu.matmul %413, %415, %cst_158 {dimension_numbers = #tpu.dot_dimension_numbers<[1], [0], [0], [1], [0, 0, 1, 1], [], []>} : vector<16x32xf32>, vector<32x64xf32>, vector<16x64xf32> -> vector<16x64xf32>
    %c1_159 = arith.constant 1 : index
    %c0_160 = arith.constant 0 : index
    %c0_161 = arith.constant 0 : index
    %417 = vector.load %arg11[%c1_159, %c0_160, %c0_161] : memref<3x1x64xf32, #tpu.memory_space<vmem>>, vector<1x1x64xf32>
    %418 = vector.shape_cast %417 : vector<1x1x64xf32> to vector<1x64xf32>
    %419 = vector.broadcast %418 : vector<1x64xf32> to vector<16x64xf32>
    %420 = arith.addf %416, %419 : vector<16x64xf32>
    %cst_162 = arith.constant 0.000000e+00 : f32
    %421 = vector.broadcast %cst_162 : f32 to vector<16x64xf32>
    %422 = arith.maximumf %420, %421 : vector<16x64xf32>
    %c1_163 = arith.constant 1 : index
    %c0_164 = arith.constant 0 : index
    %c0_165 = arith.constant 0 : index
    %423 = vector.load %arg12[%c1_163, %c0_164, %c0_165] : memref<3x64x32xf32, #tpu.memory_space<vmem>>, vector<1x64x32xf32>
    %424 = vector.shape_cast %423 : vector<1x64x32xf32> to vector<64x32xf32>
    %cst_166 = arith.constant dense<0.000000e+00> : vector<16x32xf32>
    %425 = tpu.matmul %422, %424, %cst_166 {dimension_numbers = #tpu.dot_dimension_numbers<[1], [0], [0], [1], [0, 0, 1, 1], [], []>} : vector<16x64xf32>, vector<64x32xf32>, vector<16x32xf32> -> vector<16x32xf32>
    %c1_167 = arith.constant 1 : index
    %c0_168 = arith.constant 0 : index
    %c0_169 = arith.constant 0 : index
    %426 = vector.load %arg13[%c1_167, %c0_168, %c0_169] : memref<3x1x32xf32, #tpu.memory_space<vmem>>, vector<1x1x32xf32>
    %427 = vector.shape_cast %426 : vector<1x1x32xf32> to vector<1x32xf32>
    %428 = vector.broadcast %427 : vector<1x32xf32> to vector<16x32xf32>
    %429 = arith.addf %425, %428 : vector<16x32xf32>
    %c2 = arith.constant 2 : index
    %c0_170 = arith.constant 0 : index
    %c0_171 = arith.constant 0 : index
    %430 = vector.load %arg4[%c2, %c0_170, %c0_171] : memref<3x32x768xf32, #tpu.memory_space<vmem>>, vector<1x32x768xf32>
    %431 = vector.shape_cast %430 : vector<1x32x768xf32> to vector<32x768xf32>
    %cst_172 = arith.constant dense<0.000000e+00> : vector<16x768xf32>
    %432 = tpu.matmul %429, %431, %cst_172 {dimension_numbers = #tpu.dot_dimension_numbers<[1], [0], [0], [1], [0, 0, 1, 1], [], []>} : vector<16x32xf32>, vector<32x768xf32>, vector<16x768xf32> -> vector<16x768xf32>
    %c2_173 = arith.constant 2 : index
    %c0_174 = arith.constant 0 : index
    %c0_175 = arith.constant 0 : index
    %433 = vector.load %arg5[%c2_173, %c0_174, %c0_175] : memref<3x1x768xf32, #tpu.memory_space<vmem>>, vector<1x1x768xf32>
    %434 = vector.shape_cast %433 : vector<1x1x768xf32> to vector<1x768xf32>
    %435 = vector.broadcast %434 : vector<1x768xf32> to vector<16x768xf32>
    %436 = arith.addf %432, %435 : vector<16x768xf32>
    %437 = vector.extract_strided_slice %436 {offsets = [0, 0], sizes = [16, 32], strides = [1, 1]} : vector<16x768xf32> to vector<16x32xf32>
    %438 = vector.extract_strided_slice %436 {offsets = [0, 256], sizes = [16, 32], strides = [1, 1]} : vector<16x768xf32> to vector<16x32xf32>
    %439 = vector.extract_strided_slice %436 {offsets = [0, 512], sizes = [16, 32], strides = [1, 1]} : vector<16x768xf32> to vector<16x32xf32>
    %cst_176 = arith.constant dense<0.000000e+00> : vector<16x16xf32>
    %440 = tpu.matmul %437, %438, %cst_176 {dimension_numbers = #tpu.dot_dimension_numbers<[1], [1], [0], [0], [0, 0, 1, 0], [], []>} : vector<16x32xf32>, vector<16x32xf32>, vector<16x16xf32> -> vector<16x16xf32>
    %cst_177 = arith.constant 0.176776692 : f32
    %441 = vector.broadcast %cst_177 : f32 to vector<16x16xf32>
    %442 = arith.mulf %440, %441 : vector<16x16xf32>
    %443 = arith.addf %442, %25 : vector<16x16xf32>
    %cst_178 = arith.constant dense<0xFF800000> : vector<16xf32>
    %444 = vector.multi_reduction <maximumf>, %443, %cst_178 [1] : vector<16x16xf32> to vector<16xf32>
    %445 = vector.shape_cast %444 : vector<16xf32> to vector<16x1xf32>
    %446 = vector.broadcast %445 : vector<16x1xf32> to vector<16x16xf32>
    %447 = arith.subf %443, %446 : vector<16x16xf32>
    %448 = math.exp %447 : vector<16x16xf32>
    %cst_179 = arith.constant dense<0.000000e+00> : vector<16xf32>
    %449 = vector.multi_reduction <add>, %448, %cst_179 [1] : vector<16x16xf32> to vector<16xf32>
    %450 = vector.shape_cast %449 : vector<16xf32> to vector<16x1xf32>
    %451 = tpu.reciprocal %450 {approx = true} : vector<16x1xf32> -> vector<16x1xf32>
    %452 = vector.broadcast %451 : vector<16x1xf32> to vector<16x16xf32>
    %453 = arith.mulf %448, %452 : vector<16x16xf32>
    %cst_180 = arith.constant dense<0.000000e+00> : vector<16x32xf32>
    %454 = tpu.matmul %453, %439, %cst_180 {dimension_numbers = #tpu.dot_dimension_numbers<[1], [0], [0], [1], [0, 0, 1, 1], [], []>} : vector<16x16xf32>, vector<16x32xf32>, vector<16x32xf32> -> vector<16x32xf32>
    %455 = vector.extract_strided_slice %436 {offsets = [0, 32], sizes = [16, 32], strides = [1, 1]} : vector<16x768xf32> to vector<16x32xf32>
    %456 = vector.extract_strided_slice %436 {offsets = [0, 288], sizes = [16, 32], strides = [1, 1]} : vector<16x768xf32> to vector<16x32xf32>
    %457 = vector.extract_strided_slice %436 {offsets = [0, 544], sizes = [16, 32], strides = [1, 1]} : vector<16x768xf32> to vector<16x32xf32>
    %cst_181 = arith.constant dense<0.000000e+00> : vector<16x16xf32>
    %458 = tpu.matmul %455, %456, %cst_181 {dimension_numbers = #tpu.dot_dimension_numbers<[1], [1], [0], [0], [0, 0, 1, 0], [], []>} : vector<16x32xf32>, vector<16x32xf32>, vector<16x16xf32> -> vector<16x16xf32>
    %cst_182 = arith.constant 0.176776692 : f32
    %459 = vector.broadcast %cst_182 : f32 to vector<16x16xf32>
    %460 = arith.mulf %458, %459 : vector<16x16xf32>
    %461 = arith.addf %460, %25 : vector<16x16xf32>
    %cst_183 = arith.constant dense<0xFF800000> : vector<16xf32>
    %462 = vector.multi_reduction <maximumf>, %461, %cst_183 [1] : vector<16x16xf32> to vector<16xf32>
    %463 = vector.shape_cast %462 : vector<16xf32> to vector<16x1xf32>
    %464 = vector.broadcast %463 : vector<16x1xf32> to vector<16x16xf32>
    %465 = arith.subf %461, %464 : vector<16x16xf32>
    %466 = math.exp %465 : vector<16x16xf32>
    %cst_184 = arith.constant dense<0.000000e+00> : vector<16xf32>
    %467 = vector.multi_reduction <add>, %466, %cst_184 [1] : vector<16x16xf32> to vector<16xf32>
    %468 = vector.shape_cast %467 : vector<16xf32> to vector<16x1xf32>
    %469 = tpu.reciprocal %468 {approx = true} : vector<16x1xf32> -> vector<16x1xf32>
    %470 = vector.broadcast %469 : vector<16x1xf32> to vector<16x16xf32>
    %471 = arith.mulf %466, %470 : vector<16x16xf32>
    %cst_185 = arith.constant dense<0.000000e+00> : vector<16x32xf32>
    %472 = tpu.matmul %471, %457, %cst_185 {dimension_numbers = #tpu.dot_dimension_numbers<[1], [0], [0], [1], [0, 0, 1, 1], [], []>} : vector<16x16xf32>, vector<16x32xf32>, vector<16x32xf32> -> vector<16x32xf32>
    %473 = vector.extract_strided_slice %436 {offsets = [0, 64], sizes = [16, 32], strides = [1, 1]} : vector<16x768xf32> to vector<16x32xf32>
    %474 = vector.extract_strided_slice %436 {offsets = [0, 320], sizes = [16, 32], strides = [1, 1]} : vector<16x768xf32> to vector<16x32xf32>
    %475 = vector.extract_strided_slice %436 {offsets = [0, 576], sizes = [16, 32], strides = [1, 1]} : vector<16x768xf32> to vector<16x32xf32>
    %cst_186 = arith.constant dense<0.000000e+00> : vector<16x16xf32>
    %476 = tpu.matmul %473, %474, %cst_186 {dimension_numbers = #tpu.dot_dimension_numbers<[1], [1], [0], [0], [0, 0, 1, 0], [], []>} : vector<16x32xf32>, vector<16x32xf32>, vector<16x16xf32> -> vector<16x16xf32>
    %cst_187 = arith.constant 0.176776692 : f32
    %477 = vector.broadcast %cst_187 : f32 to vector<16x16xf32>
    %478 = arith.mulf %476, %477 : vector<16x16xf32>
    %479 = arith.addf %478, %25 : vector<16x16xf32>
    %cst_188 = arith.constant dense<0xFF800000> : vector<16xf32>
    %480 = vector.multi_reduction <maximumf>, %479, %cst_188 [1] : vector<16x16xf32> to vector<16xf32>
    %481 = vector.shape_cast %480 : vector<16xf32> to vector<16x1xf32>
    %482 = vector.broadcast %481 : vector<16x1xf32> to vector<16x16xf32>
    %483 = arith.subf %479, %482 : vector<16x16xf32>
    %484 = math.exp %483 : vector<16x16xf32>
    %cst_189 = arith.constant dense<0.000000e+00> : vector<16xf32>
    %485 = vector.multi_reduction <add>, %484, %cst_189 [1] : vector<16x16xf32> to vector<16xf32>
    %486 = vector.shape_cast %485 : vector<16xf32> to vector<16x1xf32>
    %487 = tpu.reciprocal %486 {approx = true} : vector<16x1xf32> -> vector<16x1xf32>
    %488 = vector.broadcast %487 : vector<16x1xf32> to vector<16x16xf32>
    %489 = arith.mulf %484, %488 : vector<16x16xf32>
    %cst_190 = arith.constant dense<0.000000e+00> : vector<16x32xf32>
    %490 = tpu.matmul %489, %475, %cst_190 {dimension_numbers = #tpu.dot_dimension_numbers<[1], [0], [0], [1], [0, 0, 1, 1], [], []>} : vector<16x16xf32>, vector<16x32xf32>, vector<16x32xf32> -> vector<16x32xf32>
    %491 = vector.extract_strided_slice %436 {offsets = [0, 96], sizes = [16, 32], strides = [1, 1]} : vector<16x768xf32> to vector<16x32xf32>
    %492 = vector.extract_strided_slice %436 {offsets = [0, 352], sizes = [16, 32], strides = [1, 1]} : vector<16x768xf32> to vector<16x32xf32>
    %493 = vector.extract_strided_slice %436 {offsets = [0, 608], sizes = [16, 32], strides = [1, 1]} : vector<16x768xf32> to vector<16x32xf32>
    %cst_191 = arith.constant dense<0.000000e+00> : vector<16x16xf32>
    %494 = tpu.matmul %491, %492, %cst_191 {dimension_numbers = #tpu.dot_dimension_numbers<[1], [1], [0], [0], [0, 0, 1, 0], [], []>} : vector<16x32xf32>, vector<16x32xf32>, vector<16x16xf32> -> vector<16x16xf32>
    %cst_192 = arith.constant 0.176776692 : f32
    %495 = vector.broadcast %cst_192 : f32 to vector<16x16xf32>
    %496 = arith.mulf %494, %495 : vector<16x16xf32>
    %497 = arith.addf %496, %25 : vector<16x16xf32>
    %cst_193 = arith.constant dense<0xFF800000> : vector<16xf32>
    %498 = vector.multi_reduction <maximumf>, %497, %cst_193 [1] : vector<16x16xf32> to vector<16xf32>
    %499 = vector.shape_cast %498 : vector<16xf32> to vector<16x1xf32>
    %500 = vector.broadcast %499 : vector<16x1xf32> to vector<16x16xf32>
    %501 = arith.subf %497, %500 : vector<16x16xf32>
    %502 = math.exp %501 : vector<16x16xf32>
    %cst_194 = arith.constant dense<0.000000e+00> : vector<16xf32>
    %503 = vector.multi_reduction <add>, %502, %cst_194 [1] : vector<16x16xf32> to vector<16xf32>
    %504 = vector.shape_cast %503 : vector<16xf32> to vector<16x1xf32>
    %505 = tpu.reciprocal %504 {approx = true} : vector<16x1xf32> -> vector<16x1xf32>
    %506 = vector.broadcast %505 : vector<16x1xf32> to vector<16x16xf32>
    %507 = arith.mulf %502, %506 : vector<16x16xf32>
    %cst_195 = arith.constant dense<0.000000e+00> : vector<16x32xf32>
    %508 = tpu.matmul %507, %493, %cst_195 {dimension_numbers = #tpu.dot_dimension_numbers<[1], [0], [0], [1], [0, 0, 1, 1], [], []>} : vector<16x16xf32>, vector<16x32xf32>, vector<16x32xf32> -> vector<16x32xf32>
    %509 = vector.extract_strided_slice %436 {offsets = [0, 128], sizes = [16, 32], strides = [1, 1]} : vector<16x768xf32> to vector<16x32xf32>
    %510 = vector.extract_strided_slice %436 {offsets = [0, 384], sizes = [16, 32], strides = [1, 1]} : vector<16x768xf32> to vector<16x32xf32>
    %511 = vector.extract_strided_slice %436 {offsets = [0, 640], sizes = [16, 32], strides = [1, 1]} : vector<16x768xf32> to vector<16x32xf32>
    %cst_196 = arith.constant dense<0.000000e+00> : vector<16x16xf32>
    %512 = tpu.matmul %509, %510, %cst_196 {dimension_numbers = #tpu.dot_dimension_numbers<[1], [1], [0], [0], [0, 0, 1, 0], [], []>} : vector<16x32xf32>, vector<16x32xf32>, vector<16x16xf32> -> vector<16x16xf32>
    %cst_197 = arith.constant 0.176776692 : f32
    %513 = vector.broadcast %cst_197 : f32 to vector<16x16xf32>
    %514 = arith.mulf %512, %513 : vector<16x16xf32>
    %515 = arith.addf %514, %25 : vector<16x16xf32>
    %cst_198 = arith.constant dense<0xFF800000> : vector<16xf32>
    %516 = vector.multi_reduction <maximumf>, %515, %cst_198 [1] : vector<16x16xf32> to vector<16xf32>
    %517 = vector.shape_cast %516 : vector<16xf32> to vector<16x1xf32>
    %518 = vector.broadcast %517 : vector<16x1xf32> to vector<16x16xf32>
    %519 = arith.subf %515, %518 : vector<16x16xf32>
    %520 = math.exp %519 : vector<16x16xf32>
    %cst_199 = arith.constant dense<0.000000e+00> : vector<16xf32>
    %521 = vector.multi_reduction <add>, %520, %cst_199 [1] : vector<16x16xf32> to vector<16xf32>
    %522 = vector.shape_cast %521 : vector<16xf32> to vector<16x1xf32>
    %523 = tpu.reciprocal %522 {approx = true} : vector<16x1xf32> -> vector<16x1xf32>
    %524 = vector.broadcast %523 : vector<16x1xf32> to vector<16x16xf32>
    %525 = arith.mulf %520, %524 : vector<16x16xf32>
    %cst_200 = arith.constant dense<0.000000e+00> : vector<16x32xf32>
    %526 = tpu.matmul %525, %511, %cst_200 {dimension_numbers = #tpu.dot_dimension_numbers<[1], [0], [0], [1], [0, 0, 1, 1], [], []>} : vector<16x16xf32>, vector<16x32xf32>, vector<16x32xf32> -> vector<16x32xf32>
    %527 = vector.extract_strided_slice %436 {offsets = [0, 160], sizes = [16, 32], strides = [1, 1]} : vector<16x768xf32> to vector<16x32xf32>
    %528 = vector.extract_strided_slice %436 {offsets = [0, 416], sizes = [16, 32], strides = [1, 1]} : vector<16x768xf32> to vector<16x32xf32>
    %529 = vector.extract_strided_slice %436 {offsets = [0, 672], sizes = [16, 32], strides = [1, 1]} : vector<16x768xf32> to vector<16x32xf32>
    %cst_201 = arith.constant dense<0.000000e+00> : vector<16x16xf32>
    %530 = tpu.matmul %527, %528, %cst_201 {dimension_numbers = #tpu.dot_dimension_numbers<[1], [1], [0], [0], [0, 0, 1, 0], [], []>} : vector<16x32xf32>, vector<16x32xf32>, vector<16x16xf32> -> vector<16x16xf32>
    %cst_202 = arith.constant 0.176776692 : f32
    %531 = vector.broadcast %cst_202 : f32 to vector<16x16xf32>
    %532 = arith.mulf %530, %531 : vector<16x16xf32>
    %533 = arith.addf %532, %25 : vector<16x16xf32>
    %cst_203 = arith.constant dense<0xFF800000> : vector<16xf32>
    %534 = vector.multi_reduction <maximumf>, %533, %cst_203 [1] : vector<16x16xf32> to vector<16xf32>
    %535 = vector.shape_cast %534 : vector<16xf32> to vector<16x1xf32>
    %536 = vector.broadcast %535 : vector<16x1xf32> to vector<16x16xf32>
    %537 = arith.subf %533, %536 : vector<16x16xf32>
    %538 = math.exp %537 : vector<16x16xf32>
    %cst_204 = arith.constant dense<0.000000e+00> : vector<16xf32>
    %539 = vector.multi_reduction <add>, %538, %cst_204 [1] : vector<16x16xf32> to vector<16xf32>
    %540 = vector.shape_cast %539 : vector<16xf32> to vector<16x1xf32>
    %541 = tpu.reciprocal %540 {approx = true} : vector<16x1xf32> -> vector<16x1xf32>
    %542 = vector.broadcast %541 : vector<16x1xf32> to vector<16x16xf32>
    %543 = arith.mulf %538, %542 : vector<16x16xf32>
    %cst_205 = arith.constant dense<0.000000e+00> : vector<16x32xf32>
    %544 = tpu.matmul %543, %529, %cst_205 {dimension_numbers = #tpu.dot_dimension_numbers<[1], [0], [0], [1], [0, 0, 1, 1], [], []>} : vector<16x16xf32>, vector<16x32xf32>, vector<16x32xf32> -> vector<16x32xf32>
    %545 = vector.extract_strided_slice %436 {offsets = [0, 192], sizes = [16, 32], strides = [1, 1]} : vector<16x768xf32> to vector<16x32xf32>
    %546 = vector.extract_strided_slice %436 {offsets = [0, 448], sizes = [16, 32], strides = [1, 1]} : vector<16x768xf32> to vector<16x32xf32>
    %547 = vector.extract_strided_slice %436 {offsets = [0, 704], sizes = [16, 32], strides = [1, 1]} : vector<16x768xf32> to vector<16x32xf32>
    %cst_206 = arith.constant dense<0.000000e+00> : vector<16x16xf32>
    %548 = tpu.matmul %545, %546, %cst_206 {dimension_numbers = #tpu.dot_dimension_numbers<[1], [1], [0], [0], [0, 0, 1, 0], [], []>} : vector<16x32xf32>, vector<16x32xf32>, vector<16x16xf32> -> vector<16x16xf32>
    %cst_207 = arith.constant 0.176776692 : f32
    %549 = vector.broadcast %cst_207 : f32 to vector<16x16xf32>
    %550 = arith.mulf %548, %549 : vector<16x16xf32>
    %551 = arith.addf %550, %25 : vector<16x16xf32>
    %cst_208 = arith.constant dense<0xFF800000> : vector<16xf32>
    %552 = vector.multi_reduction <maximumf>, %551, %cst_208 [1] : vector<16x16xf32> to vector<16xf32>
    %553 = vector.shape_cast %552 : vector<16xf32> to vector<16x1xf32>
    %554 = vector.broadcast %553 : vector<16x1xf32> to vector<16x16xf32>
    %555 = arith.subf %551, %554 : vector<16x16xf32>
    %556 = math.exp %555 : vector<16x16xf32>
    %cst_209 = arith.constant dense<0.000000e+00> : vector<16xf32>
    %557 = vector.multi_reduction <add>, %556, %cst_209 [1] : vector<16x16xf32> to vector<16xf32>
    %558 = vector.shape_cast %557 : vector<16xf32> to vector<16x1xf32>
    %559 = tpu.reciprocal %558 {approx = true} : vector<16x1xf32> -> vector<16x1xf32>
    %560 = vector.broadcast %559 : vector<16x1xf32> to vector<16x16xf32>
    %561 = arith.mulf %556, %560 : vector<16x16xf32>
    %cst_210 = arith.constant dense<0.000000e+00> : vector<16x32xf32>
    %562 = tpu.matmul %561, %547, %cst_210 {dimension_numbers = #tpu.dot_dimension_numbers<[1], [0], [0], [1], [0, 0, 1, 1], [], []>} : vector<16x16xf32>, vector<16x32xf32>, vector<16x32xf32> -> vector<16x32xf32>
    %563 = vector.extract_strided_slice %436 {offsets = [0, 224], sizes = [16, 32], strides = [1, 1]} : vector<16x768xf32> to vector<16x32xf32>
    %564 = vector.extract_strided_slice %436 {offsets = [0, 480], sizes = [16, 32], strides = [1, 1]} : vector<16x768xf32> to vector<16x32xf32>
    %565 = vector.extract_strided_slice %436 {offsets = [0, 736], sizes = [16, 32], strides = [1, 1]} : vector<16x768xf32> to vector<16x32xf32>
    %cst_211 = arith.constant dense<0.000000e+00> : vector<16x16xf32>
    %566 = tpu.matmul %563, %564, %cst_211 {dimension_numbers = #tpu.dot_dimension_numbers<[1], [1], [0], [0], [0, 0, 1, 0], [], []>} : vector<16x32xf32>, vector<16x32xf32>, vector<16x16xf32> -> vector<16x16xf32>
    %cst_212 = arith.constant 0.176776692 : f32
    %567 = vector.broadcast %cst_212 : f32 to vector<16x16xf32>
    %568 = arith.mulf %566, %567 : vector<16x16xf32>
    %569 = arith.addf %568, %25 : vector<16x16xf32>
    %cst_213 = arith.constant dense<0xFF800000> : vector<16xf32>
    %570 = vector.multi_reduction <maximumf>, %569, %cst_213 [1] : vector<16x16xf32> to vector<16xf32>
    %571 = vector.shape_cast %570 : vector<16xf32> to vector<16x1xf32>
    %572 = vector.broadcast %571 : vector<16x1xf32> to vector<16x16xf32>
    %573 = arith.subf %569, %572 : vector<16x16xf32>
    %574 = math.exp %573 : vector<16x16xf32>
    %cst_214 = arith.constant dense<0.000000e+00> : vector<16xf32>
    %575 = vector.multi_reduction <add>, %574, %cst_214 [1] : vector<16x16xf32> to vector<16xf32>
    %576 = vector.shape_cast %575 : vector<16xf32> to vector<16x1xf32>
    %577 = tpu.reciprocal %576 {approx = true} : vector<16x1xf32> -> vector<16x1xf32>
    %578 = vector.broadcast %577 : vector<16x1xf32> to vector<16x16xf32>
    %579 = arith.mulf %574, %578 : vector<16x16xf32>
    %cst_215 = arith.constant dense<0.000000e+00> : vector<16x32xf32>
    %580 = tpu.matmul %579, %565, %cst_215 {dimension_numbers = #tpu.dot_dimension_numbers<[1], [0], [0], [1], [0, 0, 1, 1], [], []>} : vector<16x16xf32>, vector<16x32xf32>, vector<16x32xf32> -> vector<16x32xf32>
    %581 = tpu.concatenate %454, %472, %490, %508, %526, %544, %562, %580 in 1 : vector<16x32xf32>, vector<16x32xf32>, vector<16x32xf32>, vector<16x32xf32>, vector<16x32xf32>, vector<16x32xf32>, vector<16x32xf32>, vector<16x32xf32> -> vector<16x256xf32>
    %c2_216 = arith.constant 2 : index
    %c0_217 = arith.constant 0 : index
    %c0_218 = arith.constant 0 : index
    %582 = vector.load %arg6[%c2_216, %c0_217, %c0_218] : memref<3x256x32xf32, #tpu.memory_space<vmem>>, vector<1x256x32xf32>
    %583 = vector.shape_cast %582 : vector<1x256x32xf32> to vector<256x32xf32>
    %cst_219 = arith.constant dense<0.000000e+00> : vector<16x32xf32>
    %584 = tpu.matmul %581, %583, %cst_219 {dimension_numbers = #tpu.dot_dimension_numbers<[1], [0], [0], [1], [0, 0, 1, 1], [], []>} : vector<16x256xf32>, vector<256x32xf32>, vector<16x32xf32> -> vector<16x32xf32>
    %c2_220 = arith.constant 2 : index
    %c0_221 = arith.constant 0 : index
    %c0_222 = arith.constant 0 : index
    %585 = vector.load %arg7[%c2_220, %c0_221, %c0_222] : memref<3x1x32xf32, #tpu.memory_space<vmem>>, vector<1x1x32xf32>
    %586 = vector.shape_cast %585 : vector<1x1x32xf32> to vector<1x32xf32>
    %587 = vector.broadcast %586 : vector<1x32xf32> to vector<16x32xf32>
    %588 = arith.addf %584, %587 : vector<16x32xf32>
    %589 = arith.addf %588, %429 : vector<16x32xf32>
    %c2_223 = arith.constant 2 : index
    %c0_224 = arith.constant 0 : index
    %c0_225 = arith.constant 0 : index
    %590 = vector.load %arg8[%c2_223, %c0_224, %c0_225] : memref<3x1x32xf32, #tpu.memory_space<vmem>>, vector<1x1x32xf32>
    %591 = vector.shape_cast %590 : vector<1x1x32xf32> to vector<1x32xf32>
    %c2_226 = arith.constant 2 : index
    %c0_227 = arith.constant 0 : index
    %c0_228 = arith.constant 0 : index
    %592 = vector.load %arg9[%c2_226, %c0_227, %c0_228] : memref<3x1x32xf32, #tpu.memory_space<vmem>>, vector<1x1x32xf32>
    %593 = vector.shape_cast %592 : vector<1x1x32xf32> to vector<1x32xf32>
    %cst_229 = arith.constant dense<0.000000e+00> : vector<16xf32>
    %594 = vector.multi_reduction <add>, %589, %cst_229 [1] : vector<16x32xf32> to vector<16xf32>
    %595 = vector.shape_cast %594 : vector<16xf32> to vector<16x1xf32>
    %cst_230 = arith.constant 3.200000e+01 : f32
    %596 = vector.broadcast %cst_230 : f32 to vector<16x1xf32>
    %597 = arith.divf %595, %596 : vector<16x1xf32>
    %598 = vector.broadcast %597 : vector<16x1xf32> to vector<16x32xf32>
    %599 = arith.subf %589, %598 : vector<16x32xf32>
    %600 = arith.mulf %599, %599 : vector<16x32xf32>
    %cst_231 = arith.constant dense<0.000000e+00> : vector<16xf32>
    %601 = vector.multi_reduction <add>, %600, %cst_231 [1] : vector<16x32xf32> to vector<16xf32>
    %602 = vector.shape_cast %601 : vector<16xf32> to vector<16x1xf32>
    %cst_232 = arith.constant 3.200000e+01 : f32
    %603 = vector.broadcast %cst_232 : f32 to vector<16x1xf32>
    %604 = arith.divf %602, %603 : vector<16x1xf32>
    %605 = vector.broadcast %597 : vector<16x1xf32> to vector<16x32xf32>
    %606 = arith.subf %589, %605 : vector<16x32xf32>
    %cst_233 = arith.constant 9.99999974E-6 : f32
    %607 = vector.broadcast %cst_233 : f32 to vector<16x1xf32>
    %608 = arith.addf %604, %607 : vector<16x1xf32>
    %609 = math.rsqrt %608 : vector<16x1xf32>
    %610 = vector.broadcast %609 : vector<16x1xf32> to vector<16x32xf32>
    %611 = arith.mulf %606, %610 : vector<16x32xf32>
    %612 = vector.broadcast %591 : vector<1x32xf32> to vector<16x32xf32>
    %613 = arith.mulf %611, %612 : vector<16x32xf32>
    %614 = vector.broadcast %593 : vector<1x32xf32> to vector<16x32xf32>
    %615 = arith.addf %613, %614 : vector<16x32xf32>
    %c2_234 = arith.constant 2 : index
    %c0_235 = arith.constant 0 : index
    %c0_236 = arith.constant 0 : index
    %616 = vector.load %arg10[%c2_234, %c0_235, %c0_236] : memref<3x32x64xf32, #tpu.memory_space<vmem>>, vector<1x32x64xf32>
    %617 = vector.shape_cast %616 : vector<1x32x64xf32> to vector<32x64xf32>
    %cst_237 = arith.constant dense<0.000000e+00> : vector<16x64xf32>
    %618 = tpu.matmul %615, %617, %cst_237 {dimension_numbers = #tpu.dot_dimension_numbers<[1], [0], [0], [1], [0, 0, 1, 1], [], []>} : vector<16x32xf32>, vector<32x64xf32>, vector<16x64xf32> -> vector<16x64xf32>
    %c2_238 = arith.constant 2 : index
    %c0_239 = arith.constant 0 : index
    %c0_240 = arith.constant 0 : index
    %619 = vector.load %arg11[%c2_238, %c0_239, %c0_240] : memref<3x1x64xf32, #tpu.memory_space<vmem>>, vector<1x1x64xf32>
    %620 = vector.shape_cast %619 : vector<1x1x64xf32> to vector<1x64xf32>
    %621 = vector.broadcast %620 : vector<1x64xf32> to vector<16x64xf32>
    %622 = arith.addf %618, %621 : vector<16x64xf32>
    %cst_241 = arith.constant 0.000000e+00 : f32
    %623 = vector.broadcast %cst_241 : f32 to vector<16x64xf32>
    %624 = arith.maximumf %622, %623 : vector<16x64xf32>
    %c2_242 = arith.constant 2 : index
    %c0_243 = arith.constant 0 : index
    %c0_244 = arith.constant 0 : index
    %625 = vector.load %arg12[%c2_242, %c0_243, %c0_244] : memref<3x64x32xf32, #tpu.memory_space<vmem>>, vector<1x64x32xf32>
    %626 = vector.shape_cast %625 : vector<1x64x32xf32> to vector<64x32xf32>
    %cst_245 = arith.constant dense<0.000000e+00> : vector<16x32xf32>
    %627 = tpu.matmul %624, %626, %cst_245 {dimension_numbers = #tpu.dot_dimension_numbers<[1], [0], [0], [1], [0, 0, 1, 1], [], []>} : vector<16x64xf32>, vector<64x32xf32>, vector<16x32xf32> -> vector<16x32xf32>
    %c2_246 = arith.constant 2 : index
    %c0_247 = arith.constant 0 : index
    %c0_248 = arith.constant 0 : index
    %628 = vector.load %arg13[%c2_246, %c0_247, %c0_248] : memref<3x1x32xf32, #tpu.memory_space<vmem>>, vector<1x1x32xf32>
    %629 = vector.shape_cast %628 : vector<1x1x32xf32> to vector<1x32xf32>
    %630 = vector.broadcast %629 : vector<1x32xf32> to vector<16x32xf32>
    %631 = arith.addf %627, %630 : vector<16x32xf32>
    %c0_249 = arith.constant 0 : index
    %c0_250 = arith.constant 0 : index
    %632 = vector.load %arg14[%c0_249, %c0_250] : memref<16x32xf32, #tpu.memory_space<vmem>>, vector<16x32xf32>
    tpu.vector_store %arg14[%c0_249, %c0_250], %631 {strides = array<i32>} : memref<16x32xf32, #tpu.memory_space<vmem>>, vector<16x32xf32>,
    return
  }
}

</mosaic_0001>

<llo_original>
// kernel: tpu_custom_call.1
$region0: #{tpu_custom_call.1}
  #allocation0 [shape = 'u32[]', space=smem, size = 0x4, offset = 0x4, fixed_abs, tag = 'smem constant byte address 0x4 - core index']
  #allocation1 [shape = 'u32[144,128]{1,0:T(1,128)}', space=vmem, size = 0x12000, scoped, tag = 'internal scratch']
  %s0 = inlined_call_operand.vmem [shape: f32[16,32], index: 0, kind: input, shape index: {}]
  %s1 = inlined_call_operand.vmem [shape: f32[1,32], index: 1, kind: input, shape index: {}]
  %s2 = inlined_call_operand.vmem [shape: f32[1,32], index: 2, kind: input, shape index: {}]
  %s3 = inlined_call_operand.vmem [shape: f32[16,16], index: 3, kind: input, shape index: {}]
  %s4 = inlined_call_operand.vmem [shape: f32[3,32,768], index: 4, kind: input, shape index: {}]
  %s5 = inlined_call_operand.vmem [shape: f32[3,1,768], index: 5, kind: input, shape index: {}]
  %s6 = inlined_call_operand.vmem [shape: f32[3,256,32], index: 6, kind: input, shape index: {}]
  %s7 = inlined_call_operand.vmem [shape: f32[3,1,32], index: 7, kind: input, shape index: {}]
  %s8 = inlined_call_operand.vmem [shape: f32[3,1,32], index: 8, kind: input, shape index: {}]
  %s9 = inlined_call_operand.vmem [shape: f32[3,1,32], index: 9, kind: input, shape index: {}]
  %s10 = inlined_call_operand.vmem [shape: f32[3,32,64], index: 10, kind: input, shape index: {}]
  %s11 = inlined_call_operand.vmem [shape: f32[3,1,64], index: 11, kind: input, shape index: {}]
  %s12 = inlined_call_operand.vmem [shape: f32[3,64,32], index: 12, kind: input, shape index: {}]
  %s13 = inlined_call_operand.vmem [shape: f32[3,1,32], index: 13, kind: input, shape index: {}]
  %s14 = inlined_call_operand.hbm [shape: f32[16,32], index: 14, kind: output, shape index: {}]
  %s15 = sld [smem:[#allocation0]]
  $region66: #{tpu_custom_call.1} parent=0
    _
  %s17 = ssub.s32 1, %s15
  %s18 = scalar_select 0, %s17, %s15
  $region1: #{tpu_custom_call.1} parent=0
    #allocation2 [shape = 'u8[8192]{0}', space=vmem, size = 0x2000, scoped, tag = 'output window, operand 0, single buffered']
    #allocation3 [shape = 's32[1]{0}', space=sflag, size = 0x4, scoped, tag = 'scoped memory for tpu_custom_call.1']
    %19 = vsyncpa [#allocation3], 0
    // Predicated region
    $region2: #{tpu_custom_call.1} parent=1 // pred_check
      _
    $region3: #{tpu_custom_call.1} parent=1 // pred_check_branch
      %21 = sbr.rel (0) target = $region5
    $region4: #{tpu_custom_call.1} parent=1 // pred_region
      _
    $region5: #{tpu_custom_call.1} parent=1 // pred_fallthru
      _
    // Predicated region
    $region6: #{tpu_custom_call.1} parent=1 // pred_check
      _
    $region7: #{tpu_custom_call.1} parent=1 // pred_check_branch
      %23 = sbr.rel (0) target = $region9
    $region8: #{tpu_custom_call.1} parent=1 // pred_region
      _
    $region9: #{tpu_custom_call.1} parent=1 // pred_fallthru
      _
    // Predicated region
    $region10: #{tpu_custom_call.1} parent=1 // pred_check
      _
    $region11: #{tpu_custom_call.1} parent=1 // pred_check_branch
      %25 = sbr.rel (0) target = $region13
    $region12: #{tpu_custom_call.1} parent=1 // pred_region
      _
    $region13: #{tpu_custom_call.1} parent=1 // pred_fallthru
      _
    // Predicated region
    $region14: #{tpu_custom_call.1} parent=1 // pred_check
      _
    $region15: #{tpu_custom_call.1} parent=1 // pred_check_branch
      %27 = sbr.rel (0) target = $region17
    $region16: #{tpu_custom_call.1} parent=1 // pred_region
      _
    $region17: #{tpu_custom_call.1} parent=1 // pred_fallthru
      _
    // Predicated region
    $region18: #{tpu_custom_call.1} parent=1 // pred_check
      _
    $region19: #{tpu_custom_call.1} parent=1 // pred_check_branch
      %29 = sbr.rel (0) target = $region21
    $region20: #{tpu_custom_call.1} parent=1 // pred_region
      _
    $region21: #{tpu_custom_call.1} parent=1 // pred_fallthru
      _
    // Predicated region
    $region22: #{tpu_custom_call.1} parent=1 // pred_check
      _
    $region23: #{tpu_custom_call.1} parent=1 // pred_check_branch
      %31 = sbr.rel (0) target = $region25
    $region24: #{tpu_custom_call.1} parent=1 // pred_region
      _
    $region25: #{tpu_custom_call.1} parent=1 // pred_fallthru
      _
    // Predicated region
    $region26: #{tpu_custom_call.1} parent=1 // pred_check
      _
    $region27: #{tpu_custom_call.1} parent=1 // pred_check_branch
      %33 = sbr.rel (0) target = $region29
    $region28: #{tpu_custom_call.1} parent=1 // pred_region
      _
    $region29: #{tpu_custom_call.1} parent=1 // pred_fallthru
      _
    // Predicated region
    $region30: #{tpu_custom_call.1} parent=1 // pred_check
      _
    $region31: #{tpu_custom_call.1} parent=1 // pred_check_branch
      %35 = sbr.rel (0) target = $region33
    $region32: #{tpu_custom_call.1} parent=1 // pred_region
      _
    $region33: #{tpu_custom_call.1} parent=1 // pred_fallthru
      _
    // Predicated region
    $region34: #{tpu_custom_call.1} parent=1 // pred_check
      _
    $region35: #{tpu_custom_call.1} parent=1 // pred_check_branch
      %37 = sbr.rel (0) target = $region37
    $region36: #{tpu_custom_call.1} parent=1 // pred_region
      _
    $region37: #{tpu_custom_call.1} parent=1 // pred_fallthru
      _
    // Predicated region
    $region38: #{tpu_custom_call.1} parent=1 // pred_check
      _
    $region39: #{tpu_custom_call.1} parent=1 // pred_check_branch
      %39 = sbr.rel (0) target = $region41
    $region40: #{tpu_custom_call.1} parent=1 // pred_region
      _
    $region41: #{tpu_custom_call.1} parent=1 // pred_fallthru
      _
    // Predicated region
    $region42: #{tpu_custom_call.1} parent=1 // pred_check
      _
    $region43: #{tpu_custom_call.1} parent=1 // pred_check_branch
      %41 = sbr.rel (0) target = $region45
    $region44: #{tpu_custom_call.1} parent=1 // pred_region
      _
    $region45: #{tpu_custom_call.1} parent=1 // pred_fallthru
      _
    // Predicated region
    $region46: #{tpu_custom_call.1} parent=1 // pred_check
      _
    $region47: #{tpu_custom_call.1} parent=1 // pred_check_branch
      %43 = sbr.rel (0) target = $region49
    $region48: #{tpu_custom_call.1} parent=1 // pred_region
      _
    $region49: #{tpu_custom_call.1} parent=1 // pred_fallthru
      _
    // Predicated region
    $region50: #{tpu_custom_call.1} parent=1 // pred_check
      _
    $region51: #{tpu_custom_call.1} parent=1 // pred_check_branch
      %45 = sbr.rel (0) target = $region53
    $region52: #{tpu_custom_call.1} parent=1 // pred_region
      _
    $region53: #{tpu_custom_call.1} parent=1 // pred_fallthru
      _
    // Predicated region
    $region54: #{tpu_custom_call.1} parent=1 // pred_check
      _
    $region55: #{tpu_custom_call.1} parent=1 // pred_check_branch
      %47 = sbr.rel (0) target = $region57
    $region56: #{tpu_custom_call.1} parent=1 // pred_region
      _
    $region57: #{tpu_custom_call.1} parent=1 // pred_fallthru
      _
    %v48 = vld [vmem:[%s0] sm:$0xff]
    %v49 = vld [vmem:[%s0 + $0x8] sm:$0xff]
    %v50 = vld [vmem:[%s1] sm:$0x1]
    %v51 = vld [vmem:[%s2] sm:$0x1]
    %vm52 = vcmask 261120
    %v53 = vsel %vm52, %v48, 0.0
    %54 = vadd.xlane.f32.xlu0 %v53
    %v55 = vpop.xlane.xlu0 %54
    %v56 = vsel %vm52, %v49, 0.0
    %57 = vadd.xlane.f32.xlu0 %v56
    %v58 = vpop.xlane.xlu0 %57
    %v59 = vrcp.pop 32.0
    %v60 = vmul.f32 %v55, %v59
    %v61 = vmul.f32 %v58, %v59
    %v62 = vsub.f32 %v48, %v60
    %v63 = vsub.f32 %v49, %v61
    %v64 = vmul.f32 %v62, %v62
    %v65 = vmul.f32 %v63, %v63
    %v66 = vsel %vm52, %v64, 0.0
    %67 = vadd.xlane.f32.xlu0 %v66
    %v68 = vpop.xlane.xlu0 %67
    %v69 = vsel %vm52, %v65, 0.0
    %70 = vadd.xlane.f32.xlu0 %v69
    %v71 = vpop.xlane.xlu0 %70
    %v72 = vmul.f32 %v68, %v59
    %v73 = vmul.f32 %v71, %v59
    %v74 = vadd.f32 %v72, 1e-05
    %v75 = vadd.f32 %v73, 1e-05
    %v76 = vrsqrt.pop %v74
    %v77 = vrsqrt.pop %v75
    %v78 = vmul.f32 %v62, %v76
    %v79 = vmul.f32 %v63, %v77
    %v81 = vlaneseq
    %v82 = vshrl.u32 %v81, 7
    %v83 = vsub.s32 0, %v82
    %v84 = vrot.slane %v50, %v83
    %v86 = vmul.f32 %v78, %v84
    %v87 = vmul.f32 %v79, %v84
    %v89 = vlaneseq
    %v90 = vshrl.u32 %v89, 7
    %v91 = vsub.s32 0, %v90
    %v92 = vrot.slane %v51, %v91
    %v94 = vadd.f32 %v86, %v92
    %v95 = vadd.f32 %v87, %v92
    %v96 = vld [vmem:[%s3] sm:$0xff]
    %v97 = vld [vmem:[%s3 + $0x8] sm:$0xff]
    %v98 = vld [vmem:[%s4] sm:$0xff]
    %v99 = vld [vmem:[%s4 + $0x8] sm:$0xff]
    %v100 = vld [vmem:[%s4 + $0x10] sm:$0xff]
    %v101 = vld [vmem:[%s4 + $0x18] sm:$0xff]
    %v102 = vld [vmem:[%s4 + $0x20] sm:$0xff]
    %v103 = vld [vmem:[%s4 + $0x28] sm:$0xff]
    %v104 = vld [vmem:[%s4 + $0x30] sm:$0xff]
    %v105 = vld [vmem:[%s4 + $0x38] sm:$0xff]
    %v106 = vld [vmem:[%s4 + $0x40] sm:$0xff]
    %v107 = vld [vmem:[%s4 + $0x48] sm:$0xff]
    %v108 = vld [vmem:[%s4 + $0x50] sm:$0xff]
    %v109 = vld [vmem:[%s4 + $0x58] sm:$0xff]
    %v110 = vld [vmem:[%s4 + $0x60] sm:$0xff]
    %v111 = vld [vmem:[%s4 + $0x68] sm:$0xff]
    %v112 = vld [vmem:[%s4 + $0x70] sm:$0xff]
    %v113 = vld [vmem:[%s4 + $0x78] sm:$0xff]
    %v114 = vld [vmem:[%s4 + $0x80] sm:$0xff]
    %v115 = vld [vmem:[%s4 + $0x88] sm:$0xff]
    %v116 = vld [vmem:[%s4 + $0x90] sm:$0xff]
    %v117 = vld [vmem:[%s4 + $0x98] sm:$0xff]
    %v118 = vld [vmem:[%s4 + $0xa0] sm:$0xff]
    %v119 = vld [vmem:[%s4 + $0xa8] sm:$0xff]
    %v120 = vld [vmem:[%s4 + $0xb0] sm:$0xff]
    %v121 = vld [vmem:[%s4 + $0xb8] sm:$0xff]
    %v122 = vld [vmem:[%s5] sm:$0x3f]
    %v124 = vlaneseq
    %v125 = vshrl.u32 %v124, 7
    %v126 = vsub.s32 0, %v125
    %v127 = vrot.slane %v122, %v126
    %v128 = vlaneseq
    %v129 = vshrl.u32 %v128, 7
    %v130 = vsub.s32 1, %v129
    %v131 = vrot.slane %v122, %v130
    %v132 = vlaneseq
    %v133 = vshrl.u32 %v132, 7
    %v134 = vsub.s32 2, %v133
    %v135 = vrot.slane %v122, %v134
    %v136 = vlaneseq
    %v137 = vshrl.u32 %v136, 7
    %v138 = vsub.s32 3, %v137
    %v139 = vrot.slane %v122, %v138
    %v140 = vlaneseq
    %v141 = vshrl.u32 %v140, 7
    %v142 = vsub.s32 4, %v141
    %v143 = vrot.slane %v122, %v142
    %v144 = vlaneseq
    %v145 = vshrl.u32 %v144, 7
    %v146 = vsub.s32 5, %v145
    %v147 = vrot.slane %v122, %v146
    %v155 = vsel %vm52, %v94, 0
    %v158 = vsel %vm52, %v95, 0
    %160 = vmatprep.subr.mxu0 0.0
    %161 = vmatpush1.msra.mxu0 0.0
    %162 = vmatprep.subr.mxu0 0.0
    %163 = vmatpush1.msra.mxu0 0.0
    %164 = vmatprep.subr.mxu0 0.0
    %165 = vmatpush1.msra.mxu0 0.0
    %166 = vmatprep.subr.mxu0 0.0
    %167 = vmatpush1.msra.mxu0 0.0
    %168 = vmatprep.subr.mxu0 0.0
    %169 = vmatpush1.msra.mxu0 0.0
    %170 = vmatprep.subr.mxu0 0.0
    %171 = vmatpush1.msra.mxu0 0.0
    %172 = vmatprep.subr.mxu0 0.0
    %173 = vmatpush1.msra.mxu0 0.0
    %174 = vmatprep.subr.mxu0 0.0
    %175 = vmatpush1.msra.mxu0 0.0
    %176 = vmatprep.subr.mxu0 0.0
    %177 = vmatpush1.msra.mxu0 0.0
    %178 = vmatprep.subr.mxu0 0.0
    %179 = vmatpush1.msra.mxu0 0.0
    %180 = vmatprep.subr.mxu0 0.0
    %181 = vmatpush1.msra.mxu0 0.0
    %182 = vmatprep.subr.mxu0 0.0
    %183 = vmatpush1.msra.mxu0 0.0
    %184 = vmatprep.subr.mxu0 %v117
    %185 = vmatpush1.msra.mxu0 %v116
    %186 = vmatprep.subr.mxu0 %v111
    %187 = vmatpush1.msra.mxu0 %v110
    %188 = vmatprep.subr.mxu0 %v105
    %189 = vmatpush1.msra.mxu0 %v104
    %190 = vmatprep.subr.mxu0 %v99
    %191 = vmatpush1.msra.mxu0 %v98
    %192 = vmatprep.subr.mxu0 0.0
    %193 = vmatpush2.msra.mxu0 0.0
    %194 = vmatprep.subr.mxu0 0.0
    %195 = vmatpush2.msra.mxu0 0.0
    %196 = vmatprep.subr.mxu0 0.0
    %197 = vmatpush2.msra.mxu0 0.0
    %198 = vmatprep.subr.mxu0 0.0
    %199 = vmatpush2.msra.mxu0 0.0
    %200 = vmatprep.subr.mxu0 0.0
    %201 = vmatpush2.msra.mxu0 0.0
    %202 = vmatprep.subr.mxu0 0.0
    %203 = vmatpush2.msra.mxu0 0.0
    %204 = vmatprep.subr.mxu0 0.0
    %205 = vmatpush2.msra.mxu0 0.0
    %206 = vmatprep.subr.mxu0 0.0
    %207 = vmatpush2.msra.mxu0 0.0
    %208 = vmatprep.subr.mxu0 0.0
    %209 = vmatpush2.msra.mxu0 0.0
    %210 = vmatprep.subr.mxu0 0.0
    %211 = vmatpush2.msra.mxu0 0.0
    %212 = vmatprep.subr.mxu0 0.0
    %213 = vmatpush2.msra.mxu0 0.0
    %214 = vmatprep.subr.mxu0 0.0
    %215 = vmatpush2.msra.mxu0 0.0
    %216 = vmatprep.subr.mxu0 0.0
    %217 = vmatpush2.msra.mxu0 0.0
    %218 = vmatprep.subr.mxu0 0.0
    %219 = vmatpush2.msra.mxu0 0.0
    %220 = vmatprep.subr.mxu0 0.0
    %221 = vmatpush2.msra.mxu0 0.0
    %222 = vmatprep.subr.mxu0 0.0
    %223 = vmatpush2.msra.mxu0 0.0
    %224 = vmatprep.mubr.f32.mxu0 0.0
    %225 = vmatmul.mubr.f32.gmra.mxu0 %v155
    %v226 = vpop.f32.mrf.mxu0
    %v227 = vadd.f32 %v127, %v226
    %v228 = vpop.f32.mrf.mxu0
    %v229 = vadd.f32 %v131, %v228
    %230 = vmatprep.mubr.f32.mxu0 0.0
    %231 = vmatmul.mubr.f32.gmra.mxu0 %v158
    %v232 = vpop.f32.mrf.mxu0
    %v233 = vadd.f32 %v127, %v232
    %v234 = vpop.f32.mrf.mxu0
    %v235 = vadd.f32 %v131, %v234
    %236 = vdwg.mxu0
    %237 = vmatprep.subr.mxu0 0.0
    %238 = vmatpush1.msra.mxu0 0.0
    %239 = vmatprep.subr.mxu0 0.0
    %240 = vmatpush1.msra.mxu0 0.0
    %241 = vmatprep.subr.mxu0 0.0
    %242 = vmatpush1.msra.mxu0 0.0
    %243 = vmatprep.subr.mxu0 0.0
    %244 = vmatpush1.msra.mxu0 0.0
    %245 = vmatprep.subr.mxu0 0.0
    %246 = vmatpush1.msra.mxu0 0.0
    %247 = vmatprep.subr.mxu0 0.0
    %248 = vmatpush1.msra.mxu0 0.0
    %249 = vmatprep.subr.mxu0 0.0
    %250 = vmatpush1.msra.mxu0 0.0
    %251 = vmatprep.subr.mxu0 0.0
    %252 = vmatpush1.msra.mxu0 0.0
    %253 = vmatprep.subr.mxu0 0.0
    %254 = vmatpush1.msra.mxu0 0.0
    %255 = vmatprep.subr.mxu0 0.0
    %256 = vmatpush1.msra.mxu0 0.0
    %257 = vmatprep.subr.mxu0 0.0
    %258 = vmatpush1.msra.mxu0 0.0
    %259 = vmatprep.subr.mxu0 0.0
    %260 = vmatpush1.msra.mxu0 0.0
    %261 = vmatprep.subr.mxu0 %v119
    %262 = vmatpush1.msra.mxu0 %v118
    %263 = vmatprep.subr.mxu0 %v113
    %264 = vmatpush1.msra.mxu0 %v112
    %265 = vmatprep.subr.mxu0 %v107
    %266 = vmatpush1.msra.mxu0 %v106
    %267 = vmatprep.subr.mxu0 %v101
    %268 = vmatpush1.msra.mxu0 %v100
    %269 = vmatprep.subr.mxu0 0.0
    %270 = vmatpush2.msra.mxu0 0.0
    %271 = vmatprep.subr.mxu0 0.0
    %272 = vmatpush2.msra.mxu0 0.0
    %273 = vmatprep.subr.mxu0 0.0
    %274 = vmatpush2.msra.mxu0 0.0
    %275 = vmatprep.subr.mxu0 0.0
    %276 = vmatpush2.msra.mxu0 0.0
    %277 = vmatprep.subr.mxu0 0.0
    %278 = vmatpush2.msra.mxu0 0.0
    %279 = vmatprep.subr.mxu0 0.0
    %280 = vmatpush2.msra.mxu0 0.0
    %281 = vmatprep.subr.mxu0 0.0
    %282 = vmatpush2.msra.mxu0 0.0
    %283 = vmatprep.subr.mxu0 0.0
    %284 = vmatpush2.msra.mxu0 0.0
    %285 = vmatprep.subr.mxu0 0.0
    %286 = vmatpush2.msra.mxu0 0.0
    %287 = vmatprep.subr.mxu0 0.0
    %288 = vmatpush2.msra.mxu0 0.0
    %289 = vmatprep.subr.mxu0 0.0
    %290 = vmatpush2.msra.mxu0 0.0
    %291 = vmatprep.subr.mxu0 0.0
    %292 = vmatpush2.msra.mxu0 0.0
    %293 = vmatprep.subr.mxu0 0.0
    %294 = vmatpush2.msra.mxu0 0.0
    %295 = vmatprep.subr.mxu0 0.0
    %296 = vmatpush2.msra.mxu0 0.0
    %297 = vmatprep.subr.mxu0 0.0
    %298 = vmatpush2.msra.mxu0 0.0
    %299 = vmatprep.subr.mxu0 0.0
    %300 = vmatpush2.msra.mxu0 0.0
    %301 = vmatprep.mubr.f32.mxu0 0.0
    %302 = vmatmul.mubr.f32.gmra.mxu0 %v155
    %v303 = vpop.f32.mrf.mxu0
    %v304 = vadd.f32 %v135, %v303
    %v305 = vpop.f32.mrf.mxu0
    %v306 = vadd.f32 %v139, %v305
    %307 = vmatprep.mubr.f32.mxu0 0.0
    %308 = vmatmul.mubr.f32.gmra.mxu0 %v158
    %v309 = vpop.f32.mrf.mxu0
    %v310 = vadd.f32 %v135, %v309
    %v311 = vpop.f32.mrf.mxu0
    %v312 = vadd.f32 %v139, %v311
    %313 = vdwg.mxu0
    %314 = vmatprep.subr.mxu0 0.0
    %315 = vmatpush1.msra.mxu0 0.0
    %316 = vmatprep.subr.mxu0 0.0
    %317 = vmatpush1.msra.mxu0 0.0
    %318 = vmatprep.subr.mxu0 0.0
    %319 = vmatpush1.msra.mxu0 0.0
    %320 = vmatprep.subr.mxu0 0.0
    %321 = vmatpush1.msra.mxu0 0.0
    %322 = vmatprep.subr.mxu0 0.0
    %323 = vmatpush1.msra.mxu0 0.0
    %324 = vmatprep.subr.mxu0 0.0
    %325 = vmatpush1.msra.mxu0 0.0
    %326 = vmatprep.subr.mxu0 0.0
    %327 = vmatpush1.msra.mxu0 0.0
    %328 = vmatprep.subr.mxu0 0.0
    %329 = vmatpush1.msra.mxu0 0.0
    %330 = vmatprep.subr.mxu0 0.0
    %331 = vmatpush1.msra.mxu0 0.0
    %332 = vmatprep.subr.mxu0 0.0
    %333 = vmatpush1.msra.mxu0 0.0
    %334 = vmatprep.subr.mxu0 0.0
    %335 = vmatpush1.msra.mxu0 0.0
    %336 = vmatprep.subr.mxu0 0.0
    %337 = vmatpush1.msra.mxu0 0.0
    %338 = vmatprep.subr.mxu0 %v121
    %339 = vmatpush1.msra.mxu0 %v120
    %340 = vmatprep.subr.mxu0 %v115
    %341 = vmatpush1.msra.mxu0 %v114
    %342 = vmatprep.subr.mxu0 %v109
    %343 = vmatpush1.msra.mxu0 %v108
    %344 = vmatprep.subr.mxu0 %v103
    %345 = vmatpush1.msra.mxu0 %v102
    %346 = vmatprep.subr.mxu0 0.0
    %347 = vmatpush2.msra.mxu0 0.0
    %348 = vmatprep.subr.mxu0 0.0
    %349 = vmatpush2.msra.mxu0 0.0
    %350 = vmatprep.subr.mxu0 0.0
    %351 = vmatpush2.msra.mxu0 0.0
    %352 = vmatprep.subr.mxu0 0.0
    %353 = vmatpush2.msra.mxu0 0.0
    %354 = vmatprep.subr.mxu0 0.0
    %355 = vmatpush2.msra.mxu0 0.0
    %356 = vmatprep.subr.mxu0 0.0
    %357 = vmatpush2.msra.mxu0 0.0
    %358 = vmatprep.subr.mxu0 0.0
    %359 = vmatpush2.msra.mxu0 0.0
    %360 = vmatprep.subr.mxu0 0.0
    %361 = vmatpush2.msra.mxu0 0.0
    %362 = vmatprep.subr.mxu0 0.0
    %363 = vmatpush2.msra.mxu0 0.0
    %364 = vmatprep.subr.mxu0 0.0
    %365 = vmatpush2.msra.mxu0 0.0
    %366 = vmatprep.subr.mxu0 0.0
    %367 = vmatpush2.msra.mxu0 0.0
    %368 = vmatprep.subr.mxu0 0.0
    %369 = vmatpush2.msra.mxu0 0.0
    %370 = vmatprep.subr.mxu0 0.0
    %371 = vmatpush2.msra.mxu0 0.0
    %372 = vmatprep.subr.mxu0 0.0
    %373 = vmatpush2.msra.mxu0 0.0
    %374 = vmatprep.subr.mxu0 0.0
    %375 = vmatpush2.msra.mxu0 0.0
    %376 = vmatprep.subr.mxu0 0.0
    %377 = vmatpush2.msra.mxu0 0.0
    %378 = vmatprep.mubr.f32.mxu0 0.0
    %379 = vmatmul.mubr.f32.gmra.mxu0 %v155
    %v380 = vpop.f32.mrf.mxu0
    %v381 = vadd.f32 %v143, %v380
    %v382 = vpop.f32.mrf.mxu0
    %v383 = vadd.f32 %v147, %v382
    %384 = vmatprep.mubr.f32.mxu0 0.0
    %385 = vmatmul.mubr.f32.gmra.mxu0 %v158
    %v386 = vpop.f32.mrf.mxu0
    %v387 = vadd.f32 %v143, %v386
    %v388 = vpop.f32.mrf.mxu0
    %v389 = vadd.f32 %v147, %v388
    %390 = vdwg.mxu0
    %v392 = vsel %vm52, %v227, 0
    %v395 = vsel %vm52, %v233, 0
    %v398 = vsel %vm52, %v304, 0
    %v401 = vsel %vm52, %v310, 0
    %403 = vmatprep.subr.mxu0 0.0
    %404 = vmatpush1.xpose.msra.mxu0 0.0
    %405 = vmatprep.subr.mxu0 0.0
    %406 = vmatpush1.xpose.msra.mxu0 0.0
    %407 = vmatprep.subr.mxu0 0.0
    %408 = vmatpush1.xpose.msra.mxu0 0.0
    %409 = vmatprep.subr.mxu0 0.0
    %410 = vmatpush1.xpose.msra.mxu0 0.0
    %411 = vmatprep.subr.mxu0 0.0
    %412 = vmatpush1.xpose.msra.mxu0 0.0
    %413 = vmatprep.subr.mxu0 0.0
    %414 = vmatpush1.xpose.msra.mxu0 0.0
    %415 = vmatprep.subr.mxu0 0.0
    %416 = vmatpush1.xpose.msra.mxu0 0.0
    %417 = vmatprep.subr.mxu0 0.0
    %418 = vmatpush1.xpose.msra.mxu0 0.0
    %419 = vmatprep.subr.mxu0 0.0
    %420 = vmatpush1.xpose.msra.mxu0 0.0
    %421 = vmatprep.subr.mxu0 0.0
    %422 = vmatpush1.xpose.msra.mxu0 0.0
    %423 = vmatprep.subr.mxu0 0.0
    %424 = vmatpush1.xpose.msra.mxu0 0.0
    %425 = vmatprep.subr.mxu0 0.0
    %426 = vmatpush1.xpose.msra.mxu0 0.0
    %427 = vmatprep.subr.mxu0 0.0
    %428 = vmatpush1.xpose.msra.mxu0 0.0
    %429 = vmatprep.subr.mxu0 0.0
    %430 = vmatpush1.xpose.msra.mxu0 0.0
    %431 = vmatprep.subr.mxu0 0.0
    %432 = vmatpush1.xpose.msra.mxu0 %v401
    %433 = vmatprep.subr.mxu0 0.0
    %434 = vmatpush1.xpose.msra.mxu0 %v398
    %435 = vmatprep.subr.mxu0 0.0
    %436 = vmatpush2.xpose.msra.mxu0 0.0
    %437 = vmatprep.subr.mxu0 0.0
    %438 = vmatpush2.xpose.msra.mxu0 0.0
    %439 = vmatprep.subr.mxu0 0.0
    %440 = vmatpush2.xpose.msra.mxu0 0.0
    %441 = vmatprep.subr.mxu0 0.0
    %442 = vmatpush2.xpose.msra.mxu0 0.0
    %443 = vmatprep.subr.mxu0 0.0
    %444 = vmatpush2.xpose.msra.mxu0 0.0
    %445 = vmatprep.subr.mxu0 0.0
    %446 = vmatpush2.xpose.msra.mxu0 0.0
    %447 = vmatprep.subr.mxu0 0.0
    %448 = vmatpush2.xpose.msra.mxu0 0.0
    %449 = vmatprep.subr.mxu0 0.0
    %450 = vmatpush2.xpose.msra.mxu0 0.0
    %451 = vmatprep.subr.mxu0 0.0
    %452 = vmatpush2.xpose.msra.mxu0 0.0
    %453 = vmatprep.subr.mxu0 0.0
    %454 = vmatpush2.xpose.msra.mxu0 0.0
    %455 = vmatprep.subr.mxu0 0.0
    %456 = vmatpush2.xpose.msra.mxu0 0.0
    %457 = vmatprep.subr.mxu0 0.0
    %458 = vmatpush2.xpose.msra.mxu0 0.0
    %459 = vmatprep.subr.mxu0 0.0
    %460 = vmatpush2.xpose.msra.mxu0 0.0
    %461 = vmatprep.subr.mxu0 0.0
    %462 = vmatpush2.xpose.msra.mxu0 0.0
    %463 = vmatprep.subr.mxu0 0.0
    %464 = vmatpush2.xpose.msra.mxu0 0.0
    %465 = vmatprep.subr.mxu0 0.0
    %466 = vmatpush2.xpose.msra.mxu0 0.0
    %467 = vmatprep.mubr.f32.mxu0 0.0
    %468 = vmatmul.mubr.f32.gmra.mxu0 %v392
    %v469 = vpop.f32.mrf.mxu0
    %v470 = vadd.f32 0.0, %v469
    %v471 = vpop.f32.mrf.mxu0
    %472 = vmatprep.mubr.f32.mxu0 0.0
    %473 = vmatmul.mubr.f32.gmra.mxu0 %v395
    %v474 = vpop.f32.mrf.mxu0
    %v475 = vadd.f32 0.0, %v474
    %v476 = vpop.f32.mrf.mxu0
    %477 = vdwg.mxu0
    %v478 = vmul.f32 %v470, 0.17677669
    %v479 = vmul.f32 %v475, 0.17677669
    %v480 = vadd.f32 %v478, %v96
    %v481 = vadd.f32 %v479, %v97
    %vm482 = vcmask 130048
    %v483 = vsel %vm482, %v480, -inf
    %484 = vmax.xlane.f32.xlu0 %v483
    %v485 = vpop.xlane.xlu0 %484
    %v486 = vsel %vm482, %v481, -inf
    %487 = vmax.xlane.f32.xlu0 %v486
    %v488 = vpop.xlane.xlu0 %487
    %v489 = vsub.f32 %v480, %v485
    %v490 = vsub.f32 %v481, %v488
    %v491 = vmul.f32 %v489, 1.442695
    %v492 = vpow.pop %v491
    %v493 = vmul.f32 %v490, 1.442695
    %v494 = vpow.pop %v493
    %v495 = vsel %vm482, %v492, 0.0
    %496 = vadd.xlane.f32.xlu0 %v495
    %v497 = vpop.xlane.xlu0 %496
    %v498 = vsel %vm482, %v494, 0.0
    %499 = vadd.xlane.f32.xlu0 %v498
    %v500 = vpop.xlane.xlu0 %499
    %v501 = vrcp.pop %v497
    %v502 = vrcp.pop %v500
    %v503 = vmul.f32 %v492, %v501
    %v504 = vmul.f32 %v494, %v502
    %v506 = vsel %vm482, %v503, 0
    %v509 = vsel %vm482, %v504, 0
    %511 = vmatprep.subr.mxu0 0.0
    %512 = vmatpush1.msra.mxu0 0.0
    %513 = vmatprep.subr.mxu0 0.0
    %514 = vmatpush1.msra.mxu0 0.0
    %515 = vmatprep.subr.mxu0 0.0
    %516 = vmatpush1.msra.mxu0 0.0
    %517 = vmatprep.subr.mxu0 0.0
    %518 = vmatpush1.msra.mxu0 0.0
    %519 = vmatprep.subr.mxu0 0.0
    %520 = vmatpush1.msra.mxu0 0.0
    %521 = vmatprep.subr.mxu0 0.0
    %522 = vmatpush1.msra.mxu0 0.0
    %523 = vmatprep.subr.mxu0 0.0
    %524 = vmatpush1.msra.mxu0 0.0
    %525 = vmatprep.subr.mxu0 0.0
    %526 = vmatpush1.msra.mxu0 0.0
    %527 = vmatprep.subr.mxu0 0.0
    %528 = vmatpush1.msra.mxu0 0.0
    %529 = vmatprep.subr.mxu0 0.0
    %530 = vmatpush1.msra.mxu0 0.0
    %531 = vmatprep.subr.mxu0 0.0
    %532 = vmatpush1.msra.mxu0 0.0
    %533 = vmatprep.subr.mxu0 0.0
    %534 = vmatpush1.msra.mxu0 0.0
    %535 = vmatprep.subr.mxu0 0.0
    %536 = vmatpush1.msra.mxu0 0.0
    %537 = vmatprep.subr.mxu0 0.0
    %538 = vmatpush1.msra.mxu0 0.0
    %539 = vmatprep.subr.mxu0 0.0
    %540 = vmatpush1.msra.mxu0 %v387
    %541 = vmatprep.subr.mxu0 0.0
    %542 = vmatpush1.msra.mxu0 %v381
    %543 = vmatprep.subr.mxu0 0.0
    %544 = vmatpush2.msra.mxu0 0.0
    %545 = vmatprep.subr.mxu0 0.0
    %546 = vmatpush2.msra.mxu0 0.0
    %547 = vmatprep.subr.mxu0 0.0
    %548 = vmatpush2.msra.mxu0 0.0
    %549 = vmatprep.subr.mxu0 0.0
    %550 = vmatpush2.msra.mxu0 0.0
    %551 = vmatprep.subr.mxu0 0.0
    %552 = vmatpush2.msra.mxu0 0.0
    %553 = vmatprep.subr.mxu0 0.0
    %554 = vmatpush2.msra.mxu0 0.0
    %555 = vmatprep.subr.mxu0 0.0
    %556 = vmatpush2.msra.mxu0 0.0
    %557 = vmatprep.subr.mxu0 0.0
    %558 = vmatpush2.msra.mxu0 0.0
    %559 = vmatprep.subr.mxu0 0.0
    %560 = vmatpush2.msra.mxu0 0.0
    %561 = vmatprep.subr.mxu0 0.0
    %562 = vmatpush2.msra.mxu0 0.0
    %563 = vmatprep.subr.mxu0 0.0
    %564 = vmatpush2.msra.mxu0 0.0
    %565 = vmatprep.subr.mxu0 0.0
    %566 = vmatpush2.msra.mxu0 0.0
    %567 = vmatprep.subr.mxu0 0.0
    %568 = vmatpush2.msra.mxu0 0.0
    %569 = vmatprep.subr.mxu0 0.0
    %570 = vmatpush2.msra.mxu0 0.0
    %571 = vmatprep.subr.mxu0 0.0
    %572 = vmatpush2.msra.mxu0 0.0
    %573 = vmatprep.subr.mxu0 0.0
    %574 = vmatpush2.msra.mxu0 0.0
    %575 = vmatprep.mubr.f32.mxu0 0.0
    %576 = vmatmul.mubr.f32.gmra.mxu0 %v506
    %v577 = vpop.f32.mrf.mxu0
    %v578 = vadd.f32 0.0, %v577
    %v579 = vpop.f32.mrf.mxu0
    %580 = vmatprep.mubr.f32.mxu0 0.0
    %581 = vmatmul.mubr.f32.gmra.mxu0 %v509
    %v582 = vpop.f32.mrf.mxu0
    %v583 = vadd.f32 0.0, %v582
    %v584 = vpop.f32.mrf.mxu0
    %585 = vdwg.mxu0
    %586 = vrot.lane.b32.xlu0 %v227, 96
    %v587 = vpop.permute.xlu0 %586
    %588 = vrot.lane.b32.xlu0 %v233, 96
    %v589 = vpop.permute.xlu0 %588
    %590 = vrot.lane.b32.xlu0 %v304, 96
    %v591 = vpop.permute.xlu0 %590
    %592 = vrot.lane.b32.xlu0 %v310, 96
    %v593 = vpop.permute.xlu0 %592
    %v594 = vsel %vm52, %v587, 0
    %v596 = vsel %vm52, %v589, 0
    %v598 = vsel %vm52, %v591, 0
    %v600 = vsel %vm52, %v593, 0
    %602 = vmatprep.subr.mxu0 0.0
    %603 = vmatpush1.xpose.msra.mxu0 0.0
    %604 = vmatprep.subr.mxu0 0.0
    %605 = vmatpush1.xpose.msra.mxu0 0.0
    %606 = vmatprep.subr.mxu0 0.0
    %607 = vmatpush1.xpose.msra.mxu0 0.0
    %608 = vmatprep.subr.mxu0 0.0
    %609 = vmatpush1.xpose.msra.mxu0 0.0
    %610 = vmatprep.subr.mxu0 0.0
    %611 = vmatpush1.xpose.msra.mxu0 0.0
    %612 = vmatprep.subr.mxu0 0.0
    %613 = vmatpush1.xpose.msra.mxu0 0.0
    %614 = vmatprep.subr.mxu0 0.0
    %615 = vmatpush1.xpose.msra.mxu0 0.0
    %616 = vmatprep.subr.mxu0 0.0
    %617 = vmatpush1.xpose.msra.mxu0 0.0
    %618 = vmatprep.subr.mxu0 0.0
    %619 = vmatpush1.xpose.msra.mxu0 0.0
    %620 = vmatprep.subr.mxu0 0.0
    %621 = vmatpush1.xpose.msra.mxu0 0.0
    %622 = vmatprep.subr.mxu0 0.0
    %623 = vmatpush1.xpose.msra.mxu0 0.0
    %624 = vmatprep.subr.mxu0 0.0
    %625 = vmatpush1.xpose.msra.mxu0 0.0
    %626 = vmatprep.subr.mxu0 0.0
    %627 = vmatpush1.xpose.msra.mxu0 0.0
    %628 = vmatprep.subr.mxu0 0.0
    %629 = vmatpush1.xpose.msra.mxu0 0.0
    %630 = vmatprep.subr.mxu0 0.0
    %631 = vmatpush1.xpose.msra.mxu0 %v600
    %632 = vmatprep.subr.mxu0 0.0
    %633 = vmatpush1.xpose.msra.mxu0 %v598
    %634 = vmatprep.subr.mxu0 0.0
    %635 = vmatpush2.xpose.msra.mxu0 0.0
    %636 = vmatprep.subr.mxu0 0.0
    %637 = vmatpush2.xpose.msra.mxu0 0.0
    %638 = vmatprep.subr.mxu0 0.0
    %639 = vmatpush2.xpose.msra.mxu0 0.0
    %640 = vmatprep.subr.mxu0 0.0
    %641 = vmatpush2.xpose.msra.mxu0 0.0
    %642 = vmatprep.subr.mxu0 0.0
    %643 = vmatpush2.xpose.msra.mxu0 0.0
    %644 = vmatprep.subr.mxu0 0.0
    %645 = vmatpush2.xpose.msra.mxu0 0.0
    %646 = vmatprep.subr.mxu0 0.0
    %647 = vmatpush2.xpose.msra.mxu0 0.0
    %648 = vmatprep.subr.mxu0 0.0
    %649 = vmatpush2.xpose.msra.mxu0 0.0
    %650 = vmatprep.subr.mxu0 0.0
    %651 = vmatpush2.xpose.msra.mxu0 0.0
    %652 = vmatprep.subr.mxu0 0.0
    %653 = vmatpush2.xpose.msra.mxu0 0.0
    %654 = vmatprep.subr.mxu0 0.0
    %655 = vmatpush2.xpose.msra.mxu0 0.0
    %656 = vmatprep.subr.mxu0 0.0
    %657 = vmatpush2.xpose.msra.mxu0 0.0
    %658 = vmatprep.subr.mxu0 0.0
    %659 = vmatpush2.xpose.msra.mxu0 0.0
    %660 = vmatprep.subr.mxu0 0.0
    %661 = vmatpush2.xpose.msra.mxu0 0.0
    %662 = vmatprep.subr.mxu0 0.0
    %663 = vmatpush2.xpose.msra.mxu0 0.0
    %664 = vmatprep.subr.mxu0 0.0
    %665 = vmatpush2.xpose.msra.mxu0 0.0
    %666 = vmatprep.mubr.f32.mxu0 0.0
    %667 = vmatmul.mubr.f32.gmra.mxu0 %v594
    %v668 = vpop.f32.mrf.mxu0
    %v669 = vadd.f32 0.0, %v668
    %v670 = vpop.f32.mrf.mxu0
    %671 = vmatprep.mubr.f32.mxu0 0.0
    %672 = vmatmul.mubr.f32.gmra.mxu0 %v596
    %v673 = vpop.f32.mrf.mxu0
    %v674 = vadd.f32 0.0, %v673
    %v675 = vpop.f32.mrf.mxu0
    %676 = vdwg.mxu0
    %v677 = vmul.f32 %v669, 0.17677669
    %v678 = vmul.f32 %v674, 0.17677669
    %v679 = vadd.f32 %v677, %v96
    %v680 = vadd.f32 %v678, %v97
    %v681 = vsel %vm482, %v679, -inf
    %682 = vmax.xlane.f32.xlu0 %v681
    %v683 = vpop.xlane.xlu0 %682
    %v684 = vsel %vm482, %v680, -inf
    %685 = vmax.xlane.f32.xlu0 %v684
    %v686 = vpop.xlane.xlu0 %685
    %v687 = vsub.f32 %v679, %v683
    %v688 = vsub.f32 %v680, %v686
    %v689 = vmul.f32 %v687, 1.442695
    %v690 = vpow.pop %v689
    %v691 = vmul.f32 %v688, 1.442695
    %v692 = vpow.pop %v691
    %v693 = vsel %vm482, %v690, 0.0
    %694 = vadd.xlane.f32.xlu0 %v693
    %v695 = vpop.xlane.xlu0 %694
    %v696 = vsel %vm482, %v692, 0.0
    %697 = vadd.xlane.f32.xlu0 %v696
    %v698 = vpop.xlane.xlu0 %697
    %v699 = vrcp.pop %v695
    %v700 = vrcp.pop %v698
    %v701 = vmul.f32 %v690, %v699
    %v702 = vmul.f32 %v692, %v700
    %705 = vrot.lane.b32.xlu0 %v381, 96
    %v706 = vpop.permute.xlu0 %705
    %707 = vrot.lane.b32.xlu0 %v387, 96
    %v708 = vpop.permute.xlu0 %707
    %v712 = vsel %vm482, %v701, 0
    %v715 = vsel %vm482, %v702, 0
    %717 = vmatprep.subr.mxu0 0.0
    %718 = vmatpush1.msra.mxu0 0.0
    %719 = vmatprep.subr.mxu0 0.0
    %720 = vmatpush1.msra.mxu0 0.0
    %721 = vmatprep.subr.mxu0 0.0
    %722 = vmatpush1.msra.mxu0 0.0
    %723 = vmatprep.subr.mxu0 0.0
    %724 = vmatpush1.msra.mxu0 0.0
    %725 = vmatprep.subr.mxu0 0.0
    %726 = vmatpush1.msra.mxu0 0.0
    %727 = vmatprep.subr.mxu0 0.0
    %728 = vmatpush1.msra.mxu0 0.0
    %729 = vmatprep.subr.mxu0 0.0
    %730 = vmatpush1.msra.mxu0 0.0
    %731 = vmatprep.subr.mxu0 0.0
    %732 = vmatpush1.msra.mxu0 0.0
    %733 = vmatprep.subr.mxu0 0.0
    %734 = vmatpush1.msra.mxu0 0.0
    %735 = vmatprep.subr.mxu0 0.0
    %736 = vmatpush1.msra.mxu0 0.0
    %737 = vmatprep.subr.mxu0 0.0
    %738 = vmatpush1.msra.mxu0 0.0
    %739 = vmatprep.subr.mxu0 0.0
    %740 = vmatpush1.msra.mxu0 0.0
    %741 = vmatprep.subr.mxu0 0.0
    %742 = vmatpush1.msra.mxu0 0.0
    %743 = vmatprep.subr.mxu0 0.0
    %744 = vmatpush1.msra.mxu0 0.0
    %745 = vmatprep.subr.mxu0 0.0
    %746 = vmatpush1.msra.mxu0 %v708
    %747 = vmatprep.subr.mxu0 0.0
    %748 = vmatpush1.msra.mxu0 %v706
    %749 = vmatprep.subr.mxu0 0.0
    %750 = vmatpush2.msra.mxu0 0.0
    %751 = vmatprep.subr.mxu0 0.0
    %752 = vmatpush2.msra.mxu0 0.0
    %753 = vmatprep.subr.mxu0 0.0
    %754 = vmatpush2.msra.mxu0 0.0
    %755 = vmatprep.subr.mxu0 0.0
    %756 = vmatpush2.msra.mxu0 0.0
    %757 = vmatprep.subr.mxu0 0.0
    %758 = vmatpush2.msra.mxu0 0.0
    %759 = vmatprep.subr.mxu0 0.0
    %760 = vmatpush2.msra.mxu0 0.0
    %761 = vmatprep.subr.mxu0 0.0
    %762 = vmatpush2.msra.mxu0 0.0
    %763 = vmatprep.subr.mxu0 0.0
    %764 = vmatpush2.msra.mxu0 0.0
    %765 = vmatprep.subr.mxu0 0.0
    %766 = vmatpush2.msra.mxu0 0.0
    %767 = vmatprep.subr.mxu0 0.0
    %768 = vmatpush2.msra.mxu0 0.0
    %769 = vmatprep.subr.mxu0 0.0
    %770 = vmatpush2.msra.mxu0 0.0
    %771 = vmatprep.subr.mxu0 0.0
    %772 = vmatpush2.msra.mxu0 0.0
    %773 = vmatprep.subr.mxu0 0.0
    %774 = vmatpush2.msra.mxu0 0.0
    %775 = vmatprep.subr.mxu0 0.0
    %776 = vmatpush2.msra.mxu0 0.0
    %777 = vmatprep.subr.mxu0 0.0
    %778 = vmatpush2.msra.mxu0 0.0
    %779 = vmatprep.subr.mxu0 0.0
    %780 = vmatpush2.msra.mxu0 0.0
    %781 = vmatprep.mubr.f32.mxu0 0.0
    %782 = vmatmul.mubr.f32.gmra.mxu0 %v712
    %v783 = vpop.f32.mrf.mxu0
    %v784 = vadd.f32 0.0, %v783
    %v785 = vpop.f32.mrf.mxu0
    %786 = vmatprep.mubr.f32.mxu0 0.0
    %787 = vmatmul.mubr.f32.gmra.mxu0 %v715
    %v788 = vpop.f32.mrf.mxu0
    %v789 = vadd.f32 0.0, %v788
    %v790 = vpop.f32.mrf.mxu0
    %791 = vdwg.mxu0
    %792 = vrot.lane.b32.xlu0 %v227, 64
    %v793 = vpop.permute.xlu0 %792
    %794 = vrot.lane.b32.xlu0 %v233, 64
    %v795 = vpop.permute.xlu0 %794
    %796 = vrot.lane.b32.xlu0 %v304, 64
    %v797 = vpop.permute.xlu0 %796
    %798 = vrot.lane.b32.xlu0 %v310, 64
    %v799 = vpop.permute.xlu0 %798
    %v800 = vsel %vm52, %v793, 0
    %v802 = vsel %vm52, %v795, 0
    %v804 = vsel %vm52, %v797, 0
    %v806 = vsel %vm52, %v799, 0
    %808 = vmatprep.subr.mxu0 0.0
    %809 = vmatpush1.xpose.msra.mxu0 0.0
    %810 = vmatprep.subr.mxu0 0.0
    %811 = vmatpush1.xpose.msra.mxu0 0.0
    %812 = vmatprep.subr.mxu0 0.0
    %813 = vmatpush1.xpose.msra.mxu0 0.0
    %814 = vmatprep.subr.mxu0 0.0
    %815 = vmatpush1.xpose.msra.mxu0 0.0
    %816 = vmatprep.subr.mxu0 0.0
    %817 = vmatpush1.xpose.msra.mxu0 0.0
    %818 = vmatprep.subr.mxu0 0.0
    %819 = vmatpush1.xpose.msra.mxu0 0.0
    %820 = vmatprep.subr.mxu0 0.0
    %821 = vmatpush1.xpose.msra.mxu0 0.0
    %822 = vmatprep.subr.mxu0 0.0
    %823 = vmatpush1.xpose.msra.mxu0 0.0
    %824 = vmatprep.subr.mxu0 0.0
    %825 = vmatpush1.xpose.msra.mxu0 0.0
    %826 = vmatprep.subr.mxu0 0.0
    %827 = vmatpush1.xpose.msra.mxu0 0.0
    %828 = vmatprep.subr.mxu0 0.0
    %829 = vmatpush1.xpose.msra.mxu0 0.0
    %830 = vmatprep.subr.mxu0 0.0
    %831 = vmatpush1.xpose.msra.mxu0 0.0
    %832 = vmatprep.subr.mxu0 0.0
    %833 = vmatpush1.xpose.msra.mxu0 0.0
    %834 = vmatprep.subr.mxu0 0.0
    %835 = vmatpush1.xpose.msra.mxu0 0.0
    %836 = vmatprep.subr.mxu0 0.0
    %837 = vmatpush1.xpose.msra.mxu0 %v806
    %838 = vmatprep.subr.mxu0 0.0
    %839 = vmatpush1.xpose.msra.mxu0 %v804
    %840 = vmatprep.subr.mxu0 0.0
    %841 = vmatpush2.xpose.msra.mxu0 0.0
    %842 = vmatprep.subr.mxu0 0.0
    %843 = vmatpush2.xpose.msra.mxu0 0.0
    %844 = vmatprep.subr.mxu0 0.0
    %845 = vmatpush2.xpose.msra.mxu0 0.0
    %846 = vmatprep.subr.mxu0 0.0
    %847 = vmatpush2.xpose.msra.mxu0 0.0
    %848 = vmatprep.subr.mxu0 0.0
    %849 = vmatpush2.xpose.msra.mxu0 0.0
    %850 = vmatprep.subr.mxu0 0.0
    %851 = vmatpush2.xpose.msra.mxu0 0.0
    %852 = vmatprep.subr.mxu0 0.0
    %853 = vmatpush2.xpose.msra.mxu0 0.0
    %854 = vmatprep.subr.mxu0 0.0
    %855 = vmatpush2.xpose.msra.mxu0 0.0
    %856 = vmatprep.subr.mxu0 0.0
    %857 = vmatpush2.xpose.msra.mxu0 0.0
    %858 = vmatprep.subr.mxu0 0.0
    %859 = vmatpush2.xpose.msra.mxu0 0.0
    %860 = vmatprep.subr.mxu0 0.0
    %861 = vmatpush2.xpose.msra.mxu0 0.0
    %862 = vmatprep.subr.mxu0 0.0
    %863 = vmatpush2.xpose.msra.mxu0 0.0
    %864 = vmatprep.subr.mxu0 0.0
    %865 = vmatpush2.xpose.msra.mxu0 0.0
    %866 = vmatprep.subr.mxu0 0.0
    %867 = vmatpush2.xpose.msra.mxu0 0.0
    %868 = vmatprep.subr.mxu0 0.0
    %869 = vmatpush2.xpose.msra.mxu0 0.0
    %870 = vmatprep.subr.mxu0 0.0
    %871 = vmatpush2.xpose.msra.mxu0 0.0
    %872 = vmatprep.mubr.f32.mxu0 0.0
    %873 = vmatmul.mubr.f32.gmra.mxu0 %v800
    %v874 = vpop.f32.mrf.mxu0
    %v875 = vadd.f32 0.0, %v874
    %v876 = vpop.f32.mrf.mxu0
    %877 = vmatprep.mubr.f32.mxu0 0.0
    %878 = vmatmul.mubr.f32.gmra.mxu0 %v802
    %v879 = vpop.f32.mrf.mxu0
    %v880 = vadd.f32 0.0, %v879
    %v881 = vpop.f32.mrf.mxu0
    %882 = vdwg.mxu0
    %v883 = vmul.f32 %v875, 0.17677669
    %v884 = vmul.f32 %v880, 0.17677669
    %v885 = vadd.f32 %v883, %v96
    %v886 = vadd.f32 %v884, %v97
    %v887 = vsel %vm482, %v885, -inf
    %888 = vmax.xlane.f32.xlu0 %v887
    %v889 = vpop.xlane.xlu0 %888
    %v890 = vsel %vm482, %v886, -inf
    %891 = vmax.xlane.f32.xlu0 %v890
    %v892 = vpop.xlane.xlu0 %891
    %v893 = vsub.f32 %v885, %v889
    %v894 = vsub.f32 %v886, %v892
    %v895 = vmul.f32 %v893, 1.442695
    %v896 = vpow.pop %v895
    %v897 = vmul.f32 %v894, 1.442695
    %v898 = vpow.pop %v897
    %v899 = vsel %vm482, %v896, 0.0
    %900 = vadd.xlane.f32.xlu0 %v899
    %v901 = vpop.xlane.xlu0 %900
    %v902 = vsel %vm482, %v898, 0.0
    %903 = vadd.xlane.f32.xlu0 %v902
    %v904 = vpop.xlane.xlu0 %903
    %v905 = vrcp.pop %v901
    %v906 = vrcp.pop %v904
    %v907 = vmul.f32 %v896, %v905
    %v908 = vmul.f32 %v898, %v906
    %909 = vrot.lane.b32.xlu0 %v381, 64
    %v910 = vpop.permute.xlu0 %909
    %911 = vrot.lane.b32.xlu0 %v387, 64
    %v912 = vpop.permute.xlu0 %911
    %v916 = vsel %vm482, %v907, 0
    %v919 = vsel %vm482, %v908, 0
    %921 = vmatprep.subr.mxu0 0.0
    %922 = vmatpush1.msra.mxu0 0.0
    %923 = vmatprep.subr.mxu0 0.0
    %924 = vmatpush1.msra.mxu0 0.0
    %925 = vmatprep.subr.mxu0 0.0
    %926 = vmatpush1.msra.mxu0 0.0
    %927 = vmatprep.subr.mxu0 0.0
    %928 = vmatpush1.msra.mxu0 0.0
    %929 = vmatprep.subr.mxu0 0.0
    %930 = vmatpush1.msra.mxu0 0.0
    %931 = vmatprep.subr.mxu0 0.0
    %932 = vmatpush1.msra.mxu0 0.0
    %933 = vmatprep.subr.mxu0 0.0
    %934 = vmatpush1.msra.mxu0 0.0
    %935 = vmatprep.subr.mxu0 0.0
    %936 = vmatpush1.msra.mxu0 0.0
    %937 = vmatprep.subr.mxu0 0.0
    %938 = vmatpush1.msra.mxu0 0.0
    %939 = vmatprep.subr.mxu0 0.0
    %940 = vmatpush1.msra.mxu0 0.0
    %941 = vmatprep.subr.mxu0 0.0
    %942 = vmatpush1.msra.mxu0 0.0
    %943 = vmatprep.subr.mxu0 0.0
    %944 = vmatpush1.msra.mxu0 0.0
    %945 = vmatprep.subr.mxu0 0.0
    %946 = vmatpush1.msra.mxu0 0.0
    %947 = vmatprep.subr.mxu0 0.0
    %948 = vmatpush1.msra.mxu0 0.0
    %949 = vmatprep.subr.mxu0 0.0
    %950 = vmatpush1.msra.mxu0 %v912
    %951 = vmatprep.subr.mxu0 0.0
    %952 = vmatpush1.msra.mxu0 %v910
    %953 = vmatprep.subr.mxu0 0.0
    %954 = vmatpush2.msra.mxu0 0.0
    %955 = vmatprep.subr.mxu0 0.0
    %956 = vmatpush2.msra.mxu0 0.0
    %957 = vmatprep.subr.mxu0 0.0
    %958 = vmatpush2.msra.mxu0 0.0
    %959 = vmatprep.subr.mxu0 0.0
    %960 = vmatpush2.msra.mxu0 0.0
    %961 = vmatprep.subr.mxu0 0.0
    %962 = vmatpush2.msra.mxu0 0.0
    %963 = vmatprep.subr.mxu0 0.0
    %964 = vmatpush2.msra.mxu0 0.0
    %965 = vmatprep.subr.mxu0 0.0
    %966 = vmatpush2.msra.mxu0 0.0
    %967 = vmatprep.subr.mxu0 0.0
    %968 = vmatpush2.msra.mxu0 0.0
    %969 = vmatprep.subr.mxu0 0.0
    %970 = vmatpush2.msra.mxu0 0.0
    %971 = vmatprep.subr.mxu0 0.0
    %972 = vmatpush2.msra.mxu0 0.0
    %973 = vmatprep.subr.mxu0 0.0
    %974 = vmatpush2.msra.mxu0 0.0
    %975 = vmatprep.subr.mxu0 0.0
    %976 = vmatpush2.msra.mxu0 0.0
    %977 = vmatprep.subr.mxu0 0.0
    %978 = vmatpush2.msra.mxu0 0.0
    %979 = vmatprep.subr.mxu0 0.0
    %980 = vmatpush2.msra.mxu0 0.0
    %981 = vmatprep.subr.mxu0 0.0
    %982 = vmatpush2.msra.mxu0 0.0
    %983 = vmatprep.subr.mxu0 0.0
    %984 = vmatpush2.msra.mxu0 0.0
    %985 = vmatprep.mubr.f32.mxu0 0.0
    %986 = vmatmul.mubr.f32.gmra.mxu0 %v916
    %v987 = vpop.f32.mrf.mxu0
    %v988 = vadd.f32 0.0, %v987
    %v989 = vpop.f32.mrf.mxu0
    %990 = vmatprep.mubr.f32.mxu0 0.0
    %991 = vmatmul.mubr.f32.gmra.mxu0 %v919
    %v992 = vpop.f32.mrf.mxu0
    %v993 = vadd.f32 0.0, %v992
    %v994 = vpop.f32.mrf.mxu0
    %995 = vdwg.mxu0
    %996 = vrot.lane.b32.xlu0 %v227, 32
    %v997 = vpop.permute.xlu0 %996
    %998 = vrot.lane.b32.xlu0 %v233, 32
    %v999 = vpop.permute.xlu0 %998
    %1000 = vrot.lane.b32.xlu0 %v304, 32
    %v1001 = vpop.permute.xlu0 %1000
    %1002 = vrot.lane.b32.xlu0 %v310, 32
    %v1003 = vpop.permute.xlu0 %1002
    %v1004 = vsel %vm52, %v997, 0
    %v1006 = vsel %vm52, %v999, 0
    %v1008 = vsel %vm52, %v1001, 0
    %v1010 = vsel %vm52, %v1003, 0
    %1012 = vmatprep.subr.mxu0 0.0
    %1013 = vmatpush1.xpose.msra.mxu0 0.0
    %1014 = vmatprep.subr.mxu0 0.0
    %1015 = vmatpush1.xpose.msra.mxu0 0.0
    %1016 = vmatprep.subr.mxu0 0.0
    %1017 = vmatpush1.xpose.msra.mxu0 0.0
    %1018 = vmatprep.subr.mxu0 0.0
    %1019 = vmatpush1.xpose.msra.mxu0 0.0
    %1020 = vmatprep.subr.mxu0 0.0
    %1021 = vmatpush1.xpose.msra.mxu0 0.0
    %1022 = vmatprep.subr.mxu0 0.0
    %1023 = vmatpush1.xpose.msra.mxu0 0.0
    %1024 = vmatprep.subr.mxu0 0.0
    %1025 = vmatpush1.xpose.msra.mxu0 0.0
    %1026 = vmatprep.subr.mxu0 0.0
    %1027 = vmatpush1.xpose.msra.mxu0 0.0
    %1028 = vmatprep.subr.mxu0 0.0
    %1029 = vmatpush1.xpose.msra.mxu0 0.0
    %1030 = vmatprep.subr.mxu0 0.0
    %1031 = vmatpush1.xpose.msra.mxu0 0.0
    %1032 = vmatprep.subr.mxu0 0.0
    %1033 = vmatpush1.xpose.msra.mxu0 0.0
    %1034 = vmatprep.subr.mxu0 0.0
    %1035 = vmatpush1.xpose.msra.mxu0 0.0
    %1036 = vmatprep.subr.mxu0 0.0
    %1037 = vmatpush1.xpose.msra.mxu0 0.0
    %1038 = vmatprep.subr.mxu0 0.0
    %1039 = vmatpush1.xpose.msra.mxu0 0.0
    %1040 = vmatprep.subr.mxu0 0.0
    %1041 = vmatpush1.xpose.msra.mxu0 %v1010
    %1042 = vmatprep.subr.mxu0 0.0
    %1043 = vmatpush1.xpose.msra.mxu0 %v1008
    %1044 = vmatprep.subr.mxu0 0.0
    %1045 = vmatpush2.xpose.msra.mxu0 0.0
    %1046 = vmatprep.subr.mxu0 0.0
    %1047 = vmatpush2.xpose.msra.mxu0 0.0
    %1048 = vmatprep.subr.mxu0 0.0
    %1049 = vmatpush2.xpose.msra.mxu0 0.0
    %1050 = vmatprep.subr.mxu0 0.0
    %1051 = vmatpush2.xpose.msra.mxu0 0.0
    %1052 = vmatprep.subr.mxu0 0.0
    %1053 = vmatpush2.xpose.msra.mxu0 0.0
    %1054 = vmatprep.subr.mxu0 0.0
    %1055 = vmatpush2.xpose.msra.mxu0 0.0
    %1056 = vmatprep.subr.mxu0 0.0
    %1057 = vmatpush2.xpose.msra.mxu0 0.0
    %1058 = vmatprep.subr.mxu0 0.0
    %1059 = vmatpush2.xpose.msra.mxu0 0.0
    %1060 = vmatprep.subr.mxu0 0.0
    %1061 = vmatpush2.xpose.msra.mxu0 0.0
    %1062 = vmatprep.subr.mxu0 0.0
    %1063 = vmatpush2.xpose.msra.mxu0 0.0
    %1064 = vmatprep.subr.mxu0 0.0
    %1065 = vmatpush2.xpose.msra.mxu0 0.0
    %1066 = vmatprep.subr.mxu0 0.0
    %1067 = vmatpush2.xpose.msra.mxu0 0.0
    %1068 = vmatprep.subr.mxu0 0.0
    %1069 = vmatpush2.xpose.msra.mxu0 0.0
    %1070 = vmatprep.subr.mxu0 0.0
    %1071 = vmatpush2.xpose.msra.mxu0 0.0
    %1072 = vmatprep.subr.mxu0 0.0
    %1073 = vmatpush2.xpose.msra.mxu0 0.0
    %1074 = vmatprep.subr.mxu0 0.0
    %1075 = vmatpush2.xpose.msra.mxu0 0.0
    %1076 = vmatprep.mubr.f32.mxu0 0.0
    %1077 = vmatmul.mubr.f32.gmra.mxu0 %v1004
    %v1078 = vpop.f32.mrf.mxu0
    %v1079 = vadd.f32 0.0, %v1078
    %v1080 = vpop.f32.mrf.mxu0
    %1081 = vmatprep.mubr.f32.mxu0 0.0
    %1082 = vmatmul.mubr.f32.gmra.mxu0 %v1006
    %v1083 = vpop.f32.mrf.mxu0
    %v1084 = vadd.f32 0.0, %v1083
    %v1085 = vpop.f32.mrf.mxu0
    %1086 = vdwg.mxu0
    %v1087 = vmul.f32 %v1079, 0.17677669
    %v1088 = vmul.f32 %v1084, 0.17677669
    %v1089 = vadd.f32 %v1087, %v96
    %v1090 = vadd.f32 %v1088, %v97
    %v1091 = vsel %vm482, %v1089, -inf
    %1092 = vmax.xlane.f32.xlu0 %v1091
    %v1093 = vpop.xlane.xlu0 %1092
    %v1094 = vsel %vm482, %v1090, -inf
    %1095 = vmax.xlane.f32.xlu0 %v1094
    %v1096 = vpop.xlane.xlu0 %1095
    %v1097 = vsub.f32 %v1089, %v1093
    %v1098 = vsub.f32 %v1090, %v1096
    %v1099 = vmul.f32 %v1097, 1.442695
    %v1100 = vpow.pop %v1099
    %v1101 = vmul.f32 %v1098, 1.442695
    %v1102 = vpow.pop %v1101
    %v1103 = vsel %vm482, %v1100, 0.0
    %1104 = vadd.xlane.f32.xlu0 %v1103
    %v1105 = vpop.xlane.xlu0 %1104
    %v1106 = vsel %vm482, %v1102, 0.0
    %1107 = vadd.xlane.f32.xlu0 %v1106
    %v1108 = vpop.xlane.xlu0 %1107
    %v1109 = vrcp.pop %v1105
    %v1110 = vrcp.pop %v1108
    %v1111 = vmul.f32 %v1100, %v1109
    %v1112 = vmul.f32 %v1102, %v1110
    %1113 = vrot.lane.b32.xlu0 %v381, 32
    %v1114 = vpop.permute.xlu0 %1113
    %1115 = vrot.lane.b32.xlu0 %v387, 32
    %v1116 = vpop.permute.xlu0 %1115
    %v1120 = vsel %vm482, %v1111, 0
    %v1123 = vsel %vm482, %v1112, 0
    %1125 = vmatprep.subr.mxu0 0.0
    %1126 = vmatpush1.msra.mxu0 0.0
    %1127 = vmatprep.subr.mxu0 0.0
    %1128 = vmatpush1.msra.mxu0 0.0
    %1129 = vmatprep.subr.mxu0 0.0
    %1130 = vmatpush1.msra.mxu0 0.0
    %1131 = vmatprep.subr.mxu0 0.0
    %1132 = vmatpush1.msra.mxu0 0.0
    %1133 = vmatprep.subr.mxu0 0.0
    %1134 = vmatpush1.msra.mxu0 0.0
    %1135 = vmatprep.subr.mxu0 0.0
    %1136 = vmatpush1.msra.mxu0 0.0
    %1137 = vmatprep.subr.mxu0 0.0
    %1138 = vmatpush1.msra.mxu0 0.0
    %1139 = vmatprep.subr.mxu0 0.0
    %1140 = vmatpush1.msra.mxu0 0.0
    %1141 = vmatprep.subr.mxu0 0.0
    %1142 = vmatpush1.msra.mxu0 0.0
    %1143 = vmatprep.subr.mxu0 0.0
    %1144 = vmatpush1.msra.mxu0 0.0
    %1145 = vmatprep.subr.mxu0 0.0
    %1146 = vmatpush1.msra.mxu0 0.0
    %1147 = vmatprep.subr.mxu0 0.0
    %1148 = vmatpush1.msra.mxu0 0.0
    %1149 = vmatprep.subr.mxu0 0.0
    %1150 = vmatpush1.msra.mxu0 0.0
    %1151 = vmatprep.subr.mxu0 0.0
    %1152 = vmatpush1.msra.mxu0 0.0
    %1153 = vmatprep.subr.mxu0 0.0
    %1154 = vmatpush1.msra.mxu0 %v1116
    %1155 = vmatprep.subr.mxu0 0.0
    %1156 = vmatpush1.msra.mxu0 %v1114
    %1157 = vmatprep.subr.mxu0 0.0
    %1158 = vmatpush2.msra.mxu0 0.0
    %1159 = vmatprep.subr.mxu0 0.0
    %1160 = vmatpush2.msra.mxu0 0.0
    %1161 = vmatprep.subr.mxu0 0.0
    %1162 = vmatpush2.msra.mxu0 0.0
    %1163 = vmatprep.subr.mxu0 0.0
    %1164 = vmatpush2.msra.mxu0 0.0
    %1165 = vmatprep.subr.mxu0 0.0
    %1166 = vmatpush2.msra.mxu0 0.0
    %1167 = vmatprep.subr.mxu0 0.0
    %1168 = vmatpush2.msra.mxu0 0.0
    %1169 = vmatprep.subr.mxu0 0.0
    %1170 = vmatpush2.msra.mxu0 0.0
    %1171 = vmatprep.subr.mxu0 0.0
    %1172 = vmatpush2.msra.mxu0 0.0
    %1173 = vmatprep.subr.mxu0 0.0
    %1174 = vmatpush2.msra.mxu0 0.0
    %1175 = vmatprep.subr.mxu0 0.0
    %1176 = vmatpush2.msra.mxu0 0.0
    %1177 = vmatprep.subr.mxu0 0.0
    %1178 = vmatpush2.msra.mxu0 0.0
    %1179 = vmatprep.subr.mxu0 0.0
    %1180 = vmatpush2.msra.mxu0 0.0
    %1181 = vmatprep.subr.mxu0 0.0
    %1182 = vmatpush2.msra.mxu0 0.0
    %1183 = vmatprep.subr.mxu0 0.0
    %1184 = vmatpush2.msra.mxu0 0.0
    %1185 = vmatprep.subr.mxu0 0.0
    %1186 = vmatpush2.msra.mxu0 0.0
    %1187 = vmatprep.subr.mxu0 0.0
    %1188 = vmatpush2.msra.mxu0 0.0
    %1189 = vmatprep.mubr.f32.mxu0 0.0
    %1190 = vmatmul.mubr.f32.gmra.mxu0 %v1120
    %v1191 = vpop.f32.mrf.mxu0
    %v1192 = vadd.f32 0.0, %v1191
    %v1193 = vpop.f32.mrf.mxu0
    %1194 = vmatprep.mubr.f32.mxu0 0.0
    %1195 = vmatmul.mubr.f32.gmra.mxu0 %v1123
    %v1196 = vpop.f32.mrf.mxu0
    %v1197 = vadd.f32 0.0, %v1196
    %v1198 = vpop.f32.mrf.mxu0
    %1199 = vdwg.mxu0
    %v1201 = vsel %vm52, %v229, 0
    %v1204 = vsel %vm52, %v235, 0
    %v1207 = vsel %vm52, %v306, 0
    %v1210 = vsel %vm52, %v312, 0
    %1212 = vmatprep.subr.mxu0 0.0
    %1213 = vmatpush1.xpose.msra.mxu0 0.0
    %1214 = vmatprep.subr.mxu0 0.0
    %1215 = vmatpush1.xpose.msra.mxu0 0.0
    %1216 = vmatprep.subr.mxu0 0.0
    %1217 = vmatpush1.xpose.msra.mxu0 0.0
    %1218 = vmatprep.subr.mxu0 0.0
    %1219 = vmatpush1.xpose.msra.mxu0 0.0
    %1220 = vmatprep.subr.mxu0 0.0
    %1221 = vmatpush1.xpose.msra.mxu0 0.0
    %1222 = vmatprep.subr.mxu0 0.0
    %1223 = vmatpush1.xpose.msra.mxu0 0.0
    %1224 = vmatprep.subr.mxu0 0.0
    %1225 = vmatpush1.xpose.msra.mxu0 0.0
    %1226 = vmatprep.subr.mxu0 0.0
    %1227 = vmatpush1.xpose.msra.mxu0 0.0
    %1228 = vmatprep.subr.mxu0 0.0
    %1229 = vmatpush1.xpose.msra.mxu0 0.0
    %1230 = vmatprep.subr.mxu0 0.0
    %1231 = vmatpush1.xpose.msra.mxu0 0.0
    %1232 = vmatprep.subr.mxu0 0.0
    %1233 = vmatpush1.xpose.msra.mxu0 0.0
    %1234 = vmatprep.subr.mxu0 0.0
    %1235 = vmatpush1.xpose.msra.mxu0 0.0
    %1236 = vmatprep.subr.mxu0 0.0
    %1237 = vmatpush1.xpose.msra.mxu0 0.0
    %1238 = vmatprep.subr.mxu0 0.0
    %1239 = vmatpush1.xpose.msra.mxu0 0.0
    %1240 = vmatprep.subr.mxu0 0.0
    %1241 = vmatpush1.xpose.msra.mxu0 %v1210
    %1242 = vmatprep.subr.mxu0 0.0
    %1243 = vmatpush1.xpose.msra.mxu0 %v1207
    %1244 = vmatprep.subr.mxu0 0.0
    %1245 = vmatpush2.xpose.msra.mxu0 0.0
    %1246 = vmatprep.subr.mxu0 0.0
    %1247 = vmatpush2.xpose.msra.mxu0 0.0
    %1248 = vmatprep.subr.mxu0 0.0
    %1249 = vmatpush2.xpose.msra.mxu0 0.0
    %1250 = vmatprep.subr.mxu0 0.0
    %1251 = vmatpush2.xpose.msra.mxu0 0.0
    %1252 = vmatprep.subr.mxu0 0.0
    %1253 = vmatpush2.xpose.msra.mxu0 0.0
    %1254 = vmatprep.subr.mxu0 0.0
    %1255 = vmatpush2.xpose.msra.mxu0 0.0
    %1256 = vmatprep.subr.mxu0 0.0
    %1257 = vmatpush2.xpose.msra.mxu0 0.0
    %1258 = vmatprep.subr.mxu0 0.0
    %1259 = vmatpush2.xpose.msra.mxu0 0.0
    %1260 = vmatprep.subr.mxu0 0.0
    %1261 = vmatpush2.xpose.msra.mxu0 0.0
    %1262 = vmatprep.subr.mxu0 0.0
    %1263 = vmatpush2.xpose.msra.mxu0 0.0
    %1264 = vmatprep.subr.mxu0 0.0
    %1265 = vmatpush2.xpose.msra.mxu0 0.0
    %1266 = vmatprep.subr.mxu0 0.0
    %1267 = vmatpush2.xpose.msra.mxu0 0.0
    %1268 = vmatprep.subr.mxu0 0.0
    %1269 = vmatpush2.xpose.msra.mxu0 0.0
    %1270 = vmatprep.subr.mxu0 0.0
    %1271 = vmatpush2.xpose.msra.mxu0 0.0
    %1272 = vmatprep.subr.mxu0 0.0
    %1273 = vmatpush2.xpose.msra.mxu0 0.0
    %1274 = vmatprep.subr.mxu0 0.0
    %1275 = vmatpush2.xpose.msra.mxu0 0.0
    %1276 = vmatprep.mubr.f32.mxu0 0.0
    %1277 = vmatmul.mubr.f32.gmra.mxu0 %v1201
    %v1278 = vpop.f32.mrf.mxu0
    %v1279 = vadd.f32 0.0, %v1278
    %v1280 = vpop.f32.mrf.mxu0
    %1281 = vmatprep.mubr.f32.mxu0 0.0
    %1282 = vmatmul.mubr.f32.gmra.mxu0 %v1204
    %v1283 = vpop.f32.mrf.mxu0
    %v1284 = vadd.f32 0.0, %v1283
    %v1285 = vpop.f32.mrf.mxu0
    %1286 = vdwg.mxu0
    %v1287 = vmul.f32 %v1279, 0.17677669
    %v1288 = vmul.f32 %v1284, 0.17677669
    %v1289 = vadd.f32 %v1287, %v96
    %v1290 = vadd.f32 %v1288, %v97
    %v1291 = vsel %vm482, %v1289, -inf
    %1292 = vmax.xlane.f32.xlu0 %v1291
    %v1293 = vpop.xlane.xlu0 %1292
    %v1294 = vsel %vm482, %v1290, -inf
    %1295 = vmax.xlane.f32.xlu0 %v1294
    %v1296 = vpop.xlane.xlu0 %1295
    %v1297 = vsub.f32 %v1289, %v1293
    %v1298 = vsub.f32 %v1290, %v1296
    %v1299 = vmul.f32 %v1297, 1.442695
    %v1300 = vpow.pop %v1299
    %v1301 = vmul.f32 %v1298, 1.442695
    %v1302 = vpow.pop %v1301
    %v1303 = vsel %vm482, %v1300, 0.0
    %1304 = vadd.xlane.f32.xlu0 %v1303
    %v1305 = vpop.xlane.xlu0 %1304
    %v1306 = vsel %vm482, %v1302, 0.0
    %1307 = vadd.xlane.f32.xlu0 %v1306
    %v1308 = vpop.xlane.xlu0 %1307
    %v1309 = vrcp.pop %v1305
    %v1310 = vrcp.pop %v1308
    %v1311 = vmul.f32 %v1300, %v1309
    %v1312 = vmul.f32 %v1302, %v1310
    %v1314 = vsel %vm482, %v1311, 0
    %v1317 = vsel %vm482, %v1312, 0
    %1319 = vmatprep.subr.mxu0 0.0
    %1320 = vmatpush1.msra.mxu0 0.0
    %1321 = vmatprep.subr.mxu0 0.0
    %1322 = vmatpush1.msra.mxu0 0.0
    %1323 = vmatprep.subr.mxu0 0.0
    %1324 = vmatpush1.msra.mxu0 0.0
    %1325 = vmatprep.subr.mxu0 0.0
    %1326 = vmatpush1.msra.mxu0 0.0
    %1327 = vmatprep.subr.mxu0 0.0
    %1328 = vmatpush1.msra.mxu0 0.0
    %1329 = vmatprep.subr.mxu0 0.0
    %1330 = vmatpush1.msra.mxu0 0.0
    %1331 = vmatprep.subr.mxu0 0.0
    %1332 = vmatpush1.msra.mxu0 0.0
    %1333 = vmatprep.subr.mxu0 0.0
    %1334 = vmatpush1.msra.mxu0 0.0
    %1335 = vmatprep.subr.mxu0 0.0
    %1336 = vmatpush1.msra.mxu0 0.0
    %1337 = vmatprep.subr.mxu0 0.0
    %1338 = vmatpush1.msra.mxu0 0.0
    %1339 = vmatprep.subr.mxu0 0.0
    %1340 = vmatpush1.msra.mxu0 0.0
    %1341 = vmatprep.subr.mxu0 0.0
    %1342 = vmatpush1.msra.mxu0 0.0
    %1343 = vmatprep.subr.mxu0 0.0
    %1344 = vmatpush1.msra.mxu0 0.0
    %1345 = vmatprep.subr.mxu0 0.0
    %1346 = vmatpush1.msra.mxu0 0.0
    %1347 = vmatprep.subr.mxu0 0.0
    %1348 = vmatpush1.msra.mxu0 %v389
    %1349 = vmatprep.subr.mxu0 0.0
    %1350 = vmatpush1.msra.mxu0 %v383
    %1351 = vmatprep.subr.mxu0 0.0
    %1352 = vmatpush2.msra.mxu0 0.0
    %1353 = vmatprep.subr.mxu0 0.0
    %1354 = vmatpush2.msra.mxu0 0.0
    %1355 = vmatprep.subr.mxu0 0.0
    %1356 = vmatpush2.msra.mxu0 0.0
    %1357 = vmatprep.subr.mxu0 0.0
    %1358 = vmatpush2.msra.mxu0 0.0
    %1359 = vmatprep.subr.mxu0 0.0
    %1360 = vmatpush2.msra.mxu0 0.0
    %1361 = vmatprep.subr.mxu0 0.0
    %1362 = vmatpush2.msra.mxu0 0.0
    %1363 = vmatprep.subr.mxu0 0.0
    %1364 = vmatpush2.msra.mxu0 0.0
    %1365 = vmatprep.subr.mxu0 0.0
    %1366 = vmatpush2.msra.mxu0 0.0
    %1367 = vmatprep.subr.mxu0 0.0
    %1368 = vmatpush2.msra.mxu0 0.0
    %1369 = vmatprep.subr.mxu0 0.0
    %1370 = vmatpush2.msra.mxu0 0.0
    %1371 = vmatprep.subr.mxu0 0.0
    %1372 = vmatpush2.msra.mxu0 0.0
    %1373 = vmatprep.subr.mxu0 0.0
    %1374 = vmatpush2.msra.mxu0 0.0
    %1375 = vmatprep.subr.mxu0 0.0
    %1376 = vmatpush2.msra.mxu0 0.0
    %1377 = vmatprep.subr.mxu0 0.0
    %1378 = vmatpush2.msra.mxu0 0.0
    %1379 = vmatprep.subr.mxu0 0.0
    %1380 = vmatpush2.msra.mxu0 0.0
    %1381 = vmatprep.subr.mxu0 0.0
    %1382 = vmatpush2.msra.mxu0 0.0
    %1383 = vmatprep.mubr.f32.mxu0 0.0
    %1384 = vmatmul.mubr.f32.gmra.mxu0 %v1314
    %v1385 = vpop.f32.mrf.mxu0
    %v1386 = vadd.f32 0.0, %v1385
    %v1387 = vpop.f32.mrf.mxu0
    %1388 = vmatprep.mubr.f32.mxu0 0.0
    %1389 = vmatmul.mubr.f32.gmra.mxu0 %v1317
    %v1390 = vpop.f32.mrf.mxu0
    %v1391 = vadd.f32 0.0, %v1390
    %v1392 = vpop.f32.mrf.mxu0
    %1393 = vdwg.mxu0
    %1394 = vrot.lane.b32.xlu0 %v229, 96
    %v1395 = vpop.permute.xlu0 %1394
    %1396 = vrot.lane.b32.xlu0 %v235, 96
    %v1397 = vpop.permute.xlu0 %1396
    %1398 = vrot.lane.b32.xlu0 %v306, 96
    %v1399 = vpop.permute.xlu0 %1398
    %1400 = vrot.lane.b32.xlu0 %v312, 96
    %v1401 = vpop.permute.xlu0 %1400
    %v1402 = vsel %vm52, %v1395, 0
    %v1404 = vsel %vm52, %v1397, 0
    %v1406 = vsel %vm52, %v1399, 0
    %v1408 = vsel %vm52, %v1401, 0
    %1410 = vmatprep.subr.mxu0 0.0
    %1411 = vmatpush1.xpose.msra.mxu0 0.0
    %1412 = vmatprep.subr.mxu0 0.0
    %1413 = vmatpush1.xpose.msra.mxu0 0.0
    %1414 = vmatprep.subr.mxu0 0.0
    %1415 = vmatpush1.xpose.msra.mxu0 0.0
    %1416 = vmatprep.subr.mxu0 0.0
    %1417 = vmatpush1.xpose.msra.mxu0 0.0
    %1418 = vmatprep.subr.mxu0 0.0
    %1419 = vmatpush1.xpose.msra.mxu0 0.0
    %1420 = vmatprep.subr.mxu0 0.0
    %1421 = vmatpush1.xpose.msra.mxu0 0.0
    %1422 = vmatprep.subr.mxu0 0.0
    %1423 = vmatpush1.xpose.msra.mxu0 0.0
    %1424 = vmatprep.subr.mxu0 0.0
    %1425 = vmatpush1.xpose.msra.mxu0 0.0
    %1426 = vmatprep.subr.mxu0 0.0
    %1427 = vmatpush1.xpose.msra.mxu0 0.0
    %1428 = vmatprep.subr.mxu0 0.0
    %1429 = vmatpush1.xpose.msra.mxu0 0.0
    %1430 = vmatprep.subr.mxu0 0.0
    %1431 = vmatpush1.xpose.msra.mxu0 0.0
    %1432 = vmatprep.subr.mxu0 0.0
    %1433 = vmatpush1.xpose.msra.mxu0 0.0
    %1434 = vmatprep.subr.mxu0 0.0
    %1435 = vmatpush1.xpose.msra.mxu0 0.0
    %1436 = vmatprep.subr.mxu0 0.0
    %1437 = vmatpush1.xpose.msra.mxu0 0.0
    %1438 = vmatprep.subr.mxu0 0.0
    %1439 = vmatpush1.xpose.msra.mxu0 %v1408
    %1440 = vmatprep.subr.mxu0 0.0
    %1441 = vmatpush1.xpose.msra.mxu0 %v1406
    %1442 = vmatprep.subr.mxu0 0.0
    %1443 = vmatpush2.xpose.msra.mxu0 0.0
    %1444 = vmatprep.subr.mxu0 0.0
    %1445 = vmatpush2.xpose.msra.mxu0 0.0
    %1446 = vmatprep.subr.mxu0 0.0
    %1447 = vmatpush2.xpose.msra.mxu0 0.0
    %1448 = vmatprep.subr.mxu0 0.0
    %1449 = vmatpush2.xpose.msra.mxu0 0.0
    %1450 = vmatprep.subr.mxu0 0.0
    %1451 = vmatpush2.xpose.msra.mxu0 0.0
    %1452 = vmatprep.subr.mxu0 0.0
    %1453 = vmatpush2.xpose.msra.mxu0 0.0
    %1454 = vmatprep.subr.mxu0 0.0
    %1455 = vmatpush2.xpose.msra.mxu0 0.0
    %1456 = vmatprep.subr.mxu0 0.0
    %1457 = vmatpush2.xpose.msra.mxu0 0.0
    %1458 = vmatprep.subr.mxu0 0.0
    %1459 = vmatpush2.xpose.msra.mxu0 0.0
    %1460 = vmatprep.subr.mxu0 0.0
    %1461 = vmatpush2.xpose.msra.mxu0 0.0
    %1462 = vmatprep.subr.mxu0 0.0
    %1463 = vmatpush2.xpose.msra.mxu0 0.0
    %1464 = vmatprep.subr.mxu0 0.0
    %1465 = vmatpush2.xpose.msra.mxu0 0.0
    %1466 = vmatprep.subr.mxu0 0.0
    %1467 = vmatpush2.xpose.msra.mxu0 0.0
    %1468 = vmatprep.subr.mxu0 0.0
    %1469 = vmatpush2.xpose.msra.mxu0 0.0
    %1470 = vmatprep.subr.mxu0 0.0
    %1471 = vmatpush2.xpose.msra.mxu0 0.0
    %1472 = vmatprep.subr.mxu0 0.0
    %1473 = vmatpush2.xpose.msra.mxu0 0.0
    %1474 = vmatprep.mubr.f32.mxu0 0.0
    %1475 = vmatmul.mubr.f32.gmra.mxu0 %v1402
    %v1476 = vpop.f32.mrf.mxu0
    %v1477 = vadd.f32 0.0, %v1476
    %v1478 = vpop.f32.mrf.mxu0
    %1479 = vmatprep.mubr.f32.mxu0 0.0
    %1480 = vmatmul.mubr.f32.gmra.mxu0 %v1404
    %v1481 = vpop.f32.mrf.mxu0
    %v1482 = vadd.f32 0.0, %v1481
    %v1483 = vpop.f32.mrf.mxu0
    %1484 = vdwg.mxu0
    %v1485 = vmul.f32 %v1477, 0.17677669
    %v1486 = vmul.f32 %v1482, 0.17677669
    %v1487 = vadd.f32 %v1485, %v96
    %v1488 = vadd.f32 %v1486, %v97
    %v1489 = vsel %vm482, %v1487, -inf
    %1490 = vmax.xlane.f32.xlu0 %v1489
    %v1491 = vpop.xlane.xlu0 %1490
    %v1492 = vsel %vm482, %v1488, -inf
    %1493 = vmax.xlane.f32.xlu0 %v1492
    %v1494 = vpop.xlane.xlu0 %1493
    %v1495 = vsub.f32 %v1487, %v1491
    %v1496 = vsub.f32 %v1488, %v1494
    %v1497 = vmul.f32 %v1495, 1.442695
    %v1498 = vpow.pop %v1497
    %v1499 = vmul.f32 %v1496, 1.442695
    %v1500 = vpow.pop %v1499
    %v1501 = vsel %vm482, %v1498, 0.0
    %1502 = vadd.xlane.f32.xlu0 %v1501
    %v1503 = vpop.xlane.xlu0 %1502
    %v1504 = vsel %vm482, %v1500, 0.0
    %1505 = vadd.xlane.f32.xlu0 %v1504
    %v1506 = vpop.xlane.xlu0 %1505
    %v1507 = vrcp.pop %v1503
    %v1508 = vrcp.pop %v1506
    %v1509 = vmul.f32 %v1498, %v1507
    %v1510 = vmul.f32 %v1500, %v1508
    %1513 = vrot.lane.b32.xlu0 %v383, 96
    %v1514 = vpop.permute.xlu0 %1513
    %1515 = vrot.lane.b32.xlu0 %v389, 96
    %v1516 = vpop.permute.xlu0 %1515
    %v1520 = vsel %vm482, %v1509, 0
    %v1523 = vsel %vm482, %v1510, 0
    %1525 = vmatprep.subr.mxu0 0.0
    %1526 = vmatpush1.msra.mxu0 0.0
    %1527 = vmatprep.subr.mxu0 0.0
    %1528 = vmatpush1.msra.mxu0 0.0
    %1529 = vmatprep.subr.mxu0 0.0
    %1530 = vmatpush1.msra.mxu0 0.0
    %1531 = vmatprep.subr.mxu0 0.0
    %1532 = vmatpush1.msra.mxu0 0.0
    %1533 = vmatprep.subr.mxu0 0.0
    %1534 = vmatpush1.msra.mxu0 0.0
    %1535 = vmatprep.subr.mxu0 0.0
    %1536 = vmatpush1.msra.mxu0 0.0
    %1537 = vmatprep.subr.mxu0 0.0
    %1538 = vmatpush1.msra.mxu0 0.0
    %1539 = vmatprep.subr.mxu0 0.0
    %1540 = vmatpush1.msra.mxu0 0.0
    %1541 = vmatprep.subr.mxu0 0.0
    %1542 = vmatpush1.msra.mxu0 0.0
    %1543 = vmatprep.subr.mxu0 0.0
    %1544 = vmatpush1.msra.mxu0 0.0
    %1545 = vmatprep.subr.mxu0 0.0
    %1546 = vmatpush1.msra.mxu0 0.0
    %1547 = vmatprep.subr.mxu0 0.0
    %1548 = vmatpush1.msra.mxu0 0.0
    %1549 = vmatprep.subr.mxu0 0.0
    %1550 = vmatpush1.msra.mxu0 0.0
    %1551 = vmatprep.subr.mxu0 0.0
    %1552 = vmatpush1.msra.mxu0 0.0
    %1553 = vmatprep.subr.mxu0 0.0
    %1554 = vmatpush1.msra.mxu0 %v1516
    %1555 = vmatprep.subr.mxu0 0.0
    %1556 = vmatpush1.msra.mxu0 %v1514
    %1557 = vmatprep.subr.mxu0 0.0
    %1558 = vmatpush2.msra.mxu0 0.0
    %1559 = vmatprep.subr.mxu0 0.0
    %1560 = vmatpush2.msra.mxu0 0.0
    %1561 = vmatprep.subr.mxu0 0.0
    %1562 = vmatpush2.msra.mxu0 0.0
    %1563 = vmatprep.subr.mxu0 0.0
    %1564 = vmatpush2.msra.mxu0 0.0
    %1565 = vmatprep.subr.mxu0 0.0
    %1566 = vmatpush2.msra.mxu0 0.0
    %1567 = vmatprep.subr.mxu0 0.0
    %1568 = vmatpush2.msra.mxu0 0.0
    %1569 = vmatprep.subr.mxu0 0.0
    %1570 = vmatpush2.msra.mxu0 0.0
    %1571 = vmatprep.subr.mxu0 0.0
    %1572 = vmatpush2.msra.mxu0 0.0
    %1573 = vmatprep.subr.mxu0 0.0
    %1574 = vmatpush2.msra.mxu0 0.0
    %1575 = vmatprep.subr.mxu0 0.0
    %1576 = vmatpush2.msra.mxu0 0.0
    %1577 = vmatprep.subr.mxu0 0.0
    %1578 = vmatpush2.msra.mxu0 0.0
    %1579 = vmatprep.subr.mxu0 0.0
    %1580 = vmatpush2.msra.mxu0 0.0
    %1581 = vmatprep.subr.mxu0 0.0
    %1582 = vmatpush2.msra.mxu0 0.0
    %1583 = vmatprep.subr.mxu0 0.0
    %1584 = vmatpush2.msra.mxu0 0.0
    %1585 = vmatprep.subr.mxu0 0.0
    %1586 = vmatpush2.msra.mxu0 0.0
    %1587 = vmatprep.subr.mxu0 0.0
    %1588 = vmatpush2.msra.mxu0 0.0
    %1589 = vmatprep.mubr.f32.mxu0 0.0
    %1590 = vmatmul.mubr.f32.gmra.mxu0 %v1520
    %v1591 = vpop.f32.mrf.mxu0
    %v1592 = vadd.f32 0.0, %v1591
    %v1593 = vpop.f32.mrf.mxu0
    %1594 = vmatprep.mubr.f32.mxu0 0.0
    %1595 = vmatmul.mubr.f32.gmra.mxu0 %v1523
    %v1596 = vpop.f32.mrf.mxu0
    %v1597 = vadd.f32 0.0, %v1596
    %v1598 = vpop.f32.mrf.mxu0
    %1599 = vdwg.mxu0
    %1600 = vrot.lane.b32.xlu0 %v229, 64
    %v1601 = vpop.permute.xlu0 %1600
    %1602 = vrot.lane.b32.xlu0 %v235, 64
    %v1603 = vpop.permute.xlu0 %1602
    %1604 = vrot.lane.b32.xlu0 %v306, 64
    %v1605 = vpop.permute.xlu0 %1604
    %1606 = vrot.lane.b32.xlu0 %v312, 64
    %v1607 = vpop.permute.xlu0 %1606
    %v1608 = vsel %vm52, %v1601, 0
    %v1610 = vsel %vm52, %v1603, 0
    %v1612 = vsel %vm52, %v1605, 0
    %v1614 = vsel %vm52, %v1607, 0
    %1616 = vmatprep.subr.mxu0 0.0
    %1617 = vmatpush1.xpose.msra.mxu0 0.0
    %1618 = vmatprep.subr.mxu0 0.0
    %1619 = vmatpush1.xpose.msra.mxu0 0.0
    %1620 = vmatprep.subr.mxu0 0.0
    %1621 = vmatpush1.xpose.msra.mxu0 0.0
    %1622 = vmatprep.subr.mxu0 0.0
    %1623 = vmatpush1.xpose.msra.mxu0 0.0
    %1624 = vmatprep.subr.mxu0 0.0
    %1625 = vmatpush1.xpose.msra.mxu0 0.0
    %1626 = vmatprep.subr.mxu0 0.0
    %1627 = vmatpush1.xpose.msra.mxu0 0.0
    %1628 = vmatprep.subr.mxu0 0.0
    %1629 = vmatpush1.xpose.msra.mxu0 0.0
    %1630 = vmatprep.subr.mxu0 0.0
    %1631 = vmatpush1.xpose.msra.mxu0 0.0
    %1632 = vmatprep.subr.mxu0 0.0
    %1633 = vmatpush1.xpose.msra.mxu0 0.0
    %1634 = vmatprep.subr.mxu0 0.0
    %1635 = vmatpush1.xpose.msra.mxu0 0.0
    %1636 = vmatprep.subr.mxu0 0.0
    %1637 = vmatpush1.xpose.msra.mxu0 0.0
    %1638 = vmatprep.subr.mxu0 0.0
    %1639 = vmatpush1.xpose.msra.mxu0 0.0
    %1640 = vmatprep.subr.mxu0 0.0
    %1641 = vmatpush1.xpose.msra.mxu0 0.0
    %1642 = vmatprep.subr.mxu0 0.0
    %1643 = vmatpush1.xpose.msra.mxu0 0.0
    %1644 = vmatprep.subr.mxu0 0.0
    %1645 = vmatpush1.xpose.msra.mxu0 %v1614
    %1646 = vmatprep.subr.mxu0 0.0
    %1647 = vmatpush1.xpose.msra.mxu0 %v1612
    %1648 = vmatprep.subr.mxu0 0.0
    %1649 = vmatpush2.xpose.msra.mxu0 0.0
    %1650 = vmatprep.subr.mxu0 0.0
    %1651 = vmatpush2.xpose.msra.mxu0 0.0
    %1652 = vmatprep.subr.mxu0 0.0
    %1653 = vmatpush2.xpose.msra.mxu0 0.0
    %1654 = vmatprep.subr.mxu0 0.0
    %1655 = vmatpush2.xpose.msra.mxu0 0.0
    %1656 = vmatprep.subr.mxu0 0.0
    %1657 = vmatpush2.xpose.msra.mxu0 0.0
    %1658 = vmatprep.subr.mxu0 0.0
    %1659 = vmatpush2.xpose.msra.mxu0 0.0
    %1660 = vmatprep.subr.mxu0 0.0
    %1661 = vmatpush2.xpose.msra.mxu0 0.0
    %1662 = vmatprep.subr.mxu0 0.0
    %1663 = vmatpush2.xpose.msra.mxu0 0.0
    %1664 = vmatprep.subr.mxu0 0.0
    %1665 = vmatpush2.xpose.msra.mxu0 0.0
    %1666 = vmatprep.subr.mxu0 0.0
    %1667 = vmatpush2.xpose.msra.mxu0 0.0
    %1668 = vmatprep.subr.mxu0 0.0
    %1669 = vmatpush2.xpose.msra.mxu0 0.0
    %1670 = vmatprep.subr.mxu0 0.0
    %1671 = vmatpush2.xpose.msra.mxu0 0.0
    %1672 = vmatprep.subr.mxu0 0.0
    %1673 = vmatpush2.xpose.msra.mxu0 0.0
    %1674 = vmatprep.subr.mxu0 0.0
    %1675 = vmatpush2.xpose.msra.mxu0 0.0
    %1676 = vmatprep.subr.mxu0 0.0
    %1677 = vmatpush2.xpose.msra.mxu0 0.0
    %1678 = vmatprep.subr.mxu0 0.0
    %1679 = vmatpush2.xpose.msra.mxu0 0.0
    %1680 = vmatprep.mubr.f32.mxu0 0.0
    %1681 = vmatmul.mubr.f32.gmra.mxu0 %v1608
    %v1682 = vpop.f32.mrf.mxu0
    %v1683 = vadd.f32 0.0, %v1682
    %v1684 = vpop.f32.mrf.mxu0
    %1685 = vmatprep.mubr.f32.mxu0 0.0
    %1686 = vmatmul.mubr.f32.gmra.mxu0 %v1610
    %v1687 = vpop.f32.mrf.mxu0
    %v1688 = vadd.f32 0.0, %v1687
    %v1689 = vpop.f32.mrf.mxu0
    %1690 = vdwg.mxu0
    %v1691 = vmul.f32 %v1683, 0.17677669
    %v1692 = vmul.f32 %v1688, 0.17677669
    %v1693 = vadd.f32 %v1691, %v96
    %v1694 = vadd.f32 %v1692, %v97
    %v1695 = vsel %vm482, %v1693, -inf
    %1696 = vmax.xlane.f32.xlu0 %v1695
    %v1697 = vpop.xlane.xlu0 %1696
    %v1698 = vsel %vm482, %v1694, -inf
    %1699 = vmax.xlane.f32.xlu0 %v1698
    %v1700 = vpop.xlane.xlu0 %1699
    %v1701 = vsub.f32 %v1693, %v1697
    %v1702 = vsub.f32 %v1694, %v1700
    %v1703 = vmul.f32 %v1701, 1.442695
    %v1704 = vpow.pop %v1703
    %v1705 = vmul.f32 %v1702, 1.442695
    %v1706 = vpow.pop %v1705
    %v1707 = vsel %vm482, %v1704, 0.0
    %1708 = vadd.xlane.f32.xlu0 %v1707
    %v1709 = vpop.xlane.xlu0 %1708
    %v1710 = vsel %vm482, %v1706, 0.0
    %1711 = vadd.xlane.f32.xlu0 %v1710
    %v1712 = vpop.xlane.xlu0 %1711
    %v1713 = vrcp.pop %v1709
    %v1714 = vrcp.pop %v1712
    %v1715 = vmul.f32 %v1704, %v1713
    %v1716 = vmul.f32 %v1706, %v1714
    %1717 = vrot.lane.b32.xlu0 %v383, 64
    %v1718 = vpop.permute.xlu0 %1717
    %1719 = vrot.lane.b32.xlu0 %v389, 64
    %v1720 = vpop.permute.xlu0 %1719
    %v1724 = vsel %vm482, %v1715, 0
    %v1727 = vsel %vm482, %v1716, 0
    %1729 = vmatprep.subr.mxu0 0.0
    %1730 = vmatpush1.msra.mxu0 0.0
    %1731 = vmatprep.subr.mxu0 0.0
    %1732 = vmatpush1.msra.mxu0 0.0
    %1733 = vmatprep.subr.mxu0 0.0
    %1734 = vmatpush1.msra.mxu0 0.0
    %1735 = vmatprep.subr.mxu0 0.0
    %1736 = vmatpush1.msra.mxu0 0.0
    %1737 = vmatprep.subr.mxu0 0.0
    %1738 = vmatpush1.msra.mxu0 0.0
    %1739 = vmatprep.subr.mxu0 0.0
    %1740 = vmatpush1.msra.mxu0 0.0
    %1741 = vmatprep.subr.mxu0 0.0
    %1742 = vmatpush1.msra.mxu0 0.0
    %1743 = vmatprep.subr.mxu0 0.0
    %1744 = vmatpush1.msra.mxu0 0.0
    %1745 = vmatprep.subr.mxu0 0.0
    %1746 = vmatpush1.msra.mxu0 0.0
    %1747 = vmatprep.subr.mxu0 0.0
    %1748 = vmatpush1.msra.mxu0 0.0
    %1749 = vmatprep.subr.mxu0 0.0
    %1750 = vmatpush1.msra.mxu0 0.0
    %1751 = vmatprep.subr.mxu0 0.0
    %1752 = vmatpush1.msra.mxu0 0.0
    %1753 = vmatprep.subr.mxu0 0.0
    %1754 = vmatpush1.msra.mxu0 0.0
    %1755 = vmatprep.subr.mxu0 0.0
    %1756 = vmatpush1.msra.mxu0 0.0
    %1757 = vmatprep.subr.mxu0 0.0
    %1758 = vmatpush1.msra.mxu0 %v1720
    %1759 = vmatprep.subr.mxu0 0.0
    %1760 = vmatpush1.msra.mxu0 %v1718
    %1761 = vmatprep.subr.mxu0 0.0
    %1762 = vmatpush2.msra.mxu0 0.0
    %1763 = vmatprep.subr.mxu0 0.0
    %1764 = vmatpush2.msra.mxu0 0.0
    %1765 = vmatprep.subr.mxu0 0.0
    %1766 = vmatpush2.msra.mxu0 0.0
    %1767 = vmatprep.subr.mxu0 0.0
    %1768 = vmatpush2.msra.mxu0 0.0
    %1769 = vmatprep.subr.mxu0 0.0
    %1770 = vmatpush2.msra.mxu0 0.0
    %1771 = vmatprep.subr.mxu0 0.0
    %1772 = vmatpush2.msra.mxu0 0.0
    %1773 = vmatprep.subr.mxu0 0.0
    %1774 = vmatpush2.msra.mxu0 0.0
    %1775 = vmatprep.subr.mxu0 0.0
    %1776 = vmatpush2.msra.mxu0 0.0
    %1777 = vmatprep.subr.mxu0 0.0
    %1778 = vmatpush2.msra.mxu0 0.0
    %1779 = vmatprep.subr.mxu0 0.0
    %1780 = vmatpush2.msra.mxu0 0.0
    %1781 = vmatprep.subr.mxu0 0.0
    %1782 = vmatpush2.msra.mxu0 0.0
    %1783 = vmatprep.subr.mxu0 0.0
    %1784 = vmatpush2.msra.mxu0 0.0
    %1785 = vmatprep.subr.mxu0 0.0
    %1786 = vmatpush2.msra.mxu0 0.0
    %1787 = vmatprep.subr.mxu0 0.0
    %1788 = vmatpush2.msra.mxu0 0.0
    %1789 = vmatprep.subr.mxu0 0.0
    %1790 = vmatpush2.msra.mxu0 0.0
    %1791 = vmatprep.subr.mxu0 0.0
    %1792 = vmatpush2.msra.mxu0 0.0
    %1793 = vmatprep.mubr.f32.mxu0 0.0
    %1794 = vmatmul.mubr.f32.gmra.mxu0 %v1724
    %v1795 = vpop.f32.mrf.mxu0
    %v1796 = vadd.f32 0.0, %v1795
    %v1797 = vpop.f32.mrf.mxu0
    %1798 = vmatprep.mubr.f32.mxu0 0.0
    %1799 = vmatmul.mubr.f32.gmra.mxu0 %v1727
    %v1800 = vpop.f32.mrf.mxu0
    %v1801 = vadd.f32 0.0, %v1800
    %v1802 = vpop.f32.mrf.mxu0
    %1803 = vdwg.mxu0
    %1804 = vrot.lane.b32.xlu0 %v229, 32
    %v1805 = vpop.permute.xlu0 %1804
    %1806 = vrot.lane.b32.xlu0 %v235, 32
    %v1807 = vpop.permute.xlu0 %1806
    %1808 = vrot.lane.b32.xlu0 %v306, 32
    %v1809 = vpop.permute.xlu0 %1808
    %1810 = vrot.lane.b32.xlu0 %v312, 32
    %v1811 = vpop.permute.xlu0 %1810
    %v1812 = vsel %vm52, %v1805, 0
    %v1814 = vsel %vm52, %v1807, 0
    %v1816 = vsel %vm52, %v1809, 0
    %v1818 = vsel %vm52, %v1811, 0
    %1820 = vmatprep.subr.mxu0 0.0
    %1821 = vmatpush1.xpose.msra.mxu0 0.0
    %1822 = vmatprep.subr.mxu0 0.0
    %1823 = vmatpush1.xpose.msra.mxu0 0.0
    %1824 = vmatprep.subr.mxu0 0.0
    %1825 = vmatpush1.xpose.msra.mxu0 0.0
    %1826 = vmatprep.subr.mxu0 0.0
    %1827 = vmatpush1.xpose.msra.mxu0 0.0
    %1828 = vmatprep.subr.mxu0 0.0
    %1829 = vmatpush1.xpose.msra.mxu0 0.0
    %1830 = vmatprep.subr.mxu0 0.0
    %1831 = vmatpush1.xpose.msra.mxu0 0.0
    %1832 = vmatprep.subr.mxu0 0.0
    %1833 = vmatpush1.xpose.msra.mxu0 0.0
    %1834 = vmatprep.subr.mxu0 0.0
    %1835 = vmatpush1.xpose.msra.mxu0 0.0
    %1836 = vmatprep.subr.mxu0 0.0
    %1837 = vmatpush1.xpose.msra.mxu0 0.0
    %1838 = vmatprep.subr.mxu0 0.0
    %1839 = vmatpush1.xpose.msra.mxu0 0.0
    %1840 = vmatprep.subr.mxu0 0.0
    %1841 = vmatpush1.xpose.msra.mxu0 0.0
    %1842 = vmatprep.subr.mxu0 0.0
    %1843 = vmatpush1.xpose.msra.mxu0 0.0
    %1844 = vmatprep.subr.mxu0 0.0
    %1845 = vmatpush1.xpose.msra.mxu0 0.0
    %1846 = vmatprep.subr.mxu0 0.0
    %1847 = vmatpush1.xpose.msra.mxu0 0.0
    %1848 = vmatprep.subr.mxu0 0.0
    %1849 = vmatpush1.xpose.msra.mxu0 %v1818
    %1850 = vmatprep.subr.mxu0 0.0
    %1851 = vmatpush1.xpose.msra.mxu0 %v1816
    %1852 = vmatprep.subr.mxu0 0.0
    %1853 = vmatpush2.xpose.msra.mxu0 0.0
    %1854 = vmatprep.subr.mxu0 0.0
    %1855 = vmatpush2.xpose.msra.mxu0 0.0
    %1856 = vmatprep.subr.mxu0 0.0
    %1857 = vmatpush2.xpose.msra.mxu0 0.0
    %1858 = vmatprep.subr.mxu0 0.0
    %1859 = vmatpush2.xpose.msra.mxu0 0.0
    %1860 = vmatprep.subr.mxu0 0.0
    %1861 = vmatpush2.xpose.msra.mxu0 0.0
    %1862 = vmatprep.subr.mxu0 0.0
    %1863 = vmatpush2.xpose.msra.mxu0 0.0
    %1864 = vmatprep.subr.mxu0 0.0
    %1865 = vmatpush2.xpose.msra.mxu0 0.0
    %1866 = vmatprep.subr.mxu0 0.0
    %1867 = vmatpush2.xpose.msra.mxu0 0.0
    %1868 = vmatprep.subr.mxu0 0.0
    %1869 = vmatpush2.xpose.msra.mxu0 0.0
    %1870 = vmatprep.subr.mxu0 0.0
    %1871 = vmatpush2.xpose.msra.mxu0 0.0
    %1872 = vmatprep.subr.mxu0 0.0
    %1873 = vmatpush2.xpose.msra.mxu0 0.0
    %1874 = vmatprep.subr.mxu0 0.0
    %1875 = vmatpush2.xpose.msra.mxu0 0.0
    %1876 = vmatprep.subr.mxu0 0.0
    %1877 = vmatpush2.xpose.msra.mxu0 0.0
    %1878 = vmatprep.subr.mxu0 0.0
    %1879 = vmatpush2.xpose.msra.mxu0 0.0
    %1880 = vmatprep.subr.mxu0 0.0
    %1881 = vmatpush2.xpose.msra.mxu0 0.0
    %1882 = vmatprep.subr.mxu0 0.0
    %1883 = vmatpush2.xpose.msra.mxu0 0.0
    %1884 = vmatprep.mubr.f32.mxu0 0.0
    %1885 = vmatmul.mubr.f32.gmra.mxu0 %v1812
    %v1886 = vpop.f32.mrf.mxu0
    %v1887 = vadd.f32 0.0, %v1886
    %v1888 = vpop.f32.mrf.mxu0
    %1889 = vmatprep.mubr.f32.mxu0 0.0
    %1890 = vmatmul.mubr.f32.gmra.mxu0 %v1814
    %v1891 = vpop.f32.mrf.mxu0
    %v1892 = vadd.f32 0.0, %v1891
    %v1893 = vpop.f32.mrf.mxu0
    %1894 = vdwg.mxu0
    %v1895 = vmul.f32 %v1887, 0.17677669
    %v1896 = vmul.f32 %v1892, 0.17677669
    %v1897 = vadd.f32 %v1895, %v96
    %v1898 = vadd.f32 %v1896, %v97
    %v1899 = vsel %vm482, %v1897, -inf
    %1900 = vmax.xlane.f32.xlu0 %v1899
    %v1901 = vpop.xlane.xlu0 %1900
    %v1902 = vsel %vm482, %v1898, -inf
    %1903 = vmax.xlane.f32.xlu0 %v1902
    %v1904 = vpop.xlane.xlu0 %1903
    %v1905 = vsub.f32 %v1897, %v1901
    %v1906 = vsub.f32 %v1898, %v1904
    %v1907 = vmul.f32 %v1905, 1.442695
    %v1908 = vpow.pop %v1907
    %v1909 = vmul.f32 %v1906, 1.442695
    %v1910 = vpow.pop %v1909
    %v1911 = vsel %vm482, %v1908, 0.0
    %1912 = vadd.xlane.f32.xlu0 %v1911
    %v1913 = vpop.xlane.xlu0 %1912
    %v1914 = vsel %vm482, %v1910, 0.0
    %1915 = vadd.xlane.f32.xlu0 %v1914
    %v1916 = vpop.xlane.xlu0 %1915
    %v1917 = vrcp.pop %v1913
    %v1918 = vrcp.pop %v1916
    %v1919 = vmul.f32 %v1908, %v1917
    %v1920 = vmul.f32 %v1910, %v1918
    %1921 = vrot.lane.b32.xlu0 %v383, 32
    %v1922 = vpop.permute.xlu0 %1921
    %1923 = vrot.lane.b32.xlu0 %v389, 32
    %v1924 = vpop.permute.xlu0 %1923
    %v1928 = vsel %vm482, %v1919, 0
    %v1931 = vsel %vm482, %v1920, 0
    %1933 = vmatprep.subr.mxu0 0.0
    %1934 = vmatpush1.msra.mxu0 0.0
    %1935 = vmatprep.subr.mxu0 0.0
    %1936 = vmatpush1.msra.mxu0 0.0
    %1937 = vmatprep.subr.mxu0 0.0
    %1938 = vmatpush1.msra.mxu0 0.0
    %1939 = vmatprep.subr.mxu0 0.0
    %1940 = vmatpush1.msra.mxu0 0.0
    %1941 = vmatprep.subr.mxu0 0.0
    %1942 = vmatpush1.msra.mxu0 0.0
    %1943 = vmatprep.subr.mxu0 0.0
    %1944 = vmatpush1.msra.mxu0 0.0
    %1945 = vmatprep.subr.mxu0 0.0
    %1946 = vmatpush1.msra.mxu0 0.0
    %1947 = vmatprep.subr.mxu0 0.0
    %1948 = vmatpush1.msra.mxu0 0.0
    %1949 = vmatprep.subr.mxu0 0.0
    %1950 = vmatpush1.msra.mxu0 0.0
    %1951 = vmatprep.subr.mxu0 0.0
    %1952 = vmatpush1.msra.mxu0 0.0
    %1953 = vmatprep.subr.mxu0 0.0
    %1954 = vmatpush1.msra.mxu0 0.0
    %1955 = vmatprep.subr.mxu0 0.0
    %1956 = vmatpush1.msra.mxu0 0.0
    %1957 = vmatprep.subr.mxu0 0.0
    %1958 = vmatpush1.msra.mxu0 0.0
    %1959 = vmatprep.subr.mxu0 0.0
    %1960 = vmatpush1.msra.mxu0 0.0
    %1961 = vmatprep.subr.mxu0 0.0
    %1962 = vmatpush1.msra.mxu0 %v1924
    %1963 = vmatprep.subr.mxu0 0.0
    %1964 = vmatpush1.msra.mxu0 %v1922
    %1965 = vmatprep.subr.mxu0 0.0
    %1966 = vmatpush2.msra.mxu0 0.0
    %1967 = vmatprep.subr.mxu0 0.0
    %1968 = vmatpush2.msra.mxu0 0.0
    %1969 = vmatprep.subr.mxu0 0.0
    %1970 = vmatpush2.msra.mxu0 0.0
    %1971 = vmatprep.subr.mxu0 0.0
    %1972 = vmatpush2.msra.mxu0 0.0
    %1973 = vmatprep.subr.mxu0 0.0
    %1974 = vmatpush2.msra.mxu0 0.0
    %1975 = vmatprep.subr.mxu0 0.0
    %1976 = vmatpush2.msra.mxu0 0.0
    %1977 = vmatprep.subr.mxu0 0.0
    %1978 = vmatpush2.msra.mxu0 0.0
    %1979 = vmatprep.subr.mxu0 0.0
    %1980 = vmatpush2.msra.mxu0 0.0
    %1981 = vmatprep.subr.mxu0 0.0
    %1982 = vmatpush2.msra.mxu0 0.0
    %1983 = vmatprep.subr.mxu0 0.0
    %1984 = vmatpush2.msra.mxu0 0.0
    %1985 = vmatprep.subr.mxu0 0.0
    %1986 = vmatpush2.msra.mxu0 0.0
    %1987 = vmatprep.subr.mxu0 0.0
    %1988 = vmatpush2.msra.mxu0 0.0
    %1989 = vmatprep.subr.mxu0 0.0
    %1990 = vmatpush2.msra.mxu0 0.0
    %1991 = vmatprep.subr.mxu0 0.0
    %1992 = vmatpush2.msra.mxu0 0.0
    %1993 = vmatprep.subr.mxu0 0.0
    %1994 = vmatpush2.msra.mxu0 0.0
    %1995 = vmatprep.subr.mxu0 0.0
    %1996 = vmatpush2.msra.mxu0 0.0
    %1997 = vmatprep.mubr.f32.mxu0 0.0
    %1998 = vmatmul.mubr.f32.gmra.mxu0 %v1928
    %v1999 = vpop.f32.mrf.mxu0
    %v2000 = vadd.f32 0.0, %v1999
    %v2001 = vpop.f32.mrf.mxu0
    %2002 = vmatprep.mubr.f32.mxu0 0.0
    %2003 = vmatmul.mubr.f32.gmra.mxu0 %v1931
    %v2004 = vpop.f32.mrf.mxu0
    %v2005 = vadd.f32 0.0, %v2004
    %v2006 = vpop.f32.mrf.mxu0
    %2007 = vdwg.mxu0
    %2010 = vrot.lane.b32.xlu0 %v784, 32
    %v2011 = vpop.permute.xlu0 %2010
    %2012 = vrot.lane.b32.xlu0 %v789, 32
    %v2013 = vpop.permute.xlu0 %2012
    %2018 = vrot.lane.b32.xlu0 %v988, 64
    %v2019 = vpop.permute.xlu0 %2018
    %2020 = vrot.lane.b32.xlu0 %v993, 64
    %v2021 = vpop.permute.xlu0 %2020
    %2026 = vrot.lane.b32.xlu0 %v1192, 96
    %v2027 = vpop.permute.xlu0 %2026
    %2028 = vrot.lane.b32.xlu0 %v1197, 96
    %v2029 = vpop.permute.xlu0 %2028
    %2034 = vrot.lane.b32.xlu0 %v1592, 32
    %v2035 = vpop.permute.xlu0 %2034
    %2036 = vrot.lane.b32.xlu0 %v1597, 32
    %v2037 = vpop.permute.xlu0 %2036
    %2042 = vrot.lane.b32.xlu0 %v1796, 64
    %v2043 = vpop.permute.xlu0 %2042
    %2044 = vrot.lane.b32.xlu0 %v1801, 64
    %v2045 = vpop.permute.xlu0 %2044
    %2050 = vrot.lane.b32.xlu0 %v2000, 96
    %v2051 = vpop.permute.xlu0 %2050
    %2052 = vrot.lane.b32.xlu0 %v2005, 96
    %v2053 = vpop.permute.xlu0 %2052
    %v2056 = vsel %vm52, %v578, %v2011
    %v2057 = vsel %vm52, %v583, %v2013
    %vm2058 = vcmask 523264
    %v2059 = vsel %vm2058, %v2056, %v2019
    %v2060 = vsel %vm2058, %v2057, %v2021
    %vm2061 = vcmask 785408
    %v2062 = vsel %vm2061, %v2059, %v2027
    %v2063 = vsel %vm2061, %v2060, %v2029
    %v2064 = vsel %vm52, %v1386, %v2035
    %v2065 = vsel %vm52, %v1391, %v2037
    %v2066 = vsel %vm2058, %v2064, %v2043
    %v2067 = vsel %vm2058, %v2065, %v2045
    %v2068 = vsel %vm2061, %v2066, %v2051
    %v2069 = vsel %vm2061, %v2067, %v2053
    %v2070 = vld [vmem:[%s6] sm:$0xff]
    %v2071 = vld [vmem:[%s6 + $0x8] sm:$0xff]
    %v2072 = vld [vmem:[%s6 + $0x10] sm:$0xff]
    %v2073 = vld [vmem:[%s6 + $0x18] sm:$0xff]
    %v2074 = vld [vmem:[%s6 + $0x20] sm:$0xff]
    %v2075 = vld [vmem:[%s6 + $0x28] sm:$0xff]
    %v2076 = vld [vmem:[%s6 + $0x30] sm:$0xff]
    %v2077 = vld [vmem:[%s6 + $0x38] sm:$0xff]
    %v2078 = vld [vmem:[%s6 + $0x40] sm:$0xff]
    %v2079 = vld [vmem:[%s6 + $0x48] sm:$0xff]
    %v2080 = vld [vmem:[%s6 + $0x50] sm:$0xff]
    %v2081 = vld [vmem:[%s6 + $0x58] sm:$0xff]
    %v2082 = vld [vmem:[%s6 + $0x60] sm:$0xff]
    %v2083 = vld [vmem:[%s6 + $0x68] sm:$0xff]
    %v2084 = vld [vmem:[%s6 + $0x70] sm:$0xff]
    %v2085 = vld [vmem:[%s6 + $0x78] sm:$0xff]
    %v2086 = vld [vmem:[%s6 + $0x80] sm:$0xff]
    %v2087 = vld [vmem:[%s6 + $0x88] sm:$0xff]
    %v2088 = vld [vmem:[%s6 + $0x90] sm:$0xff]
    %v2089 = vld [vmem:[%s6 + $0x98] sm:$0xff]
    %v2090 = vld [vmem:[%s6 + $0xa0] sm:$0xff]
    %v2091 = vld [vmem:[%s6 + $0xa8] sm:$0xff]
    %v2092 = vld [vmem:[%s6 + $0xb0] sm:$0xff]
    %v2093 = vld [vmem:[%s6 + $0xb8] sm:$0xff]
    %v2094 = vld [vmem:[%s6 + $0xc0] sm:$0xff]
    %v2095 = vld [vmem:[%s6 + $0xc8] sm:$0xff]
    %v2096 = vld [vmem:[%s6 + $0xd0] sm:$0xff]
    %v2097 = vld [vmem:[%s6 + $0xd8] sm:$0xff]
    %v2098 = vld [vmem:[%s6 + $0xe0] sm:$0xff]
    %v2099 = vld [vmem:[%s6 + $0xe8] sm:$0xff]
    %v2100 = vld [vmem:[%s6 + $0xf0] sm:$0xff]
    %v2101 = vld [vmem:[%s6 + $0xf8] sm:$0xff]
    %v2102 = vld [vmem:[%s7] sm:$0x1]
    %v2104 = vlaneseq
    %v2105 = vshrl.u32 %v2104, 7
    %v2106 = vsub.s32 0, %v2105
    %v2107 = vrot.slane %v2102, %v2106
    %2109 = vmatprep.subr.mxu0 0.0
    %2110 = vmatpush1.msra.mxu0 %v2085
    %2111 = vmatprep.subr.mxu0 0.0
    %2112 = vmatpush1.msra.mxu0 %v2084
    %2113 = vmatprep.subr.mxu0 0.0
    %2114 = vmatpush1.msra.mxu0 %v2083
    %2115 = vmatprep.subr.mxu0 0.0
    %2116 = vmatpush1.msra.mxu0 %v2082
    %2117 = vmatprep.subr.mxu0 0.0
    %2118 = vmatpush1.msra.mxu0 %v2081
    %2119 = vmatprep.subr.mxu0 0.0
    %2120 = vmatpush1.msra.mxu0 %v2080
    %2121 = vmatprep.subr.mxu0 0.0
    %2122 = vmatpush1.msra.mxu0 %v2079
    %2123 = vmatprep.subr.mxu0 0.0
    %2124 = vmatpush1.msra.mxu0 %v2078
    %2125 = vmatprep.subr.mxu0 0.0
    %2126 = vmatpush1.msra.mxu0 %v2077
    %2127 = vmatprep.subr.mxu0 0.0
    %2128 = vmatpush1.msra.mxu0 %v2076
    %2129 = vmatprep.subr.mxu0 0.0
    %2130 = vmatpush1.msra.mxu0 %v2075
    %2131 = vmatprep.subr.mxu0 0.0
    %2132 = vmatpush1.msra.mxu0 %v2074
    %2133 = vmatprep.subr.mxu0 0.0
    %2134 = vmatpush1.msra.mxu0 %v2073
    %2135 = vmatprep.subr.mxu0 0.0
    %2136 = vmatpush1.msra.mxu0 %v2072
    %2137 = vmatprep.subr.mxu0 0.0
    %2138 = vmatpush1.msra.mxu0 %v2071
    %2139 = vmatprep.subr.mxu0 0.0
    %2140 = vmatpush1.msra.mxu0 %v2070
    %2141 = vmatprep.subr.mxu0 0.0
    %2142 = vmatpush2.msra.mxu0 %v2101
    %2143 = vmatprep.subr.mxu0 0.0
    %2144 = vmatpush2.msra.mxu0 %v2100
    %2145 = vmatprep.subr.mxu0 0.0
    %2146 = vmatpush2.msra.mxu0 %v2099
    %2147 = vmatprep.subr.mxu0 0.0
    %2148 = vmatpush2.msra.mxu0 %v2098
    %2149 = vmatprep.subr.mxu0 0.0
    %2150 = vmatpush2.msra.mxu0 %v2097
    %2151 = vmatprep.subr.mxu0 0.0
    %2152 = vmatpush2.msra.mxu0 %v2096
    %2153 = vmatprep.subr.mxu0 0.0
    %2154 = vmatpush2.msra.mxu0 %v2095
    %2155 = vmatprep.subr.mxu0 0.0
    %2156 = vmatpush2.msra.mxu0 %v2094
    %2157 = vmatprep.subr.mxu0 0.0
    %2158 = vmatpush2.msra.mxu0 %v2093
    %2159 = vmatprep.subr.mxu0 0.0
    %2160 = vmatpush2.msra.mxu0 %v2092
    %2161 = vmatprep.subr.mxu0 0.0
    %2162 = vmatpush2.msra.mxu0 %v2091
    %2163 = vmatprep.subr.mxu0 0.0
    %2164 = vmatpush2.msra.mxu0 %v2090
    %2165 = vmatprep.subr.mxu0 0.0
    %2166 = vmatpush2.msra.mxu0 %v2089
    %2167 = vmatprep.subr.mxu0 0.0
    %2168 = vmatpush2.msra.mxu0 %v2088
    %2169 = vmatprep.subr.mxu0 0.0
    %2170 = vmatpush2.msra.mxu0 %v2087
    %2171 = vmatprep.subr.mxu0 0.0
    %2172 = vmatpush2.msra.mxu0 %v2086
    %2173 = vmatprep.mubr.f32.mxu0 %v2068
    %2174 = vmatmul.mubr.f32.gmra.mxu0 %v2062
    %v2175 = vpop.f32.mrf.mxu0
    %v2176 = vadd.f32 %v2107, %v2175
    %v2177 = vpop.f32.mrf.mxu0
    %2178 = vmatprep.mubr.f32.mxu0 %v2069
    %2179 = vmatmul.mubr.f32.gmra.mxu0 %v2063
    %v2180 = vpop.f32.mrf.mxu0
    %v2181 = vadd.f32 %v2107, %v2180
    %v2182 = vpop.f32.mrf.mxu0
    %2183 = vdwg.mxu0
    %v2184 = vadd.f32 %v2176, %v94
    %v2185 = vadd.f32 %v2181, %v95
    %v2186 = vld [vmem:[%s8] sm:$0x1]
    %v2187 = vld [vmem:[%s9] sm:$0x1]
    %v2188 = vsel %vm52, %v2184, 0.0
    %2189 = vadd.xlane.f32.xlu0 %v2188
    %v2190 = vpop.xlane.xlu0 %2189
    %v2191 = vsel %vm52, %v2185, 0.0
    %2192 = vadd.xlane.f32.xlu0 %v2191
    %v2193 = vpop.xlane.xlu0 %2192
    %v2194 = vmul.f32 %v2190, %v59
    %v2195 = vmul.f32 %v2193, %v59
    %v2196 = vsub.f32 %v2184, %v2194
    %v2197 = vsub.f32 %v2185, %v2195
    %v2198 = vmul.f32 %v2196, %v2196
    %v2199 = vmul.f32 %v2197, %v2197
    %v2200 = vsel %vm52, %v2198, 0.0
    %2201 = vadd.xlane.f32.xlu0 %v2200
    %v2202 = vpop.xlane.xlu0 %2201
    %v2203 = vsel %vm52, %v2199, 0.0
    %2204 = vadd.xlane.f32.xlu0 %v2203
    %v2205 = vpop.xlane.xlu0 %2204
    %v2206 = vmul.f32 %v2202, %v59
    %v2207 = vmul.f32 %v2205, %v59
    %v2208 = vadd.f32 %v2206, 1e-05
    %v2209 = vadd.f32 %v2207, 1e-05
    %v2210 = vrsqrt.pop %v2208
    %v2211 = vrsqrt.pop %v2209
    %v2212 = vmul.f32 %v2196, %v2210
    %v2213 = vmul.f32 %v2197, %v2211
    %v2215 = vlaneseq
    %v2216 = vshrl.u32 %v2215, 7
    %v2217 = vsub.s32 0, %v2216
    %v2218 = vrot.slane %v2186, %v2217
    %v2220 = vmul.f32 %v2212, %v2218
    %v2221 = vmul.f32 %v2213, %v2218
    %v2223 = vlaneseq
    %v2224 = vshrl.u32 %v2223, 7
    %v2225 = vsub.s32 0, %v2224
    %v2226 = vrot.slane %v2187, %v2225
    %v2228 = vadd.f32 %v2220, %v2226
    %v2229 = vadd.f32 %v2221, %v2226
    %v2230 = vld [vmem:[%s10] sm:$0xff]
    %v2231 = vld [vmem:[%s10 + $0x8] sm:$0xff]
    %v2232 = vld [vmem:[%s10 + $0x10] sm:$0xff]
    %v2233 = vld [vmem:[%s10 + $0x18] sm:$0xff]
    %v2234 = vld [vmem:[%s11] sm:$0x1]
    %v2236 = vlaneseq
    %v2237 = vshrl.u32 %v2236, 7
    %v2238 = vsub.s32 0, %v2237
    %v2239 = vrot.slane %v2234, %v2238
    %v2242 = vsel %vm52, %v2228, 0
    %v2245 = vsel %vm52, %v2229, 0
    %2247 = vmatprep.subr.mxu0 0.0
    %2248 = vmatpush1.msra.mxu0 0.0
    %2249 = vmatprep.subr.mxu0 0.0
    %2250 = vmatpush1.msra.mxu0 0.0
    %2251 = vmatprep.subr.mxu0 0.0
    %2252 = vmatpush1.msra.mxu0 0.0
    %2253 = vmatprep.subr.mxu0 0.0
    %2254 = vmatpush1.msra.mxu0 0.0
    %2255 = vmatprep.subr.mxu0 0.0
    %2256 = vmatpush1.msra.mxu0 0.0
    %2257 = vmatprep.subr.mxu0 0.0
    %2258 = vmatpush1.msra.mxu0 0.0
    %2259 = vmatprep.subr.mxu0 0.0
    %2260 = vmatpush1.msra.mxu0 0.0
    %2261 = vmatprep.subr.mxu0 0.0
    %2262 = vmatpush1.msra.mxu0 0.0
    %2263 = vmatprep.subr.mxu0 0.0
    %2264 = vmatpush1.msra.mxu0 0.0
    %2265 = vmatprep.subr.mxu0 0.0
    %2266 = vmatpush1.msra.mxu0 0.0
    %2267 = vmatprep.subr.mxu0 0.0
    %2268 = vmatpush1.msra.mxu0 0.0
    %2269 = vmatprep.subr.mxu0 0.0
    %2270 = vmatpush1.msra.mxu0 0.0
    %2271 = vmatprep.subr.mxu0 0.0
    %2272 = vmatpush1.msra.mxu0 %v2233
    %2273 = vmatprep.subr.mxu0 0.0
    %2274 = vmatpush1.msra.mxu0 %v2232
    %2275 = vmatprep.subr.mxu0 0.0
    %2276 = vmatpush1.msra.mxu0 %v2231
    %2277 = vmatprep.subr.mxu0 0.0
    %2278 = vmatpush1.msra.mxu0 %v2230
    %2279 = vmatprep.subr.mxu0 0.0
    %2280 = vmatpush2.msra.mxu0 0.0
    %2281 = vmatprep.subr.mxu0 0.0
    %2282 = vmatpush2.msra.mxu0 0.0
    %2283 = vmatprep.subr.mxu0 0.0
    %2284 = vmatpush2.msra.mxu0 0.0
    %2285 = vmatprep.subr.mxu0 0.0
    %2286 = vmatpush2.msra.mxu0 0.0
    %2287 = vmatprep.subr.mxu0 0.0
    %2288 = vmatpush2.msra.mxu0 0.0
    %2289 = vmatprep.subr.mxu0 0.0
    %2290 = vmatpush2.msra.mxu0 0.0
    %2291 = vmatprep.subr.mxu0 0.0
    %2292 = vmatpush2.msra.mxu0 0.0
    %2293 = vmatprep.subr.mxu0 0.0
    %2294 = vmatpush2.msra.mxu0 0.0
    %2295 = vmatprep.subr.mxu0 0.0
    %2296 = vmatpush2.msra.mxu0 0.0
    %2297 = vmatprep.subr.mxu0 0.0
    %2298 = vmatpush2.msra.mxu0 0.0
    %2299 = vmatprep.subr.mxu0 0.0
    %2300 = vmatpush2.msra.mxu0 0.0
    %2301 = vmatprep.subr.mxu0 0.0
    %2302 = vmatpush2.msra.mxu0 0.0
    %2303 = vmatprep.subr.mxu0 0.0
    %2304 = vmatpush2.msra.mxu0 0.0
    %2305 = vmatprep.subr.mxu0 0.0
    %2306 = vmatpush2.msra.mxu0 0.0
    %2307 = vmatprep.subr.mxu0 0.0
    %2308 = vmatpush2.msra.mxu0 0.0
    %2309 = vmatprep.subr.mxu0 0.0
    %2310 = vmatpush2.msra.mxu0 0.0
    %2311 = vmatprep.mubr.f32.mxu0 0.0
    %2312 = vmatmul.mubr.f32.gmra.mxu0 %v2242
    %v2313 = vpop.f32.mrf.mxu0
    %v2314 = vadd.f32 %v2239, %v2313
    %v2315 = vpop.f32.mrf.mxu0
    %2316 = vmatprep.mubr.f32.mxu0 0.0
    %2317 = vmatmul.mubr.f32.gmra.mxu0 %v2245
    %v2318 = vpop.f32.mrf.mxu0
    %v2319 = vadd.f32 %v2239, %v2318
    %v2320 = vpop.f32.mrf.mxu0
    %2321 = vdwg.mxu0
    %v2322 = vmax.f32 %v2314, 0.0
    %v2323 = vmax.f32 %v2319, 0.0
    %v2324 = vld [vmem:[%s12] sm:$0xff]
    %v2325 = vld [vmem:[%s12 + $0x8] sm:$0xff]
    %v2326 = vld [vmem:[%s12 + $0x10] sm:$0xff]
    %v2327 = vld [vmem:[%s12 + $0x18] sm:$0xff]
    %v2328 = vld [vmem:[%s12 + $0x20] sm:$0xff]
    %v2329 = vld [vmem:[%s12 + $0x28] sm:$0xff]
    %v2330 = vld [vmem:[%s12 + $0x30] sm:$0xff]
    %v2331 = vld [vmem:[%s12 + $0x38] sm:$0xff]
    %v2332 = vld [vmem:[%s13] sm:$0x1]
    %v2334 = vlaneseq
    %v2335 = vshrl.u32 %v2334, 7
    %v2336 = vsub.s32 0, %v2335
    %v2337 = vrot.slane %v2332, %v2336
    %v2340 = vsel %vm2058, %v2322, 0
    %v2343 = vsel %vm2058, %v2323, 0
    %2345 = vmatprep.subr.mxu0 0.0
    %2346 = vmatpush1.msra.mxu0 0.0
    %2347 = vmatprep.subr.mxu0 0.0
    %2348 = vmatpush1.msra.mxu0 0.0
    %2349 = vmatprep.subr.mxu0 0.0
    %2350 = vmatpush1.msra.mxu0 0.0
    %2351 = vmatprep.subr.mxu0 0.0
    %2352 = vmatpush1.msra.mxu0 0.0
    %2353 = vmatprep.subr.mxu0 0.0
    %2354 = vmatpush1.msra.mxu0 0.0
    %2355 = vmatprep.subr.mxu0 0.0
    %2356 = vmatpush1.msra.mxu0 0.0
    %2357 = vmatprep.subr.mxu0 0.0
    %2358 = vmatpush1.msra.mxu0 0.0
    %2359 = vmatprep.subr.mxu0 0.0
    %2360 = vmatpush1.msra.mxu0 0.0
    %2361 = vmatprep.subr.mxu0 0.0
    %2362 = vmatpush1.msra.mxu0 %v2331
    %2363 = vmatprep.subr.mxu0 0.0
    %2364 = vmatpush1.msra.mxu0 %v2330
    %2365 = vmatprep.subr.mxu0 0.0
    %2366 = vmatpush1.msra.mxu0 %v2329
    %2367 = vmatprep.subr.mxu0 0.0
    %2368 = vmatpush1.msra.mxu0 %v2328
    %2369 = vmatprep.subr.mxu0 0.0
    %2370 = vmatpush1.msra.mxu0 %v2327
    %2371 = vmatprep.subr.mxu0 0.0
    %2372 = vmatpush1.msra.mxu0 %v2326
    %2373 = vmatprep.subr.mxu0 0.0
    %2374 = vmatpush1.msra.mxu0 %v2325
    %2375 = vmatprep.subr.mxu0 0.0
    %2376 = vmatpush1.msra.mxu0 %v2324
    %2377 = vmatprep.subr.mxu0 0.0
    %2378 = vmatpush2.msra.mxu0 0.0
    %2379 = vmatprep.subr.mxu0 0.0
    %2380 = vmatpush2.msra.mxu0 0.0
    %2381 = vmatprep.subr.mxu0 0.0
    %2382 = vmatpush2.msra.mxu0 0.0
    %2383 = vmatprep.subr.mxu0 0.0
    %2384 = vmatpush2.msra.mxu0 0.0
    %2385 = vmatprep.subr.mxu0 0.0
    %2386 = vmatpush2.msra.mxu0 0.0
    %2387 = vmatprep.subr.mxu0 0.0
    %2388 = vmatpush2.msra.mxu0 0.0
    %2389 = vmatprep.subr.mxu0 0.0
    %2390 = vmatpush2.msra.mxu0 0.0
    %2391 = vmatprep.subr.mxu0 0.0
    %2392 = vmatpush2.msra.mxu0 0.0
    %2393 = vmatprep.subr.mxu0 0.0
    %2394 = vmatpush2.msra.mxu0 0.0
    %2395 = vmatprep.subr.mxu0 0.0
    %2396 = vmatpush2.msra.mxu0 0.0
    %2397 = vmatprep.subr.mxu0 0.0
    %2398 = vmatpush2.msra.mxu0 0.0
    %2399 = vmatprep.subr.mxu0 0.0
    %2400 = vmatpush2.msra.mxu0 0.0
    %2401 = vmatprep.subr.mxu0 0.0
    %2402 = vmatpush2.msra.mxu0 0.0
    %2403 = vmatprep.subr.mxu0 0.0
    %2404 = vmatpush2.msra.mxu0 0.0
    %2405 = vmatprep.subr.mxu0 0.0
    %2406 = vmatpush2.msra.mxu0 0.0
    %2407 = vmatprep.subr.mxu0 0.0
    %2408 = vmatpush2.msra.mxu0 0.0
    %2409 = vmatprep.mubr.f32.mxu0 0.0
    %2410 = vmatmul.mubr.f32.gmra.mxu0 %v2340
    %v2411 = vpop.f32.mrf.mxu0
    %v2412 = vadd.f32 %v2337, %v2411
    %v2413 = vpop.f32.mrf.mxu0
    %2414 = vmatprep.mubr.f32.mxu0 0.0
    %2415 = vmatmul.mubr.f32.gmra.mxu0 %v2343
    %v2416 = vpop.f32.mrf.mxu0
    %v2417 = vadd.f32 %v2337, %v2416
    %v2418 = vpop.f32.mrf.mxu0
    %2419 = vdwg.mxu0
    %s2420 = scalar_lea.vmem %s4, 192
    %v2421 = vld [vmem:[%s2420] sm:$0xff]
    %v2422 = vld [vmem:[%s2420 + $0x8] sm:$0xff]
    %v2423 = vld [vmem:[%s2420 + $0x10] sm:$0xff]
    %v2424 = vld [vmem:[%s2420 + $0x18] sm:$0xff]
    %v2425 = vld [vmem:[%s2420 + $0x20] sm:$0xff]
    %v2426 = vld [vmem:[%s2420 + $0x28] sm:$0xff]
    %v2427 = vld [vmem:[%s2420 + $0x30] sm:$0xff]
    %v2428 = vld [vmem:[%s2420 + $0x38] sm:$0xff]
    %v2429 = vld [vmem:[%s2420 + $0x40] sm:$0xff]
    %v2430 = vld [vmem:[%s2420 + $0x48] sm:$0xff]
    %v2431 = vld [vmem:[%s2420 + $0x50] sm:$0xff]
    %v2432 = vld [vmem:[%s2420 + $0x58] sm:$0xff]
    %v2433 = vld [vmem:[%s2420 + $0x60] sm:$0xff]
    %v2434 = vld [vmem:[%s2420 + $0x68] sm:$0xff]
    %v2435 = vld [vmem:[%s2420 + $0x70] sm:$0xff]
    %v2436 = vld [vmem:[%s2420 + $0x78] sm:$0xff]
    %v2437 = vld [vmem:[%s2420 + $0x80] sm:$0xff]
    %v2438 = vld [vmem:[%s2420 + $0x88] sm:$0xff]
    %v2439 = vld [vmem:[%s2420 + $0x90] sm:$0xff]
    %v2440 = vld [vmem:[%s2420 + $0x98] sm:$0xff]
    %v2441 = vld [vmem:[%s2420 + $0xa0] sm:$0xff]
    %v2442 = vld [vmem:[%s2420 + $0xa8] sm:$0xff]
    %v2443 = vld [vmem:[%s2420 + $0xb0] sm:$0xff]
    %v2444 = vld [vmem:[%s2420 + $0xb8] sm:$0xff]
    %s2445 = scalar_lea.vmem %s5, 6
    %v2446 = vld [vmem:[%s2445] sm:$0x3f]
    %v2448 = vlaneseq
    %v2449 = vshrl.u32 %v2448, 7
    %v2450 = vsub.s32 0, %v2449
    %v2451 = vrot.slane %v2446, %v2450
    %v2452 = vlaneseq
    %v2453 = vshrl.u32 %v2452, 7
    %v2454 = vsub.s32 1, %v2453
    %v2455 = vrot.slane %v2446, %v2454
    %v2456 = vlaneseq
    %v2457 = vshrl.u32 %v2456, 7
    %v2458 = vsub.s32 2, %v2457
    %v2459 = vrot.slane %v2446, %v2458
    %v2460 = vlaneseq
    %v2461 = vshrl.u32 %v2460, 7
    %v2462 = vsub.s32 3, %v2461
    %v2463 = vrot.slane %v2446, %v2462
    %v2464 = vlaneseq
    %v2465 = vshrl.u32 %v2464, 7
    %v2466 = vsub.s32 4, %v2465
    %v2467 = vrot.slane %v2446, %v2466
    %v2468 = vlaneseq
    %v2469 = vshrl.u32 %v2468, 7
    %v2470 = vsub.s32 5, %v2469
    %v2471 = vrot.slane %v2446, %v2470
    %v2479 = vsel %vm52, %v2412, 0
    %v2482 = vsel %vm52, %v2417, 0
    %2484 = vmatprep.subr.mxu0 0.0
    %2485 = vmatpush1.msra.mxu0 0.0
    %2486 = vmatprep.subr.mxu0 0.0
    %2487 = vmatpush1.msra.mxu0 0.0
    %2488 = vmatprep.subr.mxu0 0.0
    %2489 = vmatpush1.msra.mxu0 0.0
    %2490 = vmatprep.subr.mxu0 0.0
    %2491 = vmatpush1.msra.mxu0 0.0
    %2492 = vmatprep.subr.mxu0 0.0
    %2493 = vmatpush1.msra.mxu0 0.0
    %2494 = vmatprep.subr.mxu0 0.0
    %2495 = vmatpush1.msra.mxu0 0.0
    %2496 = vmatprep.subr.mxu0 0.0
    %2497 = vmatpush1.msra.mxu0 0.0
    %2498 = vmatprep.subr.mxu0 0.0
    %2499 = vmatpush1.msra.mxu0 0.0
    %2500 = vmatprep.subr.mxu0 0.0
    %2501 = vmatpush1.msra.mxu0 0.0
    %2502 = vmatprep.subr.mxu0 0.0
    %2503 = vmatpush1.msra.mxu0 0.0
    %2504 = vmatprep.subr.mxu0 0.0
    %2505 = vmatpush1.msra.mxu0 0.0
    %2506 = vmatprep.subr.mxu0 0.0
    %2507 = vmatpush1.msra.mxu0 0.0
    %2508 = vmatprep.subr.mxu0 %v2440
    %2509 = vmatpush1.msra.mxu0 %v2439
    %2510 = vmatprep.subr.mxu0 %v2434
    %2511 = vmatpush1.msra.mxu0 %v2433
    %2512 = vmatprep.subr.mxu0 %v2428
    %2513 = vmatpush1.msra.mxu0 %v2427
    %2514 = vmatprep.subr.mxu0 %v2422
    %2515 = vmatpush1.msra.mxu0 %v2421
    %2516 = vmatprep.subr.mxu0 0.0
    %2517 = vmatpush2.msra.mxu0 0.0
    %2518 = vmatprep.subr.mxu0 0.0
    %2519 = vmatpush2.msra.mxu0 0.0
    %2520 = vmatprep.subr.mxu0 0.0
    %2521 = vmatpush2.msra.mxu0 0.0
    %2522 = vmatprep.subr.mxu0 0.0
    %2523 = vmatpush2.msra.mxu0 0.0
    %2524 = vmatprep.subr.mxu0 0.0
    %2525 = vmatpush2.msra.mxu0 0.0
    %2526 = vmatprep.subr.mxu0 0.0
    %2527 = vmatpush2.msra.mxu0 0.0
    %2528 = vmatprep.subr.mxu0 0.0
    %2529 = vmatpush2.msra.mxu0 0.0
    %2530 = vmatprep.subr.mxu0 0.0
    %2531 = vmatpush2.msra.mxu0 0.0
    %2532 = vmatprep.subr.mxu0 0.0
    %2533 = vmatpush2.msra.mxu0 0.0
    %2534 = vmatprep.subr.mxu0 0.0
    %2535 = vmatpush2.msra.mxu0 0.0
    %2536 = vmatprep.subr.mxu0 0.0
    %2537 = vmatpush2.msra.mxu0 0.0
    %2538 = vmatprep.subr.mxu0 0.0
    %2539 = vmatpush2.msra.mxu0 0.0
    %2540 = vmatprep.subr.mxu0 0.0
    %2541 = vmatpush2.msra.mxu0 0.0
    %2542 = vmatprep.subr.mxu0 0.0
    %2543 = vmatpush2.msra.mxu0 0.0
    %2544 = vmatprep.subr.mxu0 0.0
    %2545 = vmatpush2.msra.mxu0 0.0
    %2546 = vmatprep.subr.mxu0 0.0
    %2547 = vmatpush2.msra.mxu0 0.0
    %2548 = vmatprep.mubr.f32.mxu0 0.0
    %2549 = vmatmul.mubr.f32.gmra.mxu0 %v2479
    %v2550 = vpop.f32.mrf.mxu0
    %v2551 = vadd.f32 %v2451, %v2550
    %v2552 = vpop.f32.mrf.mxu0
    %v2553 = vadd.f32 %v2455, %v2552
    %2554 = vmatprep.mubr.f32.mxu0 0.0
    %2555 = vmatmul.mubr.f32.gmra.mxu0 %v2482
    %v2556 = vpop.f32.mrf.mxu0
    %v2557 = vadd.f32 %v2451, %v2556
    %v2558 = vpop.f32.mrf.mxu0
    %v2559 = vadd.f32 %v2455, %v2558
    %2560 = vdwg.mxu0
    %2561 = vmatprep.subr.mxu0 0.0
    %2562 = vmatpush1.msra.mxu0 0.0
    %2563 = vmatprep.subr.mxu0 0.0
    %2564 = vmatpush1.msra.mxu0 0.0
    %2565 = vmatprep.subr.mxu0 0.0
    %2566 = vmatpush1.msra.mxu0 0.0
    %2567 = vmatprep.subr.mxu0 0.0
    %2568 = vmatpush1.msra.mxu0 0.0
    %2569 = vmatprep.subr.mxu0 0.0
    %2570 = vmatpush1.msra.mxu0 0.0
    %2571 = vmatprep.subr.mxu0 0.0
    %2572 = vmatpush1.msra.mxu0 0.0
    %2573 = vmatprep.subr.mxu0 0.0
    %2574 = vmatpush1.msra.mxu0 0.0
    %2575 = vmatprep.subr.mxu0 0.0
    %2576 = vmatpush1.msra.mxu0 0.0
    %2577 = vmatprep.subr.mxu0 0.0
    %2578 = vmatpush1.msra.mxu0 0.0
    %2579 = vmatprep.subr.mxu0 0.0
    %2580 = vmatpush1.msra.mxu0 0.0
    %2581 = vmatprep.subr.mxu0 0.0
    %2582 = vmatpush1.msra.mxu0 0.0
    %2583 = vmatprep.subr.mxu0 0.0
    %2584 = vmatpush1.msra.mxu0 0.0
    %2585 = vmatprep.subr.mxu0 %v2442
    %2586 = vmatpush1.msra.mxu0 %v2441
    %2587 = vmatprep.subr.mxu0 %v2436
    %2588 = vmatpush1.msra.mxu0 %v2435
    %2589 = vmatprep.subr.mxu0 %v2430
    %2590 = vmatpush1.msra.mxu0 %v2429
    %2591 = vmatprep.subr.mxu0 %v2424
    %2592 = vmatpush1.msra.mxu0 %v2423
    %2593 = vmatprep.subr.mxu0 0.0
    %2594 = vmatpush2.msra.mxu0 0.0
    %2595 = vmatprep.subr.mxu0 0.0
    %2596 = vmatpush2.msra.mxu0 0.0
    %2597 = vmatprep.subr.mxu0 0.0
    %2598 = vmatpush2.msra.mxu0 0.0
    %2599 = vmatprep.subr.mxu0 0.0
    %2600 = vmatpush2.msra.mxu0 0.0
    %2601 = vmatprep.subr.mxu0 0.0
    %2602 = vmatpush2.msra.mxu0 0.0
    %2603 = vmatprep.subr.mxu0 0.0
    %2604 = vmatpush2.msra.mxu0 0.0
    %2605 = vmatprep.subr.mxu0 0.0
    %2606 = vmatpush2.msra.mxu0 0.0
    %2607 = vmatprep.subr.mxu0 0.0
    %2608 = vmatpush2.msra.mxu0 0.0
    %2609 = vmatprep.subr.mxu0 0.0
    %2610 = vmatpush2.msra.mxu0 0.0
    %2611 = vmatprep.subr.mxu0 0.0
    %2612 = vmatpush2.msra.mxu0 0.0
    %2613 = vmatprep.subr.mxu0 0.0
    %2614 = vmatpush2.msra.mxu0 0.0
    %2615 = vmatprep.subr.mxu0 0.0
    %2616 = vmatpush2.msra.mxu0 0.0
    %2617 = vmatprep.subr.mxu0 0.0
    %2618 = vmatpush2.msra.mxu0 0.0
    %2619 = vmatprep.subr.mxu0 0.0
    %2620 = vmatpush2.msra.mxu0 0.0
    %2621 = vmatprep.subr.mxu0 0.0
    %2622 = vmatpush2.msra.mxu0 0.0
    %2623 = vmatprep.subr.mxu0 0.0
    %2624 = vmatpush2.msra.mxu0 0.0
    %2625 = vmatprep.mubr.f32.mxu0 0.0
    %2626 = vmatmul.mubr.f32.gmra.mxu0 %v2479
    %v2627 = vpop.f32.mrf.mxu0
    %v2628 = vadd.f32 %v2459, %v2627
    %v2629 = vpop.f32.mrf.mxu0
    %v2630 = vadd.f32 %v2463, %v2629
    %2631 = vmatprep.mubr.f32.mxu0 0.0
    %2632 = vmatmul.mubr.f32.gmra.mxu0 %v2482
    %v2633 = vpop.f32.mrf.mxu0
    %v2634 = vadd.f32 %v2459, %v2633
    %v2635 = vpop.f32.mrf.mxu0
    %v2636 = vadd.f32 %v2463, %v2635
    %2637 = vdwg.mxu0
    %2638 = vmatprep.subr.mxu0 0.0
    %2639 = vmatpush1.msra.mxu0 0.0
    %2640 = vmatprep.subr.mxu0 0.0
    %2641 = vmatpush1.msra.mxu0 0.0
    %2642 = vmatprep.subr.mxu0 0.0
    %2643 = vmatpush1.msra.mxu0 0.0
    %2644 = vmatprep.subr.mxu0 0.0
    %2645 = vmatpush1.msra.mxu0 0.0
    %2646 = vmatprep.subr.mxu0 0.0
    %2647 = vmatpush1.msra.mxu0 0.0
    %2648 = vmatprep.subr.mxu0 0.0
    %2649 = vmatpush1.msra.mxu0 0.0
    %2650 = vmatprep.subr.mxu0 0.0
    %2651 = vmatpush1.msra.mxu0 0.0
    %2652 = vmatprep.subr.mxu0 0.0
    %2653 = vmatpush1.msra.mxu0 0.0
    %2654 = vmatprep.subr.mxu0 0.0
    %2655 = vmatpush1.msra.mxu0 0.0
    %2656 = vmatprep.subr.mxu0 0.0
    %2657 = vmatpush1.msra.mxu0 0.0
    %2658 = vmatprep.subr.mxu0 0.0
    %2659 = vmatpush1.msra.mxu0 0.0
    %2660 = vmatprep.subr.mxu0 0.0
    %2661 = vmatpush1.msra.mxu0 0.0
    %2662 = vmatprep.subr.mxu0 %v2444
    %2663 = vmatpush1.msra.mxu0 %v2443
    %2664 = vmatprep.subr.mxu0 %v2438
    %2665 = vmatpush1.msra.mxu0 %v2437
    %2666 = vmatprep.subr.mxu0 %v2432
    %2667 = vmatpush1.msra.mxu0 %v2431
    %2668 = vmatprep.subr.mxu0 %v2426
    %2669 = vmatpush1.msra.mxu0 %v2425
    %2670 = vmatprep.subr.mxu0 0.0
    %2671 = vmatpush2.msra.mxu0 0.0
    %2672 = vmatprep.subr.mxu0 0.0
    %2673 = vmatpush2.msra.mxu0 0.0
    %2674 = vmatprep.subr.mxu0 0.0
    %2675 = vmatpush2.msra.mxu0 0.0
    %2676 = vmatprep.subr.mxu0 0.0
    %2677 = vmatpush2.msra.mxu0 0.0
    %2678 = vmatprep.subr.mxu0 0.0
    %2679 = vmatpush2.msra.mxu0 0.0
    %2680 = vmatprep.subr.mxu0 0.0
    %2681 = vmatpush2.msra.mxu0 0.0
    %2682 = vmatprep.subr.mxu0 0.0
    %2683 = vmatpush2.msra.mxu0 0.0
    %2684 = vmatprep.subr.mxu0 0.0
    %2685 = vmatpush2.msra.mxu0 0.0
    %2686 = vmatprep.subr.mxu0 0.0
    %2687 = vmatpush2.msra.mxu0 0.0
    %2688 = vmatprep.subr.mxu0 0.0
    %2689 = vmatpush2.msra.mxu0 0.0
    %2690 = vmatprep.subr.mxu0 0.0
    %2691 = vmatpush2.msra.mxu0 0.0
    %2692 = vmatprep.subr.mxu0 0.0
    %2693 = vmatpush2.msra.mxu0 0.0
    %2694 = vmatprep.subr.mxu0 0.0
    %2695 = vmatpush2.msra.mxu0 0.0
    %2696 = vmatprep.subr.mxu0 0.0
    %2697 = vmatpush2.msra.mxu0 0.0
    %2698 = vmatprep.subr.mxu0 0.0
    %2699 = vmatpush2.msra.mxu0 0.0
    %2700 = vmatprep.subr.mxu0 0.0
    %2701 = vmatpush2.msra.mxu0 0.0
    %2702 = vmatprep.mubr.f32.mxu0 0.0
    %2703 = vmatmul.mubr.f32.gmra.mxu0 %v2479
    %v2704 = vpop.f32.mrf.mxu0
    %v2705 = vadd.f32 %v2467, %v2704
    %v2706 = vpop.f32.mrf.mxu0
    %v2707 = vadd.f32 %v2471, %v2706
    %2708 = vmatprep.mubr.f32.mxu0 0.0
    %2709 = vmatmul.mubr.f32.gmra.mxu0 %v2482
    %v2710 = vpop.f32.mrf.mxu0
    %v2711 = vadd.f32 %v2467, %v2710
    %v2712 = vpop.f32.mrf.mxu0
    %v2713 = vadd.f32 %v2471, %v2712
    %2714 = vdwg.mxu0
    %v2716 = vsel %vm52, %v2551, 0
    %v2719 = vsel %vm52, %v2557, 0
    %v2722 = vsel %vm52, %v2628, 0
    %v2725 = vsel %vm52, %v2634, 0
    %2727 = vmatprep.subr.mxu0 0.0
    %2728 = vmatpush1.xpose.msra.mxu0 0.0
    %2729 = vmatprep.subr.mxu0 0.0
    %2730 = vmatpush1.xpose.msra.mxu0 0.0
    %2731 = vmatprep.subr.mxu0 0.0
    %2732 = vmatpush1.xpose.msra.mxu0 0.0
    %2733 = vmatprep.subr.mxu0 0.0
    %2734 = vmatpush1.xpose.msra.mxu0 0.0
    %2735 = vmatprep.subr.mxu0 0.0
    %2736 = vmatpush1.xpose.msra.mxu0 0.0
    %2737 = vmatprep.subr.mxu0 0.0
    %2738 = vmatpush1.xpose.msra.mxu0 0.0
    %2739 = vmatprep.subr.mxu0 0.0
    %2740 = vmatpush1.xpose.msra.mxu0 0.0
    %2741 = vmatprep.subr.mxu0 0.0
    %2742 = vmatpush1.xpose.msra.mxu0 0.0
    %2743 = vmatprep.subr.mxu0 0.0
    %2744 = vmatpush1.xpose.msra.mxu0 0.0
    %2745 = vmatprep.subr.mxu0 0.0
    %2746 = vmatpush1.xpose.msra.mxu0 0.0
    %2747 = vmatprep.subr.mxu0 0.0
    %2748 = vmatpush1.xpose.msra.mxu0 0.0
    %2749 = vmatprep.subr.mxu0 0.0
    %2750 = vmatpush1.xpose.msra.mxu0 0.0
    %2751 = vmatprep.subr.mxu0 0.0
    %2752 = vmatpush1.xpose.msra.mxu0 0.0
    %2753 = vmatprep.subr.mxu0 0.0
    %2754 = vmatpush1.xpose.msra.mxu0 0.0
    %2755 = vmatprep.subr.mxu0 0.0
    %2756 = vmatpush1.xpose.msra.mxu0 %v2725
    %2757 = vmatprep.subr.mxu0 0.0
    %2758 = vmatpush1.xpose.msra.mxu0 %v2722
    %2759 = vmatprep.subr.mxu0 0.0
    %2760 = vmatpush2.xpose.msra.mxu0 0.0
    %2761 = vmatprep.subr.mxu0 0.0
    %2762 = vmatpush2.xpose.msra.mxu0 0.0
    %2763 = vmatprep.subr.mxu0 0.0
    %2764 = vmatpush2.xpose.msra.mxu0 0.0
    %2765 = vmatprep.subr.mxu0 0.0
    %2766 = vmatpush2.xpose.msra.mxu0 0.0
    %2767 = vmatprep.subr.mxu0 0.0
    %2768 = vmatpush2.xpose.msra.mxu0 0.0
    %2769 = vmatprep.subr.mxu0 0.0
    %2770 = vmatpush2.xpose.msra.mxu0 0.0
    %2771 = vmatprep.subr.mxu0 0.0
    %2772 = vmatpush2.xpose.msra.mxu0 0.0
    %2773 = vmatprep.subr.mxu0 0.0
    %2774 = vmatpush2.xpose.msra.mxu0 0.0
    %2775 = vmatprep.subr.mxu0 0.0
    %2776 = vmatpush2.xpose.msra.mxu0 0.0
    %2777 = vmatprep.subr.mxu0 0.0
    %2778 = vmatpush2.xpose.msra.mxu0 0.0
    %2779 = vmatprep.subr.mxu0 0.0
    %2780 = vmatpush2.xpose.msra.mxu0 0.0
    %2781 = vmatprep.subr.mxu0 0.0
    %2782 = vmatpush2.xpose.msra.mxu0 0.0
    %2783 = vmatprep.subr.mxu0 0.0
    %2784 = vmatpush2.xpose.msra.mxu0 0.0
    %2785 = vmatprep.subr.mxu0 0.0
    %2786 = vmatpush2.xpose.msra.mxu0 0.0
    %2787 = vmatprep.subr.mxu0 0.0
    %2788 = vmatpush2.xpose.msra.mxu0 0.0
    %2789 = vmatprep.subr.mxu0 0.0
    %2790 = vmatpush2.xpose.msra.mxu0 0.0
    %2791 = vmatprep.mubr.f32.mxu0 0.0
    %2792 = vmatmul.mubr.f32.gmra.mxu0 %v2716
    %v2793 = vpop.f32.mrf.mxu0
    %v2794 = vadd.f32 0.0, %v2793
    %v2795 = vpop.f32.mrf.mxu0
    %2796 = vmatprep.mubr.f32.mxu0 0.0
    %2797 = vmatmul.mubr.f32.gmra.mxu0 %v2719
    %v2798 = vpop.f32.mrf.mxu0
    %v2799 = vadd.f32 0.0, %v2798
    %v2800 = vpop.f32.mrf.mxu0
    %2801 = vdwg.mxu0
    %v2802 = vmul.f32 %v2794, 0.17677669
    %v2803 = vmul.f32 %v2799, 0.17677669
    %v2804 = vadd.f32 %v2802, %v96
    %v2805 = vadd.f32 %v2803, %v97
    %v2806 = vsel %vm482, %v2804, -inf
    %2807 = vmax.xlane.f32.xlu0 %v2806
    %v2808 = vpop.xlane.xlu0 %2807
    %v2809 = vsel %vm482, %v2805, -inf
    %2810 = vmax.xlane.f32.xlu0 %v2809
    %v2811 = vpop.xlane.xlu0 %2810
    %v2812 = vsub.f32 %v2804, %v2808
    %v2813 = vsub.f32 %v2805, %v2811
    %v2814 = vmul.f32 %v2812, 1.442695
    %v2815 = vpow.pop %v2814
    %v2816 = vmul.f32 %v2813, 1.442695
    %v2817 = vpow.pop %v2816
    %v2818 = vsel %vm482, %v2815, 0.0
    %2819 = vadd.xlane.f32.xlu0 %v2818
    %v2820 = vpop.xlane.xlu0 %2819
    %v2821 = vsel %vm482, %v2817, 0.0
    %2822 = vadd.xlane.f32.xlu0 %v2821
    %v2823 = vpop.xlane.xlu0 %2822
    %v2824 = vrcp.pop %v2820
    %v2825 = vrcp.pop %v2823
    %v2826 = vmul.f32 %v2815, %v2824
    %v2827 = vmul.f32 %v2817, %v2825
    %v2829 = vsel %vm482, %v2826, 0
    %v2832 = vsel %vm482, %v2827, 0
    %2834 = vmatprep.subr.mxu0 0.0
    %2835 = vmatpush1.msra.mxu0 0.0
    %2836 = vmatprep.subr.mxu0 0.0
    %2837 = vmatpush1.msra.mxu0 0.0
    %2838 = vmatprep.subr.mxu0 0.0
    %2839 = vmatpush1.msra.mxu0 0.0
    %2840 = vmatprep.subr.mxu0 0.0
    %2841 = vmatpush1.msra.mxu0 0.0
    %2842 = vmatprep.subr.mxu0 0.0
    %2843 = vmatpush1.msra.mxu0 0.0
    %2844 = vmatprep.subr.mxu0 0.0
    %2845 = vmatpush1.msra.mxu0 0.0
    %2846 = vmatprep.subr.mxu0 0.0
    %2847 = vmatpush1.msra.mxu0 0.0
    %2848 = vmatprep.subr.mxu0 0.0
    %2849 = vmatpush1.msra.mxu0 0.0
    %2850 = vmatprep.subr.mxu0 0.0
    %2851 = vmatpush1.msra.mxu0 0.0
    %2852 = vmatprep.subr.mxu0 0.0
    %2853 = vmatpush1.msra.mxu0 0.0
    %2854 = vmatprep.subr.mxu0 0.0
    %2855 = vmatpush1.msra.mxu0 0.0
    %2856 = vmatprep.subr.mxu0 0.0
    %2857 = vmatpush1.msra.mxu0 0.0
    %2858 = vmatprep.subr.mxu0 0.0
    %2859 = vmatpush1.msra.mxu0 0.0
    %2860 = vmatprep.subr.mxu0 0.0
    %2861 = vmatpush1.msra.mxu0 0.0
    %2862 = vmatprep.subr.mxu0 0.0
    %2863 = vmatpush1.msra.mxu0 %v2711
    %2864 = vmatprep.subr.mxu0 0.0
    %2865 = vmatpush1.msra.mxu0 %v2705
    %2866 = vmatprep.subr.mxu0 0.0
    %2867 = vmatpush2.msra.mxu0 0.0
    %2868 = vmatprep.subr.mxu0 0.0
    %2869 = vmatpush2.msra.mxu0 0.0
    %2870 = vmatprep.subr.mxu0 0.0
    %2871 = vmatpush2.msra.mxu0 0.0
    %2872 = vmatprep.subr.mxu0 0.0
    %2873 = vmatpush2.msra.mxu0 0.0
    %2874 = vmatprep.subr.mxu0 0.0
    %2875 = vmatpush2.msra.mxu0 0.0
    %2876 = vmatprep.subr.mxu0 0.0
    %2877 = vmatpush2.msra.mxu0 0.0
    %2878 = vmatprep.subr.mxu0 0.0
    %2879 = vmatpush2.msra.mxu0 0.0
    %2880 = vmatprep.subr.mxu0 0.0
    %2881 = vmatpush2.msra.mxu0 0.0
    %2882 = vmatprep.subr.mxu0 0.0
    %2883 = vmatpush2.msra.mxu0 0.0
    %2884 = vmatprep.subr.mxu0 0.0
    %2885 = vmatpush2.msra.mxu0 0.0
    %2886 = vmatprep.subr.mxu0 0.0
    %2887 = vmatpush2.msra.mxu0 0.0
    %2888 = vmatprep.subr.mxu0 0.0
    %2889 = vmatpush2.msra.mxu0 0.0
    %2890 = vmatprep.subr.mxu0 0.0
    %2891 = vmatpush2.msra.mxu0 0.0
    %2892 = vmatprep.subr.mxu0 0.0
    %2893 = vmatpush2.msra.mxu0 0.0
    %2894 = vmatprep.subr.mxu0 0.0
    %2895 = vmatpush2.msra.mxu0 0.0
    %2896 = vmatprep.subr.mxu0 0.0
    %2897 = vmatpush2.msra.mxu0 0.0
    %2898 = vmatprep.mubr.f32.mxu0 0.0
    %2899 = vmatmul.mubr.f32.gmra.mxu0 %v2829
    %v2900 = vpop.f32.mrf.mxu0
    %v2901 = vadd.f32 0.0, %v2900
    %v2902 = vpop.f32.mrf.mxu0
    %2903 = vmatprep.mubr.f32.mxu0 0.0
    %2904 = vmatmul.mubr.f32.gmra.mxu0 %v2832
    %v2905 = vpop.f32.mrf.mxu0
    %v2906 = vadd.f32 0.0, %v2905
    %v2907 = vpop.f32.mrf.mxu0
    %2908 = vdwg.mxu0
    %2909 = vrot.lane.b32.xlu0 %v2551, 96
    %v2910 = vpop.permute.xlu0 %2909
    %2911 = vrot.lane.b32.xlu0 %v2557, 96
    %v2912 = vpop.permute.xlu0 %2911
    %2913 = vrot.lane.b32.xlu0 %v2628, 96
    %v2914 = vpop.permute.xlu0 %2913
    %2915 = vrot.lane.b32.xlu0 %v2634, 96
    %v2916 = vpop.permute.xlu0 %2915
    %v2917 = vsel %vm52, %v2910, 0
    %v2919 = vsel %vm52, %v2912, 0
    %v2921 = vsel %vm52, %v2914, 0
    %v2923 = vsel %vm52, %v2916, 0
    %2925 = vmatprep.subr.mxu0 0.0
    %2926 = vmatpush1.xpose.msra.mxu0 0.0
    %2927 = vmatprep.subr.mxu0 0.0
    %2928 = vmatpush1.xpose.msra.mxu0 0.0
    %2929 = vmatprep.subr.mxu0 0.0
    %2930 = vmatpush1.xpose.msra.mxu0 0.0
    %2931 = vmatprep.subr.mxu0 0.0
    %2932 = vmatpush1.xpose.msra.mxu0 0.0
    %2933 = vmatprep.subr.mxu0 0.0
    %2934 = vmatpush1.xpose.msra.mxu0 0.0
    %2935 = vmatprep.subr.mxu0 0.0
    %2936 = vmatpush1.xpose.msra.mxu0 0.0
    %2937 = vmatprep.subr.mxu0 0.0
    %2938 = vmatpush1.xpose.msra.mxu0 0.0
    %2939 = vmatprep.subr.mxu0 0.0
    %2940 = vmatpush1.xpose.msra.mxu0 0.0
    %2941 = vmatprep.subr.mxu0 0.0
    %2942 = vmatpush1.xpose.msra.mxu0 0.0
    %2943 = vmatprep.subr.mxu0 0.0
    %2944 = vmatpush1.xpose.msra.mxu0 0.0
    %2945 = vmatprep.subr.mxu0 0.0
    %2946 = vmatpush1.xpose.msra.mxu0 0.0
    %2947 = vmatprep.subr.mxu0 0.0
    %2948 = vmatpush1.xpose.msra.mxu0 0.0
    %2949 = vmatprep.subr.mxu0 0.0
    %2950 = vmatpush1.xpose.msra.mxu0 0.0
    %2951 = vmatprep.subr.mxu0 0.0
    %2952 = vmatpush1.xpose.msra.mxu0 0.0
    %2953 = vmatprep.subr.mxu0 0.0
    %2954 = vmatpush1.xpose.msra.mxu0 %v2923
    %2955 = vmatprep.subr.mxu0 0.0
    %2956 = vmatpush1.xpose.msra.mxu0 %v2921
    %2957 = vmatprep.subr.mxu0 0.0
    %2958 = vmatpush2.xpose.msra.mxu0 0.0
    %2959 = vmatprep.subr.mxu0 0.0
    %2960 = vmatpush2.xpose.msra.mxu0 0.0
    %2961 = vmatprep.subr.mxu0 0.0
    %2962 = vmatpush2.xpose.msra.mxu0 0.0
    %2963 = vmatprep.subr.mxu0 0.0
    %2964 = vmatpush2.xpose.msra.mxu0 0.0
    %2965 = vmatprep.subr.mxu0 0.0
    %2966 = vmatpush2.xpose.msra.mxu0 0.0
    %2967 = vmatprep.subr.mxu0 0.0
    %2968 = vmatpush2.xpose.msra.mxu0 0.0
    %2969 = vmatprep.subr.mxu0 0.0
    %2970 = vmatpush2.xpose.msra.mxu0 0.0
    %2971 = vmatprep.subr.mxu0 0.0
    %2972 = vmatpush2.xpose.msra.mxu0 0.0
    %2973 = vmatprep.subr.mxu0 0.0
    %2974 = vmatpush2.xpose.msra.mxu0 0.0
    %2975 = vmatprep.subr.mxu0 0.0
    %2976 = vmatpush2.xpose.msra.mxu0 0.0
    %2977 = vmatprep.subr.mxu0 0.0
    %2978 = vmatpush2.xpose.msra.mxu0 0.0
    %2979 = vmatprep.subr.mxu0 0.0
    %2980 = vmatpush2.xpose.msra.mxu0 0.0
    %2981 = vmatprep.subr.mxu0 0.0
    %2982 = vmatpush2.xpose.msra.mxu0 0.0
    %2983 = vmatprep.subr.mxu0 0.0
    %2984 = vmatpush2.xpose.msra.mxu0 0.0
    %2985 = vmatprep.subr.mxu0 0.0
    %2986 = vmatpush2.xpose.msra.mxu0 0.0
    %2987 = vmatprep.subr.mxu0 0.0
    %2988 = vmatpush2.xpose.msra.mxu0 0.0
    %2989 = vmatprep.mubr.f32.mxu0 0.0
    %2990 = vmatmul.mubr.f32.gmra.mxu0 %v2917
    %v2991 = vpop.f32.mrf.mxu0
    %v2992 = vadd.f32 0.0, %v2991
    %v2993 = vpop.f32.mrf.mxu0
    %2994 = vmatprep.mubr.f32.mxu0 0.0
    %2995 = vmatmul.mubr.f32.gmra.mxu0 %v2919
    %v2996 = vpop.f32.mrf.mxu0
    %v2997 = vadd.f32 0.0, %v2996
    %v2998 = vpop.f32.mrf.mxu0
    %2999 = vdwg.mxu0
    %v3000 = vmul.f32 %v2992, 0.17677669
    %v3001 = vmul.f32 %v2997, 0.17677669
    %v3002 = vadd.f32 %v3000, %v96
    %v3003 = vadd.f32 %v3001, %v97
    %v3004 = vsel %vm482, %v3002, -inf
    %3005 = vmax.xlane.f32.xlu0 %v3004
    %v3006 = vpop.xlane.xlu0 %3005
    %v3007 = vsel %vm482, %v3003, -inf
    %3008 = vmax.xlane.f32.xlu0 %v3007
    %v3009 = vpop.xlane.xlu0 %3008
    %v3010 = vsub.f32 %v3002, %v3006
    %v3011 = vsub.f32 %v3003, %v3009
    %v3012 = vmul.f32 %v3010, 1.442695
    %v3013 = vpow.pop %v3012
    %v3014 = vmul.f32 %v3011, 1.442695
    %v3015 = vpow.pop %v3014
    %v3016 = vsel %vm482, %v3013, 0.0
    %3017 = vadd.xlane.f32.xlu0 %v3016
    %v3018 = vpop.xlane.xlu0 %3017
    %v3019 = vsel %vm482, %v3015, 0.0
    %3020 = vadd.xlane.f32.xlu0 %v3019
    %v3021 = vpop.xlane.xlu0 %3020
    %v3022 = vrcp.pop %v3018
    %v3023 = vrcp.pop %v3021
    %v3024 = vmul.f32 %v3013, %v3022
    %v3025 = vmul.f32 %v3015, %v3023
    %3028 = vrot.lane.b32.xlu0 %v2705, 96
    %v3029 = vpop.permute.xlu0 %3028
    %3030 = vrot.lane.b32.xlu0 %v2711, 96
    %v3031 = vpop.permute.xlu0 %3030
    %v3035 = vsel %vm482, %v3024, 0
    %v3038 = vsel %vm482, %v3025, 0
    %3040 = vmatprep.subr.mxu0 0.0
    %3041 = vmatpush1.msra.mxu0 0.0
    %3042 = vmatprep.subr.mxu0 0.0
    %3043 = vmatpush1.msra.mxu0 0.0
    %3044 = vmatprep.subr.mxu0 0.0
    %3045 = vmatpush1.msra.mxu0 0.0
    %3046 = vmatprep.subr.mxu0 0.0
    %3047 = vmatpush1.msra.mxu0 0.0
    %3048 = vmatprep.subr.mxu0 0.0
    %3049 = vmatpush1.msra.mxu0 0.0
    %3050 = vmatprep.subr.mxu0 0.0
    %3051 = vmatpush1.msra.mxu0 0.0
    %3052 = vmatprep.subr.mxu0 0.0
    %3053 = vmatpush1.msra.mxu0 0.0
    %3054 = vmatprep.subr.mxu0 0.0
    %3055 = vmatpush1.msra.mxu0 0.0
    %3056 = vmatprep.subr.mxu0 0.0
    %3057 = vmatpush1.msra.mxu0 0.0
    %3058 = vmatprep.subr.mxu0 0.0
    %3059 = vmatpush1.msra.mxu0 0.0
    %3060 = vmatprep.subr.mxu0 0.0
    %3061 = vmatpush1.msra.mxu0 0.0
    %3062 = vmatprep.subr.mxu0 0.0
    %3063 = vmatpush1.msra.mxu0 0.0
    %3064 = vmatprep.subr.mxu0 0.0
    %3065 = vmatpush1.msra.mxu0 0.0
    %3066 = vmatprep.subr.mxu0 0.0
    %3067 = vmatpush1.msra.mxu0 0.0
    %3068 = vmatprep.subr.mxu0 0.0
    %3069 = vmatpush1.msra.mxu0 %v3031
    %3070 = vmatprep.subr.mxu0 0.0
    %3071 = vmatpush1.msra.mxu0 %v3029
    %3072 = vmatprep.subr.mxu0 0.0
    %3073 = vmatpush2.msra.mxu0 0.0
    %3074 = vmatprep.subr.mxu0 0.0
    %3075 = vmatpush2.msra.mxu0 0.0
    %3076 = vmatprep.subr.mxu0 0.0
    %3077 = vmatpush2.msra.mxu0 0.0
    %3078 = vmatprep.subr.mxu0 0.0
    %3079 = vmatpush2.msra.mxu0 0.0
    %3080 = vmatprep.subr.mxu0 0.0
    %3081 = vmatpush2.msra.mxu0 0.0
    %3082 = vmatprep.subr.mxu0 0.0
    %3083 = vmatpush2.msra.mxu0 0.0
    %3084 = vmatprep.subr.mxu0 0.0
    %3085 = vmatpush2.msra.mxu0 0.0
    %3086 = vmatprep.subr.mxu0 0.0
    %3087 = vmatpush2.msra.mxu0 0.0
    %3088 = vmatprep.subr.mxu0 0.0
    %3089 = vmatpush2.msra.mxu0 0.0
    %3090 = vmatprep.subr.mxu0 0.0
    %3091 = vmatpush2.msra.mxu0 0.0
    %3092 = vmatprep.subr.mxu0 0.0
    %3093 = vmatpush2.msra.mxu0 0.0
    %3094 = vmatprep.subr.mxu0 0.0
    %3095 = vmatpush2.msra.mxu0 0.0
    %3096 = vmatprep.subr.mxu0 0.0
    %3097 = vmatpush2.msra.mxu0 0.0
    %3098 = vmatprep.subr.mxu0 0.0
    %3099 = vmatpush2.msra.mxu0 0.0
    %3100 = vmatprep.subr.mxu0 0.0
    %3101 = vmatpush2.msra.mxu0 0.0
    %3102 = vmatprep.subr.mxu0 0.0
    %3103 = vmatpush2.msra.mxu0 0.0
    %3104 = vmatprep.mubr.f32.mxu0 0.0
    %3105 = vmatmul.mubr.f32.gmra.mxu0 %v3035
    %v3106 = vpop.f32.mrf.mxu0
    %v3107 = vadd.f32 0.0, %v3106
    %v3108 = vpop.f32.mrf.mxu0
    %3109 = vmatprep.mubr.f32.mxu0 0.0
    %3110 = vmatmul.mubr.f32.gmra.mxu0 %v3038
    %v3111 = vpop.f32.mrf.mxu0
    %v3112 = vadd.f32 0.0, %v3111
    %v3113 = vpop.f32.mrf.mxu0
    %3114 = vdwg.mxu0
    %3115 = vrot.lane.b32.xlu0 %v2551, 64
    %v3116 = vpop.permute.xlu0 %3115
    %3117 = vrot.lane.b32.xlu0 %v2557, 64
    %v3118 = vpop.permute.xlu0 %3117
    %3119 = vrot.lane.b32.xlu0 %v2628, 64
    %v3120 = vpop.permute.xlu0 %3119
    %3121 = vrot.lane.b32.xlu0 %v2634, 64
    %v3122 = vpop.permute.xlu0 %3121
    %v3123 = vsel %vm52, %v3116, 0
    %v3125 = vsel %vm52, %v3118, 0
    %v3127 = vsel %vm52, %v3120, 0
    %v3129 = vsel %vm52, %v3122, 0
    %3131 = vmatprep.subr.mxu0 0.0
    %3132 = vmatpush1.xpose.msra.mxu0 0.0
    %3133 = vmatprep.subr.mxu0 0.0
    %3134 = vmatpush1.xpose.msra.mxu0 0.0
    %3135 = vmatprep.subr.mxu0 0.0
    %3136 = vmatpush1.xpose.msra.mxu0 0.0
    %3137 = vmatprep.subr.mxu0 0.0
    %3138 = vmatpush1.xpose.msra.mxu0 0.0
    %3139 = vmatprep.subr.mxu0 0.0
    %3140 = vmatpush1.xpose.msra.mxu0 0.0
    %3141 = vmatprep.subr.mxu0 0.0
    %3142 = vmatpush1.xpose.msra.mxu0 0.0
    %3143 = vmatprep.subr.mxu0 0.0
    %3144 = vmatpush1.xpose.msra.mxu0 0.0
    %3145 = vmatprep.subr.mxu0 0.0
    %3146 = vmatpush1.xpose.msra.mxu0 0.0
    %3147 = vmatprep.subr.mxu0 0.0
    %3148 = vmatpush1.xpose.msra.mxu0 0.0
    %3149 = vmatprep.subr.mxu0 0.0
    %3150 = vmatpush1.xpose.msra.mxu0 0.0
    %3151 = vmatprep.subr.mxu0 0.0
    %3152 = vmatpush1.xpose.msra.mxu0 0.0
    %3153 = vmatprep.subr.mxu0 0.0
    %3154 = vmatpush1.xpose.msra.mxu0 0.0
    %3155 = vmatprep.subr.mxu0 0.0
    %3156 = vmatpush1.xpose.msra.mxu0 0.0
    %3157 = vmatprep.subr.mxu0 0.0
    %3158 = vmatpush1.xpose.msra.mxu0 0.0
    %3159 = vmatprep.subr.mxu0 0.0
    %3160 = vmatpush1.xpose.msra.mxu0 %v3129
    %3161 = vmatprep.subr.mxu0 0.0
    %3162 = vmatpush1.xpose.msra.mxu0 %v3127
    %3163 = vmatprep.subr.mxu0 0.0
    %3164 = vmatpush2.xpose.msra.mxu0 0.0
    %3165 = vmatprep.subr.mxu0 0.0
    %3166 = vmatpush2.xpose.msra.mxu0 0.0
    %3167 = vmatprep.subr.mxu0 0.0
    %3168 = vmatpush2.xpose.msra.mxu0 0.0
    %3169 = vmatprep.subr.mxu0 0.0
    %3170 = vmatpush2.xpose.msra.mxu0 0.0
    %3171 = vmatprep.subr.mxu0 0.0
    %3172 = vmatpush2.xpose.msra.mxu0 0.0
    %3173 = vmatprep.subr.mxu0 0.0
    %3174 = vmatpush2.xpose.msra.mxu0 0.0
    %3175 = vmatprep.subr.mxu0 0.0
    %3176 = vmatpush2.xpose.msra.mxu0 0.0
    %3177 = vmatprep.subr.mxu0 0.0
    %3178 = vmatpush2.xpose.msra.mxu0 0.0
    %3179 = vmatprep.subr.mxu0 0.0
    %3180 = vmatpush2.xpose.msra.mxu0 0.0
    %3181 = vmatprep.subr.mxu0 0.0
    %3182 = vmatpush2.xpose.msra.mxu0 0.0
    %3183 = vmatprep.subr.mxu0 0.0
    %3184 = vmatpush2.xpose.msra.mxu0 0.0
    %3185 = vmatprep.subr.mxu0 0.0
    %3186 = vmatpush2.xpose.msra.mxu0 0.0
    %3187 = vmatprep.subr.mxu0 0.0
    %3188 = vmatpush2.xpose.msra.mxu0 0.0
    %3189 = vmatprep.subr.mxu0 0.0
    %3190 = vmatpush2.xpose.msra.mxu0 0.0
    %3191 = vmatprep.subr.mxu0 0.0
    %3192 = vmatpush2.xpose.msra.mxu0 0.0
    %3193 = vmatprep.subr.mxu0 0.0
    %3194 = vmatpush2.xpose.msra.mxu0 0.0
    %3195 = vmatprep.mubr.f32.mxu0 0.0
    %3196 = vmatmul.mubr.f32.gmra.mxu0 %v3123
    %v3197 = vpop.f32.mrf.mxu0
    %v3198 = vadd.f32 0.0, %v3197
    %v3199 = vpop.f32.mrf.mxu0
    %3200 = vmatprep.mubr.f32.mxu0 0.0
    %3201 = vmatmul.mubr.f32.gmra.mxu0 %v3125
    %v3202 = vpop.f32.mrf.mxu0
    %v3203 = vadd.f32 0.0, %v3202
    %v3204 = vpop.f32.mrf.mxu0
    %3205 = vdwg.mxu0
    %v3206 = vmul.f32 %v3198, 0.17677669
    %v3207 = vmul.f32 %v3203, 0.17677669
    %v3208 = vadd.f32 %v3206, %v96
    %v3209 = vadd.f32 %v3207, %v97
    %v3210 = vsel %vm482, %v3208, -inf
    %3211 = vmax.xlane.f32.xlu0 %v3210
    %v3212 = vpop.xlane.xlu0 %3211
    %v3213 = vsel %vm482, %v3209, -inf
    %3214 = vmax.xlane.f32.xlu0 %v3213
    %v3215 = vpop.xlane.xlu0 %3214
    %v3216 = vsub.f32 %v3208, %v3212
    %v3217 = vsub.f32 %v3209, %v3215
    %v3218 = vmul.f32 %v3216, 1.442695
    %v3219 = vpow.pop %v3218
    %v3220 = vmul.f32 %v3217, 1.442695
    %v3221 = vpow.pop %v3220
    %v3222 = vsel %vm482, %v3219, 0.0
    %3223 = vadd.xlane.f32.xlu0 %v3222
    %v3224 = vpop.xlane.xlu0 %3223
    %v3225 = vsel %vm482, %v3221, 0.0
    %3226 = vadd.xlane.f32.xlu0 %v3225
    %v3227 = vpop.xlane.xlu0 %3226
    %v3228 = vrcp.pop %v3224
    %v3229 = vrcp.pop %v3227
    %v3230 = vmul.f32 %v3219, %v3228
    %v3231 = vmul.f32 %v3221, %v3229
    %3232 = vrot.lane.b32.xlu0 %v2705, 64
    %v3233 = vpop.permute.xlu0 %3232
    %3234 = vrot.lane.b32.xlu0 %v2711, 64
    %v3235 = vpop.permute.xlu0 %3234
    %v3239 = vsel %vm482, %v3230, 0
    %v3242 = vsel %vm482, %v3231, 0
    %3244 = vmatprep.subr.mxu0 0.0
    %3245 = vmatpush1.msra.mxu0 0.0
    %3246 = vmatprep.subr.mxu0 0.0
    %3247 = vmatpush1.msra.mxu0 0.0
    %3248 = vmatprep.subr.mxu0 0.0
    %3249 = vmatpush1.msra.mxu0 0.0
    %3250 = vmatprep.subr.mxu0 0.0
    %3251 = vmatpush1.msra.mxu0 0.0
    %3252 = vmatprep.subr.mxu0 0.0
    %3253 = vmatpush1.msra.mxu0 0.0
    %3254 = vmatprep.subr.mxu0 0.0
    %3255 = vmatpush1.msra.mxu0 0.0
    %3256 = vmatprep.subr.mxu0 0.0
    %3257 = vmatpush1.msra.mxu0 0.0
    %3258 = vmatprep.subr.mxu0 0.0
    %3259 = vmatpush1.msra.mxu0 0.0
    %3260 = vmatprep.subr.mxu0 0.0
    %3261 = vmatpush1.msra.mxu0 0.0
    %3262 = vmatprep.subr.mxu0 0.0
    %3263 = vmatpush1.msra.mxu0 0.0
    %3264 = vmatprep.subr.mxu0 0.0
    %3265 = vmatpush1.msra.mxu0 0.0
    %3266 = vmatprep.subr.mxu0 0.0
    %3267 = vmatpush1.msra.mxu0 0.0
    %3268 = vmatprep.subr.mxu0 0.0
    %3269 = vmatpush1.msra.mxu0 0.0
    %3270 = vmatprep.subr.mxu0 0.0
    %3271 = vmatpush1.msra.mxu0 0.0
    %3272 = vmatprep.subr.mxu0 0.0
    %3273 = vmatpush1.msra.mxu0 %v3235
    %3274 = vmatprep.subr.mxu0 0.0
    %3275 = vmatpush1.msra.mxu0 %v3233
    %3276 = vmatprep.subr.mxu0 0.0
    %3277 = vmatpush2.msra.mxu0 0.0
    %3278 = vmatprep.subr.mxu0 0.0
    %3279 = vmatpush2.msra.mxu0 0.0
    %3280 = vmatprep.subr.mxu0 0.0
    %3281 = vmatpush2.msra.mxu0 0.0
    %3282 = vmatprep.subr.mxu0 0.0
    %3283 = vmatpush2.msra.mxu0 0.0
    %3284 = vmatprep.subr.mxu0 0.0
    %3285 = vmatpush2.msra.mxu0 0.0
    %3286 = vmatprep.subr.mxu0 0.0
    %3287 = vmatpush2.msra.mxu0 0.0
    %3288 = vmatprep.subr.mxu0 0.0
    %3289 = vmatpush2.msra.mxu0 0.0
    %3290 = vmatprep.subr.mxu0 0.0
    %3291 = vmatpush2.msra.mxu0 0.0
    %3292 = vmatprep.subr.mxu0 0.0
    %3293 = vmatpush2.msra.mxu0 0.0
    %3294 = vmatprep.subr.mxu0 0.0
    %3295 = vmatpush2.msra.mxu0 0.0
    %3296 = vmatprep.subr.mxu0 0.0
    %3297 = vmatpush2.msra.mxu0 0.0
    %3298 = vmatprep.subr.mxu0 0.0
    %3299 = vmatpush2.msra.mxu0 0.0
    %3300 = vmatprep.subr.mxu0 0.0
    %3301 = vmatpush2.msra.mxu0 0.0
    %3302 = vmatprep.subr.mxu0 0.0
    %3303 = vmatpush2.msra.mxu0 0.0
    %3304 = vmatprep.subr.mxu0 0.0
    %3305 = vmatpush2.msra.mxu0 0.0
    %3306 = vmatprep.subr.mxu0 0.0
    %3307 = vmatpush2.msra.mxu0 0.0
    %3308 = vmatprep.mubr.f32.mxu0 0.0
    %3309 = vmatmul.mubr.f32.gmra.mxu0 %v3239
    %v3310 = vpop.f32.mrf.mxu0
    %v3311 = vadd.f32 0.0, %v3310
    %v3312 = vpop.f32.mrf.mxu0
    %3313 = vmatprep.mubr.f32.mxu0 0.0
    %3314 = vmatmul.mubr.f32.gmra.mxu0 %v3242
    %v3315 = vpop.f32.mrf.mxu0
    %v3316 = vadd.f32 0.0, %v3315
    %v3317 = vpop.f32.mrf.mxu0
    %3318 = vdwg.mxu0
    %3319 = vrot.lane.b32.xlu0 %v2551, 32
    %v3320 = vpop.permute.xlu0 %3319
    %3321 = vrot.lane.b32.xlu0 %v2557, 32
    %v3322 = vpop.permute.xlu0 %3321
    %3323 = vrot.lane.b32.xlu0 %v2628, 32
    %v3324 = vpop.permute.xlu0 %3323
    %3325 = vrot.lane.b32.xlu0 %v2634, 32
    %v3326 = vpop.permute.xlu0 %3325
    %v3327 = vsel %vm52, %v3320, 0
    %v3329 = vsel %vm52, %v3322, 0
    %v3331 = vsel %vm52, %v3324, 0
    %v3333 = vsel %vm52, %v3326, 0
    %3335 = vmatprep.subr.mxu0 0.0
    %3336 = vmatpush1.xpose.msra.mxu0 0.0
    %3337 = vmatprep.subr.mxu0 0.0
    %3338 = vmatpush1.xpose.msra.mxu0 0.0
    %3339 = vmatprep.subr.mxu0 0.0
    %3340 = vmatpush1.xpose.msra.mxu0 0.0
    %3341 = vmatprep.subr.mxu0 0.0
    %3342 = vmatpush1.xpose.msra.mxu0 0.0
    %3343 = vmatprep.subr.mxu0 0.0
    %3344 = vmatpush1.xpose.msra.mxu0 0.0
    %3345 = vmatprep.subr.mxu0 0.0
    %3346 = vmatpush1.xpose.msra.mxu0 0.0
    %3347 = vmatprep.subr.mxu0 0.0
    %3348 = vmatpush1.xpose.msra.mxu0 0.0
    %3349 = vmatprep.subr.mxu0 0.0
    %3350 = vmatpush1.xpose.msra.mxu0 0.0
    %3351 = vmatprep.subr.mxu0 0.0
    %3352 = vmatpush1.xpose.msra.mxu0 0.0
    %3353 = vmatprep.subr.mxu0 0.0
    %3354 = vmatpush1.xpose.msra.mxu0 0.0
    %3355 = vmatprep.subr.mxu0 0.0
    %3356 = vmatpush1.xpose.msra.mxu0 0.0
    %3357 = vmatprep.subr.mxu0 0.0
    %3358 = vmatpush1.xpose.msra.mxu0 0.0
    %3359 = vmatprep.subr.mxu0 0.0
    %3360 = vmatpush1.xpose.msra.mxu0 0.0
    %3361 = vmatprep.subr.mxu0 0.0
    %3362 = vmatpush1.xpose.msra.mxu0 0.0
    %3363 = vmatprep.subr.mxu0 0.0
    %3364 = vmatpush1.xpose.msra.mxu0 %v3333
    %3365 = vmatprep.subr.mxu0 0.0
    %3366 = vmatpush1.xpose.msra.mxu0 %v3331
    %3367 = vmatprep.subr.mxu0 0.0
    %3368 = vmatpush2.xpose.msra.mxu0 0.0
    %3369 = vmatprep.subr.mxu0 0.0
    %3370 = vmatpush2.xpose.msra.mxu0 0.0
    %3371 = vmatprep.subr.mxu0 0.0
    %3372 = vmatpush2.xpose.msra.mxu0 0.0
    %3373 = vmatprep.subr.mxu0 0.0
    %3374 = vmatpush2.xpose.msra.mxu0 0.0
    %3375 = vmatprep.subr.mxu0 0.0
    %3376 = vmatpush2.xpose.msra.mxu0 0.0
    %3377 = vmatprep.subr.mxu0 0.0
    %3378 = vmatpush2.xpose.msra.mxu0 0.0
    %3379 = vmatprep.subr.mxu0 0.0
    %3380 = vmatpush2.xpose.msra.mxu0 0.0
    %3381 = vmatprep.subr.mxu0 0.0
    %3382 = vmatpush2.xpose.msra.mxu0 0.0
    %3383 = vmatprep.subr.mxu0 0.0
    %3384 = vmatpush2.xpose.msra.mxu0 0.0
    %3385 = vmatprep.subr.mxu0 0.0
    %3386 = vmatpush2.xpose.msra.mxu0 0.0
    %3387 = vmatprep.subr.mxu0 0.0
    %3388 = vmatpush2.xpose.msra.mxu0 0.0
    %3389 = vmatprep.subr.mxu0 0.0
    %3390 = vmatpush2.xpose.msra.mxu0 0.0
    %3391 = vmatprep.subr.mxu0 0.0
    %3392 = vmatpush2.xpose.msra.mxu0 0.0
    %3393 = vmatprep.subr.mxu0 0.0
    %3394 = vmatpush2.xpose.msra.mxu0 0.0
    %3395 = vmatprep.subr.mxu0 0.0
    %3396 = vmatpush2.xpose.msra.mxu0 0.0
    %3397 = vmatprep.subr.mxu0 0.0
    %3398 = vmatpush2.xpose.msra.mxu0 0.0
    %3399 = vmatprep.mubr.f32.mxu0 0.0
    %3400 = vmatmul.mubr.f32.gmra.mxu0 %v3327
    %v3401 = vpop.f32.mrf.mxu0
    %v3402 = vadd.f32 0.0, %v3401
    %v3403 = vpop.f32.mrf.mxu0
    %3404 = vmatprep.mubr.f32.mxu0 0.0
    %3405 = vmatmul.mubr.f32.gmra.mxu0 %v3329
    %v3406 = vpop.f32.mrf.mxu0
    %v3407 = vadd.f32 0.0, %v3406
    %v3408 = vpop.f32.mrf.mxu0
    %3409 = vdwg.mxu0
    %v3410 = vmul.f32 %v3402, 0.17677669
    %v3411 = vmul.f32 %v3407, 0.17677669
    %v3412 = vadd.f32 %v3410, %v96
    %v3413 = vadd.f32 %v3411, %v97
    %v3414 = vsel %vm482, %v3412, -inf
    %3415 = vmax.xlane.f32.xlu0 %v3414
    %v3416 = vpop.xlane.xlu0 %3415
    %v3417 = vsel %vm482, %v3413, -inf
    %3418 = vmax.xlane.f32.xlu0 %v3417
    %v3419 = vpop.xlane.xlu0 %3418
    %v3420 = vsub.f32 %v3412, %v3416
    %v3421 = vsub.f32 %v3413, %v3419
    %v3422 = vmul.f32 %v3420, 1.442695
    %v3423 = vpow.pop %v3422
    %v3424 = vmul.f32 %v3421, 1.442695
    %v3425 = vpow.pop %v3424
    %v3426 = vsel %vm482, %v3423, 0.0
    %3427 = vadd.xlane.f32.xlu0 %v3426
    %v3428 = vpop.xlane.xlu0 %3427
    %v3429 = vsel %vm482, %v3425, 0.0
    %3430 = vadd.xlane.f32.xlu0 %v3429
    %v3431 = vpop.xlane.xlu0 %3430
    %v3432 = vrcp.pop %v3428
    %v3433 = vrcp.pop %v3431
    %v3434 = vmul.f32 %v3423, %v3432
    %v3435 = vmul.f32 %v3425, %v3433
    %3436 = vrot.lane.b32.xlu0 %v2705, 32
    %v3437 = vpop.permute.xlu0 %3436
    %3438 = vrot.lane.b32.xlu0 %v2711, 32
    %v3439 = vpop.permute.xlu0 %3438
    %v3443 = vsel %vm482, %v3434, 0
    %v3446 = vsel %vm482, %v3435, 0
    %3448 = vmatprep.subr.mxu0 0.0
    %3449 = vmatpush1.msra.mxu0 0.0
    %3450 = vmatprep.subr.mxu0 0.0
    %3451 = vmatpush1.msra.mxu0 0.0
    %3452 = vmatprep.subr.mxu0 0.0
    %3453 = vmatpush1.msra.mxu0 0.0
    %3454 = vmatprep.subr.mxu0 0.0
    %3455 = vmatpush1.msra.mxu0 0.0
    %3456 = vmatprep.subr.mxu0 0.0
    %3457 = vmatpush1.msra.mxu0 0.0
    %3458 = vmatprep.subr.mxu0 0.0
    %3459 = vmatpush1.msra.mxu0 0.0
    %3460 = vmatprep.subr.mxu0 0.0
    %3461 = vmatpush1.msra.mxu0 0.0
    %3462 = vmatprep.subr.mxu0 0.0
    %3463 = vmatpush1.msra.mxu0 0.0
    %3464 = vmatprep.subr.mxu0 0.0
    %3465 = vmatpush1.msra.mxu0 0.0
    %3466 = vmatprep.subr.mxu0 0.0
    %3467 = vmatpush1.msra.mxu0 0.0
    %3468 = vmatprep.subr.mxu0 0.0
    %3469 = vmatpush1.msra.mxu0 0.0
    %3470 = vmatprep.subr.mxu0 0.0
    %3471 = vmatpush1.msra.mxu0 0.0
    %3472 = vmatprep.subr.mxu0 0.0
    %3473 = vmatpush1.msra.mxu0 0.0
    %3474 = vmatprep.subr.mxu0 0.0
    %3475 = vmatpush1.msra.mxu0 0.0
    %3476 = vmatprep.subr.mxu0 0.0
    %3477 = vmatpush1.msra.mxu0 %v3439
    %3478 = vmatprep.subr.mxu0 0.0
    %3479 = vmatpush1.msra.mxu0 %v3437
    %3480 = vmatprep.subr.mxu0 0.0
    %3481 = vmatpush2.msra.mxu0 0.0
    %3482 = vmatprep.subr.mxu0 0.0
    %3483 = vmatpush2.msra.mxu0 0.0
    %3484 = vmatprep.subr.mxu0 0.0
    %3485 = vmatpush2.msra.mxu0 0.0
    %3486 = vmatprep.subr.mxu0 0.0
    %3487 = vmatpush2.msra.mxu0 0.0
    %3488 = vmatprep.subr.mxu0 0.0
    %3489 = vmatpush2.msra.mxu0 0.0
    %3490 = vmatprep.subr.mxu0 0.0
    %3491 = vmatpush2.msra.mxu0 0.0
    %3492 = vmatprep.subr.mxu0 0.0
    %3493 = vmatpush2.msra.mxu0 0.0
    %3494 = vmatprep.subr.mxu0 0.0
    %3495 = vmatpush2.msra.mxu0 0.0
    %3496 = vmatprep.subr.mxu0 0.0
    %3497 = vmatpush2.msra.mxu0 0.0
    %3498 = vmatprep.subr.mxu0 0.0
    %3499 = vmatpush2.msra.mxu0 0.0
    %3500 = vmatprep.subr.mxu0 0.0
    %3501 = vmatpush2.msra.mxu0 0.0
    %3502 = vmatprep.subr.mxu0 0.0
    %3503 = vmatpush2.msra.mxu0 0.0
    %3504 = vmatprep.subr.mxu0 0.0
    %3505 = vmatpush2.msra.mxu0 0.0
    %3506 = vmatprep.subr.mxu0 0.0
    %3507 = vmatpush2.msra.mxu0 0.0
    %3508 = vmatprep.subr.mxu0 0.0
    %3509 = vmatpush2.msra.mxu0 0.0
    %3510 = vmatprep.subr.mxu0 0.0
    %3511 = vmatpush2.msra.mxu0 0.0
    %3512 = vmatprep.mubr.f32.mxu0 0.0
    %3513 = vmatmul.mubr.f32.gmra.mxu0 %v3443
    %v3514 = vpop.f32.mrf.mxu0
    %v3515 = vadd.f32 0.0, %v3514
    %v3516 = vpop.f32.mrf.mxu0
    %3517 = vmatprep.mubr.f32.mxu0 0.0
    %3518 = vmatmul.mubr.f32.gmra.mxu0 %v3446
    %v3519 = vpop.f32.mrf.mxu0
    %v3520 = vadd.f32 0.0, %v3519
    %v3521 = vpop.f32.mrf.mxu0
    %3522 = vdwg.mxu0
    %v3524 = vsel %vm52, %v2553, 0
    %v3527 = vsel %vm52, %v2559, 0
    %v3530 = vsel %vm52, %v2630, 0
    %v3533 = vsel %vm52, %v2636, 0
    %3535 = vmatprep.subr.mxu0 0.0
    %3536 = vmatpush1.xpose.msra.mxu0 0.0
    %3537 = vmatprep.subr.mxu0 0.0
    %3538 = vmatpush1.xpose.msra.mxu0 0.0
    %3539 = vmatprep.subr.mxu0 0.0
    %3540 = vmatpush1.xpose.msra.mxu0 0.0
    %3541 = vmatprep.subr.mxu0 0.0
    %3542 = vmatpush1.xpose.msra.mxu0 0.0
    %3543 = vmatprep.subr.mxu0 0.0
    %3544 = vmatpush1.xpose.msra.mxu0 0.0
    %3545 = vmatprep.subr.mxu0 0.0
    %3546 = vmatpush1.xpose.msra.mxu0 0.0
    %3547 = vmatprep.subr.mxu0 0.0
    %3548 = vmatpush1.xpose.msra.mxu0 0.0
    %3549 = vmatprep.subr.mxu0 0.0
    %3550 = vmatpush1.xpose.msra.mxu0 0.0
    %3551 = vmatprep.subr.mxu0 0.0
    %3552 = vmatpush1.xpose.msra.mxu0 0.0
    %3553 = vmatprep.subr.mxu0 0.0
    %3554 = vmatpush1.xpose.msra.mxu0 0.0
    %3555 = vmatprep.subr.mxu0 0.0
    %3556 = vmatpush1.xpose.msra.mxu0 0.0
    %3557 = vmatprep.subr.mxu0 0.0
    %3558 = vmatpush1.xpose.msra.mxu0 0.0
    %3559 = vmatprep.subr.mxu0 0.0
    %3560 = vmatpush1.xpose.msra.mxu0 0.0
    %3561 = vmatprep.subr.mxu0 0.0
    %3562 = vmatpush1.xpose.msra.mxu0 0.0
    %3563 = vmatprep.subr.mxu0 0.0
    %3564 = vmatpush1.xpose.msra.mxu0 %v3533
    %3565 = vmatprep.subr.mxu0 0.0
    %3566 = vmatpush1.xpose.msra.mxu0 %v3530
    %3567 = vmatprep.subr.mxu0 0.0
    %3568 = vmatpush2.xpose.msra.mxu0 0.0
    %3569 = vmatprep.subr.mxu0 0.0
    %3570 = vmatpush2.xpose.msra.mxu0 0.0
    %3571 = vmatprep.subr.mxu0 0.0
    %3572 = vmatpush2.xpose.msra.mxu0 0.0
    %3573 = vmatprep.subr.mxu0 0.0
    %3574 = vmatpush2.xpose.msra.mxu0 0.0
    %3575 = vmatprep.subr.mxu0 0.0
    %3576 = vmatpush2.xpose.msra.mxu0 0.0
    %3577 = vmatprep.subr.mxu0 0.0
    %3578 = vmatpush2.xpose.msra.mxu0 0.0
    %3579 = vmatprep.subr.mxu0 0.0
    %3580 = vmatpush2.xpose.msra.mxu0 0.0
    %3581 = vmatprep.subr.mxu0 0.0
    %3582 = vmatpush2.xpose.msra.mxu0 0.0
    %3583 = vmatprep.subr.mxu0 0.0
    %3584 = vmatpush2.xpose.msra.mxu0 0.0
    %3585 = vmatprep.subr.mxu0 0.0
    %3586 = vmatpush2.xpose.msra.mxu0 0.0
    %3587 = vmatprep.subr.mxu0 0.0
    %3588 = vmatpush2.xpose.msra.mxu0 0.0
    %3589 = vmatprep.subr.mxu0 0.0
    %3590 = vmatpush2.xpose.msra.mxu0 0.0
    %3591 = vmatprep.subr.mxu0 0.0
    %3592 = vmatpush2.xpose.msra.mxu0 0.0
    %3593 = vmatprep.subr.mxu0 0.0
    %3594 = vmatpush2.xpose.msra.mxu0 0.0
    %3595 = vmatprep.subr.mxu0 0.0
    %3596 = vmatpush2.xpose.msra.mxu0 0.0
    %3597 = vmatprep.subr.mxu0 0.0
    %3598 = vmatpush2.xpose.msra.mxu0 0.0
    %3599 = vmatprep.mubr.f32.mxu0 0.0
    %3600 = vmatmul.mubr.f32.gmra.mxu0 %v3524
    %v3601 = vpop.f32.mrf.mxu0
    %v3602 = vadd.f32 0.0, %v3601
    %v3603 = vpop.f32.mrf.mxu0
    %3604 = vmatprep.mubr.f32.mxu0 0.0
    %3605 = vmatmul.mubr.f32.gmra.mxu0 %v3527
    %v3606 = vpop.f32.mrf.mxu0
    %v3607 = vadd.f32 0.0, %v3606
    %v3608 = vpop.f32.mrf.mxu0
    %3609 = vdwg.mxu0
    %v3610 = vmul.f32 %v3602, 0.17677669
    %v3611 = vmul.f32 %v3607, 0.17677669
    %v3612 = vadd.f32 %v3610, %v96
    %v3613 = vadd.f32 %v3611, %v97
    %v3614 = vsel %vm482, %v3612, -inf
    %3615 = vmax.xlane.f32.xlu0 %v3614
    %v3616 = vpop.xlane.xlu0 %3615
    %v3617 = vsel %vm482, %v3613, -inf
    %3618 = vmax.xlane.f32.xlu0 %v3617
    %v3619 = vpop.xlane.xlu0 %3618
    %v3620 = vsub.f32 %v3612, %v3616
    %v3621 = vsub.f32 %v3613, %v3619
    %v3622 = vmul.f32 %v3620, 1.442695
    %v3623 = vpow.pop %v3622
    %v3624 = vmul.f32 %v3621, 1.442695
    %v3625 = vpow.pop %v3624
    %v3626 = vsel %vm482, %v3623, 0.0
    %3627 = vadd.xlane.f32.xlu0 %v3626
    %v3628 = vpop.xlane.xlu0 %3627
    %v3629 = vsel %vm482, %v3625, 0.0
    %3630 = vadd.xlane.f32.xlu0 %v3629
    %v3631 = vpop.xlane.xlu0 %3630
    %v3632 = vrcp.pop %v3628
    %v3633 = vrcp.pop %v3631
    %v3634 = vmul.f32 %v3623, %v3632
    %v3635 = vmul.f32 %v3625, %v3633
    %v3637 = vsel %vm482, %v3634, 0
    %v3640 = vsel %vm482, %v3635, 0
    %3642 = vmatprep.subr.mxu0 0.0
    %3643 = vmatpush1.msra.mxu0 0.0
    %3644 = vmatprep.subr.mxu0 0.0
    %3645 = vmatpush1.msra.mxu0 0.0
    %3646 = vmatprep.subr.mxu0 0.0
    %3647 = vmatpush1.msra.mxu0 0.0
    %3648 = vmatprep.subr.mxu0 0.0
    %3649 = vmatpush1.msra.mxu0 0.0
    %3650 = vmatprep.subr.mxu0 0.0
    %3651 = vmatpush1.msra.mxu0 0.0
    %3652 = vmatprep.subr.mxu0 0.0
    %3653 = vmatpush1.msra.mxu0 0.0
    %3654 = vmatprep.subr.mxu0 0.0
    %3655 = vmatpush1.msra.mxu0 0.0
    %3656 = vmatprep.subr.mxu0 0.0
    %3657 = vmatpush1.msra.mxu0 0.0
    %3658 = vmatprep.subr.mxu0 0.0
    %3659 = vmatpush1.msra.mxu0 0.0
    %3660 = vmatprep.subr.mxu0 0.0
    %3661 = vmatpush1.msra.mxu0 0.0
    %3662 = vmatprep.subr.mxu0 0.0
    %3663 = vmatpush1.msra.mxu0 0.0
    %3664 = vmatprep.subr.mxu0 0.0
    %3665 = vmatpush1.msra.mxu0 0.0
    %3666 = vmatprep.subr.mxu0 0.0
    %3667 = vmatpush1.msra.mxu0 0.0
    %3668 = vmatprep.subr.mxu0 0.0
    %3669 = vmatpush1.msra.mxu0 0.0
    %3670 = vmatprep.subr.mxu0 0.0
    %3671 = vmatpush1.msra.mxu0 %v2713
    %3672 = vmatprep.subr.mxu0 0.0
    %3673 = vmatpush1.msra.mxu0 %v2707
    %3674 = vmatprep.subr.mxu0 0.0
    %3675 = vmatpush2.msra.mxu0 0.0
    %3676 = vmatprep.subr.mxu0 0.0
    %3677 = vmatpush2.msra.mxu0 0.0
    %3678 = vmatprep.subr.mxu0 0.0
    %3679 = vmatpush2.msra.mxu0 0.0
    %3680 = vmatprep.subr.mxu0 0.0
    %3681 = vmatpush2.msra.mxu0 0.0
    %3682 = vmatprep.subr.mxu0 0.0
    %3683 = vmatpush2.msra.mxu0 0.0
    %3684 = vmatprep.subr.mxu0 0.0
    %3685 = vmatpush2.msra.mxu0 0.0
    %3686 = vmatprep.subr.mxu0 0.0
    %3687 = vmatpush2.msra.mxu0 0.0
    %3688 = vmatprep.subr.mxu0 0.0
    %3689 = vmatpush2.msra.mxu0 0.0
    %3690 = vmatprep.subr.mxu0 0.0
    %3691 = vmatpush2.msra.mxu0 0.0
    %3692 = vmatprep.subr.mxu0 0.0
    %3693 = vmatpush2.msra.mxu0 0.0
    %3694 = vmatprep.subr.mxu0 0.0
    %3695 = vmatpush2.msra.mxu0 0.0
    %3696 = vmatprep.subr.mxu0 0.0
    %3697 = vmatpush2.msra.mxu0 0.0
    %3698 = vmatprep.subr.mxu0 0.0
    %3699 = vmatpush2.msra.mxu0 0.0
    %3700 = vmatprep.subr.mxu0 0.0
    %3701 = vmatpush2.msra.mxu0 0.0
    %3702 = vmatprep.subr.mxu0 0.0
    %3703 = vmatpush2.msra.mxu0 0.0
    %3704 = vmatprep.subr.mxu0 0.0
    %3705 = vmatpush2.msra.mxu0 0.0
    %3706 = vmatprep.mubr.f32.mxu0 0.0
    %3707 = vmatmul.mubr.f32.gmra.mxu0 %v3637
    %v3708 = vpop.f32.mrf.mxu0
    %v3709 = vadd.f32 0.0, %v3708
    %v3710 = vpop.f32.mrf.mxu0
    %3711 = vmatprep.mubr.f32.mxu0 0.0
    %3712 = vmatmul.mubr.f32.gmra.mxu0 %v3640
    %v3713 = vpop.f32.mrf.mxu0
    %v3714 = vadd.f32 0.0, %v3713
    %v3715 = vpop.f32.mrf.mxu0
    %3716 = vdwg.mxu0
    %3717 = vrot.lane.b32.xlu0 %v2553, 96
    %v3718 = vpop.permute.xlu0 %3717
    %3719 = vrot.lane.b32.xlu0 %v2559, 96
    %v3720 = vpop.permute.xlu0 %3719
    %3721 = vrot.lane.b32.xlu0 %v2630, 96
    %v3722 = vpop.permute.xlu0 %3721
    %3723 = vrot.lane.b32.xlu0 %v2636, 96
    %v3724 = vpop.permute.xlu0 %3723
    %v3725 = vsel %vm52, %v3718, 0
    %v3727 = vsel %vm52, %v3720, 0
    %v3729 = vsel %vm52, %v3722, 0
    %v3731 = vsel %vm52, %v3724, 0
    %3733 = vmatprep.subr.mxu0 0.0
    %3734 = vmatpush1.xpose.msra.mxu0 0.0
    %3735 = vmatprep.subr.mxu0 0.0
    %3736 = vmatpush1.xpose.msra.mxu0 0.0
    %3737 = vmatprep.subr.mxu0 0.0
    %3738 = vmatpush1.xpose.msra.mxu0 0.0
    %3739 = vmatprep.subr.mxu0 0.0
    %3740 = vmatpush1.xpose.msra.mxu0 0.0
    %3741 = vmatprep.subr.mxu0 0.0
    %3742 = vmatpush1.xpose.msra.mxu0 0.0
    %3743 = vmatprep.subr.mxu0 0.0
    %3744 = vmatpush1.xpose.msra.mxu0 0.0
    %3745 = vmatprep.subr.mxu0 0.0
    %3746 = vmatpush1.xpose.msra.mxu0 0.0
    %3747 = vmatprep.subr.mxu0 0.0
    %3748 = vmatpush1.xpose.msra.mxu0 0.0
    %3749 = vmatprep.subr.mxu0 0.0
    %3750 = vmatpush1.xpose.msra.mxu0 0.0
    %3751 = vmatprep.subr.mxu0 0.0
    %3752 = vmatpush1.xpose.msra.mxu0 0.0
    %3753 = vmatprep.subr.mxu0 0.0
    %3754 = vmatpush1.xpose.msra.mxu0 0.0
    %3755 = vmatprep.subr.mxu0 0.0
    %3756 = vmatpush1.xpose.msra.mxu0 0.0
    %3757 = vmatprep.subr.mxu0 0.0
    %3758 = vmatpush1.xpose.msra.mxu0 0.0
    %3759 = vmatprep.subr.mxu0 0.0
    %3760 = vmatpush1.xpose.msra.mxu0 0.0
    %3761 = vmatprep.subr.mxu0 0.0
    %3762 = vmatpush1.xpose.msra.mxu0 %v3731
    %3763 = vmatprep.subr.mxu0 0.0
    %3764 = vmatpush1.xpose.msra.mxu0 %v3729
    %3765 = vmatprep.subr.mxu0 0.0
    %3766 = vmatpush2.xpose.msra.mxu0 0.0
    %3767 = vmatprep.subr.mxu0 0.0
    %3768 = vmatpush2.xpose.msra.mxu0 0.0
    %3769 = vmatprep.subr.mxu0 0.0
    %3770 = vmatpush2.xpose.msra.mxu0 0.0
    %3771 = vmatprep.subr.mxu0 0.0
    %3772 = vmatpush2.xpose.msra.mxu0 0.0
    %3773 = vmatprep.subr.mxu0 0.0
    %3774 = vmatpush2.xpose.msra.mxu0 0.0
    %3775 = vmatprep.subr.mxu0 0.0
    %3776 = vmatpush2.xpose.msra.mxu0 0.0
    %3777 = vmatprep.subr.mxu0 0.0
    %3778 = vmatpush2.xpose.msra.mxu0 0.0
    %3779 = vmatprep.subr.mxu0 0.0
    %3780 = vmatpush2.xpose.msra.mxu0 0.0
    %3781 = vmatprep.subr.mxu0 0.0
    %3782 = vmatpush2.xpose.msra.mxu0 0.0
    %3783 = vmatprep.subr.mxu0 0.0
    %3784 = vmatpush2.xpose.msra.mxu0 0.0
    %3785 = vmatprep.subr.mxu0 0.0
    %3786 = vmatpush2.xpose.msra.mxu0 0.0
    %3787 = vmatprep.subr.mxu0 0.0
    %3788 = vmatpush2.xpose.msra.mxu0 0.0
    %3789 = vmatprep.subr.mxu0 0.0
    %3790 = vmatpush2.xpose.msra.mxu0 0.0
    %3791 = vmatprep.subr.mxu0 0.0
    %3792 = vmatpush2.xpose.msra.mxu0 0.0
    %3793 = vmatprep.subr.mxu0 0.0
    %3794 = vmatpush2.xpose.msra.mxu0 0.0
    %3795 = vmatprep.subr.mxu0 0.0
    %3796 = vmatpush2.xpose.msra.mxu0 0.0
    %3797 = vmatprep.mubr.f32.mxu0 0.0
    %3798 = vmatmul.mubr.f32.gmra.mxu0 %v3725
    %v3799 = vpop.f32.mrf.mxu0
    %v3800 = vadd.f32 0.0, %v3799
    %v3801 = vpop.f32.mrf.mxu0
    %3802 = vmatprep.mubr.f32.mxu0 0.0
    %3803 = vmatmul.mubr.f32.gmra.mxu0 %v3727
    %v3804 = vpop.f32.mrf.mxu0
    %v3805 = vadd.f32 0.0, %v3804
    %v3806 = vpop.f32.mrf.mxu0
    %3807 = vdwg.mxu0
    %v3808 = vmul.f32 %v3800, 0.17677669
    %v3809 = vmul.f32 %v3805, 0.17677669
    %v3810 = vadd.f32 %v3808, %v96
    %v3811 = vadd.f32 %v3809, %v97
    %v3812 = vsel %vm482, %v3810, -inf
    %3813 = vmax.xlane.f32.xlu0 %v3812
    %v3814 = vpop.xlane.xlu0 %3813
    %v3815 = vsel %vm482, %v3811, -inf
    %3816 = vmax.xlane.f32.xlu0 %v3815
    %v3817 = vpop.xlane.xlu0 %3816
    %v3818 = vsub.f32 %v3810, %v3814
    %v3819 = vsub.f32 %v3811, %v3817
    %v3820 = vmul.f32 %v3818, 1.442695
    %v3821 = vpow.pop %v3820
    %v3822 = vmul.f32 %v3819, 1.442695
    %v3823 = vpow.pop %v3822
    %v3824 = vsel %vm482, %v3821, 0.0
    %3825 = vadd.xlane.f32.xlu0 %v3824
    %v3826 = vpop.xlane.xlu0 %3825
    %v3827 = vsel %vm482, %v3823, 0.0
    %3828 = vadd.xlane.f32.xlu0 %v3827
    %v3829 = vpop.xlane.xlu0 %3828
    %v3830 = vrcp.pop %v3826
    %v3831 = vrcp.pop %v3829
    %v3832 = vmul.f32 %v3821, %v3830
    %v3833 = vmul.f32 %v3823, %v3831
    %3836 = vrot.lane.b32.xlu0 %v2707, 96
    %v3837 = vpop.permute.xlu0 %3836
    %3838 = vrot.lane.b32.xlu0 %v2713, 96
    %v3839 = vpop.permute.xlu0 %3838
    %v3843 = vsel %vm482, %v3832, 0
    %v3846 = vsel %vm482, %v3833, 0
    %3848 = vmatprep.subr.mxu0 0.0
    %3849 = vmatpush1.msra.mxu0 0.0
    %3850 = vmatprep.subr.mxu0 0.0
    %3851 = vmatpush1.msra.mxu0 0.0
    %3852 = vmatprep.subr.mxu0 0.0
    %3853 = vmatpush1.msra.mxu0 0.0
    %3854 = vmatprep.subr.mxu0 0.0
    %3855 = vmatpush1.msra.mxu0 0.0
    %3856 = vmatprep.subr.mxu0 0.0
    %3857 = vmatpush1.msra.mxu0 0.0
    %3858 = vmatprep.subr.mxu0 0.0
    %3859 = vmatpush1.msra.mxu0 0.0
    %3860 = vmatprep.subr.mxu0 0.0
    %3861 = vmatpush1.msra.mxu0 0.0
    %3862 = vmatprep.subr.mxu0 0.0
    %3863 = vmatpush1.msra.mxu0 0.0
    %3864 = vmatprep.subr.mxu0 0.0
    %3865 = vmatpush1.msra.mxu0 0.0
    %3866 = vmatprep.subr.mxu0 0.0
    %3867 = vmatpush1.msra.mxu0 0.0
    %3868 = vmatprep.subr.mxu0 0.0
    %3869 = vmatpush1.msra.mxu0 0.0
    %3870 = vmatprep.subr.mxu0 0.0
    %3871 = vmatpush1.msra.mxu0 0.0
    %3872 = vmatprep.subr.mxu0 0.0
    %3873 = vmatpush1.msra.mxu0 0.0
    %3874 = vmatprep.subr.mxu0 0.0
    %3875 = vmatpush1.msra.mxu0 0.0
    %3876 = vmatprep.subr.mxu0 0.0
    %3877 = vmatpush1.msra.mxu0 %v3839
    %3878 = vmatprep.subr.mxu0 0.0
    %3879 = vmatpush1.msra.mxu0 %v3837
    %3880 = vmatprep.subr.mxu0 0.0
    %3881 = vmatpush2.msra.mxu0 0.0
    %3882 = vmatprep.subr.mxu0 0.0
    %3883 = vmatpush2.msra.mxu0 0.0
    %3884 = vmatprep.subr.mxu0 0.0
    %3885 = vmatpush2.msra.mxu0 0.0
    %3886 = vmatprep.subr.mxu0 0.0
    %3887 = vmatpush2.msra.mxu0 0.0
    %3888 = vmatprep.subr.mxu0 0.0
    %3889 = vmatpush2.msra.mxu0 0.0
    %3890 = vmatprep.subr.mxu0 0.0
    %3891 = vmatpush2.msra.mxu0 0.0
    %3892 = vmatprep.subr.mxu0 0.0
    %3893 = vmatpush2.msra.mxu0 0.0
    %3894 = vmatprep.subr.mxu0 0.0
    %3895 = vmatpush2.msra.mxu0 0.0
    %3896 = vmatprep.subr.mxu0 0.0
    %3897 = vmatpush2.msra.mxu0 0.0
    %3898 = vmatprep.subr.mxu0 0.0
    %3899 = vmatpush2.msra.mxu0 0.0
    %3900 = vmatprep.subr.mxu0 0.0
    %3901 = vmatpush2.msra.mxu0 0.0
    %3902 = vmatprep.subr.mxu0 0.0
    %3903 = vmatpush2.msra.mxu0 0.0
    %3904 = vmatprep.subr.mxu0 0.0
    %3905 = vmatpush2.msra.mxu0 0.0
    %3906 = vmatprep.subr.mxu0 0.0
    %3907 = vmatpush2.msra.mxu0 0.0
    %3908 = vmatprep.subr.mxu0 0.0
    %3909 = vmatpush2.msra.mxu0 0.0
    %3910 = vmatprep.subr.mxu0 0.0
    %3911 = vmatpush2.msra.mxu0 0.0
    %3912 = vmatprep.mubr.f32.mxu0 0.0
    %3913 = vmatmul.mubr.f32.gmra.mxu0 %v3843
    %v3914 = vpop.f32.mrf.mxu0
    %v3915 = vadd.f32 0.0, %v3914
    %v3916 = vpop.f32.mrf.mxu0
    %3917 = vmatprep.mubr.f32.mxu0 0.0
    %3918 = vmatmul.mubr.f32.gmra.mxu0 %v3846
    %v3919 = vpop.f32.mrf.mxu0
    %v3920 = vadd.f32 0.0, %v3919
    %v3921 = vpop.f32.mrf.mxu0
    %3922 = vdwg.mxu0
    %3923 = vrot.lane.b32.xlu0 %v2553, 64
    %v3924 = vpop.permute.xlu0 %3923
    %3925 = vrot.lane.b32.xlu0 %v2559, 64
    %v3926 = vpop.permute.xlu0 %3925
    %3927 = vrot.lane.b32.xlu0 %v2630, 64
    %v3928 = vpop.permute.xlu0 %3927
    %3929 = vrot.lane.b32.xlu0 %v2636, 64
    %v3930 = vpop.permute.xlu0 %3929
    %v3931 = vsel %vm52, %v3924, 0
    %v3933 = vsel %vm52, %v3926, 0
    %v3935 = vsel %vm52, %v3928, 0
    %v3937 = vsel %vm52, %v3930, 0
    %3939 = vmatprep.subr.mxu0 0.0
    %3940 = vmatpush1.xpose.msra.mxu0 0.0
    %3941 = vmatprep.subr.mxu0 0.0
    %3942 = vmatpush1.xpose.msra.mxu0 0.0
    %3943 = vmatprep.subr.mxu0 0.0
    %3944 = vmatpush1.xpose.msra.mxu0 0.0
    %3945 = vmatprep.subr.mxu0 0.0
    %3946 = vmatpush1.xpose.msra.mxu0 0.0
    %3947 = vmatprep.subr.mxu0 0.0
    %3948 = vmatpush1.xpose.msra.mxu0 0.0
    %3949 = vmatprep.subr.mxu0 0.0
    %3950 = vmatpush1.xpose.msra.mxu0 0.0
    %3951 = vmatprep.subr.mxu0 0.0
    %3952 = vmatpush1.xpose.msra.mxu0 0.0
    %3953 = vmatprep.subr.mxu0 0.0
    %3954 = vmatpush1.xpose.msra.mxu0 0.0
    %3955 = vmatprep.subr.mxu0 0.0
    %3956 = vmatpush1.xpose.msra.mxu0 0.0
    %3957 = vmatprep.subr.mxu0 0.0
    %3958 = vmatpush1.xpose.msra.mxu0 0.0
    %3959 = vmatprep.subr.mxu0 0.0
    %3960 = vmatpush1.xpose.msra.mxu0 0.0
    %3961 = vmatprep.subr.mxu0 0.0
    %3962 = vmatpush1.xpose.msra.mxu0 0.0
    %3963 = vmatprep.subr.mxu0 0.0
    %3964 = vmatpush1.xpose.msra.mxu0 0.0
    %3965 = vmatprep.subr.mxu0 0.0
    %3966 = vmatpush1.xpose.msra.mxu0 0.0
    %3967 = vmatprep.subr.mxu0 0.0
    %3968 = vmatpush1.xpose.msra.mxu0 %v3937
    %3969 = vmatprep.subr.mxu0 0.0
    %3970 = vmatpush1.xpose.msra.mxu0 %v3935
    %3971 = vmatprep.subr.mxu0 0.0
    %3972 = vmatpush2.xpose.msra.mxu0 0.0
    %3973 = vmatprep.subr.mxu0 0.0
    %3974 = vmatpush2.xpose.msra.mxu0 0.0
    %3975 = vmatprep.subr.mxu0 0.0
    %3976 = vmatpush2.xpose.msra.mxu0 0.0
    %3977 = vmatprep.subr.mxu0 0.0
    %3978 = vmatpush2.xpose.msra.mxu0 0.0
    %3979 = vmatprep.subr.mxu0 0.0
    %3980 = vmatpush2.xpose.msra.mxu0 0.0
    %3981 = vmatprep.subr.mxu0 0.0
    %3982 = vmatpush2.xpose.msra.mxu0 0.0
    %3983 = vmatprep.subr.mxu0 0.0
    %3984 = vmatpush2.xpose.msra.mxu0 0.0
    %3985 = vmatprep.subr.mxu0 0.0
    %3986 = vmatpush2.xpose.msra.mxu0 0.0
    %3987 = vmatprep.subr.mxu0 0.0
    %3988 = vmatpush2.xpose.msra.mxu0 0.0
    %3989 = vmatprep.subr.mxu0 0.0
    %3990 = vmatpush2.xpose.msra.mxu0 0.0
    %3991 = vmatprep.subr.mxu0 0.0
    %3992 = vmatpush2.xpose.msra.mxu0 0.0
    %3993 = vmatprep.subr.mxu0 0.0
    %3994 = vmatpush2.xpose.msra.mxu0 0.0
    %3995 = vmatprep.subr.mxu0 0.0
    %3996 = vmatpush2.xpose.msra.mxu0 0.0
    %3997 = vmatprep.subr.mxu0 0.0
    %3998 = vmatpush2.xpose.msra.mxu0 0.0
    %3999 = vmatprep.subr.mxu0 0.0
    %4000 = vmatpush2.xpose.msra.mxu0 0.0
    %4001 = vmatprep.subr.mxu0 0.0
    %4002 = vmatpush2.xpose.msra.mxu0 0.0
    %4003 = vmatprep.mubr.f32.mxu0 0.0
    %4004 = vmatmul.mubr.f32.gmra.mxu0 %v3931
    %v4005 = vpop.f32.mrf.mxu0
    %v4006 = vadd.f32 0.0, %v4005
    %v4007 = vpop.f32.mrf.mxu0
    %4008 = vmatprep.mubr.f32.mxu0 0.0
    %4009 = vmatmul.mubr.f32.gmra.mxu0 %v3933
    %v4010 = vpop.f32.mrf.mxu0
    %v4011 = vadd.f32 0.0, %v4010
    %v4012 = vpop.f32.mrf.mxu0
    %4013 = vdwg.mxu0
    %v4014 = vmul.f32 %v4006, 0.17677669
    %v4015 = vmul.f32 %v4011, 0.17677669
    %v4016 = vadd.f32 %v4014, %v96
    %v4017 = vadd.f32 %v4015, %v97
    %v4018 = vsel %vm482, %v4016, -inf
    %4019 = vmax.xlane.f32.xlu0 %v4018
    %v4020 = vpop.xlane.xlu0 %4019
    %v4021 = vsel %vm482, %v4017, -inf
    %4022 = vmax.xlane.f32.xlu0 %v4021
    %v4023 = vpop.xlane.xlu0 %4022
    %v4024 = vsub.f32 %v4016, %v4020
    %v4025 = vsub.f32 %v4017, %v4023
    %v4026 = vmul.f32 %v4024, 1.442695
    %v4027 = vpow.pop %v4026
    %v4028 = vmul.f32 %v4025, 1.442695
    %v4029 = vpow.pop %v4028
    %v4030 = vsel %vm482, %v4027, 0.0
    %4031 = vadd.xlane.f32.xlu0 %v4030
    %v4032 = vpop.xlane.xlu0 %4031
    %v4033 = vsel %vm482, %v4029, 0.0
    %4034 = vadd.xlane.f32.xlu0 %v4033
    %v4035 = vpop.xlane.xlu0 %4034
    %v4036 = vrcp.pop %v4032
    %v4037 = vrcp.pop %v4035
    %v4038 = vmul.f32 %v4027, %v4036
    %v4039 = vmul.f32 %v4029, %v4037
    %4040 = vrot.lane.b32.xlu0 %v2707, 64
    %v4041 = vpop.permute.xlu0 %4040
    %4042 = vrot.lane.b32.xlu0 %v2713, 64
    %v4043 = vpop.permute.xlu0 %4042
    %v4047 = vsel %vm482, %v4038, 0
    %v4050 = vsel %vm482, %v4039, 0
    %4052 = vmatprep.subr.mxu0 0.0
    %4053 = vmatpush1.msra.mxu0 0.0
    %4054 = vmatprep.subr.mxu0 0.0
    %4055 = vmatpush1.msra.mxu0 0.0
    %4056 = vmatprep.subr.mxu0 0.0
    %4057 = vmatpush1.msra.mxu0 0.0
    %4058 = vmatprep.subr.mxu0 0.0
    %4059 = vmatpush1.msra.mxu0 0.0
    %4060 = vmatprep.subr.mxu0 0.0
    %4061 = vmatpush1.msra.mxu0 0.0
    %4062 = vmatprep.subr.mxu0 0.0
    %4063 = vmatpush1.msra.mxu0 0.0
    %4064 = vmatprep.subr.mxu0 0.0
    %4065 = vmatpush1.msra.mxu0 0.0
    %4066 = vmatprep.subr.mxu0 0.0
    %4067 = vmatpush1.msra.mxu0 0.0
    %4068 = vmatprep.subr.mxu0 0.0
    %4069 = vmatpush1.msra.mxu0 0.0
    %4070 = vmatprep.subr.mxu0 0.0
    %4071 = vmatpush1.msra.mxu0 0.0
    %4072 = vmatprep.subr.mxu0 0.0
    %4073 = vmatpush1.msra.mxu0 0.0
    %4074 = vmatprep.subr.mxu0 0.0
    %4075 = vmatpush1.msra.mxu0 0.0
    %4076 = vmatprep.subr.mxu0 0.0
    %4077 = vmatpush1.msra.mxu0 0.0
    %4078 = vmatprep.subr.mxu0 0.0
    %4079 = vmatpush1.msra.mxu0 0.0
    %4080 = vmatprep.subr.mxu0 0.0
    %4081 = vmatpush1.msra.mxu0 %v4043
    %4082 = vmatprep.subr.mxu0 0.0
    %4083 = vmatpush1.msra.mxu0 %v4041
    %4084 = vmatprep.subr.mxu0 0.0
    %4085 = vmatpush2.msra.mxu0 0.0
    %4086 = vmatprep.subr.mxu0 0.0
    %4087 = vmatpush2.msra.mxu0 0.0
    %4088 = vmatprep.subr.mxu0 0.0
    %4089 = vmatpush2.msra.mxu0 0.0
    %4090 = vmatprep.subr.mxu0 0.0
    %4091 = vmatpush2.msra.mxu0 0.0
    %4092 = vmatprep.subr.mxu0 0.0
    %4093 = vmatpush2.msra.mxu0 0.0
    %4094 = vmatprep.subr.mxu0 0.0
    %4095 = vmatpush2.msra.mxu0 0.0
    %4096 = vmatprep.subr.mxu0 0.0
    %4097 = vmatpush2.msra.mxu0 0.0
    %4098 = vmatprep.subr.mxu0 0.0
    %4099 = vmatpush2.msra.mxu0 0.0
    %4100 = vmatprep.subr.mxu0 0.0
    %4101 = vmatpush2.msra.mxu0 0.0
    %4102 = vmatprep.subr.mxu0 0.0
    %4103 = vmatpush2.msra.mxu0 0.0
    %4104 = vmatprep.subr.mxu0 0.0
    %4105 = vmatpush2.msra.mxu0 0.0
    %4106 = vmatprep.subr.mxu0 0.0
    %4107 = vmatpush2.msra.mxu0 0.0
    %4108 = vmatprep.subr.mxu0 0.0
    %4109 = vmatpush2.msra.mxu0 0.0
    %4110 = vmatprep.subr.mxu0 0.0
    %4111 = vmatpush2.msra.mxu0 0.0
    %4112 = vmatprep.subr.mxu0 0.0
    %4113 = vmatpush2.msra.mxu0 0.0
    %4114 = vmatprep.subr.mxu0 0.0
    %4115 = vmatpush2.msra.mxu0 0.0
    %4116 = vmatprep.mubr.f32.mxu0 0.0
    %4117 = vmatmul.mubr.f32.gmra.mxu0 %v4047
    %v4118 = vpop.f32.mrf.mxu0
    %v4119 = vadd.f32 0.0, %v4118
    %v4120 = vpop.f32.mrf.mxu0
    %4121 = vmatprep.mubr.f32.mxu0 0.0
    %4122 = vmatmul.mubr.f32.gmra.mxu0 %v4050
    %v4123 = vpop.f32.mrf.mxu0
    %v4124 = vadd.f32 0.0, %v4123
    %v4125 = vpop.f32.mrf.mxu0
    %4126 = vdwg.mxu0
    %4127 = vrot.lane.b32.xlu0 %v2553, 32
    %v4128 = vpop.permute.xlu0 %4127
    %4129 = vrot.lane.b32.xlu0 %v2559, 32
    %v4130 = vpop.permute.xlu0 %4129
    %4131 = vrot.lane.b32.xlu0 %v2630, 32
    %v4132 = vpop.permute.xlu0 %4131
    %4133 = vrot.lane.b32.xlu0 %v2636, 32
    %v4134 = vpop.permute.xlu0 %4133
    %v4135 = vsel %vm52, %v4128, 0
    %v4137 = vsel %vm52, %v4130, 0
    %v4139 = vsel %vm52, %v4132, 0
    %v4141 = vsel %vm52, %v4134, 0
    %4143 = vmatprep.subr.mxu0 0.0
    %4144 = vmatpush1.xpose.msra.mxu0 0.0
    %4145 = vmatprep.subr.mxu0 0.0
    %4146 = vmatpush1.xpose.msra.mxu0 0.0
    %4147 = vmatprep.subr.mxu0 0.0
    %4148 = vmatpush1.xpose.msra.mxu0 0.0
    %4149 = vmatprep.subr.mxu0 0.0
    %4150 = vmatpush1.xpose.msra.mxu0 0.0
    %4151 = vmatprep.subr.mxu0 0.0
    %4152 = vmatpush1.xpose.msra.mxu0 0.0
    %4153 = vmatprep.subr.mxu0 0.0
    %4154 = vmatpush1.xpose.msra.mxu0 0.0
    %4155 = vmatprep.subr.mxu0 0.0
    %4156 = vmatpush1.xpose.msra.mxu0 0.0
    %4157 = vmatprep.subr.mxu0 0.0
    %4158 = vmatpush1.xpose.msra.mxu0 0.0
    %4159 = vmatprep.subr.mxu0 0.0
    %4160 = vmatpush1.xpose.msra.mxu0 0.0
    %4161 = vmatprep.subr.mxu0 0.0
    %4162 = vmatpush1.xpose.msra.mxu0 0.0
    %4163 = vmatprep.subr.mxu0 0.0
    %4164 = vmatpush1.xpose.msra.mxu0 0.0
    %4165 = vmatprep.subr.mxu0 0.0
    %4166 = vmatpush1.xpose.msra.mxu0 0.0
    %4167 = vmatprep.subr.mxu0 0.0
    %4168 = vmatpush1.xpose.msra.mxu0 0.0
    %4169 = vmatprep.subr.mxu0 0.0
    %4170 = vmatpush1.xpose.msra.mxu0 0.0
    %4171 = vmatprep.subr.mxu0 0.0
    %4172 = vmatpush1.xpose.msra.mxu0 %v4141
    %4173 = vmatprep.subr.mxu0 0.0
    %4174 = vmatpush1.xpose.msra.mxu0 %v4139
    %4175 = vmatprep.subr.mxu0 0.0
    %4176 = vmatpush2.xpose.msra.mxu0 0.0
    %4177 = vmatprep.subr.mxu0 0.0
    %4178 = vmatpush2.xpose.msra.mxu0 0.0
    %4179 = vmatprep.subr.mxu0 0.0
    %4180 = vmatpush2.xpose.msra.mxu0 0.0
    %4181 = vmatprep.subr.mxu0 0.0
    %4182 = vmatpush2.xpose.msra.mxu0 0.0
    %4183 = vmatprep.subr.mxu0 0.0
    %4184 = vmatpush2.xpose.msra.mxu0 0.0
    %4185 = vmatprep.subr.mxu0 0.0
    %4186 = vmatpush2.xpose.msra.mxu0 0.0
    %4187 = vmatprep.subr.mxu0 0.0
    %4188 = vmatpush2.xpose.msra.mxu0 0.0
    %4189 = vmatprep.subr.mxu0 0.0
    %4190 = vmatpush2.xpose.msra.mxu0 0.0
    %4191 = vmatprep.subr.mxu0 0.0
    %4192 = vmatpush2.xpose.msra.mxu0 0.0
    %4193 = vmatprep.subr.mxu0 0.0
    %4194 = vmatpush2.xpose.msra.mxu0 0.0
    %4195 = vmatprep.subr.mxu0 0.0
    %4196 = vmatpush2.xpose.msra.mxu0 0.0
    %4197 = vmatprep.subr.mxu0 0.0
    %4198 = vmatpush2.xpose.msra.mxu0 0.0
    %4199 = vmatprep.subr.mxu0 0.0
    %4200 = vmatpush2.xpose.msra.mxu0 0.0
    %4201 = vmatprep.subr.mxu0 0.0
    %4202 = vmatpush2.xpose.msra.mxu0 0.0
    %4203 = vmatprep.subr.mxu0 0.0
    %4204 = vmatpush2.xpose.msra.mxu0 0.0
    %4205 = vmatprep.subr.mxu0 0.0
    %4206 = vmatpush2.xpose.msra.mxu0 0.0
    %4207 = vmatprep.mubr.f32.mxu0 0.0
    %4208 = vmatmul.mubr.f32.gmra.mxu0 %v4135
    %v4209 = vpop.f32.mrf.mxu0
    %v4210 = vadd.f32 0.0, %v4209
    %v4211 = vpop.f32.mrf.mxu0
    %4212 = vmatprep.mubr.f32.mxu0 0.0
    %4213 = vmatmul.mubr.f32.gmra.mxu0 %v4137
    %v4214 = vpop.f32.mrf.mxu0
    %v4215 = vadd.f32 0.0, %v4214
    %v4216 = vpop.f32.mrf.mxu0
    %4217 = vdwg.mxu0
    %v4218 = vmul.f32 %v4210, 0.17677669
    %v4219 = vmul.f32 %v4215, 0.17677669
    %v4220 = vadd.f32 %v4218, %v96
    %v4221 = vadd.f32 %v4219, %v97
    %v4222 = vsel %vm482, %v4220, -inf
    %4223 = vmax.xlane.f32.xlu0 %v4222
    %v4224 = vpop.xlane.xlu0 %4223
    %v4225 = vsel %vm482, %v4221, -inf
    %4226 = vmax.xlane.f32.xlu0 %v4225
    %v4227 = vpop.xlane.xlu0 %4226
    %v4228 = vsub.f32 %v4220, %v4224
    %v4229 = vsub.f32 %v4221, %v4227
    %v4230 = vmul.f32 %v4228, 1.442695
    %v4231 = vpow.pop %v4230
    %v4232 = vmul.f32 %v4229, 1.442695
    %v4233 = vpow.pop %v4232
    %v4234 = vsel %vm482, %v4231, 0.0
    %4235 = vadd.xlane.f32.xlu0 %v4234
    %v4236 = vpop.xlane.xlu0 %4235
    %v4237 = vsel %vm482, %v4233, 0.0
    %4238 = vadd.xlane.f32.xlu0 %v4237
    %v4239 = vpop.xlane.xlu0 %4238
    %v4240 = vrcp.pop %v4236
    %v4241 = vrcp.pop %v4239
    %v4242 = vmul.f32 %v4231, %v4240
    %v4243 = vmul.f32 %v4233, %v4241
    %4244 = vrot.lane.b32.xlu0 %v2707, 32
    %v4245 = vpop.permute.xlu0 %4244
    %4246 = vrot.lane.b32.xlu0 %v2713, 32
    %v4247 = vpop.permute.xlu0 %4246
    %v4251 = vsel %vm482, %v4242, 0
    %v4254 = vsel %vm482, %v4243, 0
    %4256 = vmatprep.subr.mxu0 0.0
    %4257 = vmatpush1.msra.mxu0 0.0
    %4258 = vmatprep.subr.mxu0 0.0
    %4259 = vmatpush1.msra.mxu0 0.0
    %4260 = vmatprep.subr.mxu0 0.0
    %4261 = vmatpush1.msra.mxu0 0.0
    %4262 = vmatprep.subr.mxu0 0.0
    %4263 = vmatpush1.msra.mxu0 0.0
    %4264 = vmatprep.subr.mxu0 0.0
    %4265 = vmatpush1.msra.mxu0 0.0
    %4266 = vmatprep.subr.mxu0 0.0
    %4267 = vmatpush1.msra.mxu0 0.0
    %4268 = vmatprep.subr.mxu0 0.0
    %4269 = vmatpush1.msra.mxu0 0.0
    %4270 = vmatprep.subr.mxu0 0.0
    %4271 = vmatpush1.msra.mxu0 0.0
    %4272 = vmatprep.subr.mxu0 0.0
    %4273 = vmatpush1.msra.mxu0 0.0
    %4274 = vmatprep.subr.mxu0 0.0
    %4275 = vmatpush1.msra.mxu0 0.0
    %4276 = vmatprep.subr.mxu0 0.0
    %4277 = vmatpush1.msra.mxu0 0.0
    %4278 = vmatprep.subr.mxu0 0.0
    %4279 = vmatpush1.msra.mxu0 0.0
    %4280 = vmatprep.subr.mxu0 0.0
    %4281 = vmatpush1.msra.mxu0 0.0
    %4282 = vmatprep.subr.mxu0 0.0
    %4283 = vmatpush1.msra.mxu0 0.0
    %4284 = vmatprep.subr.mxu0 0.0
    %4285 = vmatpush1.msra.mxu0 %v4247
    %4286 = vmatprep.subr.mxu0 0.0
    %4287 = vmatpush1.msra.mxu0 %v4245
    %4288 = vmatprep.subr.mxu0 0.0
    %4289 = vmatpush2.msra.mxu0 0.0
    %4290 = vmatprep.subr.mxu0 0.0
    %4291 = vmatpush2.msra.mxu0 0.0
    %4292 = vmatprep.subr.mxu0 0.0
    %4293 = vmatpush2.msra.mxu0 0.0
    %4294 = vmatprep.subr.mxu0 0.0
    %4295 = vmatpush2.msra.mxu0 0.0
    %4296 = vmatprep.subr.mxu0 0.0
    %4297 = vmatpush2.msra.mxu0 0.0
    %4298 = vmatprep.subr.mxu0 0.0
    %4299 = vmatpush2.msra.mxu0 0.0
    %4300 = vmatprep.subr.mxu0 0.0
    %4301 = vmatpush2.msra.mxu0 0.0
    %4302 = vmatprep.subr.mxu0 0.0
    %4303 = vmatpush2.msra.mxu0 0.0
    %4304 = vmatprep.subr.mxu0 0.0
    %4305 = vmatpush2.msra.mxu0 0.0
    %4306 = vmatprep.subr.mxu0 0.0
    %4307 = vmatpush2.msra.mxu0 0.0
    %4308 = vmatprep.subr.mxu0 0.0
    %4309 = vmatpush2.msra.mxu0 0.0
    %4310 = vmatprep.subr.mxu0 0.0
    %4311 = vmatpush2.msra.mxu0 0.0
    %4312 = vmatprep.subr.mxu0 0.0
    %4313 = vmatpush2.msra.mxu0 0.0
    %4314 = vmatprep.subr.mxu0 0.0
    %4315 = vmatpush2.msra.mxu0 0.0
    %4316 = vmatprep.subr.mxu0 0.0
    %4317 = vmatpush2.msra.mxu0 0.0
    %4318 = vmatprep.subr.mxu0 0.0
    %4319 = vmatpush2.msra.mxu0 0.0
    %4320 = vmatprep.mubr.f32.mxu0 0.0
    %4321 = vmatmul.mubr.f32.gmra.mxu0 %v4251
    %v4322 = vpop.f32.mrf.mxu0
    %v4323 = vadd.f32 0.0, %v4322
    %v4324 = vpop.f32.mrf.mxu0
    %4325 = vmatprep.mubr.f32.mxu0 0.0
    %4326 = vmatmul.mubr.f32.gmra.mxu0 %v4254
    %v4327 = vpop.f32.mrf.mxu0
    %v4328 = vadd.f32 0.0, %v4327
    %v4329 = vpop.f32.mrf.mxu0
    %4330 = vdwg.mxu0
    %4333 = vrot.lane.b32.xlu0 %v3107, 32
    %v4334 = vpop.permute.xlu0 %4333
    %4335 = vrot.lane.b32.xlu0 %v3112, 32
    %v4336 = vpop.permute.xlu0 %4335
    %4341 = vrot.lane.b32.xlu0 %v3311, 64
    %v4342 = vpop.permute.xlu0 %4341
    %4343 = vrot.lane.b32.xlu0 %v3316, 64
    %v4344 = vpop.permute.xlu0 %4343
    %4349 = vrot.lane.b32.xlu0 %v3515, 96
    %v4350 = vpop.permute.xlu0 %4349
    %4351 = vrot.lane.b32.xlu0 %v3520, 96
    %v4352 = vpop.permute.xlu0 %4351
    %4357 = vrot.lane.b32.xlu0 %v3915, 32
    %v4358 = vpop.permute.xlu0 %4357
    %4359 = vrot.lane.b32.xlu0 %v3920, 32
    %v4360 = vpop.permute.xlu0 %4359
    %4365 = vrot.lane.b32.xlu0 %v4119, 64
    %v4366 = vpop.permute.xlu0 %4365
    %4367 = vrot.lane.b32.xlu0 %v4124, 64
    %v4368 = vpop.permute.xlu0 %4367
    %4373 = vrot.lane.b32.xlu0 %v4323, 96
    %v4374 = vpop.permute.xlu0 %4373
    %4375 = vrot.lane.b32.xlu0 %v4328, 96
    %v4376 = vpop.permute.xlu0 %4375
    %v4379 = vsel %vm52, %v2901, %v4334
    %v4380 = vsel %vm52, %v2906, %v4336
    %v4381 = vsel %vm2058, %v4379, %v4342
    %v4382 = vsel %vm2058, %v4380, %v4344
    %v4383 = vsel %vm2061, %v4381, %v4350
    %v4384 = vsel %vm2061, %v4382, %v4352
    %v4385 = vsel %vm52, %v3709, %v4358
    %v4386 = vsel %vm52, %v3714, %v4360
    %v4387 = vsel %vm2058, %v4385, %v4366
    %v4388 = vsel %vm2058, %v4386, %v4368
    %v4389 = vsel %vm2061, %v4387, %v4374
    %v4390 = vsel %vm2061, %v4388, %v4376
    %s4391 = scalar_lea.vmem %s6, 256
    %v4392 = vld [vmem:[%s4391] sm:$0xff]
    %v4393 = vld [vmem:[%s4391 + $0x8] sm:$0xff]
    %v4394 = vld [vmem:[%s4391 + $0x10] sm:$0xff]
    %v4395 = vld [vmem:[%s4391 + $0x18] sm:$0xff]
    %v4396 = vld [vmem:[%s4391 + $0x20] sm:$0xff]
    %v4397 = vld [vmem:[%s4391 + $0x28] sm:$0xff]
    %v4398 = vld [vmem:[%s4391 + $0x30] sm:$0xff]
    %v4399 = vld [vmem:[%s4391 + $0x38] sm:$0xff]
    %v4400 = vld [vmem:[%s4391 + $0x40] sm:$0xff]
    %v4401 = vld [vmem:[%s4391 + $0x48] sm:$0xff]
    %v4402 = vld [vmem:[%s4391 + $0x50] sm:$0xff]
    %v4403 = vld [vmem:[%s4391 + $0x58] sm:$0xff]
    %v4404 = vld [vmem:[%s4391 + $0x60] sm:$0xff]
    %v4405 = vld [vmem:[%s4391 + $0x68] sm:$0xff]
    %v4406 = vld [vmem:[%s4391 + $0x70] sm:$0xff]
    %v4407 = vld [vmem:[%s4391 + $0x78] sm:$0xff]
    %v4408 = vld [vmem:[%s4391 + $0x80] sm:$0xff]
    %v4409 = vld [vmem:[%s4391 + $0x88] sm:$0xff]
    %v4410 = vld [vmem:[%s4391 + $0x90] sm:$0xff]
    %v4411 = vld [vmem:[%s4391 + $0x98] sm:$0xff]
    %v4412 = vld [vmem:[%s4391 + $0xa0] sm:$0xff]
    %v4413 = vld [vmem:[%s4391 + $0xa8] sm:$0xff]
    %v4414 = vld [vmem:[%s4391 + $0xb0] sm:$0xff]
    %v4415 = vld [vmem:[%s4391 + $0xb8] sm:$0xff]
    %v4416 = vld [vmem:[%s4391 + $0xc0] sm:$0xff]
    %v4417 = vld [vmem:[%s4391 + $0xc8] sm:$0xff]
    %v4418 = vld [vmem:[%s4391 + $0xd0] sm:$0xff]
    %v4419 = vld [vmem:[%s4391 + $0xd8] sm:$0xff]
    %v4420 = vld [vmem:[%s4391 + $0xe0] sm:$0xff]
    %v4421 = vld [vmem:[%s4391 + $0xe8] sm:$0xff]
    %v4422 = vld [vmem:[%s4391 + $0xf0] sm:$0xff]
    %v4423 = vld [vmem:[%s4391 + $0xf8] sm:$0xff]
    %s4424 = scalar_lea.vmem %s7, 1
    %v4425 = vld [vmem:[%s4424] sm:$0x1]
    %v4427 = vlaneseq
    %v4428 = vshrl.u32 %v4427, 7
    %v4429 = vsub.s32 0, %v4428
    %v4430 = vrot.slane %v4425, %v4429
    %4432 = vmatprep.subr.mxu0 0.0
    %4433 = vmatpush1.msra.mxu0 %v4407
    %4434 = vmatprep.subr.mxu0 0.0
    %4435 = vmatpush1.msra.mxu0 %v4406
    %4436 = vmatprep.subr.mxu0 0.0
    %4437 = vmatpush1.msra.mxu0 %v4405
    %4438 = vmatprep.subr.mxu0 0.0
    %4439 = vmatpush1.msra.mxu0 %v4404
    %4440 = vmatprep.subr.mxu0 0.0
    %4441 = vmatpush1.msra.mxu0 %v4403
    %4442 = vmatprep.subr.mxu0 0.0
    %4443 = vmatpush1.msra.mxu0 %v4402
    %4444 = vmatprep.subr.mxu0 0.0
    %4445 = vmatpush1.msra.mxu0 %v4401
    %4446 = vmatprep.subr.mxu0 0.0
    %4447 = vmatpush1.msra.mxu0 %v4400
    %4448 = vmatprep.subr.mxu0 0.0
    %4449 = vmatpush1.msra.mxu0 %v4399
    %4450 = vmatprep.subr.mxu0 0.0
    %4451 = vmatpush1.msra.mxu0 %v4398
    %4452 = vmatprep.subr.mxu0 0.0
    %4453 = vmatpush1.msra.mxu0 %v4397
    %4454 = vmatprep.subr.mxu0 0.0
    %4455 = vmatpush1.msra.mxu0 %v4396
    %4456 = vmatprep.subr.mxu0 0.0
    %4457 = vmatpush1.msra.mxu0 %v4395
    %4458 = vmatprep.subr.mxu0 0.0
    %4459 = vmatpush1.msra.mxu0 %v4394
    %4460 = vmatprep.subr.mxu0 0.0
    %4461 = vmatpush1.msra.mxu0 %v4393
    %4462 = vmatprep.subr.mxu0 0.0
    %4463 = vmatpush1.msra.mxu0 %v4392
    %4464 = vmatprep.subr.mxu0 0.0
    %4465 = vmatpush2.msra.mxu0 %v4423
    %4466 = vmatprep.subr.mxu0 0.0
    %4467 = vmatpush2.msra.mxu0 %v4422
    %4468 = vmatprep.subr.mxu0 0.0
    %4469 = vmatpush2.msra.mxu0 %v4421
    %4470 = vmatprep.subr.mxu0 0.0
    %4471 = vmatpush2.msra.mxu0 %v4420
    %4472 = vmatprep.subr.mxu0 0.0
    %4473 = vmatpush2.msra.mxu0 %v4419
    %4474 = vmatprep.subr.mxu0 0.0
    %4475 = vmatpush2.msra.mxu0 %v4418
    %4476 = vmatprep.subr.mxu0 0.0
    %4477 = vmatpush2.msra.mxu0 %v4417
    %4478 = vmatprep.subr.mxu0 0.0
    %4479 = vmatpush2.msra.mxu0 %v4416
    %4480 = vmatprep.subr.mxu0 0.0
    %4481 = vmatpush2.msra.mxu0 %v4415
    %4482 = vmatprep.subr.mxu0 0.0
    %4483 = vmatpush2.msra.mxu0 %v4414
    %4484 = vmatprep.subr.mxu0 0.0
    %4485 = vmatpush2.msra.mxu0 %v4413
    %4486 = vmatprep.subr.mxu0 0.0
    %4487 = vmatpush2.msra.mxu0 %v4412
    %4488 = vmatprep.subr.mxu0 0.0
    %4489 = vmatpush2.msra.mxu0 %v4411
    %4490 = vmatprep.subr.mxu0 0.0
    %4491 = vmatpush2.msra.mxu0 %v4410
    %4492 = vmatprep.subr.mxu0 0.0
    %4493 = vmatpush2.msra.mxu0 %v4409
    %4494 = vmatprep.subr.mxu0 0.0
    %4495 = vmatpush2.msra.mxu0 %v4408
    %4496 = vmatprep.mubr.f32.mxu0 %v4389
    %4497 = vmatmul.mubr.f32.gmra.mxu0 %v4383
    %v4498 = vpop.f32.mrf.mxu0
    %v4499 = vadd.f32 %v4430, %v4498
    %v4500 = vpop.f32.mrf.mxu0
    %4501 = vmatprep.mubr.f32.mxu0 %v4390
    %4502 = vmatmul.mubr.f32.gmra.mxu0 %v4384
    %v4503 = vpop.f32.mrf.mxu0
    %v4504 = vadd.f32 %v4430, %v4503
    %v4505 = vpop.f32.mrf.mxu0
    %4506 = vdwg.mxu0
    %v4507 = vadd.f32 %v4499, %v2412
    %v4508 = vadd.f32 %v4504, %v2417
    %s4509 = scalar_lea.vmem %s8, 1
    %v4510 = vld [vmem:[%s4509] sm:$0x1]
    %s4511 = scalar_lea.vmem %s9, 1
    %v4512 = vld [vmem:[%s4511] sm:$0x1]
    %v4513 = vsel %vm52, %v4507, 0.0
    %4514 = vadd.xlane.f32.xlu0 %v4513
    %v4515 = vpop.xlane.xlu0 %4514
    %v4516 = vsel %vm52, %v4508, 0.0
    %4517 = vadd.xlane.f32.xlu0 %v4516
    %v4518 = vpop.xlane.xlu0 %4517
    %v4519 = vmul.f32 %v4515, %v59
    %v4520 = vmul.f32 %v4518, %v59
    %v4521 = vsub.f32 %v4507, %v4519
    %v4522 = vsub.f32 %v4508, %v4520
    %v4523 = vmul.f32 %v4521, %v4521
    %v4524 = vmul.f32 %v4522, %v4522
    %v4525 = vsel %vm52, %v4523, 0.0
    %4526 = vadd.xlane.f32.xlu0 %v4525
    %v4527 = vpop.xlane.xlu0 %4526
    %v4528 = vsel %vm52, %v4524, 0.0
    %4529 = vadd.xlane.f32.xlu0 %v4528
    %v4530 = vpop.xlane.xlu0 %4529
    %v4531 = vmul.f32 %v4527, %v59
    %v4532 = vmul.f32 %v4530, %v59
    %v4533 = vadd.f32 %v4531, 1e-05
    %v4534 = vadd.f32 %v4532, 1e-05
    %v4535 = vrsqrt.pop %v4533
    %v4536 = vrsqrt.pop %v4534
    %v4537 = vmul.f32 %v4521, %v4535
    %v4538 = vmul.f32 %v4522, %v4536
    %v4540 = vlaneseq
    %v4541 = vshrl.u32 %v4540, 7
    %v4542 = vsub.s32 0, %v4541
    %v4543 = vrot.slane %v4510, %v4542
    %v4545 = vmul.f32 %v4537, %v4543
    %v4546 = vmul.f32 %v4538, %v4543
    %v4548 = vlaneseq
    %v4549 = vshrl.u32 %v4548, 7
    %v4550 = vsub.s32 0, %v4549
    %v4551 = vrot.slane %v4512, %v4550
    %v4553 = vadd.f32 %v4545, %v4551
    %v4554 = vadd.f32 %v4546, %v4551
    %s4555 = scalar_lea.vmem %s10, 32
    %v4556 = vld [vmem:[%s4555] sm:$0xff]
    %v4557 = vld [vmem:[%s4555 + $0x8] sm:$0xff]
    %v4558 = vld [vmem:[%s4555 + $0x10] sm:$0xff]
    %v4559 = vld [vmem:[%s4555 + $0x18] sm:$0xff]
    %s4560 = scalar_lea.vmem %s11, 1
    %v4561 = vld [vmem:[%s4560] sm:$0x1]
    %v4563 = vlaneseq
    %v4564 = vshrl.u32 %v4563, 7
    %v4565 = vsub.s32 0, %v4564
    %v4566 = vrot.slane %v4561, %v4565
    %v4569 = vsel %vm52, %v4553, 0
    %v4572 = vsel %vm52, %v4554, 0
    %4574 = vmatprep.subr.mxu0 0.0
    %4575 = vmatpush1.msra.mxu0 0.0
    %4576 = vmatprep.subr.mxu0 0.0
    %4577 = vmatpush1.msra.mxu0 0.0
    %4578 = vmatprep.subr.mxu0 0.0
    %4579 = vmatpush1.msra.mxu0 0.0
    %4580 = vmatprep.subr.mxu0 0.0
    %4581 = vmatpush1.msra.mxu0 0.0
    %4582 = vmatprep.subr.mxu0 0.0
    %4583 = vmatpush1.msra.mxu0 0.0
    %4584 = vmatprep.subr.mxu0 0.0
    %4585 = vmatpush1.msra.mxu0 0.0
    %4586 = vmatprep.subr.mxu0 0.0
    %4587 = vmatpush1.msra.mxu0 0.0
    %4588 = vmatprep.subr.mxu0 0.0
    %4589 = vmatpush1.msra.mxu0 0.0
    %4590 = vmatprep.subr.mxu0 0.0
    %4591 = vmatpush1.msra.mxu0 0.0
    %4592 = vmatprep.subr.mxu0 0.0
    %4593 = vmatpush1.msra.mxu0 0.0
    %4594 = vmatprep.subr.mxu0 0.0
    %4595 = vmatpush1.msra.mxu0 0.0
    %4596 = vmatprep.subr.mxu0 0.0
    %4597 = vmatpush1.msra.mxu0 0.0
    %4598 = vmatprep.subr.mxu0 0.0
    %4599 = vmatpush1.msra.mxu0 %v4559
    %4600 = vmatprep.subr.mxu0 0.0
    %4601 = vmatpush1.msra.mxu0 %v4558
    %4602 = vmatprep.subr.mxu0 0.0
    %4603 = vmatpush1.msra.mxu0 %v4557
    %4604 = vmatprep.subr.mxu0 0.0
    %4605 = vmatpush1.msra.mxu0 %v4556
    %4606 = vmatprep.subr.mxu0 0.0
    %4607 = vmatpush2.msra.mxu0 0.0
    %4608 = vmatprep.subr.mxu0 0.0
    %4609 = vmatpush2.msra.mxu0 0.0
    %4610 = vmatprep.subr.mxu0 0.0
    %4611 = vmatpush2.msra.mxu0 0.0
    %4612 = vmatprep.subr.mxu0 0.0
    %4613 = vmatpush2.msra.mxu0 0.0
    %4614 = vmatprep.subr.mxu0 0.0
    %4615 = vmatpush2.msra.mxu0 0.0
    %4616 = vmatprep.subr.mxu0 0.0
    %4617 = vmatpush2.msra.mxu0 0.0
    %4618 = vmatprep.subr.mxu0 0.0
    %4619 = vmatpush2.msra.mxu0 0.0
    %4620 = vmatprep.subr.mxu0 0.0
    %4621 = vmatpush2.msra.mxu0 0.0
    %4622 = vmatprep.subr.mxu0 0.0
    %4623 = vmatpush2.msra.mxu0 0.0
    %4624 = vmatprep.subr.mxu0 0.0
    %4625 = vmatpush2.msra.mxu0 0.0
    %4626 = vmatprep.subr.mxu0 0.0
    %4627 = vmatpush2.msra.mxu0 0.0
    %4628 = vmatprep.subr.mxu0 0.0
    %4629 = vmatpush2.msra.mxu0 0.0
    %4630 = vmatprep.subr.mxu0 0.0
    %4631 = vmatpush2.msra.mxu0 0.0
    %4632 = vmatprep.subr.mxu0 0.0
    %4633 = vmatpush2.msra.mxu0 0.0
    %4634 = vmatprep.subr.mxu0 0.0
    %4635 = vmatpush2.msra.mxu0 0.0
    %4636 = vmatprep.subr.mxu0 0.0
    %4637 = vmatpush2.msra.mxu0 0.0
    %4638 = vmatprep.mubr.f32.mxu0 0.0
    %4639 = vmatmul.mubr.f32.gmra.mxu0 %v4569
    %v4640 = vpop.f32.mrf.mxu0
    %v4641 = vadd.f32 %v4566, %v4640
    %v4642 = vpop.f32.mrf.mxu0
    %4643 = vmatprep.mubr.f32.mxu0 0.0
    %4644 = vmatmul.mubr.f32.gmra.mxu0 %v4572
    %v4645 = vpop.f32.mrf.mxu0
    %v4646 = vadd.f32 %v4566, %v4645
    %v4647 = vpop.f32.mrf.mxu0
    %4648 = vdwg.mxu0
    %v4649 = vmax.f32 %v4641, 0.0
    %v4650 = vmax.f32 %v4646, 0.0
    %s4651 = scalar_lea.vmem %s12, 64
    %v4652 = vld [vmem:[%s4651] sm:$0xff]
    %v4653 = vld [vmem:[%s4651 + $0x8] sm:$0xff]
    %v4654 = vld [vmem:[%s4651 + $0x10] sm:$0xff]
    %v4655 = vld [vmem:[%s4651 + $0x18] sm:$0xff]
    %v4656 = vld [vmem:[%s4651 + $0x20] sm:$0xff]
    %v4657 = vld [vmem:[%s4651 + $0x28] sm:$0xff]
    %v4658 = vld [vmem:[%s4651 + $0x30] sm:$0xff]
    %v4659 = vld [vmem:[%s4651 + $0x38] sm:$0xff]
    %s4660 = scalar_lea.vmem %s13, 1
    %v4661 = vld [vmem:[%s4660] sm:$0x1]
    %v4663 = vlaneseq
    %v4664 = vshrl.u32 %v4663, 7
    %v4665 = vsub.s32 0, %v4664
    %v4666 = vrot.slane %v4661, %v4665
    %v4669 = vsel %vm2058, %v4649, 0
    %v4672 = vsel %vm2058, %v4650, 0
    %4674 = vmatprep.subr.mxu0 0.0
    %4675 = vmatpush1.msra.mxu0 0.0
    %4676 = vmatprep.subr.mxu0 0.0
    %4677 = vmatpush1.msra.mxu0 0.0
    %4678 = vmatprep.subr.mxu0 0.0
    %4679 = vmatpush1.msra.mxu0 0.0
    %4680 = vmatprep.subr.mxu0 0.0
    %4681 = vmatpush1.msra.mxu0 0.0
    %4682 = vmatprep.subr.mxu0 0.0
    %4683 = vmatpush1.msra.mxu0 0.0
    %4684 = vmatprep.subr.mxu0 0.0
    %4685 = vmatpush1.msra.mxu0 0.0
    %4686 = vmatprep.subr.mxu0 0.0
    %4687 = vmatpush1.msra.mxu0 0.0
    %4688 = vmatprep.subr.mxu0 0.0
    %4689 = vmatpush1.msra.mxu0 0.0
    %4690 = vmatprep.subr.mxu0 0.0
    %4691 = vmatpush1.msra.mxu0 %v4659
    %4692 = vmatprep.subr.mxu0 0.0
    %4693 = vmatpush1.msra.mxu0 %v4658
    %4694 = vmatprep.subr.mxu0 0.0
    %4695 = vmatpush1.msra.mxu0 %v4657
    %4696 = vmatprep.subr.mxu0 0.0
    %4697 = vmatpush1.msra.mxu0 %v4656
    %4698 = vmatprep.subr.mxu0 0.0
    %4699 = vmatpush1.msra.mxu0 %v4655
    %4700 = vmatprep.subr.mxu0 0.0
    %4701 = vmatpush1.msra.mxu0 %v4654
    %4702 = vmatprep.subr.mxu0 0.0
    %4703 = vmatpush1.msra.mxu0 %v4653
    %4704 = vmatprep.subr.mxu0 0.0
    %4705 = vmatpush1.msra.mxu0 %v4652
    %4706 = vmatprep.subr.mxu0 0.0
    %4707 = vmatpush2.msra.mxu0 0.0
    %4708 = vmatprep.subr.mxu0 0.0
    %4709 = vmatpush2.msra.mxu0 0.0
    %4710 = vmatprep.subr.mxu0 0.0
    %4711 = vmatpush2.msra.mxu0 0.0
    %4712 = vmatprep.subr.mxu0 0.0
    %4713 = vmatpush2.msra.mxu0 0.0
    %4714 = vmatprep.subr.mxu0 0.0
    %4715 = vmatpush2.msra.mxu0 0.0
    %4716 = vmatprep.subr.mxu0 0.0
    %4717 = vmatpush2.msra.mxu0 0.0
    %4718 = vmatprep.subr.mxu0 0.0
    %4719 = vmatpush2.msra.mxu0 0.0
    %4720 = vmatprep.subr.mxu0 0.0
    %4721 = vmatpush2.msra.mxu0 0.0
    %4722 = vmatprep.subr.mxu0 0.0
    %4723 = vmatpush2.msra.mxu0 0.0
    %4724 = vmatprep.subr.mxu0 0.0
    %4725 = vmatpush2.msra.mxu0 0.0
    %4726 = vmatprep.subr.mxu0 0.0
    %4727 = vmatpush2.msra.mxu0 0.0
    %4728 = vmatprep.subr.mxu0 0.0
    %4729 = vmatpush2.msra.mxu0 0.0
    %4730 = vmatprep.subr.mxu0 0.0
    %4731 = vmatpush2.msra.mxu0 0.0
    %4732 = vmatprep.subr.mxu0 0.0
    %4733 = vmatpush2.msra.mxu0 0.0
    %4734 = vmatprep.subr.mxu0 0.0
    %4735 = vmatpush2.msra.mxu0 0.0
    %4736 = vmatprep.subr.mxu0 0.0
    %4737 = vmatpush2.msra.mxu0 0.0
    %4738 = vmatprep.mubr.f32.mxu0 0.0
    %4739 = vmatmul.mubr.f32.gmra.mxu0 %v4669
    %v4740 = vpop.f32.mrf.mxu0
    %v4741 = vadd.f32 %v4666, %v4740
    %v4742 = vpop.f32.mrf.mxu0
    %4743 = vmatprep.mubr.f32.mxu0 0.0
    %4744 = vmatmul.mubr.f32.gmra.mxu0 %v4672
    %v4745 = vpop.f32.mrf.mxu0
    %v4746 = vadd.f32 %v4666, %v4745
    %v4747 = vpop.f32.mrf.mxu0
    %4748 = vdwg.mxu0
    %s4749 = scalar_lea.vmem %s4, 384
    %v4750 = vld [vmem:[%s4749] sm:$0xff]
    %v4751 = vld [vmem:[%s4749 + $0x8] sm:$0xff]
    %v4752 = vld [vmem:[%s4749 + $0x10] sm:$0xff]
    %v4753 = vld [vmem:[%s4749 + $0x18] sm:$0xff]
    %v4754 = vld [vmem:[%s4749 + $0x20] sm:$0xff]
    %v4755 = vld [vmem:[%s4749 + $0x28] sm:$0xff]
    %v4756 = vld [vmem:[%s4749 + $0x30] sm:$0xff]
    %v4757 = vld [vmem:[%s4749 + $0x38] sm:$0xff]
    %v4758 = vld [vmem:[%s4749 + $0x40] sm:$0xff]
    %v4759 = vld [vmem:[%s4749 + $0x48] sm:$0xff]
    %v4760 = vld [vmem:[%s4749 + $0x50] sm:$0xff]
    %v4761 = vld [vmem:[%s4749 + $0x58] sm:$0xff]
    %v4762 = vld [vmem:[%s4749 + $0x60] sm:$0xff]
    %v4763 = vld [vmem:[%s4749 + $0x68] sm:$0xff]
    %v4764 = vld [vmem:[%s4749 + $0x70] sm:$0xff]
    %v4765 = vld [vmem:[%s4749 + $0x78] sm:$0xff]
    %v4766 = vld [vmem:[%s4749 + $0x80] sm:$0xff]
    %v4767 = vld [vmem:[%s4749 + $0x88] sm:$0xff]
    %v4768 = vld [vmem:[%s4749 + $0x90] sm:$0xff]
    %v4769 = vld [vmem:[%s4749 + $0x98] sm:$0xff]
    %v4770 = vld [vmem:[%s4749 + $0xa0] sm:$0xff]
    %v4771 = vld [vmem:[%s4749 + $0xa8] sm:$0xff]
    %v4772 = vld [vmem:[%s4749 + $0xb0] sm:$0xff]
    %v4773 = vld [vmem:[%s4749 + $0xb8] sm:$0xff]
    %s4774 = scalar_lea.vmem %s5, 12
    %v4775 = vld [vmem:[%s4774] sm:$0x3f]
    %v4777 = vlaneseq
    %v4778 = vshrl.u32 %v4777, 7
    %v4779 = vsub.s32 0, %v4778
    %v4780 = vrot.slane %v4775, %v4779
    %v4781 = vlaneseq
    %v4782 = vshrl.u32 %v4781, 7
    %v4783 = vsub.s32 1, %v4782
    %v4784 = vrot.slane %v4775, %v4783
    %v4785 = vlaneseq
    %v4786 = vshrl.u32 %v4785, 7
    %v4787 = vsub.s32 2, %v4786
    %v4788 = vrot.slane %v4775, %v4787
    %v4789 = vlaneseq
    %v4790 = vshrl.u32 %v4789, 7
    %v4791 = vsub.s32 3, %v4790
    %v4792 = vrot.slane %v4775, %v4791
    %v4793 = vlaneseq
    %v4794 = vshrl.u32 %v4793, 7
    %v4795 = vsub.s32 4, %v4794
    %v4796 = vrot.slane %v4775, %v4795
    %v4797 = vlaneseq
    %v4798 = vshrl.u32 %v4797, 7
    %v4799 = vsub.s32 5, %v4798
    %v4800 = vrot.slane %v4775, %v4799
    %v4808 = vsel %vm52, %v4741, 0
    %v4811 = vsel %vm52, %v4746, 0
    %4813 = vmatprep.subr.mxu0 0.0
    %4814 = vmatpush1.msra.mxu0 0.0
    %4815 = vmatprep.subr.mxu0 0.0
    %4816 = vmatpush1.msra.mxu0 0.0
    %4817 = vmatprep.subr.mxu0 0.0
    %4818 = vmatpush1.msra.mxu0 0.0
    %4819 = vmatprep.subr.mxu0 0.0
    %4820 = vmatpush1.msra.mxu0 0.0
    %4821 = vmatprep.subr.mxu0 0.0
    %4822 = vmatpush1.msra.mxu0 0.0
    %4823 = vmatprep.subr.mxu0 0.0
    %4824 = vmatpush1.msra.mxu0 0.0
    %4825 = vmatprep.subr.mxu0 0.0
    %4826 = vmatpush1.msra.mxu0 0.0
    %4827 = vmatprep.subr.mxu0 0.0
    %4828 = vmatpush1.msra.mxu0 0.0
    %4829 = vmatprep.subr.mxu0 0.0
    %4830 = vmatpush1.msra.mxu0 0.0
    %4831 = vmatprep.subr.mxu0 0.0
    %4832 = vmatpush1.msra.mxu0 0.0
    %4833 = vmatprep.subr.mxu0 0.0
    %4834 = vmatpush1.msra.mxu0 0.0
    %4835 = vmatprep.subr.mxu0 0.0
    %4836 = vmatpush1.msra.mxu0 0.0
    %4837 = vmatprep.subr.mxu0 %v4769
    %4838 = vmatpush1.msra.mxu0 %v4768
    %4839 = vmatprep.subr.mxu0 %v4763
    %4840 = vmatpush1.msra.mxu0 %v4762
    %4841 = vmatprep.subr.mxu0 %v4757
    %4842 = vmatpush1.msra.mxu0 %v4756
    %4843 = vmatprep.subr.mxu0 %v4751
    %4844 = vmatpush1.msra.mxu0 %v4750
    %4845 = vmatprep.subr.mxu0 0.0
    %4846 = vmatpush2.msra.mxu0 0.0
    %4847 = vmatprep.subr.mxu0 0.0
    %4848 = vmatpush2.msra.mxu0 0.0
    %4849 = vmatprep.subr.mxu0 0.0
    %4850 = vmatpush2.msra.mxu0 0.0
    %4851 = vmatprep.subr.mxu0 0.0
    %4852 = vmatpush2.msra.mxu0 0.0
    %4853 = vmatprep.subr.mxu0 0.0
    %4854 = vmatpush2.msra.mxu0 0.0
    %4855 = vmatprep.subr.mxu0 0.0
    %4856 = vmatpush2.msra.mxu0 0.0
    %4857 = vmatprep.subr.mxu0 0.0
    %4858 = vmatpush2.msra.mxu0 0.0
    %4859 = vmatprep.subr.mxu0 0.0
    %4860 = vmatpush2.msra.mxu0 0.0
    %4861 = vmatprep.subr.mxu0 0.0
    %4862 = vmatpush2.msra.mxu0 0.0
    %4863 = vmatprep.subr.mxu0 0.0
    %4864 = vmatpush2.msra.mxu0 0.0
    %4865 = vmatprep.subr.mxu0 0.0
    %4866 = vmatpush2.msra.mxu0 0.0
    %4867 = vmatprep.subr.mxu0 0.0
    %4868 = vmatpush2.msra.mxu0 0.0
    %4869 = vmatprep.subr.mxu0 0.0
    %4870 = vmatpush2.msra.mxu0 0.0
    %4871 = vmatprep.subr.mxu0 0.0
    %4872 = vmatpush2.msra.mxu0 0.0
    %4873 = vmatprep.subr.mxu0 0.0
    %4874 = vmatpush2.msra.mxu0 0.0
    %4875 = vmatprep.subr.mxu0 0.0
    %4876 = vmatpush2.msra.mxu0 0.0
    %4877 = vmatprep.mubr.f32.mxu0 0.0
    %4878 = vmatmul.mubr.f32.gmra.mxu0 %v4808
    %v4879 = vpop.f32.mrf.mxu0
    %v4880 = vadd.f32 %v4780, %v4879
    %v4881 = vpop.f32.mrf.mxu0
    %v4882 = vadd.f32 %v4784, %v4881
    %4883 = vmatprep.mubr.f32.mxu0 0.0
    %4884 = vmatmul.mubr.f32.gmra.mxu0 %v4811
    %v4885 = vpop.f32.mrf.mxu0
    %v4886 = vadd.f32 %v4780, %v4885
    %v4887 = vpop.f32.mrf.mxu0
    %v4888 = vadd.f32 %v4784, %v4887
    %4889 = vdwg.mxu0
    %4890 = vmatprep.subr.mxu0 0.0
    %4891 = vmatpush1.msra.mxu0 0.0
    %4892 = vmatprep.subr.mxu0 0.0
    %4893 = vmatpush1.msra.mxu0 0.0
    %4894 = vmatprep.subr.mxu0 0.0
    %4895 = vmatpush1.msra.mxu0 0.0
    %4896 = vmatprep.subr.mxu0 0.0
    %4897 = vmatpush1.msra.mxu0 0.0
    %4898 = vmatprep.subr.mxu0 0.0
    %4899 = vmatpush1.msra.mxu0 0.0
    %4900 = vmatprep.subr.mxu0 0.0
    %4901 = vmatpush1.msra.mxu0 0.0
    %4902 = vmatprep.subr.mxu0 0.0
    %4903 = vmatpush1.msra.mxu0 0.0
    %4904 = vmatprep.subr.mxu0 0.0
    %4905 = vmatpush1.msra.mxu0 0.0
    %4906 = vmatprep.subr.mxu0 0.0
    %4907 = vmatpush1.msra.mxu0 0.0
    %4908 = vmatprep.subr.mxu0 0.0
    %4909 = vmatpush1.msra.mxu0 0.0
    %4910 = vmatprep.subr.mxu0 0.0
    %4911 = vmatpush1.msra.mxu0 0.0
    %4912 = vmatprep.subr.mxu0 0.0
    %4913 = vmatpush1.msra.mxu0 0.0
    %4914 = vmatprep.subr.mxu0 %v4771
    %4915 = vmatpush1.msra.mxu0 %v4770
    %4916 = vmatprep.subr.mxu0 %v4765
    %4917 = vmatpush1.msra.mxu0 %v4764
    %4918 = vmatprep.subr.mxu0 %v4759
    %4919 = vmatpush1.msra.mxu0 %v4758
    %4920 = vmatprep.subr.mxu0 %v4753
    %4921 = vmatpush1.msra.mxu0 %v4752
    %4922 = vmatprep.subr.mxu0 0.0
    %4923 = vmatpush2.msra.mxu0 0.0
    %4924 = vmatprep.subr.mxu0 0.0
    %4925 = vmatpush2.msra.mxu0 0.0
    %4926 = vmatprep.subr.mxu0 0.0
    %4927 = vmatpush2.msra.mxu0 0.0
    %4928 = vmatprep.subr.mxu0 0.0
    %4929 = vmatpush2.msra.mxu0 0.0
    %4930 = vmatprep.subr.mxu0 0.0
    %4931 = vmatpush2.msra.mxu0 0.0
    %4932 = vmatprep.subr.mxu0 0.0
    %4933 = vmatpush2.msra.mxu0 0.0
    %4934 = vmatprep.subr.mxu0 0.0
    %4935 = vmatpush2.msra.mxu0 0.0
    %4936 = vmatprep.subr.mxu0 0.0
    %4937 = vmatpush2.msra.mxu0 0.0
    %4938 = vmatprep.subr.mxu0 0.0
    %4939 = vmatpush2.msra.mxu0 0.0
    %4940 = vmatprep.subr.mxu0 0.0
    %4941 = vmatpush2.msra.mxu0 0.0
    %4942 = vmatprep.subr.mxu0 0.0
    %4943 = vmatpush2.msra.mxu0 0.0
    %4944 = vmatprep.subr.mxu0 0.0
    %4945 = vmatpush2.msra.mxu0 0.0
    %4946 = vmatprep.subr.mxu0 0.0
    %4947 = vmatpush2.msra.mxu0 0.0
    %4948 = vmatprep.subr.mxu0 0.0
    %4949 = vmatpush2.msra.mxu0 0.0
    %4950 = vmatprep.subr.mxu0 0.0
    %4951 = vmatpush2.msra.mxu0 0.0
    %4952 = vmatprep.subr.mxu0 0.0
    %4953 = vmatpush2.msra.mxu0 0.0
    %4954 = vmatprep.mubr.f32.mxu0 0.0
    %4955 = vmatmul.mubr.f32.gmra.mxu0 %v4808
    %v4956 = vpop.f32.mrf.mxu0
    %v4957 = vadd.f32 %v4788, %v4956
    %v4958 = vpop.f32.mrf.mxu0
    %v4959 = vadd.f32 %v4792, %v4958
    %4960 = vmatprep.mubr.f32.mxu0 0.0
    %4961 = vmatmul.mubr.f32.gmra.mxu0 %v4811
    %v4962 = vpop.f32.mrf.mxu0
    %v4963 = vadd.f32 %v4788, %v4962
    %v4964 = vpop.f32.mrf.mxu0
    %v4965 = vadd.f32 %v4792, %v4964
    %4966 = vdwg.mxu0
    %4967 = vmatprep.subr.mxu0 0.0
    %4968 = vmatpush1.msra.mxu0 0.0
    %4969 = vmatprep.subr.mxu0 0.0
    %4970 = vmatpush1.msra.mxu0 0.0
    %4971 = vmatprep.subr.mxu0 0.0
    %4972 = vmatpush1.msra.mxu0 0.0
    %4973 = vmatprep.subr.mxu0 0.0
    %4974 = vmatpush1.msra.mxu0 0.0
    %4975 = vmatprep.subr.mxu0 0.0
    %4976 = vmatpush1.msra.mxu0 0.0
    %4977 = vmatprep.subr.mxu0 0.0
    %4978 = vmatpush1.msra.mxu0 0.0
    %4979 = vmatprep.subr.mxu0 0.0
    %4980 = vmatpush1.msra.mxu0 0.0
    %4981 = vmatprep.subr.mxu0 0.0
    %4982 = vmatpush1.msra.mxu0 0.0
    %4983 = vmatprep.subr.mxu0 0.0
    %4984 = vmatpush1.msra.mxu0 0.0
    %4985 = vmatprep.subr.mxu0 0.0
    %4986 = vmatpush1.msra.mxu0 0.0
    %4987 = vmatprep.subr.mxu0 0.0
    %4988 = vmatpush1.msra.mxu0 0.0
    %4989 = vmatprep.subr.mxu0 0.0
    %4990 = vmatpush1.msra.mxu0 0.0
    %4991 = vmatprep.subr.mxu0 %v4773
    %4992 = vmatpush1.msra.mxu0 %v4772
    %4993 = vmatprep.subr.mxu0 %v4767
    %4994 = vmatpush1.msra.mxu0 %v4766
    %4995 = vmatprep.subr.mxu0 %v4761
    %4996 = vmatpush1.msra.mxu0 %v4760
    %4997 = vmatprep.subr.mxu0 %v4755
    %4998 = vmatpush1.msra.mxu0 %v4754
    %4999 = vmatprep.subr.mxu0 0.0
    %5000 = vmatpush2.msra.mxu0 0.0
    %5001 = vmatprep.subr.mxu0 0.0
    %5002 = vmatpush2.msra.mxu0 0.0
    %5003 = vmatprep.subr.mxu0 0.0
    %5004 = vmatpush2.msra.mxu0 0.0
    %5005 = vmatprep.subr.mxu0 0.0
    %5006 = vmatpush2.msra.mxu0 0.0
    %5007 = vmatprep.subr.mxu0 0.0
    %5008 = vmatpush2.msra.mxu0 0.0
    %5009 = vmatprep.subr.mxu0 0.0
    %5010 = vmatpush2.msra.mxu0 0.0
    %5011 = vmatprep.subr.mxu0 0.0
    %5012 = vmatpush2.msra.mxu0 0.0
    %5013 = vmatprep.subr.mxu0 0.0
    %5014 = vmatpush2.msra.mxu0 0.0
    %5015 = vmatprep.subr.mxu0 0.0
    %5016 = vmatpush2.msra.mxu0 0.0
    %5017 = vmatprep.subr.mxu0 0.0
    %5018 = vmatpush2.msra.mxu0 0.0
    %5019 = vmatprep.subr.mxu0 0.0
    %5020 = vmatpush2.msra.mxu0 0.0
    %5021 = vmatprep.subr.mxu0 0.0
    %5022 = vmatpush2.msra.mxu0 0.0
    %5023 = vmatprep.subr.mxu0 0.0
    %5024 = vmatpush2.msra.mxu0 0.0
    %5025 = vmatprep.subr.mxu0 0.0
    %5026 = vmatpush2.msra.mxu0 0.0
    %5027 = vmatprep.subr.mxu0 0.0
    %5028 = vmatpush2.msra.mxu0 0.0
    %5029 = vmatprep.subr.mxu0 0.0
    %5030 = vmatpush2.msra.mxu0 0.0
    %5031 = vmatprep.mubr.f32.mxu0 0.0
    %5032 = vmatmul.mubr.f32.gmra.mxu0 %v4808
    %v5033 = vpop.f32.mrf.mxu0
    %v5034 = vadd.f32 %v4796, %v5033
    %v5035 = vpop.f32.mrf.mxu0
    %v5036 = vadd.f32 %v4800, %v5035
    %5037 = vmatprep.mubr.f32.mxu0 0.0
    %5038 = vmatmul.mubr.f32.gmra.mxu0 %v4811
    %v5039 = vpop.f32.mrf.mxu0
    %v5040 = vadd.f32 %v4796, %v5039
    %v5041 = vpop.f32.mrf.mxu0
    %v5042 = vadd.f32 %v4800, %v5041
    %5043 = vdwg.mxu0
    %v5045 = vsel %vm52, %v4880, 0
    %v5048 = vsel %vm52, %v4886, 0
    %v5051 = vsel %vm52, %v4957, 0
    %v5054 = vsel %vm52, %v4963, 0
    %5056 = vmatprep.subr.mxu0 0.0
    %5057 = vmatpush1.xpose.msra.mxu0 0.0
    %5058 = vmatprep.subr.mxu0 0.0
    %5059 = vmatpush1.xpose.msra.mxu0 0.0
    %5060 = vmatprep.subr.mxu0 0.0
    %5061 = vmatpush1.xpose.msra.mxu0 0.0
    %5062 = vmatprep.subr.mxu0 0.0
    %5063 = vmatpush1.xpose.msra.mxu0 0.0
    %5064 = vmatprep.subr.mxu0 0.0
    %5065 = vmatpush1.xpose.msra.mxu0 0.0
    %5066 = vmatprep.subr.mxu0 0.0
    %5067 = vmatpush1.xpose.msra.mxu0 0.0
    %5068 = vmatprep.subr.mxu0 0.0
    %5069 = vmatpush1.xpose.msra.mxu0 0.0
    %5070 = vmatprep.subr.mxu0 0.0
    %5071 = vmatpush1.xpose.msra.mxu0 0.0
    %5072 = vmatprep.subr.mxu0 0.0
    %5073 = vmatpush1.xpose.msra.mxu0 0.0
    %5074 = vmatprep.subr.mxu0 0.0
    %5075 = vmatpush1.xpose.msra.mxu0 0.0
    %5076 = vmatprep.subr.mxu0 0.0
    %5077 = vmatpush1.xpose.msra.mxu0 0.0
    %5078 = vmatprep.subr.mxu0 0.0
    %5079 = vmatpush1.xpose.msra.mxu0 0.0
    %5080 = vmatprep.subr.mxu0 0.0
    %5081 = vmatpush1.xpose.msra.mxu0 0.0
    %5082 = vmatprep.subr.mxu0 0.0
    %5083 = vmatpush1.xpose.msra.mxu0 0.0
    %5084 = vmatprep.subr.mxu0 0.0
    %5085 = vmatpush1.xpose.msra.mxu0 %v5054
    %5086 = vmatprep.subr.mxu0 0.0
    %5087 = vmatpush1.xpose.msra.mxu0 %v5051
    %5088 = vmatprep.subr.mxu0 0.0
    %5089 = vmatpush2.xpose.msra.mxu0 0.0
    %5090 = vmatprep.subr.mxu0 0.0
    %5091 = vmatpush2.xpose.msra.mxu0 0.0
    %5092 = vmatprep.subr.mxu0 0.0
    %5093 = vmatpush2.xpose.msra.mxu0 0.0
    %5094 = vmatprep.subr.mxu0 0.0
    %5095 = vmatpush2.xpose.msra.mxu0 0.0
    %5096 = vmatprep.subr.mxu0 0.0
    %5097 = vmatpush2.xpose.msra.mxu0 0.0
    %5098 = vmatprep.subr.mxu0 0.0
    %5099 = vmatpush2.xpose.msra.mxu0 0.0
    %5100 = vmatprep.subr.mxu0 0.0
    %5101 = vmatpush2.xpose.msra.mxu0 0.0
    %5102 = vmatprep.subr.mxu0 0.0
    %5103 = vmatpush2.xpose.msra.mxu0 0.0
    %5104 = vmatprep.subr.mxu0 0.0
    %5105 = vmatpush2.xpose.msra.mxu0 0.0
    %5106 = vmatprep.subr.mxu0 0.0
    %5107 = vmatpush2.xpose.msra.mxu0 0.0
    %5108 = vmatprep.subr.mxu0 0.0
    %5109 = vmatpush2.xpose.msra.mxu0 0.0
    %5110 = vmatprep.subr.mxu0 0.0
    %5111 = vmatpush2.xpose.msra.mxu0 0.0
    %5112 = vmatprep.subr.mxu0 0.0
    %5113 = vmatpush2.xpose.msra.mxu0 0.0
    %5114 = vmatprep.subr.mxu0 0.0
    %5115 = vmatpush2.xpose.msra.mxu0 0.0
    %5116 = vmatprep.subr.mxu0 0.0
    %5117 = vmatpush2.xpose.msra.mxu0 0.0
    %5118 = vmatprep.subr.mxu0 0.0
    %5119 = vmatpush2.xpose.msra.mxu0 0.0
    %5120 = vmatprep.mubr.f32.mxu0 0.0
    %5121 = vmatmul.mubr.f32.gmra.mxu0 %v5045
    %v5122 = vpop.f32.mrf.mxu0
    %v5123 = vadd.f32 0.0, %v5122
    %v5124 = vpop.f32.mrf.mxu0
    %5125 = vmatprep.mubr.f32.mxu0 0.0
    %5126 = vmatmul.mubr.f32.gmra.mxu0 %v5048
    %v5127 = vpop.f32.mrf.mxu0
    %v5128 = vadd.f32 0.0, %v5127
    %v5129 = vpop.f32.mrf.mxu0
    %5130 = vdwg.mxu0
    %v5131 = vmul.f32 %v5123, 0.17677669
    %v5132 = vmul.f32 %v5128, 0.17677669
    %v5133 = vadd.f32 %v5131, %v96
    %v5134 = vadd.f32 %v5132, %v97
    %v5135 = vsel %vm482, %v5133, -inf
    %5136 = vmax.xlane.f32.xlu0 %v5135
    %v5137 = vpop.xlane.xlu0 %5136
    %v5138 = vsel %vm482, %v5134, -inf
    %5139 = vmax.xlane.f32.xlu0 %v5138
    %v5140 = vpop.xlane.xlu0 %5139
    %v5141 = vsub.f32 %v5133, %v5137
    %v5142 = vsub.f32 %v5134, %v5140
    %v5143 = vmul.f32 %v5141, 1.442695
    %v5144 = vpow.pop %v5143
    %v5145 = vmul.f32 %v5142, 1.442695
    %v5146 = vpow.pop %v5145
    %v5147 = vsel %vm482, %v5144, 0.0
    %5148 = vadd.xlane.f32.xlu0 %v5147
    %v5149 = vpop.xlane.xlu0 %5148
    %v5150 = vsel %vm482, %v5146, 0.0
    %5151 = vadd.xlane.f32.xlu0 %v5150
    %v5152 = vpop.xlane.xlu0 %5151
    %v5153 = vrcp.pop %v5149
    %v5154 = vrcp.pop %v5152
    %v5155 = vmul.f32 %v5144, %v5153
    %v5156 = vmul.f32 %v5146, %v5154
    %v5158 = vsel %vm482, %v5155, 0
    %v5161 = vsel %vm482, %v5156, 0
    %5163 = vmatprep.subr.mxu0 0.0
    %5164 = vmatpush1.msra.mxu0 0.0
    %5165 = vmatprep.subr.mxu0 0.0
    %5166 = vmatpush1.msra.mxu0 0.0
    %5167 = vmatprep.subr.mxu0 0.0
    %5168 = vmatpush1.msra.mxu0 0.0
    %5169 = vmatprep.subr.mxu0 0.0
    %5170 = vmatpush1.msra.mxu0 0.0
    %5171 = vmatprep.subr.mxu0 0.0
    %5172 = vmatpush1.msra.mxu0 0.0
    %5173 = vmatprep.subr.mxu0 0.0
    %5174 = vmatpush1.msra.mxu0 0.0
    %5175 = vmatprep.subr.mxu0 0.0
    %5176 = vmatpush1.msra.mxu0 0.0
    %5177 = vmatprep.subr.mxu0 0.0
    %5178 = vmatpush1.msra.mxu0 0.0
    %5179 = vmatprep.subr.mxu0 0.0
    %5180 = vmatpush1.msra.mxu0 0.0
    %5181 = vmatprep.subr.mxu0 0.0
    %5182 = vmatpush1.msra.mxu0 0.0
    %5183 = vmatprep.subr.mxu0 0.0
    %5184 = vmatpush1.msra.mxu0 0.0
    %5185 = vmatprep.subr.mxu0 0.0
    %5186 = vmatpush1.msra.mxu0 0.0
    %5187 = vmatprep.subr.mxu0 0.0
    %5188 = vmatpush1.msra.mxu0 0.0
    %5189 = vmatprep.subr.mxu0 0.0
    %5190 = vmatpush1.msra.mxu0 0.0
    %5191 = vmatprep.subr.mxu0 0.0
    %5192 = vmatpush1.msra.mxu0 %v5040
    %5193 = vmatprep.subr.mxu0 0.0
    %5194 = vmatpush1.msra.mxu0 %v5034
    %5195 = vmatprep.subr.mxu0 0.0
    %5196 = vmatpush2.msra.mxu0 0.0
    %5197 = vmatprep.subr.mxu0 0.0
    %5198 = vmatpush2.msra.mxu0 0.0
    %5199 = vmatprep.subr.mxu0 0.0
    %5200 = vmatpush2.msra.mxu0 0.0
    %5201 = vmatprep.subr.mxu0 0.0
    %5202 = vmatpush2.msra.mxu0 0.0
    %5203 = vmatprep.subr.mxu0 0.0
    %5204 = vmatpush2.msra.mxu0 0.0
    %5205 = vmatprep.subr.mxu0 0.0
    %5206 = vmatpush2.msra.mxu0 0.0
    %5207 = vmatprep.subr.mxu0 0.0
    %5208 = vmatpush2.msra.mxu0 0.0
    %5209 = vmatprep.subr.mxu0 0.0
    %5210 = vmatpush2.msra.mxu0 0.0
    %5211 = vmatprep.subr.mxu0 0.0
    %5212 = vmatpush2.msra.mxu0 0.0
    %5213 = vmatprep.subr.mxu0 0.0
    %5214 = vmatpush2.msra.mxu0 0.0
    %5215 = vmatprep.subr.mxu0 0.0
    %5216 = vmatpush2.msra.mxu0 0.0
    %5217 = vmatprep.subr.mxu0 0.0
    %5218 = vmatpush2.msra.mxu0 0.0
    %5219 = vmatprep.subr.mxu0 0.0
    %5220 = vmatpush2.msra.mxu0 0.0
    %5221 = vmatprep.subr.mxu0 0.0
    %5222 = vmatpush2.msra.mxu0 0.0
    %5223 = vmatprep.subr.mxu0 0.0
    %5224 = vmatpush2.msra.mxu0 0.0
    %5225 = vmatprep.subr.mxu0 0.0
    %5226 = vmatpush2.msra.mxu0 0.0
    %5227 = vmatprep.mubr.f32.mxu0 0.0
    %5228 = vmatmul.mubr.f32.gmra.mxu0 %v5158
    %v5229 = vpop.f32.mrf.mxu0
    %v5230 = vadd.f32 0.0, %v5229
    %v5231 = vpop.f32.mrf.mxu0
    %5232 = vmatprep.mubr.f32.mxu0 0.0
    %5233 = vmatmul.mubr.f32.gmra.mxu0 %v5161
    %v5234 = vpop.f32.mrf.mxu0
    %v5235 = vadd.f32 0.0, %v5234
    %v5236 = vpop.f32.mrf.mxu0
    %5237 = vdwg.mxu0
    %5238 = vrot.lane.b32.xlu0 %v4880, 96
    %v5239 = vpop.permute.xlu0 %5238
    %5240 = vrot.lane.b32.xlu0 %v4886, 96
    %v5241 = vpop.permute.xlu0 %5240
    %5242 = vrot.lane.b32.xlu0 %v4957, 96
    %v5243 = vpop.permute.xlu0 %5242
    %5244 = vrot.lane.b32.xlu0 %v4963, 96
    %v5245 = vpop.permute.xlu0 %5244
    %v5246 = vsel %vm52, %v5239, 0
    %v5248 = vsel %vm52, %v5241, 0
    %v5250 = vsel %vm52, %v5243, 0
    %v5252 = vsel %vm52, %v5245, 0
    %5254 = vmatprep.subr.mxu0 0.0
    %5255 = vmatpush1.xpose.msra.mxu0 0.0
    %5256 = vmatprep.subr.mxu0 0.0
    %5257 = vmatpush1.xpose.msra.mxu0 0.0
    %5258 = vmatprep.subr.mxu0 0.0
    %5259 = vmatpush1.xpose.msra.mxu0 0.0
    %5260 = vmatprep.subr.mxu0 0.0
    %5261 = vmatpush1.xpose.msra.mxu0 0.0
    %5262 = vmatprep.subr.mxu0 0.0
    %5263 = vmatpush1.xpose.msra.mxu0 0.0
    %5264 = vmatprep.subr.mxu0 0.0
    %5265 = vmatpush1.xpose.msra.mxu0 0.0
    %5266 = vmatprep.subr.mxu0 0.0
    %5267 = vmatpush1.xpose.msra.mxu0 0.0
    %5268 = vmatprep.subr.mxu0 0.0
    %5269 = vmatpush1.xpose.msra.mxu0 0.0
    %5270 = vmatprep.subr.mxu0 0.0
    %5271 = vmatpush1.xpose.msra.mxu0 0.0
    %5272 = vmatprep.subr.mxu0 0.0
    %5273 = vmatpush1.xpose.msra.mxu0 0.0
    %5274 = vmatprep.subr.mxu0 0.0
    %5275 = vmatpush1.xpose.msra.mxu0 0.0
    %5276 = vmatprep.subr.mxu0 0.0
    %5277 = vmatpush1.xpose.msra.mxu0 0.0
    %5278 = vmatprep.subr.mxu0 0.0
    %5279 = vmatpush1.xpose.msra.mxu0 0.0
    %5280 = vmatprep.subr.mxu0 0.0
    %5281 = vmatpush1.xpose.msra.mxu0 0.0
    %5282 = vmatprep.subr.mxu0 0.0
    %5283 = vmatpush1.xpose.msra.mxu0 %v5252
    %5284 = vmatprep.subr.mxu0 0.0
    %5285 = vmatpush1.xpose.msra.mxu0 %v5250
    %5286 = vmatprep.subr.mxu0 0.0
    %5287 = vmatpush2.xpose.msra.mxu0 0.0
    %5288 = vmatprep.subr.mxu0 0.0
    %5289 = vmatpush2.xpose.msra.mxu0 0.0
    %5290 = vmatprep.subr.mxu0 0.0
    %5291 = vmatpush2.xpose.msra.mxu0 0.0
    %5292 = vmatprep.subr.mxu0 0.0
    %5293 = vmatpush2.xpose.msra.mxu0 0.0
    %5294 = vmatprep.subr.mxu0 0.0
    %5295 = vmatpush2.xpose.msra.mxu0 0.0
    %5296 = vmatprep.subr.mxu0 0.0
    %5297 = vmatpush2.xpose.msra.mxu0 0.0
    %5298 = vmatprep.subr.mxu0 0.0
    %5299 = vmatpush2.xpose.msra.mxu0 0.0
    %5300 = vmatprep.subr.mxu0 0.0
    %5301 = vmatpush2.xpose.msra.mxu0 0.0
    %5302 = vmatprep.subr.mxu0 0.0
    %5303 = vmatpush2.xpose.msra.mxu0 0.0
    %5304 = vmatprep.subr.mxu0 0.0
    %5305 = vmatpush2.xpose.msra.mxu0 0.0
    %5306 = vmatprep.subr.mxu0 0.0
    %5307 = vmatpush2.xpose.msra.mxu0 0.0
    %5308 = vmatprep.subr.mxu0 0.0
    %5309 = vmatpush2.xpose.msra.mxu0 0.0
    %5310 = vmatprep.subr.mxu0 0.0
    %5311 = vmatpush2.xpose.msra.mxu0 0.0
    %5312 = vmatprep.subr.mxu0 0.0
    %5313 = vmatpush2.xpose.msra.mxu0 0.0
    %5314 = vmatprep.subr.mxu0 0.0
    %5315 = vmatpush2.xpose.msra.mxu0 0.0
    %5316 = vmatprep.subr.mxu0 0.0
    %5317 = vmatpush2.xpose.msra.mxu0 0.0
    %5318 = vmatprep.mubr.f32.mxu0 0.0
    %5319 = vmatmul.mubr.f32.gmra.mxu0 %v5246
    %v5320 = vpop.f32.mrf.mxu0
    %v5321 = vadd.f32 0.0, %v5320
    %v5322 = vpop.f32.mrf.mxu0
    %5323 = vmatprep.mubr.f32.mxu0 0.0
    %5324 = vmatmul.mubr.f32.gmra.mxu0 %v5248
    %v5325 = vpop.f32.mrf.mxu0
    %v5326 = vadd.f32 0.0, %v5325
    %v5327 = vpop.f32.mrf.mxu0
    %5328 = vdwg.mxu0
    %v5329 = vmul.f32 %v5321, 0.17677669
    %v5330 = vmul.f32 %v5326, 0.17677669
    %v5331 = vadd.f32 %v5329, %v96
    %v5332 = vadd.f32 %v5330, %v97
    %v5333 = vsel %vm482, %v5331, -inf
    %5334 = vmax.xlane.f32.xlu0 %v5333
    %v5335 = vpop.xlane.xlu0 %5334
    %v5336 = vsel %vm482, %v5332, -inf
    %5337 = vmax.xlane.f32.xlu0 %v5336
    %v5338 = vpop.xlane.xlu0 %5337
    %v5339 = vsub.f32 %v5331, %v5335
    %v5340 = vsub.f32 %v5332, %v5338
    %v5341 = vmul.f32 %v5339, 1.442695
    %v5342 = vpow.pop %v5341
    %v5343 = vmul.f32 %v5340, 1.442695
    %v5344 = vpow.pop %v5343
    %v5345 = vsel %vm482, %v5342, 0.0
    %5346 = vadd.xlane.f32.xlu0 %v5345
    %v5347 = vpop.xlane.xlu0 %5346
    %v5348 = vsel %vm482, %v5344, 0.0
    %5349 = vadd.xlane.f32.xlu0 %v5348
    %v5350 = vpop.xlane.xlu0 %5349
    %v5351 = vrcp.pop %v5347
    %v5352 = vrcp.pop %v5350
    %v5353 = vmul.f32 %v5342, %v5351
    %v5354 = vmul.f32 %v5344, %v5352
    %5357 = vrot.lane.b32.xlu0 %v5034, 96
    %v5358 = vpop.permute.xlu0 %5357
    %5359 = vrot.lane.b32.xlu0 %v5040, 96
    %v5360 = vpop.permute.xlu0 %5359
    %v5364 = vsel %vm482, %v5353, 0
    %v5367 = vsel %vm482, %v5354, 0
    %5369 = vmatprep.subr.mxu0 0.0
    %5370 = vmatpush1.msra.mxu0 0.0
    %5371 = vmatprep.subr.mxu0 0.0
    %5372 = vmatpush1.msra.mxu0 0.0
    %5373 = vmatprep.subr.mxu0 0.0
    %5374 = vmatpush1.msra.mxu0 0.0
    %5375 = vmatprep.subr.mxu0 0.0
    %5376 = vmatpush1.msra.mxu0 0.0
    %5377 = vmatprep.subr.mxu0 0.0
    %5378 = vmatpush1.msra.mxu0 0.0
    %5379 = vmatprep.subr.mxu0 0.0
    %5380 = vmatpush1.msra.mxu0 0.0
    %5381 = vmatprep.subr.mxu0 0.0
    %5382 = vmatpush1.msra.mxu0 0.0
    %5383 = vmatprep.subr.mxu0 0.0
    %5384 = vmatpush1.msra.mxu0 0.0
    %5385 = vmatprep.subr.mxu0 0.0
    %5386 = vmatpush1.msra.mxu0 0.0
    %5387 = vmatprep.subr.mxu0 0.0
    %5388 = vmatpush1.msra.mxu0 0.0
    %5389 = vmatprep.subr.mxu0 0.0
    %5390 = vmatpush1.msra.mxu0 0.0
    %5391 = vmatprep.subr.mxu0 0.0
    %5392 = vmatpush1.msra.mxu0 0.0
    %5393 = vmatprep.subr.mxu0 0.0
    %5394 = vmatpush1.msra.mxu0 0.0
    %5395 = vmatprep.subr.mxu0 0.0
    %5396 = vmatpush1.msra.mxu0 0.0
    %5397 = vmatprep.subr.mxu0 0.0
    %5398 = vmatpush1.msra.mxu0 %v5360
    %5399 = vmatprep.subr.mxu0 0.0
    %5400 = vmatpush1.msra.mxu0 %v5358
    %5401 = vmatprep.subr.mxu0 0.0
    %5402 = vmatpush2.msra.mxu0 0.0
    %5403 = vmatprep.subr.mxu0 0.0
    %5404 = vmatpush2.msra.mxu0 0.0
    %5405 = vmatprep.subr.mxu0 0.0
    %5406 = vmatpush2.msra.mxu0 0.0
    %5407 = vmatprep.subr.mxu0 0.0
    %5408 = vmatpush2.msra.mxu0 0.0
    %5409 = vmatprep.subr.mxu0 0.0
    %5410 = vmatpush2.msra.mxu0 0.0
    %5411 = vmatprep.subr.mxu0 0.0
    %5412 = vmatpush2.msra.mxu0 0.0
    %5413 = vmatprep.subr.mxu0 0.0
    %5414 = vmatpush2.msra.mxu0 0.0
    %5415 = vmatprep.subr.mxu0 0.0
    %5416 = vmatpush2.msra.mxu0 0.0
    %5417 = vmatprep.subr.mxu0 0.0
    %5418 = vmatpush2.msra.mxu0 0.0
    %5419 = vmatprep.subr.mxu0 0.0
    %5420 = vmatpush2.msra.mxu0 0.0
    %5421 = vmatprep.subr.mxu0 0.0
    %5422 = vmatpush2.msra.mxu0 0.0
    %5423 = vmatprep.subr.mxu0 0.0
    %5424 = vmatpush2.msra.mxu0 0.0
    %5425 = vmatprep.subr.mxu0 0.0
    %5426 = vmatpush2.msra.mxu0 0.0
    %5427 = vmatprep.subr.mxu0 0.0
    %5428 = vmatpush2.msra.mxu0 0.0
    %5429 = vmatprep.subr.mxu0 0.0
    %5430 = vmatpush2.msra.mxu0 0.0
    %5431 = vmatprep.subr.mxu0 0.0
    %5432 = vmatpush2.msra.mxu0 0.0
    %5433 = vmatprep.mubr.f32.mxu0 0.0
    %5434 = vmatmul.mubr.f32.gmra.mxu0 %v5364
    %v5435 = vpop.f32.mrf.mxu0
    %v5436 = vadd.f32 0.0, %v5435
    %v5437 = vpop.f32.mrf.mxu0
    %5438 = vmatprep.mubr.f32.mxu0 0.0
    %5439 = vmatmul.mubr.f32.gmra.mxu0 %v5367
    %v5440 = vpop.f32.mrf.mxu0
    %v5441 = vadd.f32 0.0, %v5440
    %v5442 = vpop.f32.mrf.mxu0
    %5443 = vdwg.mxu0
    %5444 = vrot.lane.b32.xlu0 %v4880, 64
    %v5445 = vpop.permute.xlu0 %5444
    %5446 = vrot.lane.b32.xlu0 %v4886, 64
    %v5447 = vpop.permute.xlu0 %5446
    %5448 = vrot.lane.b32.xlu0 %v4957, 64
    %v5449 = vpop.permute.xlu0 %5448
    %5450 = vrot.lane.b32.xlu0 %v4963, 64
    %v5451 = vpop.permute.xlu0 %5450
    %v5452 = vsel %vm52, %v5445, 0
    %v5454 = vsel %vm52, %v5447, 0
    %v5456 = vsel %vm52, %v5449, 0
    %v5458 = vsel %vm52, %v5451, 0
    %5460 = vmatprep.subr.mxu0 0.0
    %5461 = vmatpush1.xpose.msra.mxu0 0.0
    %5462 = vmatprep.subr.mxu0 0.0
    %5463 = vmatpush1.xpose.msra.mxu0 0.0
    %5464 = vmatprep.subr.mxu0 0.0
    %5465 = vmatpush1.xpose.msra.mxu0 0.0
    %5466 = vmatprep.subr.mxu0 0.0
    %5467 = vmatpush1.xpose.msra.mxu0 0.0
    %5468 = vmatprep.subr.mxu0 0.0
    %5469 = vmatpush1.xpose.msra.mxu0 0.0
    %5470 = vmatprep.subr.mxu0 0.0
    %5471 = vmatpush1.xpose.msra.mxu0 0.0
    %5472 = vmatprep.subr.mxu0 0.0
    %5473 = vmatpush1.xpose.msra.mxu0 0.0
    %5474 = vmatprep.subr.mxu0 0.0
    %5475 = vmatpush1.xpose.msra.mxu0 0.0
    %5476 = vmatprep.subr.mxu0 0.0
    %5477 = vmatpush1.xpose.msra.mxu0 0.0
    %5478 = vmatprep.subr.mxu0 0.0
    %5479 = vmatpush1.xpose.msra.mxu0 0.0
    %5480 = vmatprep.subr.mxu0 0.0
    %5481 = vmatpush1.xpose.msra.mxu0 0.0
    %5482 = vmatprep.subr.mxu0 0.0
    %5483 = vmatpush1.xpose.msra.mxu0 0.0
    %5484 = vmatprep.subr.mxu0 0.0
    %5485 = vmatpush1.xpose.msra.mxu0 0.0
    %5486 = vmatprep.subr.mxu0 0.0
    %5487 = vmatpush1.xpose.msra.mxu0 0.0
    %5488 = vmatprep.subr.mxu0 0.0
    %5489 = vmatpush1.xpose.msra.mxu0 %v5458
    %5490 = vmatprep.subr.mxu0 0.0
    %5491 = vmatpush1.xpose.msra.mxu0 %v5456
    %5492 = vmatprep.subr.mxu0 0.0
    %5493 = vmatpush2.xpose.msra.mxu0 0.0
    %5494 = vmatprep.subr.mxu0 0.0
    %5495 = vmatpush2.xpose.msra.mxu0 0.0
    %5496 = vmatprep.subr.mxu0 0.0
    %5497 = vmatpush2.xpose.msra.mxu0 0.0
    %5498 = vmatprep.subr.mxu0 0.0
    %5499 = vmatpush2.xpose.msra.mxu0 0.0
    %5500 = vmatprep.subr.mxu0 0.0
    %5501 = vmatpush2.xpose.msra.mxu0 0.0
    %5502 = vmatprep.subr.mxu0 0.0
    %5503 = vmatpush2.xpose.msra.mxu0 0.0
    %5504 = vmatprep.subr.mxu0 0.0
    %5505 = vmatpush2.xpose.msra.mxu0 0.0
    %5506 = vmatprep.subr.mxu0 0.0
    %5507 = vmatpush2.xpose.msra.mxu0 0.0
    %5508 = vmatprep.subr.mxu0 0.0
    %5509 = vmatpush2.xpose.msra.mxu0 0.0
    %5510 = vmatprep.subr.mxu0 0.0
    %5511 = vmatpush2.xpose.msra.mxu0 0.0
    %5512 = vmatprep.subr.mxu0 0.0
    %5513 = vmatpush2.xpose.msra.mxu0 0.0
    %5514 = vmatprep.subr.mxu0 0.0
    %5515 = vmatpush2.xpose.msra.mxu0 0.0
    %5516 = vmatprep.subr.mxu0 0.0
    %5517 = vmatpush2.xpose.msra.mxu0 0.0
    %5518 = vmatprep.subr.mxu0 0.0
    %5519 = vmatpush2.xpose.msra.mxu0 0.0
    %5520 = vmatprep.subr.mxu0 0.0
    %5521 = vmatpush2.xpose.msra.mxu0 0.0
    %5522 = vmatprep.subr.mxu0 0.0
    %5523 = vmatpush2.xpose.msra.mxu0 0.0
    %5524 = vmatprep.mubr.f32.mxu0 0.0
    %5525 = vmatmul.mubr.f32.gmra.mxu0 %v5452
    %v5526 = vpop.f32.mrf.mxu0
    %v5527 = vadd.f32 0.0, %v5526
    %v5528 = vpop.f32.mrf.mxu0
    %5529 = vmatprep.mubr.f32.mxu0 0.0
    %5530 = vmatmul.mubr.f32.gmra.mxu0 %v5454
    %v5531 = vpop.f32.mrf.mxu0
    %v5532 = vadd.f32 0.0, %v5531
    %v5533 = vpop.f32.mrf.mxu0
    %5534 = vdwg.mxu0
    %v5535 = vmul.f32 %v5527, 0.17677669
    %v5536 = vmul.f32 %v5532, 0.17677669
    %v5537 = vadd.f32 %v5535, %v96
    %v5538 = vadd.f32 %v5536, %v97
    %v5539 = vsel %vm482, %v5537, -inf
    %5540 = vmax.xlane.f32.xlu0 %v5539
    %v5541 = vpop.xlane.xlu0 %5540
    %v5542 = vsel %vm482, %v5538, -inf
    %5543 = vmax.xlane.f32.xlu0 %v5542
    %v5544 = vpop.xlane.xlu0 %5543
    %v5545 = vsub.f32 %v5537, %v5541
    %v5546 = vsub.f32 %v5538, %v5544
    %v5547 = vmul.f32 %v5545, 1.442695
    %v5548 = vpow.pop %v5547
    %v5549 = vmul.f32 %v5546, 1.442695
    %v5550 = vpow.pop %v5549
    %v5551 = vsel %vm482, %v5548, 0.0
    %5552 = vadd.xlane.f32.xlu0 %v5551
    %v5553 = vpop.xlane.xlu0 %5552
    %v5554 = vsel %vm482, %v5550, 0.0
    %5555 = vadd.xlane.f32.xlu0 %v5554
    %v5556 = vpop.xlane.xlu0 %5555
    %v5557 = vrcp.pop %v5553
    %v5558 = vrcp.pop %v5556
    %v5559 = vmul.f32 %v5548, %v5557
    %v5560 = vmul.f32 %v5550, %v5558
    %5561 = vrot.lane.b32.xlu0 %v5034, 64
    %v5562 = vpop.permute.xlu0 %5561
    %5563 = vrot.lane.b32.xlu0 %v5040, 64
    %v5564 = vpop.permute.xlu0 %5563
    %v5568 = vsel %vm482, %v5559, 0
    %v5571 = vsel %vm482, %v5560, 0
    %5573 = vmatprep.subr.mxu0 0.0
    %5574 = vmatpush1.msra.mxu0 0.0
    %5575 = vmatprep.subr.mxu0 0.0
    %5576 = vmatpush1.msra.mxu0 0.0
    %5577 = vmatprep.subr.mxu0 0.0
    %5578 = vmatpush1.msra.mxu0 0.0
    %5579 = vmatprep.subr.mxu0 0.0
    %5580 = vmatpush1.msra.mxu0 0.0
    %5581 = vmatprep.subr.mxu0 0.0
    %5582 = vmatpush1.msra.mxu0 0.0
    %5583 = vmatprep.subr.mxu0 0.0
    %5584 = vmatpush1.msra.mxu0 0.0
    %5585 = vmatprep.subr.mxu0 0.0
    %5586 = vmatpush1.msra.mxu0 0.0
    %5587 = vmatprep.subr.mxu0 0.0
    %5588 = vmatpush1.msra.mxu0 0.0
    %5589 = vmatprep.subr.mxu0 0.0
    %5590 = vmatpush1.msra.mxu0 0.0
    %5591 = vmatprep.subr.mxu0 0.0
    %5592 = vmatpush1.msra.mxu0 0.0
    %5593 = vmatprep.subr.mxu0 0.0
    %5594 = vmatpush1.msra.mxu0 0.0
    %5595 = vmatprep.subr.mxu0 0.0
    %5596 = vmatpush1.msra.mxu0 0.0
    %5597 = vmatprep.subr.mxu0 0.0
    %5598 = vmatpush1.msra.mxu0 0.0
    %5599 = vmatprep.subr.mxu0 0.0
    %5600 = vmatpush1.msra.mxu0 0.0
    %5601 = vmatprep.subr.mxu0 0.0
    %5602 = vmatpush1.msra.mxu0 %v5564
    %5603 = vmatprep.subr.mxu0 0.0
    %5604 = vmatpush1.msra.mxu0 %v5562
    %5605 = vmatprep.subr.mxu0 0.0
    %5606 = vmatpush2.msra.mxu0 0.0
    %5607 = vmatprep.subr.mxu0 0.0
    %5608 = vmatpush2.msra.mxu0 0.0
    %5609 = vmatprep.subr.mxu0 0.0
    %5610 = vmatpush2.msra.mxu0 0.0
    %5611 = vmatprep.subr.mxu0 0.0
    %5612 = vmatpush2.msra.mxu0 0.0
    %5613 = vmatprep.subr.mxu0 0.0
    %5614 = vmatpush2.msra.mxu0 0.0
    %5615 = vmatprep.subr.mxu0 0.0
    %5616 = vmatpush2.msra.mxu0 0.0
    %5617 = vmatprep.subr.mxu0 0.0
    %5618 = vmatpush2.msra.mxu0 0.0
    %5619 = vmatprep.subr.mxu0 0.0
    %5620 = vmatpush2.msra.mxu0 0.0
    %5621 = vmatprep.subr.mxu0 0.0
    %5622 = vmatpush2.msra.mxu0 0.0
    %5623 = vmatprep.subr.mxu0 0.0
    %5624 = vmatpush2.msra.mxu0 0.0
    %5625 = vmatprep.subr.mxu0 0.0
    %5626 = vmatpush2.msra.mxu0 0.0
    %5627 = vmatprep.subr.mxu0 0.0
    %5628 = vmatpush2.msra.mxu0 0.0
    %5629 = vmatprep.subr.mxu0 0.0
    %5630 = vmatpush2.msra.mxu0 0.0
    %5631 = vmatprep.subr.mxu0 0.0
    %5632 = vmatpush2.msra.mxu0 0.0
    %5633 = vmatprep.subr.mxu0 0.0
    %5634 = vmatpush2.msra.mxu0 0.0
    %5635 = vmatprep.subr.mxu0 0.0
    %5636 = vmatpush2.msra.mxu0 0.0
    %5637 = vmatprep.mubr.f32.mxu0 0.0
    %5638 = vmatmul.mubr.f32.gmra.mxu0 %v5568
    %v5639 = vpop.f32.mrf.mxu0
    %v5640 = vadd.f32 0.0, %v5639
    %v5641 = vpop.f32.mrf.mxu0
    %5642 = vmatprep.mubr.f32.mxu0 0.0
    %5643 = vmatmul.mubr.f32.gmra.mxu0 %v5571
    %v5644 = vpop.f32.mrf.mxu0
    %v5645 = vadd.f32 0.0, %v5644
    %v5646 = vpop.f32.mrf.mxu0
    %5647 = vdwg.mxu0
    %5648 = vrot.lane.b32.xlu0 %v4880, 32
    %v5649 = vpop.permute.xlu0 %5648
    %5650 = vrot.lane.b32.xlu0 %v4886, 32
    %v5651 = vpop.permute.xlu0 %5650
    %5652 = vrot.lane.b32.xlu0 %v4957, 32
    %v5653 = vpop.permute.xlu0 %5652
    %5654 = vrot.lane.b32.xlu0 %v4963, 32
    %v5655 = vpop.permute.xlu0 %5654
    %v5656 = vsel %vm52, %v5649, 0
    %v5658 = vsel %vm52, %v5651, 0
    %v5660 = vsel %vm52, %v5653, 0
    %v5662 = vsel %vm52, %v5655, 0
    %5664 = vmatprep.subr.mxu0 0.0
    %5665 = vmatpush1.xpose.msra.mxu0 0.0
    %5666 = vmatprep.subr.mxu0 0.0
    %5667 = vmatpush1.xpose.msra.mxu0 0.0
    %5668 = vmatprep.subr.mxu0 0.0
    %5669 = vmatpush1.xpose.msra.mxu0 0.0
    %5670 = vmatprep.subr.mxu0 0.0
    %5671 = vmatpush1.xpose.msra.mxu0 0.0
    %5672 = vmatprep.subr.mxu0 0.0
    %5673 = vmatpush1.xpose.msra.mxu0 0.0
    %5674 = vmatprep.subr.mxu0 0.0
    %5675 = vmatpush1.xpose.msra.mxu0 0.0
    %5676 = vmatprep.subr.mxu0 0.0
    %5677 = vmatpush1.xpose.msra.mxu0 0.0
    %5678 = vmatprep.subr.mxu0 0.0
    %5679 = vmatpush1.xpose.msra.mxu0 0.0
    %5680 = vmatprep.subr.mxu0 0.0
    %5681 = vmatpush1.xpose.msra.mxu0 0.0
    %5682 = vmatprep.subr.mxu0 0.0
    %5683 = vmatpush1.xpose.msra.mxu0 0.0
    %5684 = vmatprep.subr.mxu0 0.0
    %5685 = vmatpush1.xpose.msra.mxu0 0.0
    %5686 = vmatprep.subr.mxu0 0.0
    %5687 = vmatpush1.xpose.msra.mxu0 0.0
    %5688 = vmatprep.subr.mxu0 0.0
    %5689 = vmatpush1.xpose.msra.mxu0 0.0
    %5690 = vmatprep.subr.mxu0 0.0
    %5691 = vmatpush1.xpose.msra.mxu0 0.0
    %5692 = vmatprep.subr.mxu0 0.0
    %5693 = vmatpush1.xpose.msra.mxu0 %v5662
    %5694 = vmatprep.subr.mxu0 0.0
    %5695 = vmatpush1.xpose.msra.mxu0 %v5660
    %5696 = vmatprep.subr.mxu0 0.0
    %5697 = vmatpush2.xpose.msra.mxu0 0.0
    %5698 = vmatprep.subr.mxu0 0.0
    %5699 = vmatpush2.xpose.msra.mxu0 0.0
    %5700 = vmatprep.subr.mxu0 0.0
    %5701 = vmatpush2.xpose.msra.mxu0 0.0
    %5702 = vmatprep.subr.mxu0 0.0
    %5703 = vmatpush2.xpose.msra.mxu0 0.0
    %5704 = vmatprep.subr.mxu0 0.0
    %5705 = vmatpush2.xpose.msra.mxu0 0.0
    %5706 = vmatprep.subr.mxu0 0.0
    %5707 = vmatpush2.xpose.msra.mxu0 0.0
    %5708 = vmatprep.subr.mxu0 0.0
    %5709 = vmatpush2.xpose.msra.mxu0 0.0
    %5710 = vmatprep.subr.mxu0 0.0
    %5711 = vmatpush2.xpose.msra.mxu0 0.0
    %5712 = vmatprep.subr.mxu0 0.0
    %5713 = vmatpush2.xpose.msra.mxu0 0.0
    %5714 = vmatprep.subr.mxu0 0.0
    %5715 = vmatpush2.xpose.msra.mxu0 0.0
    %5716 = vmatprep.subr.mxu0 0.0
    %5717 = vmatpush2.xpose.msra.mxu0 0.0
    %5718 = vmatprep.subr.mxu0 0.0
    %5719 = vmatpush2.xpose.msra.mxu0 0.0
    %5720 = vmatprep.subr.mxu0 0.0
    %5721 = vmatpush2.xpose.msra.mxu0 0.0
    %5722 = vmatprep.subr.mxu0 0.0
    %5723 = vmatpush2.xpose.msra.mxu0 0.0
    %5724 = vmatprep.subr.mxu0 0.0
    %5725 = vmatpush2.xpose.msra.mxu0 0.0
    %5726 = vmatprep.subr.mxu0 0.0
    %5727 = vmatpush2.xpose.msra.mxu0 0.0
    %5728 = vmatprep.mubr.f32.mxu0 0.0
    %5729 = vmatmul.mubr.f32.gmra.mxu0 %v5656
    %v5730 = vpop.f32.mrf.mxu0
    %v5731 = vadd.f32 0.0, %v5730
    %v5732 = vpop.f32.mrf.mxu0
    %5733 = vmatprep.mubr.f32.mxu0 0.0
    %5734 = vmatmul.mubr.f32.gmra.mxu0 %v5658
    %v5735 = vpop.f32.mrf.mxu0
    %v5736 = vadd.f32 0.0, %v5735
    %v5737 = vpop.f32.mrf.mxu0
    %5738 = vdwg.mxu0
    %v5739 = vmul.f32 %v5731, 0.17677669
    %v5740 = vmul.f32 %v5736, 0.17677669
    %v5741 = vadd.f32 %v5739, %v96
    %v5742 = vadd.f32 %v5740, %v97
    %v5743 = vsel %vm482, %v5741, -inf
    %5744 = vmax.xlane.f32.xlu0 %v5743
    %v5745 = vpop.xlane.xlu0 %5744
    %v5746 = vsel %vm482, %v5742, -inf
    %5747 = vmax.xlane.f32.xlu0 %v5746
    %v5748 = vpop.xlane.xlu0 %5747
    %v5749 = vsub.f32 %v5741, %v5745
    %v5750 = vsub.f32 %v5742, %v5748
    %v5751 = vmul.f32 %v5749, 1.442695
    %v5752 = vpow.pop %v5751
    %v5753 = vmul.f32 %v5750, 1.442695
    %v5754 = vpow.pop %v5753
    %v5755 = vsel %vm482, %v5752, 0.0
    %5756 = vadd.xlane.f32.xlu0 %v5755
    %v5757 = vpop.xlane.xlu0 %5756
    %v5758 = vsel %vm482, %v5754, 0.0
    %5759 = vadd.xlane.f32.xlu0 %v5758
    %v5760 = vpop.xlane.xlu0 %5759
    %v5761 = vrcp.pop %v5757
    %v5762 = vrcp.pop %v5760
    %v5763 = vmul.f32 %v5752, %v5761
    %v5764 = vmul.f32 %v5754, %v5762
    %5765 = vrot.lane.b32.xlu0 %v5034, 32
    %v5766 = vpop.permute.xlu0 %5765
    %5767 = vrot.lane.b32.xlu0 %v5040, 32
    %v5768 = vpop.permute.xlu0 %5767
    %v5772 = vsel %vm482, %v5763, 0
    %v5775 = vsel %vm482, %v5764, 0
    %5777 = vmatprep.subr.mxu0 0.0
    %5778 = vmatpush1.msra.mxu0 0.0
    %5779 = vmatprep.subr.mxu0 0.0
    %5780 = vmatpush1.msra.mxu0 0.0
    %5781 = vmatprep.subr.mxu0 0.0
    %5782 = vmatpush1.msra.mxu0 0.0
    %5783 = vmatprep.subr.mxu0 0.0
    %5784 = vmatpush1.msra.mxu0 0.0
    %5785 = vmatprep.subr.mxu0 0.0
    %5786 = vmatpush1.msra.mxu0 0.0
    %5787 = vmatprep.subr.mxu0 0.0
    %5788 = vmatpush1.msra.mxu0 0.0
    %5789 = vmatprep.subr.mxu0 0.0
    %5790 = vmatpush1.msra.mxu0 0.0
    %5791 = vmatprep.subr.mxu0 0.0
    %5792 = vmatpush1.msra.mxu0 0.0
    %5793 = vmatprep.subr.mxu0 0.0
    %5794 = vmatpush1.msra.mxu0 0.0
    %5795 = vmatprep.subr.mxu0 0.0
    %5796 = vmatpush1.msra.mxu0 0.0
    %5797 = vmatprep.subr.mxu0 0.0
    %5798 = vmatpush1.msra.mxu0 0.0
    %5799 = vmatprep.subr.mxu0 0.0
    %5800 = vmatpush1.msra.mxu0 0.0
    %5801 = vmatprep.subr.mxu0 0.0
    %5802 = vmatpush1.msra.mxu0 0.0
    %5803 = vmatprep.subr.mxu0 0.0
    %5804 = vmatpush1.msra.mxu0 0.0
    %5805 = vmatprep.subr.mxu0 0.0
    %5806 = vmatpush1.msra.mxu0 %v5768
    %5807 = vmatprep.subr.mxu0 0.0
    %5808 = vmatpush1.msra.mxu0 %v5766
    %5809 = vmatprep.subr.mxu0 0.0
    %5810 = vmatpush2.msra.mxu0 0.0
    %5811 = vmatprep.subr.mxu0 0.0
    %5812 = vmatpush2.msra.mxu0 0.0
    %5813 = vmatprep.subr.mxu0 0.0
    %5814 = vmatpush2.msra.mxu0 0.0
    %5815 = vmatprep.subr.mxu0 0.0
    %5816 = vmatpush2.msra.mxu0 0.0
    %5817 = vmatprep.subr.mxu0 0.0
    %5818 = vmatpush2.msra.mxu0 0.0
    %5819 = vmatprep.subr.mxu0 0.0
    %5820 = vmatpush2.msra.mxu0 0.0
    %5821 = vmatprep.subr.mxu0 0.0
    %5822 = vmatpush2.msra.mxu0 0.0
    %5823 = vmatprep.subr.mxu0 0.0
    %5824 = vmatpush2.msra.mxu0 0.0
    %5825 = vmatprep.subr.mxu0 0.0
    %5826 = vmatpush2.msra.mxu0 0.0
    %5827 = vmatprep.subr.mxu0 0.0
    %5828 = vmatpush2.msra.mxu0 0.0
    %5829 = vmatprep.subr.mxu0 0.0
    %5830 = vmatpush2.msra.mxu0 0.0
    %5831 = vmatprep.subr.mxu0 0.0
    %5832 = vmatpush2.msra.mxu0 0.0
    %5833 = vmatprep.subr.mxu0 0.0
    %5834 = vmatpush2.msra.mxu0 0.0
    %5835 = vmatprep.subr.mxu0 0.0
    %5836 = vmatpush2.msra.mxu0 0.0
    %5837 = vmatprep.subr.mxu0 0.0
    %5838 = vmatpush2.msra.mxu0 0.0
    %5839 = vmatprep.subr.mxu0 0.0
    %5840 = vmatpush2.msra.mxu0 0.0
    %5841 = vmatprep.mubr.f32.mxu0 0.0
    %5842 = vmatmul.mubr.f32.gmra.mxu0 %v5772
    %v5843 = vpop.f32.mrf.mxu0
    %v5844 = vadd.f32 0.0, %v5843
    %v5845 = vpop.f32.mrf.mxu0
    %5846 = vmatprep.mubr.f32.mxu0 0.0
    %5847 = vmatmul.mubr.f32.gmra.mxu0 %v5775
    %v5848 = vpop.f32.mrf.mxu0
    %v5849 = vadd.f32 0.0, %v5848
    %v5850 = vpop.f32.mrf.mxu0
    %5851 = vdwg.mxu0
    %v5853 = vsel %vm52, %v4882, 0
    %v5856 = vsel %vm52, %v4888, 0
    %v5859 = vsel %vm52, %v4959, 0
    %v5862 = vsel %vm52, %v4965, 0
    %5864 = vmatprep.subr.mxu0 0.0
    %5865 = vmatpush1.xpose.msra.mxu0 0.0
    %5866 = vmatprep.subr.mxu0 0.0
    %5867 = vmatpush1.xpose.msra.mxu0 0.0
    %5868 = vmatprep.subr.mxu0 0.0
    %5869 = vmatpush1.xpose.msra.mxu0 0.0
    %5870 = vmatprep.subr.mxu0 0.0
    %5871 = vmatpush1.xpose.msra.mxu0 0.0
    %5872 = vmatprep.subr.mxu0 0.0
    %5873 = vmatpush1.xpose.msra.mxu0 0.0
    %5874 = vmatprep.subr.mxu0 0.0
    %5875 = vmatpush1.xpose.msra.mxu0 0.0
    %5876 = vmatprep.subr.mxu0 0.0
    %5877 = vmatpush1.xpose.msra.mxu0 0.0
    %5878 = vmatprep.subr.mxu0 0.0
    %5879 = vmatpush1.xpose.msra.mxu0 0.0
    %5880 = vmatprep.subr.mxu0 0.0
    %5881 = vmatpush1.xpose.msra.mxu0 0.0
    %5882 = vmatprep.subr.mxu0 0.0
    %5883 = vmatpush1.xpose.msra.mxu0 0.0
    %5884 = vmatprep.subr.mxu0 0.0
    %5885 = vmatpush1.xpose.msra.mxu0 0.0
    %5886 = vmatprep.subr.mxu0 0.0
    %5887 = vmatpush1.xpose.msra.mxu0 0.0
    %5888 = vmatprep.subr.mxu0 0.0
    %5889 = vmatpush1.xpose.msra.mxu0 0.0
    %5890 = vmatprep.subr.mxu0 0.0
    %5891 = vmatpush1.xpose.msra.mxu0 0.0
    %5892 = vmatprep.subr.mxu0 0.0
    %5893 = vmatpush1.xpose.msra.mxu0 %v5862
    %5894 = vmatprep.subr.mxu0 0.0
    %5895 = vmatpush1.xpose.msra.mxu0 %v5859
    %5896 = vmatprep.subr.mxu0 0.0
    %5897 = vmatpush2.xpose.msra.mxu0 0.0
    %5898 = vmatprep.subr.mxu0 0.0
    %5899 = vmatpush2.xpose.msra.mxu0 0.0
    %5900 = vmatprep.subr.mxu0 0.0
    %5901 = vmatpush2.xpose.msra.mxu0 0.0
    %5902 = vmatprep.subr.mxu0 0.0
    %5903 = vmatpush2.xpose.msra.mxu0 0.0
    %5904 = vmatprep.subr.mxu0 0.0
    %5905 = vmatpush2.xpose.msra.mxu0 0.0
    %5906 = vmatprep.subr.mxu0 0.0
    %5907 = vmatpush2.xpose.msra.mxu0 0.0
    %5908 = vmatprep.subr.mxu0 0.0
    %5909 = vmatpush2.xpose.msra.mxu0 0.0
    %5910 = vmatprep.subr.mxu0 0.0
    %5911 = vmatpush2.xpose.msra.mxu0 0.0
    %5912 = vmatprep.subr.mxu0 0.0
    %5913 = vmatpush2.xpose.msra.mxu0 0.0
    %5914 = vmatprep.subr.mxu0 0.0
    %5915 = vmatpush2.xpose.msra.mxu0 0.0
    %5916 = vmatprep.subr.mxu0 0.0
    %5917 = vmatpush2.xpose.msra.mxu0 0.0
    %5918 = vmatprep.subr.mxu0 0.0
    %5919 = vmatpush2.xpose.msra.mxu0 0.0
    %5920 = vmatprep.subr.mxu0 0.0
    %5921 = vmatpush2.xpose.msra.mxu0 0.0
    %5922 = vmatprep.subr.mxu0 0.0
    %5923 = vmatpush2.xpose.msra.mxu0 0.0
    %5924 = vmatprep.subr.mxu0 0.0
    %5925 = vmatpush2.xpose.msra.mxu0 0.0
    %5926 = vmatprep.subr.mxu0 0.0
    %5927 = vmatpush2.xpose.msra.mxu0 0.0
    %5928 = vmatprep.mubr.f32.mxu0 0.0
    %5929 = vmatmul.mubr.f32.gmra.mxu0 %v5853
    %v5930 = vpop.f32.mrf.mxu0
    %v5931 = vadd.f32 0.0, %v5930
    %v5932 = vpop.f32.mrf.mxu0
    %5933 = vmatprep.mubr.f32.mxu0 0.0
    %5934 = vmatmul.mubr.f32.gmra.mxu0 %v5856
    %v5935 = vpop.f32.mrf.mxu0
    %v5936 = vadd.f32 0.0, %v5935
    %v5937 = vpop.f32.mrf.mxu0
    %5938 = vdwg.mxu0
    %v5939 = vmul.f32 %v5931, 0.17677669
    %v5940 = vmul.f32 %v5936, 0.17677669
    %v5941 = vadd.f32 %v5939, %v96
    %v5942 = vadd.f32 %v5940, %v97
    %v5943 = vsel %vm482, %v5941, -inf
    %5944 = vmax.xlane.f32.xlu0 %v5943
    %v5945 = vpop.xlane.xlu0 %5944
    %v5946 = vsel %vm482, %v5942, -inf
    %5947 = vmax.xlane.f32.xlu0 %v5946
    %v5948 = vpop.xlane.xlu0 %5947
    %v5949 = vsub.f32 %v5941, %v5945
    %v5950 = vsub.f32 %v5942, %v5948
    %v5951 = vmul.f32 %v5949, 1.442695
    %v5952 = vpow.pop %v5951
    %v5953 = vmul.f32 %v5950, 1.442695
    %v5954 = vpow.pop %v5953
    %v5955 = vsel %vm482, %v5952, 0.0
    %5956 = vadd.xlane.f32.xlu0 %v5955
    %v5957 = vpop.xlane.xlu0 %5956
    %v5958 = vsel %vm482, %v5954, 0.0
    %5959 = vadd.xlane.f32.xlu0 %v5958
    %v5960 = vpop.xlane.xlu0 %5959
    %v5961 = vrcp.pop %v5957
    %v5962 = vrcp.pop %v5960
    %v5963 = vmul.f32 %v5952, %v5961
    %v5964 = vmul.f32 %v5954, %v5962
    %v5966 = vsel %vm482, %v5963, 0
    %v5969 = vsel %vm482, %v5964, 0
    %5971 = vmatprep.subr.mxu0 0.0
    %5972 = vmatpush1.msra.mxu0 0.0
    %5973 = vmatprep.subr.mxu0 0.0
    %5974 = vmatpush1.msra.mxu0 0.0
    %5975 = vmatprep.subr.mxu0 0.0
    %5976 = vmatpush1.msra.mxu0 0.0
    %5977 = vmatprep.subr.mxu0 0.0
    %5978 = vmatpush1.msra.mxu0 0.0
    %5979 = vmatprep.subr.mxu0 0.0
    %5980 = vmatpush1.msra.mxu0 0.0
    %5981 = vmatprep.subr.mxu0 0.0
    %5982 = vmatpush1.msra.mxu0 0.0
    %5983 = vmatprep.subr.mxu0 0.0
    %5984 = vmatpush1.msra.mxu0 0.0
    %5985 = vmatprep.subr.mxu0 0.0
    %5986 = vmatpush1.msra.mxu0 0.0
    %5987 = vmatprep.subr.mxu0 0.0
    %5988 = vmatpush1.msra.mxu0 0.0
    %5989 = vmatprep.subr.mxu0 0.0
    %5990 = vmatpush1.msra.mxu0 0.0
    %5991 = vmatprep.subr.mxu0 0.0
    %5992 = vmatpush1.msra.mxu0 0.0
    %5993 = vmatprep.subr.mxu0 0.0
    %5994 = vmatpush1.msra.mxu0 0.0
    %5995 = vmatprep.subr.mxu0 0.0
    %5996 = vmatpush1.msra.mxu0 0.0
    %5997 = vmatprep.subr.mxu0 0.0
    %5998 = vmatpush1.msra.mxu0 0.0
    %5999 = vmatprep.subr.mxu0 0.0
    %6000 = vmatpush1.msra.mxu0 %v5042
    %6001 = vmatprep.subr.mxu0 0.0
    %6002 = vmatpush1.msra.mxu0 %v5036
    %6003 = vmatprep.subr.mxu0 0.0
    %6004 = vmatpush2.msra.mxu0 0.0
    %6005 = vmatprep.subr.mxu0 0.0
    %6006 = vmatpush2.msra.mxu0 0.0
    %6007 = vmatprep.subr.mxu0 0.0
    %6008 = vmatpush2.msra.mxu0 0.0
    %6009 = vmatprep.subr.mxu0 0.0
    %6010 = vmatpush2.msra.mxu0 0.0
    %6011 = vmatprep.subr.mxu0 0.0
    %6012 = vmatpush2.msra.mxu0 0.0
    %6013 = vmatprep.subr.mxu0 0.0
    %6014 = vmatpush2.msra.mxu0 0.0
    %6015 = vmatprep.subr.mxu0 0.0
    %6016 = vmatpush2.msra.mxu0 0.0
    %6017 = vmatprep.subr.mxu0 0.0
    %6018 = vmatpush2.msra.mxu0 0.0
    %6019 = vmatprep.subr.mxu0 0.0
    %6020 = vmatpush2.msra.mxu0 0.0
    %6021 = vmatprep.subr.mxu0 0.0
    %6022 = vmatpush2.msra.mxu0 0.0
    %6023 = vmatprep.subr.mxu0 0.0
    %6024 = vmatpush2.msra.mxu0 0.0
    %6025 = vmatprep.subr.mxu0 0.0
    %6026 = vmatpush2.msra.mxu0 0.0
    %6027 = vmatprep.subr.mxu0 0.0
    %6028 = vmatpush2.msra.mxu0 0.0
    %6029 = vmatprep.subr.mxu0 0.0
    %6030 = vmatpush2.msra.mxu0 0.0
    %6031 = vmatprep.subr.mxu0 0.0
    %6032 = vmatpush2.msra.mxu0 0.0
    %6033 = vmatprep.subr.mxu0 0.0
    %6034 = vmatpush2.msra.mxu0 0.0
    %6035 = vmatprep.mubr.f32.mxu0 0.0
    %6036 = vmatmul.mubr.f32.gmra.mxu0 %v5966
    %v6037 = vpop.f32.mrf.mxu0
    %v6038 = vadd.f32 0.0, %v6037
    %v6039 = vpop.f32.mrf.mxu0
    %6040 = vmatprep.mubr.f32.mxu0 0.0
    %6041 = vmatmul.mubr.f32.gmra.mxu0 %v5969
    %v6042 = vpop.f32.mrf.mxu0
    %v6043 = vadd.f32 0.0, %v6042
    %v6044 = vpop.f32.mrf.mxu0
    %6045 = vdwg.mxu0
    %6046 = vrot.lane.b32.xlu0 %v4882, 96
    %v6047 = vpop.permute.xlu0 %6046
    %6048 = vrot.lane.b32.xlu0 %v4888, 96
    %v6049 = vpop.permute.xlu0 %6048
    %6050 = vrot.lane.b32.xlu0 %v4959, 96
    %v6051 = vpop.permute.xlu0 %6050
    %6052 = vrot.lane.b32.xlu0 %v4965, 96
    %v6053 = vpop.permute.xlu0 %6052
    %v6054 = vsel %vm52, %v6047, 0
    %v6056 = vsel %vm52, %v6049, 0
    %v6058 = vsel %vm52, %v6051, 0
    %v6060 = vsel %vm52, %v6053, 0
    %6062 = vmatprep.subr.mxu0 0.0
    %6063 = vmatpush1.xpose.msra.mxu0 0.0
    %6064 = vmatprep.subr.mxu0 0.0
    %6065 = vmatpush1.xpose.msra.mxu0 0.0
    %6066 = vmatprep.subr.mxu0 0.0
    %6067 = vmatpush1.xpose.msra.mxu0 0.0
    %6068 = vmatprep.subr.mxu0 0.0
    %6069 = vmatpush1.xpose.msra.mxu0 0.0
    %6070 = vmatprep.subr.mxu0 0.0
    %6071 = vmatpush1.xpose.msra.mxu0 0.0
    %6072 = vmatprep.subr.mxu0 0.0
    %6073 = vmatpush1.xpose.msra.mxu0 0.0
    %6074 = vmatprep.subr.mxu0 0.0
    %6075 = vmatpush1.xpose.msra.mxu0 0.0
    %6076 = vmatprep.subr.mxu0 0.0
    %6077 = vmatpush1.xpose.msra.mxu0 0.0
    %6078 = vmatprep.subr.mxu0 0.0
    %6079 = vmatpush1.xpose.msra.mxu0 0.0
    %6080 = vmatprep.subr.mxu0 0.0
    %6081 = vmatpush1.xpose.msra.mxu0 0.0
    %6082 = vmatprep.subr.mxu0 0.0
    %6083 = vmatpush1.xpose.msra.mxu0 0.0
    %6084 = vmatprep.subr.mxu0 0.0
    %6085 = vmatpush1.xpose.msra.mxu0 0.0
    %6086 = vmatprep.subr.mxu0 0.0
    %6087 = vmatpush1.xpose.msra.mxu0 0.0
    %6088 = vmatprep.subr.mxu0 0.0
    %6089 = vmatpush1.xpose.msra.mxu0 0.0
    %6090 = vmatprep.subr.mxu0 0.0
    %6091 = vmatpush1.xpose.msra.mxu0 %v6060
    %6092 = vmatprep.subr.mxu0 0.0
    %6093 = vmatpush1.xpose.msra.mxu0 %v6058
    %6094 = vmatprep.subr.mxu0 0.0
    %6095 = vmatpush2.xpose.msra.mxu0 0.0
    %6096 = vmatprep.subr.mxu0 0.0
    %6097 = vmatpush2.xpose.msra.mxu0 0.0
    %6098 = vmatprep.subr.mxu0 0.0
    %6099 = vmatpush2.xpose.msra.mxu0 0.0
    %6100 = vmatprep.subr.mxu0 0.0
    %6101 = vmatpush2.xpose.msra.mxu0 0.0
    %6102 = vmatprep.subr.mxu0 0.0
    %6103 = vmatpush2.xpose.msra.mxu0 0.0
    %6104 = vmatprep.subr.mxu0 0.0
    %6105 = vmatpush2.xpose.msra.mxu0 0.0
    %6106 = vmatprep.subr.mxu0 0.0
    %6107 = vmatpush2.xpose.msra.mxu0 0.0
    %6108 = vmatprep.subr.mxu0 0.0
    %6109 = vmatpush2.xpose.msra.mxu0 0.0
    %6110 = vmatprep.subr.mxu0 0.0
    %6111 = vmatpush2.xpose.msra.mxu0 0.0
    %6112 = vmatprep.subr.mxu0 0.0
    %6113 = vmatpush2.xpose.msra.mxu0 0.0
    %6114 = vmatprep.subr.mxu0 0.0
    %6115 = vmatpush2.xpose.msra.mxu0 0.0
    %6116 = vmatprep.subr.mxu0 0.0
    %6117 = vmatpush2.xpose.msra.mxu0 0.0
    %6118 = vmatprep.subr.mxu0 0.0
    %6119 = vmatpush2.xpose.msra.mxu0 0.0
    %6120 = vmatprep.subr.mxu0 0.0
    %6121 = vmatpush2.xpose.msra.mxu0 0.0
    %6122 = vmatprep.subr.mxu0 0.0
    %6123 = vmatpush2.xpose.msra.mxu0 0.0
    %6124 = vmatprep.subr.mxu0 0.0
    %6125 = vmatpush2.xpose.msra.mxu0 0.0
    %6126 = vmatprep.mubr.f32.mxu0 0.0
    %6127 = vmatmul.mubr.f32.gmra.mxu0 %v6054
    %v6128 = vpop.f32.mrf.mxu0
    %v6129 = vadd.f32 0.0, %v6128
    %v6130 = vpop.f32.mrf.mxu0
    %6131 = vmatprep.mubr.f32.mxu0 0.0
    %6132 = vmatmul.mubr.f32.gmra.mxu0 %v6056
    %v6133 = vpop.f32.mrf.mxu0
    %v6134 = vadd.f32 0.0, %v6133
    %v6135 = vpop.f32.mrf.mxu0
    %6136 = vdwg.mxu0
    %v6137 = vmul.f32 %v6129, 0.17677669
    %v6138 = vmul.f32 %v6134, 0.17677669
    %v6139 = vadd.f32 %v6137, %v96
    %v6140 = vadd.f32 %v6138, %v97
    %v6141 = vsel %vm482, %v6139, -inf
    %6142 = vmax.xlane.f32.xlu0 %v6141
    %v6143 = vpop.xlane.xlu0 %6142
    %v6144 = vsel %vm482, %v6140, -inf
    %6145 = vmax.xlane.f32.xlu0 %v6144
    %v6146 = vpop.xlane.xlu0 %6145
    %v6147 = vsub.f32 %v6139, %v6143
    %v6148 = vsub.f32 %v6140, %v6146
    %v6149 = vmul.f32 %v6147, 1.442695
    %v6150 = vpow.pop %v6149
    %v6151 = vmul.f32 %v6148, 1.442695
    %v6152 = vpow.pop %v6151
    %v6153 = vsel %vm482, %v6150, 0.0
    %6154 = vadd.xlane.f32.xlu0 %v6153
    %v6155 = vpop.xlane.xlu0 %6154
    %v6156 = vsel %vm482, %v6152, 0.0
    %6157 = vadd.xlane.f32.xlu0 %v6156
    %v6158 = vpop.xlane.xlu0 %6157
    %v6159 = vrcp.pop %v6155
    %v6160 = vrcp.pop %v6158
    %v6161 = vmul.f32 %v6150, %v6159
    %v6162 = vmul.f32 %v6152, %v6160
    %6165 = vrot.lane.b32.xlu0 %v5036, 96
    %v6166 = vpop.permute.xlu0 %6165
    %6167 = vrot.lane.b32.xlu0 %v5042, 96
    %v6168 = vpop.permute.xlu0 %6167
    %v6172 = vsel %vm482, %v6161, 0
    %v6175 = vsel %vm482, %v6162, 0
    %6177 = vmatprep.subr.mxu0 0.0
    %6178 = vmatpush1.msra.mxu0 0.0
    %6179 = vmatprep.subr.mxu0 0.0
    %6180 = vmatpush1.msra.mxu0 0.0
    %6181 = vmatprep.subr.mxu0 0.0
    %6182 = vmatpush1.msra.mxu0 0.0
    %6183 = vmatprep.subr.mxu0 0.0
    %6184 = vmatpush1.msra.mxu0 0.0
    %6185 = vmatprep.subr.mxu0 0.0
    %6186 = vmatpush1.msra.mxu0 0.0
    %6187 = vmatprep.subr.mxu0 0.0
    %6188 = vmatpush1.msra.mxu0 0.0
    %6189 = vmatprep.subr.mxu0 0.0
    %6190 = vmatpush1.msra.mxu0 0.0
    %6191 = vmatprep.subr.mxu0 0.0
    %6192 = vmatpush1.msra.mxu0 0.0
    %6193 = vmatprep.subr.mxu0 0.0
    %6194 = vmatpush1.msra.mxu0 0.0
    %6195 = vmatprep.subr.mxu0 0.0
    %6196 = vmatpush1.msra.mxu0 0.0
    %6197 = vmatprep.subr.mxu0 0.0
    %6198 = vmatpush1.msra.mxu0 0.0
    %6199 = vmatprep.subr.mxu0 0.0
    %6200 = vmatpush1.msra.mxu0 0.0
    %6201 = vmatprep.subr.mxu0 0.0
    %6202 = vmatpush1.msra.mxu0 0.0
    %6203 = vmatprep.subr.mxu0 0.0
    %6204 = vmatpush1.msra.mxu0 0.0
    %6205 = vmatprep.subr.mxu0 0.0
    %6206 = vmatpush1.msra.mxu0 %v6168
    %6207 = vmatprep.subr.mxu0 0.0
    %6208 = vmatpush1.msra.mxu0 %v6166
    %6209 = vmatprep.subr.mxu0 0.0
    %6210 = vmatpush2.msra.mxu0 0.0
    %6211 = vmatprep.subr.mxu0 0.0
    %6212 = vmatpush2.msra.mxu0 0.0
    %6213 = vmatprep.subr.mxu0 0.0
    %6214 = vmatpush2.msra.mxu0 0.0
    %6215 = vmatprep.subr.mxu0 0.0
    %6216 = vmatpush2.msra.mxu0 0.0
    %6217 = vmatprep.subr.mxu0 0.0
    %6218 = vmatpush2.msra.mxu0 0.0
    %6219 = vmatprep.subr.mxu0 0.0
    %6220 = vmatpush2.msra.mxu0 0.0
    %6221 = vmatprep.subr.mxu0 0.0
    %6222 = vmatpush2.msra.mxu0 0.0
    %6223 = vmatprep.subr.mxu0 0.0
    %6224 = vmatpush2.msra.mxu0 0.0
    %6225 = vmatprep.subr.mxu0 0.0
    %6226 = vmatpush2.msra.mxu0 0.0
    %6227 = vmatprep.subr.mxu0 0.0
    %6228 = vmatpush2.msra.mxu0 0.0
    %6229 = vmatprep.subr.mxu0 0.0
    %6230 = vmatpush2.msra.mxu0 0.0
    %6231 = vmatprep.subr.mxu0 0.0
    %6232 = vmatpush2.msra.mxu0 0.0
    %6233 = vmatprep.subr.mxu0 0.0
    %6234 = vmatpush2.msra.mxu0 0.0
    %6235 = vmatprep.subr.mxu0 0.0
    %6236 = vmatpush2.msra.mxu0 0.0
    %6237 = vmatprep.subr.mxu0 0.0
    %6238 = vmatpush2.msra.mxu0 0.0
    %6239 = vmatprep.subr.mxu0 0.0
    %6240 = vmatpush2.msra.mxu0 0.0
    %6241 = vmatprep.mubr.f32.mxu0 0.0
    %6242 = vmatmul.mubr.f32.gmra.mxu0 %v6172
    %v6243 = vpop.f32.mrf.mxu0
    %v6244 = vadd.f32 0.0, %v6243
    %v6245 = vpop.f32.mrf.mxu0
    %6246 = vmatprep.mubr.f32.mxu0 0.0
    %6247 = vmatmul.mubr.f32.gmra.mxu0 %v6175
    %v6248 = vpop.f32.mrf.mxu0
    %v6249 = vadd.f32 0.0, %v6248
    %v6250 = vpop.f32.mrf.mxu0
    %6251 = vdwg.mxu0
    %6252 = vrot.lane.b32.xlu0 %v4882, 64
    %v6253 = vpop.permute.xlu0 %6252
    %6254 = vrot.lane.b32.xlu0 %v4888, 64
    %v6255 = vpop.permute.xlu0 %6254
    %6256 = vrot.lane.b32.xlu0 %v4959, 64
    %v6257 = vpop.permute.xlu0 %6256
    %6258 = vrot.lane.b32.xlu0 %v4965, 64
    %v6259 = vpop.permute.xlu0 %6258
    %v6260 = vsel %vm52, %v6253, 0
    %v6262 = vsel %vm52, %v6255, 0
    %v6264 = vsel %vm52, %v6257, 0
    %v6266 = vsel %vm52, %v6259, 0
    %6268 = vmatprep.subr.mxu0 0.0
    %6269 = vmatpush1.xpose.msra.mxu0 0.0
    %6270 = vmatprep.subr.mxu0 0.0
    %6271 = vmatpush1.xpose.msra.mxu0 0.0
    %6272 = vmatprep.subr.mxu0 0.0
    %6273 = vmatpush1.xpose.msra.mxu0 0.0
    %6274 = vmatprep.subr.mxu0 0.0
    %6275 = vmatpush1.xpose.msra.mxu0 0.0
    %6276 = vmatprep.subr.mxu0 0.0
    %6277 = vmatpush1.xpose.msra.mxu0 0.0
    %6278 = vmatprep.subr.mxu0 0.0
    %6279 = vmatpush1.xpose.msra.mxu0 0.0
    %6280 = vmatprep.subr.mxu0 0.0
    %6281 = vmatpush1.xpose.msra.mxu0 0.0
    %6282 = vmatprep.subr.mxu0 0.0
    %6283 = vmatpush1.xpose.msra.mxu0 0.0
    %6284 = vmatprep.subr.mxu0 0.0
    %6285 = vmatpush1.xpose.msra.mxu0 0.0
    %6286 = vmatprep.subr.mxu0 0.0
    %6287 = vmatpush1.xpose.msra.mxu0 0.0
    %6288 = vmatprep.subr.mxu0 0.0
    %6289 = vmatpush1.xpose.msra.mxu0 0.0
    %6290 = vmatprep.subr.mxu0 0.0
    %6291 = vmatpush1.xpose.msra.mxu0 0.0
    %6292 = vmatprep.subr.mxu0 0.0
    %6293 = vmatpush1.xpose.msra.mxu0 0.0
    %6294 = vmatprep.subr.mxu0 0.0
    %6295 = vmatpush1.xpose.msra.mxu0 0.0
    %6296 = vmatprep.subr.mxu0 0.0
    %6297 = vmatpush1.xpose.msra.mxu0 %v6266
    %6298 = vmatprep.subr.mxu0 0.0
    %6299 = vmatpush1.xpose.msra.mxu0 %v6264
    %6300 = vmatprep.subr.mxu0 0.0
    %6301 = vmatpush2.xpose.msra.mxu0 0.0
    %6302 = vmatprep.subr.mxu0 0.0
    %6303 = vmatpush2.xpose.msra.mxu0 0.0
    %6304 = vmatprep.subr.mxu0 0.0
    %6305 = vmatpush2.xpose.msra.mxu0 0.0
    %6306 = vmatprep.subr.mxu0 0.0
    %6307 = vmatpush2.xpose.msra.mxu0 0.0
    %6308 = vmatprep.subr.mxu0 0.0
    %6309 = vmatpush2.xpose.msra.mxu0 0.0
    %6310 = vmatprep.subr.mxu0 0.0
    %6311 = vmatpush2.xpose.msra.mxu0 0.0
    %6312 = vmatprep.subr.mxu0 0.0
    %6313 = vmatpush2.xpose.msra.mxu0 0.0
    %6314 = vmatprep.subr.mxu0 0.0
    %6315 = vmatpush2.xpose.msra.mxu0 0.0
    %6316 = vmatprep.subr.mxu0 0.0
    %6317 = vmatpush2.xpose.msra.mxu0 0.0
    %6318 = vmatprep.subr.mxu0 0.0
    %6319 = vmatpush2.xpose.msra.mxu0 0.0
    %6320 = vmatprep.subr.mxu0 0.0
    %6321 = vmatpush2.xpose.msra.mxu0 0.0
    %6322 = vmatprep.subr.mxu0 0.0
    %6323 = vmatpush2.xpose.msra.mxu0 0.0
    %6324 = vmatprep.subr.mxu0 0.0
    %6325 = vmatpush2.xpose.msra.mxu0 0.0
    %6326 = vmatprep.subr.mxu0 0.0
    %6327 = vmatpush2.xpose.msra.mxu0 0.0
    %6328 = vmatprep.subr.mxu0 0.0
    %6329 = vmatpush2.xpose.msra.mxu0 0.0
    %6330 = vmatprep.subr.mxu0 0.0
    %6331 = vmatpush2.xpose.msra.mxu0 0.0
    %6332 = vmatprep.mubr.f32.mxu0 0.0
    %6333 = vmatmul.mubr.f32.gmra.mxu0 %v6260
    %v6334 = vpop.f32.mrf.mxu0
    %v6335 = vadd.f32 0.0, %v6334
    %v6336 = vpop.f32.mrf.mxu0
    %6337 = vmatprep.mubr.f32.mxu0 0.0
    %6338 = vmatmul.mubr.f32.gmra.mxu0 %v6262
    %v6339 = vpop.f32.mrf.mxu0
    %v6340 = vadd.f32 0.0, %v6339
    %v6341 = vpop.f32.mrf.mxu0
    %6342 = vdwg.mxu0
    %v6343 = vmul.f32 %v6335, 0.17677669
    %v6344 = vmul.f32 %v6340, 0.17677669
    %v6345 = vadd.f32 %v6343, %v96
    %v6346 = vadd.f32 %v6344, %v97
    %v6347 = vsel %vm482, %v6345, -inf
    %6348 = vmax.xlane.f32.xlu0 %v6347
    %v6349 = vpop.xlane.xlu0 %6348
    %v6350 = vsel %vm482, %v6346, -inf
    %6351 = vmax.xlane.f32.xlu0 %v6350
    %v6352 = vpop.xlane.xlu0 %6351
    %v6353 = vsub.f32 %v6345, %v6349
    %v6354 = vsub.f32 %v6346, %v6352
    %v6355 = vmul.f32 %v6353, 1.442695
    %v6356 = vpow.pop %v6355
    %v6357 = vmul.f32 %v6354, 1.442695
    %v6358 = vpow.pop %v6357
    %v6359 = vsel %vm482, %v6356, 0.0
    %6360 = vadd.xlane.f32.xlu0 %v6359
    %v6361 = vpop.xlane.xlu0 %6360
    %v6362 = vsel %vm482, %v6358, 0.0
    %6363 = vadd.xlane.f32.xlu0 %v6362
    %v6364 = vpop.xlane.xlu0 %6363
    %v6365 = vrcp.pop %v6361
    %v6366 = vrcp.pop %v6364
    %v6367 = vmul.f32 %v6356, %v6365
    %v6368 = vmul.f32 %v6358, %v6366
    %6369 = vrot.lane.b32.xlu0 %v5036, 64
    %v6370 = vpop.permute.xlu0 %6369
    %6371 = vrot.lane.b32.xlu0 %v5042, 64
    %v6372 = vpop.permute.xlu0 %6371
    %v6376 = vsel %vm482, %v6367, 0
    %v6379 = vsel %vm482, %v6368, 0
    %6381 = vmatprep.subr.mxu0 0.0
    %6382 = vmatpush1.msra.mxu0 0.0
    %6383 = vmatprep.subr.mxu0 0.0
    %6384 = vmatpush1.msra.mxu0 0.0
    %6385 = vmatprep.subr.mxu0 0.0
    %6386 = vmatpush1.msra.mxu0 0.0
    %6387 = vmatprep.subr.mxu0 0.0
    %6388 = vmatpush1.msra.mxu0 0.0
    %6389 = vmatprep.subr.mxu0 0.0
    %6390 = vmatpush1.msra.mxu0 0.0
    %6391 = vmatprep.subr.mxu0 0.0
    %6392 = vmatpush1.msra.mxu0 0.0
    %6393 = vmatprep.subr.mxu0 0.0
    %6394 = vmatpush1.msra.mxu0 0.0
    %6395 = vmatprep.subr.mxu0 0.0
    %6396 = vmatpush1.msra.mxu0 0.0
    %6397 = vmatprep.subr.mxu0 0.0
    %6398 = vmatpush1.msra.mxu0 0.0
    %6399 = vmatprep.subr.mxu0 0.0
    %6400 = vmatpush1.msra.mxu0 0.0
    %6401 = vmatprep.subr.mxu0 0.0
    %6402 = vmatpush1.msra.mxu0 0.0
    %6403 = vmatprep.subr.mxu0 0.0
    %6404 = vmatpush1.msra.mxu0 0.0
    %6405 = vmatprep.subr.mxu0 0.0
    %6406 = vmatpush1.msra.mxu0 0.0
    %6407 = vmatprep.subr.mxu0 0.0
    %6408 = vmatpush1.msra.mxu0 0.0
    %6409 = vmatprep.subr.mxu0 0.0
    %6410 = vmatpush1.msra.mxu0 %v6372
    %6411 = vmatprep.subr.mxu0 0.0
    %6412 = vmatpush1.msra.mxu0 %v6370
    %6413 = vmatprep.subr.mxu0 0.0
    %6414 = vmatpush2.msra.mxu0 0.0
    %6415 = vmatprep.subr.mxu0 0.0
    %6416 = vmatpush2.msra.mxu0 0.0
    %6417 = vmatprep.subr.mxu0 0.0
    %6418 = vmatpush2.msra.mxu0 0.0
    %6419 = vmatprep.subr.mxu0 0.0
    %6420 = vmatpush2.msra.mxu0 0.0
    %6421 = vmatprep.subr.mxu0 0.0
    %6422 = vmatpush2.msra.mxu0 0.0
    %6423 = vmatprep.subr.mxu0 0.0
    %6424 = vmatpush2.msra.mxu0 0.0
    %6425 = vmatprep.subr.mxu0 0.0
    %6426 = vmatpush2.msra.mxu0 0.0
    %6427 = vmatprep.subr.mxu0 0.0
    %6428 = vmatpush2.msra.mxu0 0.0
    %6429 = vmatprep.subr.mxu0 0.0
    %6430 = vmatpush2.msra.mxu0 0.0
    %6431 = vmatprep.subr.mxu0 0.0
    %6432 = vmatpush2.msra.mxu0 0.0
    %6433 = vmatprep.subr.mxu0 0.0
    %6434 = vmatpush2.msra.mxu0 0.0
    %6435 = vmatprep.subr.mxu0 0.0
    %6436 = vmatpush2.msra.mxu0 0.0
    %6437 = vmatprep.subr.mxu0 0.0
    %6438 = vmatpush2.msra.mxu0 0.0
    %6439 = vmatprep.subr.mxu0 0.0
    %6440 = vmatpush2.msra.mxu0 0.0
    %6441 = vmatprep.subr.mxu0 0.0
    %6442 = vmatpush2.msra.mxu0 0.0
    %6443 = vmatprep.subr.mxu0 0.0
    %6444 = vmatpush2.msra.mxu0 0.0
    %6445 = vmatprep.mubr.f32.mxu0 0.0
    %6446 = vmatmul.mubr.f32.gmra.mxu0 %v6376
    %v6447 = vpop.f32.mrf.mxu0
    %v6448 = vadd.f32 0.0, %v6447
    %v6449 = vpop.f32.mrf.mxu0
    %6450 = vmatprep.mubr.f32.mxu0 0.0
    %6451 = vmatmul.mubr.f32.gmra.mxu0 %v6379
    %v6452 = vpop.f32.mrf.mxu0
    %v6453 = vadd.f32 0.0, %v6452
    %v6454 = vpop.f32.mrf.mxu0
    %6455 = vdwg.mxu0
    %6456 = vrot.lane.b32.xlu0 %v4882, 32
    %v6457 = vpop.permute.xlu0 %6456
    %6458 = vrot.lane.b32.xlu0 %v4888, 32
    %v6459 = vpop.permute.xlu0 %6458
    %6460 = vrot.lane.b32.xlu0 %v4959, 32
    %v6461 = vpop.permute.xlu0 %6460
    %6462 = vrot.lane.b32.xlu0 %v4965, 32
    %v6463 = vpop.permute.xlu0 %6462
    %v6464 = vsel %vm52, %v6457, 0
    %v6466 = vsel %vm52, %v6459, 0
    %v6468 = vsel %vm52, %v6461, 0
    %v6470 = vsel %vm52, %v6463, 0
    %6472 = vmatprep.subr.mxu0 0.0
    %6473 = vmatpush1.xpose.msra.mxu0 0.0
    %6474 = vmatprep.subr.mxu0 0.0
    %6475 = vmatpush1.xpose.msra.mxu0 0.0
    %6476 = vmatprep.subr.mxu0 0.0
    %6477 = vmatpush1.xpose.msra.mxu0 0.0
    %6478 = vmatprep.subr.mxu0 0.0
    %6479 = vmatpush1.xpose.msra.mxu0 0.0
    %6480 = vmatprep.subr.mxu0 0.0
    %6481 = vmatpush1.xpose.msra.mxu0 0.0
    %6482 = vmatprep.subr.mxu0 0.0
    %6483 = vmatpush1.xpose.msra.mxu0 0.0
    %6484 = vmatprep.subr.mxu0 0.0
    %6485 = vmatpush1.xpose.msra.mxu0 0.0
    %6486 = vmatprep.subr.mxu0 0.0
    %6487 = vmatpush1.xpose.msra.mxu0 0.0
    %6488 = vmatprep.subr.mxu0 0.0
    %6489 = vmatpush1.xpose.msra.mxu0 0.0
    %6490 = vmatprep.subr.mxu0 0.0
    %6491 = vmatpush1.xpose.msra.mxu0 0.0
    %6492 = vmatprep.subr.mxu0 0.0
    %6493 = vmatpush1.xpose.msra.mxu0 0.0
    %6494 = vmatprep.subr.mxu0 0.0
    %6495 = vmatpush1.xpose.msra.mxu0 0.0
    %6496 = vmatprep.subr.mxu0 0.0
    %6497 = vmatpush1.xpose.msra.mxu0 0.0
    %6498 = vmatprep.subr.mxu0 0.0
    %6499 = vmatpush1.xpose.msra.mxu0 0.0
    %6500 = vmatprep.subr.mxu0 0.0
    %6501 = vmatpush1.xpose.msra.mxu0 %v6470
    %6502 = vmatprep.subr.mxu0 0.0
    %6503 = vmatpush1.xpose.msra.mxu0 %v6468
    %6504 = vmatprep.subr.mxu0 0.0
    %6505 = vmatpush2.xpose.msra.mxu0 0.0
    %6506 = vmatprep.subr.mxu0 0.0
    %6507 = vmatpush2.xpose.msra.mxu0 0.0
    %6508 = vmatprep.subr.mxu0 0.0
    %6509 = vmatpush2.xpose.msra.mxu0 0.0
    %6510 = vmatprep.subr.mxu0 0.0
    %6511 = vmatpush2.xpose.msra.mxu0 0.0
    %6512 = vmatprep.subr.mxu0 0.0
    %6513 = vmatpush2.xpose.msra.mxu0 0.0
    %6514 = vmatprep.subr.mxu0 0.0
    %6515 = vmatpush2.xpose.msra.mxu0 0.0
    %6516 = vmatprep.subr.mxu0 0.0
    %6517 = vmatpush2.xpose.msra.mxu0 0.0
    %6518 = vmatprep.subr.mxu0 0.0
    %6519 = vmatpush2.xpose.msra.mxu0 0.0
    %6520 = vmatprep.subr.mxu0 0.0
    %6521 = vmatpush2.xpose.msra.mxu0 0.0
    %6522 = vmatprep.subr.mxu0 0.0
    %6523 = vmatpush2.xpose.msra.mxu0 0.0
    %6524 = vmatprep.subr.mxu0 0.0
    %6525 = vmatpush2.xpose.msra.mxu0 0.0
    %6526 = vmatprep.subr.mxu0 0.0
    %6527 = vmatpush2.xpose.msra.mxu0 0.0
    %6528 = vmatprep.subr.mxu0 0.0
    %6529 = vmatpush2.xpose.msra.mxu0 0.0
    %6530 = vmatprep.subr.mxu0 0.0
    %6531 = vmatpush2.xpose.msra.mxu0 0.0
    %6532 = vmatprep.subr.mxu0 0.0
    %6533 = vmatpush2.xpose.msra.mxu0 0.0
    %6534 = vmatprep.subr.mxu0 0.0
    %6535 = vmatpush2.xpose.msra.mxu0 0.0
    %6536 = vmatprep.mubr.f32.mxu0 0.0
    %6537 = vmatmul.mubr.f32.gmra.mxu0 %v6464
    %v6538 = vpop.f32.mrf.mxu0
    %v6539 = vadd.f32 0.0, %v6538
    %v6540 = vpop.f32.mrf.mxu0
    %6541 = vmatprep.mubr.f32.mxu0 0.0
    %6542 = vmatmul.mubr.f32.gmra.mxu0 %v6466
    %v6543 = vpop.f32.mrf.mxu0
    %v6544 = vadd.f32 0.0, %v6543
    %v6545 = vpop.f32.mrf.mxu0
    %6546 = vdwg.mxu0
    %v6547 = vmul.f32 %v6539, 0.17677669
    %v6548 = vmul.f32 %v6544, 0.17677669
    %v6549 = vadd.f32 %v6547, %v96
    %v6550 = vadd.f32 %v6548, %v97
    %v6551 = vsel %vm482, %v6549, -inf
    %6552 = vmax.xlane.f32.xlu0 %v6551
    %v6553 = vpop.xlane.xlu0 %6552
    %v6554 = vsel %vm482, %v6550, -inf
    %6555 = vmax.xlane.f32.xlu0 %v6554
    %v6556 = vpop.xlane.xlu0 %6555
    %v6557 = vsub.f32 %v6549, %v6553
    %v6558 = vsub.f32 %v6550, %v6556
    %v6559 = vmul.f32 %v6557, 1.442695
    %v6560 = vpow.pop %v6559
    %v6561 = vmul.f32 %v6558, 1.442695
    %v6562 = vpow.pop %v6561
    %v6563 = vsel %vm482, %v6560, 0.0
    %6564 = vadd.xlane.f32.xlu0 %v6563
    %v6565 = vpop.xlane.xlu0 %6564
    %v6566 = vsel %vm482, %v6562, 0.0
    %6567 = vadd.xlane.f32.xlu0 %v6566
    %v6568 = vpop.xlane.xlu0 %6567
    %v6569 = vrcp.pop %v6565
    %v6570 = vrcp.pop %v6568
    %v6571 = vmul.f32 %v6560, %v6569
    %v6572 = vmul.f32 %v6562, %v6570
    %6573 = vrot.lane.b32.xlu0 %v5036, 32
    %v6574 = vpop.permute.xlu0 %6573
    %6575 = vrot.lane.b32.xlu0 %v5042, 32
    %v6576 = vpop.permute.xlu0 %6575
    %v6580 = vsel %vm482, %v6571, 0
    %v6583 = vsel %vm482, %v6572, 0
    %6585 = vmatprep.subr.mxu0 0.0
    %6586 = vmatpush1.msra.mxu0 0.0
    %6587 = vmatprep.subr.mxu0 0.0
    %6588 = vmatpush1.msra.mxu0 0.0
    %6589 = vmatprep.subr.mxu0 0.0
    %6590 = vmatpush1.msra.mxu0 0.0
    %6591 = vmatprep.subr.mxu0 0.0
    %6592 = vmatpush1.msra.mxu0 0.0
    %6593 = vmatprep.subr.mxu0 0.0
    %6594 = vmatpush1.msra.mxu0 0.0
    %6595 = vmatprep.subr.mxu0 0.0
    %6596 = vmatpush1.msra.mxu0 0.0
    %6597 = vmatprep.subr.mxu0 0.0
    %6598 = vmatpush1.msra.mxu0 0.0
    %6599 = vmatprep.subr.mxu0 0.0
    %6600 = vmatpush1.msra.mxu0 0.0
    %6601 = vmatprep.subr.mxu0 0.0
    %6602 = vmatpush1.msra.mxu0 0.0
    %6603 = vmatprep.subr.mxu0 0.0
    %6604 = vmatpush1.msra.mxu0 0.0
    %6605 = vmatprep.subr.mxu0 0.0
    %6606 = vmatpush1.msra.mxu0 0.0
    %6607 = vmatprep.subr.mxu0 0.0
    %6608 = vmatpush1.msra.mxu0 0.0
    %6609 = vmatprep.subr.mxu0 0.0
    %6610 = vmatpush1.msra.mxu0 0.0
    %6611 = vmatprep.subr.mxu0 0.0
    %6612 = vmatpush1.msra.mxu0 0.0
    %6613 = vmatprep.subr.mxu0 0.0
    %6614 = vmatpush1.msra.mxu0 %v6576
    %6615 = vmatprep.subr.mxu0 0.0
    %6616 = vmatpush1.msra.mxu0 %v6574
    %6617 = vmatprep.subr.mxu0 0.0
    %6618 = vmatpush2.msra.mxu0 0.0
    %6619 = vmatprep.subr.mxu0 0.0
    %6620 = vmatpush2.msra.mxu0 0.0
    %6621 = vmatprep.subr.mxu0 0.0
    %6622 = vmatpush2.msra.mxu0 0.0
    %6623 = vmatprep.subr.mxu0 0.0
    %6624 = vmatpush2.msra.mxu0 0.0
    %6625 = vmatprep.subr.mxu0 0.0
    %6626 = vmatpush2.msra.mxu0 0.0
    %6627 = vmatprep.subr.mxu0 0.0
    %6628 = vmatpush2.msra.mxu0 0.0
    %6629 = vmatprep.subr.mxu0 0.0
    %6630 = vmatpush2.msra.mxu0 0.0
    %6631 = vmatprep.subr.mxu0 0.0
    %6632 = vmatpush2.msra.mxu0 0.0
    %6633 = vmatprep.subr.mxu0 0.0
    %6634 = vmatpush2.msra.mxu0 0.0
    %6635 = vmatprep.subr.mxu0 0.0
    %6636 = vmatpush2.msra.mxu0 0.0
    %6637 = vmatprep.subr.mxu0 0.0
    %6638 = vmatpush2.msra.mxu0 0.0
    %6639 = vmatprep.subr.mxu0 0.0
    %6640 = vmatpush2.msra.mxu0 0.0
    %6641 = vmatprep.subr.mxu0 0.0
    %6642 = vmatpush2.msra.mxu0 0.0
    %6643 = vmatprep.subr.mxu0 0.0
    %6644 = vmatpush2.msra.mxu0 0.0
    %6645 = vmatprep.subr.mxu0 0.0
    %6646 = vmatpush2.msra.mxu0 0.0
    %6647 = vmatprep.subr.mxu0 0.0
    %6648 = vmatpush2.msra.mxu0 0.0
    %6649 = vmatprep.mubr.f32.mxu0 0.0
    %6650 = vmatmul.mubr.f32.gmra.mxu0 %v6580
    %v6651 = vpop.f32.mrf.mxu0
    %v6652 = vadd.f32 0.0, %v6651
    %v6653 = vpop.f32.mrf.mxu0
    %6654 = vmatprep.mubr.f32.mxu0 0.0
    %6655 = vmatmul.mubr.f32.gmra.mxu0 %v6583
    %v6656 = vpop.f32.mrf.mxu0
    %v6657 = vadd.f32 0.0, %v6656
    %v6658 = vpop.f32.mrf.mxu0
    %6659 = vdwg.mxu0
    %6662 = vrot.lane.b32.xlu0 %v5436, 32
    %v6663 = vpop.permute.xlu0 %6662
    %6664 = vrot.lane.b32.xlu0 %v5441, 32
    %v6665 = vpop.permute.xlu0 %6664
    %6670 = vrot.lane.b32.xlu0 %v5640, 64
    %v6671 = vpop.permute.xlu0 %6670
    %6672 = vrot.lane.b32.xlu0 %v5645, 64
    %v6673 = vpop.permute.xlu0 %6672
    %6678 = vrot.lane.b32.xlu0 %v5844, 96
    %v6679 = vpop.permute.xlu0 %6678
    %6680 = vrot.lane.b32.xlu0 %v5849, 96
    %v6681 = vpop.permute.xlu0 %6680
    %6686 = vrot.lane.b32.xlu0 %v6244, 32
    %v6687 = vpop.permute.xlu0 %6686
    %6688 = vrot.lane.b32.xlu0 %v6249, 32
    %v6689 = vpop.permute.xlu0 %6688
    %6694 = vrot.lane.b32.xlu0 %v6448, 64
    %v6695 = vpop.permute.xlu0 %6694
    %6696 = vrot.lane.b32.xlu0 %v6453, 64
    %v6697 = vpop.permute.xlu0 %6696
    %6702 = vrot.lane.b32.xlu0 %v6652, 96
    %v6703 = vpop.permute.xlu0 %6702
    %6704 = vrot.lane.b32.xlu0 %v6657, 96
    %v6705 = vpop.permute.xlu0 %6704
    %v6708 = vsel %vm52, %v5230, %v6663
    %v6709 = vsel %vm52, %v5235, %v6665
    %v6710 = vsel %vm2058, %v6708, %v6671
    %v6711 = vsel %vm2058, %v6709, %v6673
    %v6712 = vsel %vm2061, %v6710, %v6679
    %v6713 = vsel %vm2061, %v6711, %v6681
    %v6714 = vsel %vm52, %v6038, %v6687
    %v6715 = vsel %vm52, %v6043, %v6689
    %v6716 = vsel %vm2058, %v6714, %v6695
    %v6717 = vsel %vm2058, %v6715, %v6697
    %v6718 = vsel %vm2061, %v6716, %v6703
    %v6719 = vsel %vm2061, %v6717, %v6705
    %s6720 = scalar_lea.vmem %s6, 512
    %v6721 = vld [vmem:[%s6720] sm:$0xff]
    %v6722 = vld [vmem:[%s6720 + $0x8] sm:$0xff]
    %v6723 = vld [vmem:[%s6720 + $0x10] sm:$0xff]
    %v6724 = vld [vmem:[%s6720 + $0x18] sm:$0xff]
    %v6725 = vld [vmem:[%s6720 + $0x20] sm:$0xff]
    %v6726 = vld [vmem:[%s6720 + $0x28] sm:$0xff]
    %v6727 = vld [vmem:[%s6720 + $0x30] sm:$0xff]
    %v6728 = vld [vmem:[%s6720 + $0x38] sm:$0xff]
    %v6729 = vld [vmem:[%s6720 + $0x40] sm:$0xff]
    %v6730 = vld [vmem:[%s6720 + $0x48] sm:$0xff]
    %v6731 = vld [vmem:[%s6720 + $0x50] sm:$0xff]
    %v6732 = vld [vmem:[%s6720 + $0x58] sm:$0xff]
    %v6733 = vld [vmem:[%s6720 + $0x60] sm:$0xff]
    %v6734 = vld [vmem:[%s6720 + $0x68] sm:$0xff]
    %v6735 = vld [vmem:[%s6720 + $0x70] sm:$0xff]
    %v6736 = vld [vmem:[%s6720 + $0x78] sm:$0xff]
    %v6737 = vld [vmem:[%s6720 + $0x80] sm:$0xff]
    %v6738 = vld [vmem:[%s6720 + $0x88] sm:$0xff]
    %v6739 = vld [vmem:[%s6720 + $0x90] sm:$0xff]
    %v6740 = vld [vmem:[%s6720 + $0x98] sm:$0xff]
    %v6741 = vld [vmem:[%s6720 + $0xa0] sm:$0xff]
    %v6742 = vld [vmem:[%s6720 + $0xa8] sm:$0xff]
    %v6743 = vld [vmem:[%s6720 + $0xb0] sm:$0xff]
    %v6744 = vld [vmem:[%s6720 + $0xb8] sm:$0xff]
    %v6745 = vld [vmem:[%s6720 + $0xc0] sm:$0xff]
    %v6746 = vld [vmem:[%s6720 + $0xc8] sm:$0xff]
    %v6747 = vld [vmem:[%s6720 + $0xd0] sm:$0xff]
    %v6748 = vld [vmem:[%s6720 + $0xd8] sm:$0xff]
    %v6749 = vld [vmem:[%s6720 + $0xe0] sm:$0xff]
    %v6750 = vld [vmem:[%s6720 + $0xe8] sm:$0xff]
    %v6751 = vld [vmem:[%s6720 + $0xf0] sm:$0xff]
    %v6752 = vld [vmem:[%s6720 + $0xf8] sm:$0xff]
    %s6753 = scalar_lea.vmem %s7, 2
    %v6754 = vld [vmem:[%s6753] sm:$0x1]
    %v6756 = vlaneseq
    %v6757 = vshrl.u32 %v6756, 7
    %v6758 = vsub.s32 0, %v6757
    %v6759 = vrot.slane %v6754, %v6758
    %6761 = vmatprep.subr.mxu0 0.0
    %6762 = vmatpush1.msra.mxu0 %v6736
    %6763 = vmatprep.subr.mxu0 0.0
    %6764 = vmatpush1.msra.mxu0 %v6735
    %6765 = vmatprep.subr.mxu0 0.0
    %6766 = vmatpush1.msra.mxu0 %v6734
    %6767 = vmatprep.subr.mxu0 0.0
    %6768 = vmatpush1.msra.mxu0 %v6733
    %6769 = vmatprep.subr.mxu0 0.0
    %6770 = vmatpush1.msra.mxu0 %v6732
    %6771 = vmatprep.subr.mxu0 0.0
    %6772 = vmatpush1.msra.mxu0 %v6731
    %6773 = vmatprep.subr.mxu0 0.0
    %6774 = vmatpush1.msra.mxu0 %v6730
    %6775 = vmatprep.subr.mxu0 0.0
    %6776 = vmatpush1.msra.mxu0 %v6729
    %6777 = vmatprep.subr.mxu0 0.0
    %6778 = vmatpush1.msra.mxu0 %v6728
    %6779 = vmatprep.subr.mxu0 0.0
    %6780 = vmatpush1.msra.mxu0 %v6727
    %6781 = vmatprep.subr.mxu0 0.0
    %6782 = vmatpush1.msra.mxu0 %v6726
    %6783 = vmatprep.subr.mxu0 0.0
    %6784 = vmatpush1.msra.mxu0 %v6725
    %6785 = vmatprep.subr.mxu0 0.0
    %6786 = vmatpush1.msra.mxu0 %v6724
    %6787 = vmatprep.subr.mxu0 0.0
    %6788 = vmatpush1.msra.mxu0 %v6723
    %6789 = vmatprep.subr.mxu0 0.0
    %6790 = vmatpush1.msra.mxu0 %v6722
    %6791 = vmatprep.subr.mxu0 0.0
    %6792 = vmatpush1.msra.mxu0 %v6721
    %6793 = vmatprep.subr.mxu0 0.0
    %6794 = vmatpush2.msra.mxu0 %v6752
    %6795 = vmatprep.subr.mxu0 0.0
    %6796 = vmatpush2.msra.mxu0 %v6751
    %6797 = vmatprep.subr.mxu0 0.0
    %6798 = vmatpush2.msra.mxu0 %v6750
    %6799 = vmatprep.subr.mxu0 0.0
    %6800 = vmatpush2.msra.mxu0 %v6749
    %6801 = vmatprep.subr.mxu0 0.0
    %6802 = vmatpush2.msra.mxu0 %v6748
    %6803 = vmatprep.subr.mxu0 0.0
    %6804 = vmatpush2.msra.mxu0 %v6747
    %6805 = vmatprep.subr.mxu0 0.0
    %6806 = vmatpush2.msra.mxu0 %v6746
    %6807 = vmatprep.subr.mxu0 0.0
    %6808 = vmatpush2.msra.mxu0 %v6745
    %6809 = vmatprep.subr.mxu0 0.0
    %6810 = vmatpush2.msra.mxu0 %v6744
    %6811 = vmatprep.subr.mxu0 0.0
    %6812 = vmatpush2.msra.mxu0 %v6743
    %6813 = vmatprep.subr.mxu0 0.0
    %6814 = vmatpush2.msra.mxu0 %v6742
    %6815 = vmatprep.subr.mxu0 0.0
    %6816 = vmatpush2.msra.mxu0 %v6741
    %6817 = vmatprep.subr.mxu0 0.0
    %6818 = vmatpush2.msra.mxu0 %v6740
    %6819 = vmatprep.subr.mxu0 0.0
    %6820 = vmatpush2.msra.mxu0 %v6739
    %6821 = vmatprep.subr.mxu0 0.0
    %6822 = vmatpush2.msra.mxu0 %v6738
    %6823 = vmatprep.subr.mxu0 0.0
    %6824 = vmatpush2.msra.mxu0 %v6737
    %6825 = vmatprep.mubr.f32.mxu0 %v6718
    %6826 = vmatmul.mubr.f32.gmra.mxu0 %v6712
    %v6827 = vpop.f32.mrf.mxu0
    %v6828 = vadd.f32 %v6759, %v6827
    %v6829 = vpop.f32.mrf.mxu0
    %6830 = vmatprep.mubr.f32.mxu0 %v6719
    %6831 = vmatmul.mubr.f32.gmra.mxu0 %v6713
    %v6832 = vpop.f32.mrf.mxu0
    %v6833 = vadd.f32 %v6759, %v6832
    %v6834 = vpop.f32.mrf.mxu0
    %6835 = vdwg.mxu0
    %v6836 = vadd.f32 %v6828, %v4741
    %v6837 = vadd.f32 %v6833, %v4746
    %s6838 = scalar_lea.vmem %s8, 2
    %v6839 = vld [vmem:[%s6838] sm:$0x1]
    %s6840 = scalar_lea.vmem %s9, 2
    %v6841 = vld [vmem:[%s6840] sm:$0x1]
    %v6842 = vsel %vm52, %v6836, 0.0
    %6843 = vadd.xlane.f32.xlu0 %v6842
    %v6844 = vpop.xlane.xlu0 %6843
    %v6845 = vsel %vm52, %v6837, 0.0
    %6846 = vadd.xlane.f32.xlu0 %v6845
    %v6847 = vpop.xlane.xlu0 %6846
    %v6848 = vmul.f32 %v6844, %v59
    %v6849 = vmul.f32 %v6847, %v59
    %v6850 = vsub.f32 %v6836, %v6848
    %v6851 = vsub.f32 %v6837, %v6849
    %v6852 = vmul.f32 %v6850, %v6850
    %v6853 = vmul.f32 %v6851, %v6851
    %v6854 = vsel %vm52, %v6852, 0.0
    %6855 = vadd.xlane.f32.xlu0 %v6854
    %v6856 = vpop.xlane.xlu0 %6855
    %v6857 = vsel %vm52, %v6853, 0.0
    %6858 = vadd.xlane.f32.xlu0 %v6857
    %v6859 = vpop.xlane.xlu0 %6858
    %v6860 = vmul.f32 %v6856, %v59
    %v6861 = vmul.f32 %v6859, %v59
    %v6862 = vadd.f32 %v6860, 1e-05
    %v6863 = vadd.f32 %v6861, 1e-05
    %v6864 = vrsqrt.pop %v6862
    %v6865 = vrsqrt.pop %v6863
    %v6866 = vmul.f32 %v6850, %v6864
    %v6867 = vmul.f32 %v6851, %v6865
    %v6869 = vlaneseq
    %v6870 = vshrl.u32 %v6869, 7
    %v6871 = vsub.s32 0, %v6870
    %v6872 = vrot.slane %v6839, %v6871
    %v6874 = vmul.f32 %v6866, %v6872
    %v6875 = vmul.f32 %v6867, %v6872
    %v6877 = vlaneseq
    %v6878 = vshrl.u32 %v6877, 7
    %v6879 = vsub.s32 0, %v6878
    %v6880 = vrot.slane %v6841, %v6879
    %v6882 = vadd.f32 %v6874, %v6880
    %v6883 = vadd.f32 %v6875, %v6880
    %s6884 = scalar_lea.vmem %s10, 64
    %v6885 = vld [vmem:[%s6884] sm:$0xff]
    %v6886 = vld [vmem:[%s6884 + $0x8] sm:$0xff]
    %v6887 = vld [vmem:[%s6884 + $0x10] sm:$0xff]
    %v6888 = vld [vmem:[%s6884 + $0x18] sm:$0xff]
    %s6889 = scalar_lea.vmem %s11, 2
    %v6890 = vld [vmem:[%s6889] sm:$0x1]
    %v6892 = vlaneseq
    %v6893 = vshrl.u32 %v6892, 7
    %v6894 = vsub.s32 0, %v6893
    %v6895 = vrot.slane %v6890, %v6894
    %v6898 = vsel %vm52, %v6882, 0
    %v6901 = vsel %vm52, %v6883, 0
    %6903 = vmatprep.subr.mxu0 0.0
    %6904 = vmatpush1.msra.mxu0 0.0
    %6905 = vmatprep.subr.mxu0 0.0
    %6906 = vmatpush1.msra.mxu0 0.0
    %6907 = vmatprep.subr.mxu0 0.0
    %6908 = vmatpush1.msra.mxu0 0.0
    %6909 = vmatprep.subr.mxu0 0.0
    %6910 = vmatpush1.msra.mxu0 0.0
    %6911 = vmatprep.subr.mxu0 0.0
    %6912 = vmatpush1.msra.mxu0 0.0
    %6913 = vmatprep.subr.mxu0 0.0
    %6914 = vmatpush1.msra.mxu0 0.0
    %6915 = vmatprep.subr.mxu0 0.0
    %6916 = vmatpush1.msra.mxu0 0.0
    %6917 = vmatprep.subr.mxu0 0.0
    %6918 = vmatpush1.msra.mxu0 0.0
    %6919 = vmatprep.subr.mxu0 0.0
    %6920 = vmatpush1.msra.mxu0 0.0
    %6921 = vmatprep.subr.mxu0 0.0
    %6922 = vmatpush1.msra.mxu0 0.0
    %6923 = vmatprep.subr.mxu0 0.0
    %6924 = vmatpush1.msra.mxu0 0.0
    %6925 = vmatprep.subr.mxu0 0.0
    %6926 = vmatpush1.msra.mxu0 0.0
    %6927 = vmatprep.subr.mxu0 0.0
    %6928 = vmatpush1.msra.mxu0 %v6888
    %6929 = vmatprep.subr.mxu0 0.0
    %6930 = vmatpush1.msra.mxu0 %v6887
    %6931 = vmatprep.subr.mxu0 0.0
    %6932 = vmatpush1.msra.mxu0 %v6886
    %6933 = vmatprep.subr.mxu0 0.0
    %6934 = vmatpush1.msra.mxu0 %v6885
    %6935 = vmatprep.subr.mxu0 0.0
    %6936 = vmatpush2.msra.mxu0 0.0
    %6937 = vmatprep.subr.mxu0 0.0
    %6938 = vmatpush2.msra.mxu0 0.0
    %6939 = vmatprep.subr.mxu0 0.0
    %6940 = vmatpush2.msra.mxu0 0.0
    %6941 = vmatprep.subr.mxu0 0.0
    %6942 = vmatpush2.msra.mxu0 0.0
    %6943 = vmatprep.subr.mxu0 0.0
    %6944 = vmatpush2.msra.mxu0 0.0
    %6945 = vmatprep.subr.mxu0 0.0
    %6946 = vmatpush2.msra.mxu0 0.0
    %6947 = vmatprep.subr.mxu0 0.0
    %6948 = vmatpush2.msra.mxu0 0.0
    %6949 = vmatprep.subr.mxu0 0.0
    %6950 = vmatpush2.msra.mxu0 0.0
    %6951 = vmatprep.subr.mxu0 0.0
    %6952 = vmatpush2.msra.mxu0 0.0
    %6953 = vmatprep.subr.mxu0 0.0
    %6954 = vmatpush2.msra.mxu0 0.0
    %6955 = vmatprep.subr.mxu0 0.0
    %6956 = vmatpush2.msra.mxu0 0.0
    %6957 = vmatprep.subr.mxu0 0.0
    %6958 = vmatpush2.msra.mxu0 0.0
    %6959 = vmatprep.subr.mxu0 0.0
    %6960 = vmatpush2.msra.mxu0 0.0
    %6961 = vmatprep.subr.mxu0 0.0
    %6962 = vmatpush2.msra.mxu0 0.0
    %6963 = vmatprep.subr.mxu0 0.0
    %6964 = vmatpush2.msra.mxu0 0.0
    %6965 = vmatprep.subr.mxu0 0.0
    %6966 = vmatpush2.msra.mxu0 0.0
    %6967 = vmatprep.mubr.f32.mxu0 0.0
    %6968 = vmatmul.mubr.f32.gmra.mxu0 %v6898
    %v6969 = vpop.f32.mrf.mxu0
    %v6970 = vadd.f32 %v6895, %v6969
    %v6971 = vpop.f32.mrf.mxu0
    %6972 = vmatprep.mubr.f32.mxu0 0.0
    %6973 = vmatmul.mubr.f32.gmra.mxu0 %v6901
    %v6974 = vpop.f32.mrf.mxu0
    %v6975 = vadd.f32 %v6895, %v6974
    %v6976 = vpop.f32.mrf.mxu0
    %6977 = vdwg.mxu0
    %v6978 = vmax.f32 %v6970, 0.0
    %v6979 = vmax.f32 %v6975, 0.0
    %s6980 = scalar_lea.vmem %s12, 128
    %v6981 = vld [vmem:[%s6980] sm:$0xff]
    %v6982 = vld [vmem:[%s6980 + $0x8] sm:$0xff]
    %v6983 = vld [vmem:[%s6980 + $0x10] sm:$0xff]
    %v6984 = vld [vmem:[%s6980 + $0x18] sm:$0xff]
    %v6985 = vld [vmem:[%s6980 + $0x20] sm:$0xff]
    %v6986 = vld [vmem:[%s6980 + $0x28] sm:$0xff]
    %v6987 = vld [vmem:[%s6980 + $0x30] sm:$0xff]
    %v6988 = vld [vmem:[%s6980 + $0x38] sm:$0xff]
    %s6989 = scalar_lea.vmem %s13, 2
    %v6990 = vld [vmem:[%s6989] sm:$0x1]
    %v6992 = vlaneseq
    %v6993 = vshrl.u32 %v6992, 7
    %v6994 = vsub.s32 0, %v6993
    %v6995 = vrot.slane %v6990, %v6994
    %v6998 = vsel %vm2058, %v6978, 0
    %v7001 = vsel %vm2058, %v6979, 0
    %7003 = vmatprep.subr.mxu0 0.0
    %7004 = vmatpush1.msra.mxu0 0.0
    %7005 = vmatprep.subr.mxu0 0.0
    %7006 = vmatpush1.msra.mxu0 0.0
    %7007 = vmatprep.subr.mxu0 0.0
    %7008 = vmatpush1.msra.mxu0 0.0
    %7009 = vmatprep.subr.mxu0 0.0
    %7010 = vmatpush1.msra.mxu0 0.0
    %7011 = vmatprep.subr.mxu0 0.0
    %7012 = vmatpush1.msra.mxu0 0.0
    %7013 = vmatprep.subr.mxu0 0.0
    %7014 = vmatpush1.msra.mxu0 0.0
    %7015 = vmatprep.subr.mxu0 0.0
    %7016 = vmatpush1.msra.mxu0 0.0
    %7017 = vmatprep.subr.mxu0 0.0
    %7018 = vmatpush1.msra.mxu0 0.0
    %7019 = vmatprep.subr.mxu0 0.0
    %7020 = vmatpush1.msra.mxu0 %v6988
    %7021 = vmatprep.subr.mxu0 0.0
    %7022 = vmatpush1.msra.mxu0 %v6987
    %7023 = vmatprep.subr.mxu0 0.0
    %7024 = vmatpush1.msra.mxu0 %v6986
    %7025 = vmatprep.subr.mxu0 0.0
    %7026 = vmatpush1.msra.mxu0 %v6985
    %7027 = vmatprep.subr.mxu0 0.0
    %7028 = vmatpush1.msra.mxu0 %v6984
    %7029 = vmatprep.subr.mxu0 0.0
    %7030 = vmatpush1.msra.mxu0 %v6983
    %7031 = vmatprep.subr.mxu0 0.0
    %7032 = vmatpush1.msra.mxu0 %v6982
    %7033 = vmatprep.subr.mxu0 0.0
    %7034 = vmatpush1.msra.mxu0 %v6981
    %7035 = vmatprep.subr.mxu0 0.0
    %7036 = vmatpush2.msra.mxu0 0.0
    %7037 = vmatprep.subr.mxu0 0.0
    %7038 = vmatpush2.msra.mxu0 0.0
    %7039 = vmatprep.subr.mxu0 0.0
    %7040 = vmatpush2.msra.mxu0 0.0
    %7041 = vmatprep.subr.mxu0 0.0
    %7042 = vmatpush2.msra.mxu0 0.0
    %7043 = vmatprep.subr.mxu0 0.0
    %7044 = vmatpush2.msra.mxu0 0.0
    %7045 = vmatprep.subr.mxu0 0.0
    %7046 = vmatpush2.msra.mxu0 0.0
    %7047 = vmatprep.subr.mxu0 0.0
    %7048 = vmatpush2.msra.mxu0 0.0
    %7049 = vmatprep.subr.mxu0 0.0
    %7050 = vmatpush2.msra.mxu0 0.0
    %7051 = vmatprep.subr.mxu0 0.0
    %7052 = vmatpush2.msra.mxu0 0.0
    %7053 = vmatprep.subr.mxu0 0.0
    %7054 = vmatpush2.msra.mxu0 0.0
    %7055 = vmatprep.subr.mxu0 0.0
    %7056 = vmatpush2.msra.mxu0 0.0
    %7057 = vmatprep.subr.mxu0 0.0
    %7058 = vmatpush2.msra.mxu0 0.0
    %7059 = vmatprep.subr.mxu0 0.0
    %7060 = vmatpush2.msra.mxu0 0.0
    %7061 = vmatprep.subr.mxu0 0.0
    %7062 = vmatpush2.msra.mxu0 0.0
    %7063 = vmatprep.subr.mxu0 0.0
    %7064 = vmatpush2.msra.mxu0 0.0
    %7065 = vmatprep.subr.mxu0 0.0
    %7066 = vmatpush2.msra.mxu0 0.0
    %7067 = vmatprep.mubr.f32.mxu0 0.0
    %7068 = vmatmul.mubr.f32.gmra.mxu0 %v6998
    %v7069 = vpop.f32.mrf.mxu0
    %v7070 = vadd.f32 %v6995, %v7069
    %v7071 = vpop.f32.mrf.mxu0
    %7072 = vmatprep.mubr.f32.mxu0 0.0
    %7073 = vmatmul.mubr.f32.gmra.mxu0 %v7001
    %v7074 = vpop.f32.mrf.mxu0
    %v7075 = vadd.f32 %v6995, %v7074
    %v7076 = vpop.f32.mrf.mxu0
    %7077 = vdwg.mxu0
    %7078 = vst.msk [vmem:[#allocation2] sm:$0xff] %vm52, %v7070
    %7079 = vst.msk [vmem:[#allocation2 + $0x8] sm:$0xff] %vm52, %v7075
    // Predicated region
    $region58: #{tpu_custom_call.1} parent=1 // pred_check
      _
    $region59: #{tpu_custom_call.1} parent=1 // pred_check_branch
      %7081 = sbr.rel (0) target = $region61
    $region60: #{tpu_custom_call.1} parent=1 // pred_region
      %s7083 = ssub.s32 256, 256
      %7084 = vsyncadd [#allocation3], %s7083
      %s7085 = sshll.u32 [#allocation2], 4
      %s7086 = int_to_ptr.vmem [resolvable:$true] %s7085
      %7091 = dma.vmem_to_hbm [thread:$0]  %s7086, 256, %s14, [#allocation3], 128, 128, 8
    $region61: #{tpu_custom_call.1} parent=1 // pred_fallthru
      _
    // Predicated region
    $region62: #{tpu_custom_call.1} parent=1 // pred_check
      _
    $region63: #{tpu_custom_call.1} parent=1 // pred_check_branch
      %7093 = sbr.rel (0) target = $region65
    $region64: #{tpu_custom_call.1} parent=1 // pred_region
      %7094 = dma.done [#allocation3], 256
    $region65: #{tpu_custom_call.1} parent=1 // pred_fallthru
      _
    %7095 = vsyncpa [#allocation3], 1

</llo_original>
